<compile_context>
chip_gen: v6e
topology: v6e:2x2x1
jax: 0.10.0
libtpu: 0.0.40
codegen_flags: <defaults>
</compile_context>

<pallas_src>
import numpy as np

import jax
import jax.numpy as jnp
from jax import lax
from jax.experimental import pallas as pl
from jax.experimental.pallas import tpu as pltpu


# Kernel-tap index per (output parity, window offset) for ConvTranspose2d(k=4,s=2,p=1):
#   out[2m + ph] = sum_a  x[m + ph + a - 1] * w[_KIDX[ph][a]]   (per spatial axis)
_KIDX = ((3, 1), (2, 0))


# ----------------------- init-time parameter folding ------------------------

def _deconv_row_matrices(w_deconv, bn_scale, w_in):
    """Fold ConvTranspose2d(k=4,s=2,p=1,bias=False) + inference-BN scale into
    4 row-operator matrices (one per (h-phase ph, h-tap a)).

    Row vectors are (channel-major, w-minor) flattened: col = c * W + w.
      out_row[2m+ph] = in_row[m+ph-1] @ M[ph,0] + in_row[m+ph] @ M[ph,1]
    Returns np.float32 of shape (4, Cin*w_in, Cout*2*w_in), order
    [(0,0), (0,1), (1,0), (1,1)].
    """
    w = np.asarray(w_deconv, np.float32)          # (Cin, Cout, 4, 4), torch layout
    s = np.asarray(bn_scale, np.float32)          # (Cout,)
    cin, cout = w.shape[0], w.shape[1]
    w_out = 2 * w_in
    mats = np.zeros((4, cin * w_in, cout * w_out), np.float32)
    for idx, (ph, a) in enumerate(((0, 0), (0, 1), (1, 0), (1, 1))):
        kh = _KIDX[ph][a]
        for pw in range(2):
            for b in range(2):
                kw = _KIDX[pw][b]
                blk = w[:, :, kh, kw] * s[None, :]            # (cin, cout)
                for wp in range(w_in):
                    win = wp + pw + b - 1                     # input column
                    if 0 <= win < w_in:
                        w2 = 2 * wp + pw                      # output column
                        mats[idx, win::w_in, w2::w_out] += blk
    return mats


def _bn_row_bias(shift, w_out):
    """Per-channel BN shift expanded to the (1, Cout*w_out) row layout."""
    return np.repeat(np.asarray(shift, np.float32), w_out)[None, :]


def init_ae_simple_head_params(key, in_channels, num_joints,
                               num_deconv_filters=(8, 8),
                               tag_per_joint=True, with_ae_loss=(True,),
                               std=0.05, eps=1e-5):
    """Deterministic synthetic init mirroring the module's parameter shapes.
    BatchNorm: gamma=1, beta=0, running_mean=0, running_var=1 -> inference
    scale/shift precomputed."""
    dim_tag = num_joints if tag_per_joint else 1
    out_channels = num_joints + dim_tag if with_ae_loss[0] else num_joints

    params = {"deconv": []}
    cin = in_channels
    for planes in num_deconv_filters:
        key, k1 = jax.random.split(key)
        w = std * jax.random.normal(k1, (cin, planes, 4, 4), jnp.float32)
        gamma = jnp.ones((planes,), jnp.float32)
        beta = jnp.zeros((planes,), jnp.float32)
        running_mean = jnp.zeros((planes,), jnp.float32)
        running_var = jnp.ones((planes,), jnp.float32)
        scale = gamma / jnp.sqrt(running_var + eps)
        shift = beta - running_mean * scale
        params["deconv"].append((w, scale, shift))
        cin = planes

    key, k2 = jax.random.split(key)
    params["final_w"] = std * jax.random.normal(
        k2, (out_channels, cin, 1, 1), jnp.float32)
    params["final_b"] = jnp.zeros((out_channels,), jnp.float32)
    return params


def fold_ae_simple_head_params(params, in_w):
    """One-time folding of all weights into the kernel operands (per review:
    phase/row-operator decomposition, BN fold, biases) - nothing of this runs
    per forward call."""
    assert len(params["deconv"]) == 2, "kernel is specialized for 2 deconv layers"
    (w1, s1, sh1), (w2, s2, sh2) = params["deconv"]
    m1 = _deconv_row_matrices(w1, s1, in_w)            # (4, Cin*W,  C1*2W)
    m2 = _deconv_row_matrices(w2, s2, 2 * in_w)        # (4, C1*2W, C2*4W)
    b1 = _bn_row_bias(sh1, 2 * in_w)                   # (1, C1*2W)
    b2 = _bn_row_bias(sh2, 4 * in_w)                   # (1, C2*4W)
    wf = np.asarray(params["final_w"], np.float32)[:, :, 0, 0]   # (CF, C2)
    bf = np.asarray(params["final_b"], np.float32)               # (CF,)
    return {"m1": jnp.asarray(m1), "b1": jnp.asarray(b1),
            "m2": jnp.asarray(m2), "b2": jnp.asarray(b2),
            "wf": jnp.asarray(wf), "bf": jnp.asarray(bf),
            "in_w": in_w}


# ------------------------------ Pallas kernel --------------------------------

def _make_fused_head_kernel(n_imgs, h_in, w_fin, c_mid, c_out):
    """Whole-head kernel, specialized for static (N, H, W, channels)."""

    def shift_prev(a):
        # result[(n, t)] = a[(n, t-1)], zero at t == 0 of each image (top pad)
        z = jnp.zeros((1, a.shape[1]), a.dtype)
        pieces = []
        for n in range(n_imgs):
            r = n * h_in
            pieces += [z, a[r:r + h_in - 1]]
        return jnp.concatenate(pieces, axis=0)

    def shift_next(a):
        # result[(n, t)] = a[(n, t+1)], zero at t == H-1 of each image (bottom pad)
        z = jnp.zeros((1, a.shape[1]), a.dtype)
        pieces = []
        for n in range(n_imgs):
            r = n * h_in
            pieces += [a[r + 1:r + h_in], z]
        return jnp.concatenate(pieces, axis=0)

    def dot(x, m):
        return jnp.dot(x, m, preferred_element_type=jnp.float32)

    def kernel(a0_ref, m1_ref, b1_ref, m2_ref, b2_ref, wf_ref, bf_ref, o_ref):
        a0 = a0_ref[...]                               # (N*H, Cin*W)
        a0p, a0n = shift_prev(a0), shift_next(a0)
        bias1 = b1_ref[...]

        # ---- layer 1: deconv + BN + ReLU, kept as even/odd output-row groups
        # (rows stay on the original input row grid, W already interleaved)
        e1 = jnp.maximum(dot(a0p, m1_ref[0]) + dot(a0, m1_ref[1]) + bias1, 0.0)
        o1 = jnp.maximum(dot(a0, m1_ref[2]) + dot(a0n, m1_ref[3]) + bias1, 0.0)

        # ---- layer 2: deconv + BN + ReLU -> 4 output-row groups h3 = 4t + q
        o1p, e1n = shift_prev(o1), shift_next(e1)
        bias2 = b2_ref[...]
        y = (
            jnp.maximum(dot(o1p, m2_ref[0]) + dot(e1, m2_ref[1]) + bias2, 0.0),
            jnp.maximum(dot(e1, m2_ref[2]) + dot(o1, m2_ref[3]) + bias2, 0.0),
            jnp.maximum(dot(e1, m2_ref[0]) + dot(o1, m2_ref[1]) + bias2, 0.0),
            jnp.maximum(dot(o1, m2_ref[2]) + dot(e1n, m2_ref[3]) + bias2, 0.0),
        )

        # ---- final 1x1 conv (+bias): tiny channel contraction -> SMEM-scalar
        # x vector FMAs on the VPU (no 64x structurally-sparse matmul).
        for q in range(4):
            yq = y[q]                                  # (N*H, C2*4W)
            for f in range(c_out):
                acc = bf_ref[f] + wf_ref[f, 0] * yq[:, 0:w_fin]
                for c in range(1, c_mid):
                    acc = acc + wf_ref[f, c] * yq[:, c * w_fin:(c + 1) * w_fin]
                for n in range(n_imgs):
                    # contiguous (H, 4W) tile store per (h-phase, image, channel)
                    o_ref[q, n, f, :, :] = acc[n * h_in:(n + 1) * h_in, :]

    return kernel


# ------------------------------- the "module" --------------------------------

def ae_simple_head_forward(x, folded):
    """Matches AESimpleHead.forward: accepts a tensor or a list (uses x[0]),
    returns a single-element list of NCHW heatmaps+tags."""
    if isinstance(x, list):
        x = x[0]
    n, cin, h_in, w_in = x.shape
    assert folded["m1"].shape[1] == cin * w_in, "folded params built for another width"
    c_mid = folded["m2"].shape[2] // (4 * w_in)        # channels after deconv2
    c_out = folded["wf"].shape[0]                      # heatmaps + tags
    w_fin = 4 * w_in

    # 8 KiB of input glue: NCHW -> (N*H, Cin*W) row slab (lane-dense rows).
    a0 = jnp.transpose(x.astype(jnp.float32), (0, 2, 1, 3)).reshape(n * h_in,
                                                                    cin * w_in)

    kernel = _make_fused_head_kernel(n, h_in, w_fin, c_mid, c_out)
    vmem = pl.BlockSpec(memory_space=pltpu.MemorySpace.VMEM)
    smem = pl.BlockSpec(memory_space=pltpu.MemorySpace.SMEM)

    out5 = pl.pallas_call(
        kernel,
        out_shape=jax.ShapeDtypeStruct((4, n, c_out, h_in, w_fin), jnp.float32),
        in_specs=[vmem, vmem, vmem, vmem, vmem, smem, smem],
        out_specs=vmem,
    )(a0, folded["m1"], folded["b1"], folded["m2"], folded["b2"],
      folded["wf"], folded["bf"])

    # (q, n, c, t, w) -> NCHW with h = 4*t + q.  The reshape after the
    # transpose is a free contiguous-dim merge; only this ~196 KiB transpose
    # remains outside the kernel.
    # TODO(synk): could be removed with stride-4 sublane stores into an NCHW
    # output ref, kept outside the kernel here for guaranteed lowering.
    y = jnp.transpose(out5, (1, 2, 3, 0, 4)).reshape(n, c_out, 4 * h_in, w_fin)
    return [y]


# ----------------------------- pure-JAX reference ----------------------------

def _reference_forward(x_nchw, params):
    h = jnp.transpose(x_nchw, (0, 2, 3, 1))
    for (w_deconv, scale, shift) in params["deconv"]:
        w_conv = jnp.transpose(w_deconv[:, :, ::-1, ::-1], (2, 3, 0, 1))  # HWIO
        h = lax.conv_general_dilated(
            h, w_conv, window_strides=(1, 1),
            padding=[(2, 2), (2, 2)], lhs_dilation=(2, 2),
            dimension_numbers=("NHWC", "HWIO", "NHWC"),
            precision=lax.Precision.HIGHEST)
        h = jnp.maximum(h * scale + shift, 0.0)
    w = params["final_w"]
    w_conv = jnp.transpose(w, (2, 3, 1, 0))                  # (1,1,Cin,Cout)
    y = lax.conv_general_dilated(
        h, w_conv, window_strides=(1, 1), padding=[(0, 0), (0, 0)],
        dimension_numbers=("NHWC", "HWIO", "NHWC"),
        precision=lax.Precision.HIGHEST) + params["final_b"]
    return jnp.transpose(y, (0, 3, 1, 2))


# ----------------------------------- main ------------------------------------

if __name__ == "__main__":
    key = jax.random.PRNGKey(0)
    key, kx = jax.random.split(key)

    N, C_in, H, W = 2, 4, 16, 16
    num_joints = 3
    x = jax.random.normal(kx, (N, C_in, H, W), jnp.float32)   # NCHW input

    params = init_ae_simple_head_params(
        key, in_channels=C_in, num_joints=num_joints,
        num_deconv_filters=(8, 8), tag_per_joint=True, with_ae_loss=(True,))
    folded = fold_ae_simple_head_params(params, in_w=W)        # once, at init

    fwd = jax.jit(ae_simple_head_forward)
    outs = fwd(x, folded)
    y = jax.block_until_ready(outs[0])

    # Expected output: list of one tensor, NCHW, (N, num_joints*2, 4H, 4W)
    assert isinstance(outs, list) and len(outs) == 1
    assert y.shape == (N, 2 * num_joints, 4 * H, 4 * W), y.shape

    # Cross-check the Pallas path against a plain-JAX (XLA conv) reference.
    y_ref = jax.block_until_ready(_reference_forward(x, params))
    assert jnp.allclose(y, y_ref, rtol=1e-4, atol=1e-5), "mismatch vs reference"

    print("KERNEL_OK")
</pallas_src>

<mosaic_0001>
module attributes {stable_mosaic.version = 11 : i64} {
  func.func @kernel(%arg0: memref<32x64xf32, #tpu.memory_space<vmem>>, %arg1: memref<4x64x256xf32, #tpu.memory_space<vmem>>, %arg2: memref<1x256xf32, #tpu.memory_space<vmem>>, %arg3: memref<4x256x512xf32, #tpu.memory_space<vmem>>, %arg4: memref<1x512xf32, #tpu.memory_space<vmem>>, %arg5: memref<6x8xf32, #tpu.memory_space<smem>>, %arg6: memref<6xf32, #tpu.memory_space<smem>>, %arg7: memref<4x2x6x16x64xf32, #tpu.memory_space<vmem>>) attributes {dimension_semantics = [], scalar_prefetch = 0 : i64, scratch_operands = 0 : i64, tpu.core_type = #tpu.core_type<tc>} {
    %c0 = arith.constant 0 : index
    %c0_0 = arith.constant 0 : index
    %0 = vector.load %arg0[%c0, %c0_0] : memref<32x64xf32, #tpu.memory_space<vmem>>, vector<32x64xf32>
    %cst = arith.constant 0.000000e+00 : f32
    %1 = vector.broadcast %cst : f32 to vector<1x64xf32>
    %2 = vector.extract_strided_slice %0 {offsets = [0, 0], sizes = [15, 64], strides = [1, 1]} : vector<32x64xf32> to vector<15x64xf32>
    %3 = vector.extract_strided_slice %0 {offsets = [16, 0], sizes = [15, 64], strides = [1, 1]} : vector<32x64xf32> to vector<15x64xf32>
    %4 = tpu.concatenate %1, %2, %1, %3 in 0 : vector<1x64xf32>, vector<15x64xf32>, vector<1x64xf32>, vector<15x64xf32> -> vector<32x64xf32>
    %cst_1 = arith.constant 0.000000e+00 : f32
    %5 = vector.broadcast %cst_1 : f32 to vector<1x64xf32>
    %6 = vector.extract_strided_slice %0 {offsets = [1, 0], sizes = [15, 64], strides = [1, 1]} : vector<32x64xf32> to vector<15x64xf32>
    %7 = vector.extract_strided_slice %0 {offsets = [17, 0], sizes = [15, 64], strides = [1, 1]} : vector<32x64xf32> to vector<15x64xf32>
    %8 = tpu.concatenate %6, %5, %7, %5 in 0 : vector<15x64xf32>, vector<1x64xf32>, vector<15x64xf32>, vector<1x64xf32> -> vector<32x64xf32>
    %c0_2 = arith.constant 0 : index
    %c0_3 = arith.constant 0 : index
    %9 = vector.load %arg2[%c0_2, %c0_3] : memref<1x256xf32, #tpu.memory_space<vmem>>, vector<1x256xf32>
    %c0_4 = arith.constant 0 : index
    %c0_5 = arith.constant 0 : index
    %c0_6 = arith.constant 0 : index
    %10 = vector.load %arg1[%c0_4, %c0_5, %c0_6] : memref<4x64x256xf32, #tpu.memory_space<vmem>>, vector<1x64x256xf32>
    %11 = vector.shape_cast %10 : vector<1x64x256xf32> to vector<64x256xf32>
    %cst_7 = arith.constant dense<0.000000e+00> : vector<32x256xf32>
    %12 = tpu.matmul %4, %11, %cst_7 {dimension_numbers = #tpu.dot_dimension_numbers<[1], [0], [0], [1], [0, 0, 1, 1], [], []>} : vector<32x64xf32>, vector<64x256xf32>, vector<32x256xf32> -> vector<32x256xf32>
    %c1 = arith.constant 1 : index
    %c0_8 = arith.constant 0 : index
    %c0_9 = arith.constant 0 : index
    %13 = vector.load %arg1[%c1, %c0_8, %c0_9] : memref<4x64x256xf32, #tpu.memory_space<vmem>>, vector<1x64x256xf32>
    %14 = vector.shape_cast %13 : vector<1x64x256xf32> to vector<64x256xf32>
    %cst_10 = arith.constant dense<0.000000e+00> : vector<32x256xf32>
    %15 = tpu.matmul %0, %14, %cst_10 {dimension_numbers = #tpu.dot_dimension_numbers<[1], [0], [0], [1], [0, 0, 1, 1], [], []>} : vector<32x64xf32>, vector<64x256xf32>, vector<32x256xf32> -> vector<32x256xf32>
    %16 = arith.addf %12, %15 : vector<32x256xf32>
    %17 = vector.broadcast %9 : vector<1x256xf32> to vector<32x256xf32>
    %18 = arith.addf %16, %17 : vector<32x256xf32>
    %cst_11 = arith.constant 0.000000e+00 : f32
    %19 = vector.broadcast %cst_11 : f32 to vector<32x256xf32>
    %20 = arith.maximumf %18, %19 : vector<32x256xf32>
    %c2 = arith.constant 2 : index
    %c0_12 = arith.constant 0 : index
    %c0_13 = arith.constant 0 : index
    %21 = vector.load %arg1[%c2, %c0_12, %c0_13] : memref<4x64x256xf32, #tpu.memory_space<vmem>>, vector<1x64x256xf32>
    %22 = vector.shape_cast %21 : vector<1x64x256xf32> to vector<64x256xf32>
    %cst_14 = arith.constant dense<0.000000e+00> : vector<32x256xf32>
    %23 = tpu.matmul %0, %22, %cst_14 {dimension_numbers = #tpu.dot_dimension_numbers<[1], [0], [0], [1], [0, 0, 1, 1], [], []>} : vector<32x64xf32>, vector<64x256xf32>, vector<32x256xf32> -> vector<32x256xf32>
    %c3 = arith.constant 3 : index
    %c0_15 = arith.constant 0 : index
    %c0_16 = arith.constant 0 : index
    %24 = vector.load %arg1[%c3, %c0_15, %c0_16] : memref<4x64x256xf32, #tpu.memory_space<vmem>>, vector<1x64x256xf32>
    %25 = vector.shape_cast %24 : vector<1x64x256xf32> to vector<64x256xf32>
    %cst_17 = arith.constant dense<0.000000e+00> : vector<32x256xf32>
    %26 = tpu.matmul %8, %25, %cst_17 {dimension_numbers = #tpu.dot_dimension_numbers<[1], [0], [0], [1], [0, 0, 1, 1], [], []>} : vector<32x64xf32>, vector<64x256xf32>, vector<32x256xf32> -> vector<32x256xf32>
    %27 = arith.addf %23, %26 : vector<32x256xf32>
    %28 = vector.broadcast %9 : vector<1x256xf32> to vector<32x256xf32>
    %29 = arith.addf %27, %28 : vector<32x256xf32>
    %cst_18 = arith.constant 0.000000e+00 : f32
    %30 = vector.broadcast %cst_18 : f32 to vector<32x256xf32>
    %31 = arith.maximumf %29, %30 : vector<32x256xf32>
    %cst_19 = arith.constant 0.000000e+00 : f32
    %32 = vector.broadcast %cst_19 : f32 to vector<1x256xf32>
    %33 = vector.extract_strided_slice %31 {offsets = [0, 0], sizes = [15, 256], strides = [1, 1]} : vector<32x256xf32> to vector<15x256xf32>
    %34 = vector.extract_strided_slice %31 {offsets = [16, 0], sizes = [15, 256], strides = [1, 1]} : vector<32x256xf32> to vector<15x256xf32>
    %35 = tpu.concatenate %32, %33, %32, %34 in 0 : vector<1x256xf32>, vector<15x256xf32>, vector<1x256xf32>, vector<15x256xf32> -> vector<32x256xf32>
    %cst_20 = arith.constant 0.000000e+00 : f32
    %36 = vector.broadcast %cst_20 : f32 to vector<1x256xf32>
    %37 = vector.extract_strided_slice %20 {offsets = [1, 0], sizes = [15, 256], strides = [1, 1]} : vector<32x256xf32> to vector<15x256xf32>
    %38 = vector.extract_strided_slice %20 {offsets = [17, 0], sizes = [15, 256], strides = [1, 1]} : vector<32x256xf32> to vector<15x256xf32>
    %39 = tpu.concatenate %37, %36, %38, %36 in 0 : vector<15x256xf32>, vector<1x256xf32>, vector<15x256xf32>, vector<1x256xf32> -> vector<32x256xf32>
    %c0_21 = arith.constant 0 : index
    %c0_22 = arith.constant 0 : index
    %40 = vector.load %arg4[%c0_21, %c0_22] : memref<1x512xf32, #tpu.memory_space<vmem>>, vector<1x512xf32>
    %c0_23 = arith.constant 0 : index
    %c0_24 = arith.constant 0 : index
    %c0_25 = arith.constant 0 : index
    %41 = vector.load %arg3[%c0_23, %c0_24, %c0_25] : memref<4x256x512xf32, #tpu.memory_space<vmem>>, vector<1x256x512xf32>
    %42 = vector.shape_cast %41 : vector<1x256x512xf32> to vector<256x512xf32>
    %cst_26 = arith.constant dense<0.000000e+00> : vector<32x512xf32>
    %43 = tpu.matmul %35, %42, %cst_26 {dimension_numbers = #tpu.dot_dimension_numbers<[1], [0], [0], [1], [0, 0, 1, 1], [], []>} : vector<32x256xf32>, vector<256x512xf32>, vector<32x512xf32> -> vector<32x512xf32>
    %c1_27 = arith.constant 1 : index
    %c0_28 = arith.constant 0 : index
    %c0_29 = arith.constant 0 : index
    %44 = vector.load %arg3[%c1_27, %c0_28, %c0_29] : memref<4x256x512xf32, #tpu.memory_space<vmem>>, vector<1x256x512xf32>
    %45 = vector.shape_cast %44 : vector<1x256x512xf32> to vector<256x512xf32>
    %cst_30 = arith.constant dense<0.000000e+00> : vector<32x512xf32>
    %46 = tpu.matmul %20, %45, %cst_30 {dimension_numbers = #tpu.dot_dimension_numbers<[1], [0], [0], [1], [0, 0, 1, 1], [], []>} : vector<32x256xf32>, vector<256x512xf32>, vector<32x512xf32> -> vector<32x512xf32>
    %47 = arith.addf %43, %46 : vector<32x512xf32>
    %48 = vector.broadcast %40 : vector<1x512xf32> to vector<32x512xf32>
    %49 = arith.addf %47, %48 : vector<32x512xf32>
    %cst_31 = arith.constant 0.000000e+00 : f32
    %50 = vector.broadcast %cst_31 : f32 to vector<32x512xf32>
    %51 = arith.maximumf %49, %50 : vector<32x512xf32>
    %c2_32 = arith.constant 2 : index
    %c0_33 = arith.constant 0 : index
    %c0_34 = arith.constant 0 : index
    %52 = vector.load %arg3[%c2_32, %c0_33, %c0_34] : memref<4x256x512xf32, #tpu.memory_space<vmem>>, vector<1x256x512xf32>
    %53 = vector.shape_cast %52 : vector<1x256x512xf32> to vector<256x512xf32>
    %cst_35 = arith.constant dense<0.000000e+00> : vector<32x512xf32>
    %54 = tpu.matmul %20, %53, %cst_35 {dimension_numbers = #tpu.dot_dimension_numbers<[1], [0], [0], [1], [0, 0, 1, 1], [], []>} : vector<32x256xf32>, vector<256x512xf32>, vector<32x512xf32> -> vector<32x512xf32>
    %c3_36 = arith.constant 3 : index
    %c0_37 = arith.constant 0 : index
    %c0_38 = arith.constant 0 : index
    %55 = vector.load %arg3[%c3_36, %c0_37, %c0_38] : memref<4x256x512xf32, #tpu.memory_space<vmem>>, vector<1x256x512xf32>
    %56 = vector.shape_cast %55 : vector<1x256x512xf32> to vector<256x512xf32>
    %cst_39 = arith.constant dense<0.000000e+00> : vector<32x512xf32>
    %57 = tpu.matmul %31, %56, %cst_39 {dimension_numbers = #tpu.dot_dimension_numbers<[1], [0], [0], [1], [0, 0, 1, 1], [], []>} : vector<32x256xf32>, vector<256x512xf32>, vector<32x512xf32> -> vector<32x512xf32>
    %58 = arith.addf %54, %57 : vector<32x512xf32>
    %59 = vector.broadcast %40 : vector<1x512xf32> to vector<32x512xf32>
    %60 = arith.addf %58, %59 : vector<32x512xf32>
    %cst_40 = arith.constant 0.000000e+00 : f32
    %61 = vector.broadcast %cst_40 : f32 to vector<32x512xf32>
    %62 = arith.maximumf %60, %61 : vector<32x512xf32>
    %c0_41 = arith.constant 0 : index
    %c0_42 = arith.constant 0 : index
    %c0_43 = arith.constant 0 : index
    %63 = vector.load %arg3[%c0_41, %c0_42, %c0_43] : memref<4x256x512xf32, #tpu.memory_space<vmem>>, vector<1x256x512xf32>
    %64 = vector.shape_cast %63 : vector<1x256x512xf32> to vector<256x512xf32>
    %cst_44 = arith.constant dense<0.000000e+00> : vector<32x512xf32>
    %65 = tpu.matmul %20, %64, %cst_44 {dimension_numbers = #tpu.dot_dimension_numbers<[1], [0], [0], [1], [0, 0, 1, 1], [], []>} : vector<32x256xf32>, vector<256x512xf32>, vector<32x512xf32> -> vector<32x512xf32>
    %c1_45 = arith.constant 1 : index
    %c0_46 = arith.constant 0 : index
    %c0_47 = arith.constant 0 : index
    %66 = vector.load %arg3[%c1_45, %c0_46, %c0_47] : memref<4x256x512xf32, #tpu.memory_space<vmem>>, vector<1x256x512xf32>
    %67 = vector.shape_cast %66 : vector<1x256x512xf32> to vector<256x512xf32>
    %cst_48 = arith.constant dense<0.000000e+00> : vector<32x512xf32>
    %68 = tpu.matmul %31, %67, %cst_48 {dimension_numbers = #tpu.dot_dimension_numbers<[1], [0], [0], [1], [0, 0, 1, 1], [], []>} : vector<32x256xf32>, vector<256x512xf32>, vector<32x512xf32> -> vector<32x512xf32>
    %69 = arith.addf %65, %68 : vector<32x512xf32>
    %70 = vector.broadcast %40 : vector<1x512xf32> to vector<32x512xf32>
    %71 = arith.addf %69, %70 : vector<32x512xf32>
    %cst_49 = arith.constant 0.000000e+00 : f32
    %72 = vector.broadcast %cst_49 : f32 to vector<32x512xf32>
    %73 = arith.maximumf %71, %72 : vector<32x512xf32>
    %c2_50 = arith.constant 2 : index
    %c0_51 = arith.constant 0 : index
    %c0_52 = arith.constant 0 : index
    %74 = vector.load %arg3[%c2_50, %c0_51, %c0_52] : memref<4x256x512xf32, #tpu.memory_space<vmem>>, vector<1x256x512xf32>
    %75 = vector.shape_cast %74 : vector<1x256x512xf32> to vector<256x512xf32>
    %cst_53 = arith.constant dense<0.000000e+00> : vector<32x512xf32>
    %76 = tpu.matmul %31, %75, %cst_53 {dimension_numbers = #tpu.dot_dimension_numbers<[1], [0], [0], [1], [0, 0, 1, 1], [], []>} : vector<32x256xf32>, vector<256x512xf32>, vector<32x512xf32> -> vector<32x512xf32>
    %c3_54 = arith.constant 3 : index
    %c0_55 = arith.constant 0 : index
    %c0_56 = arith.constant 0 : index
    %77 = vector.load %arg3[%c3_54, %c0_55, %c0_56] : memref<4x256x512xf32, #tpu.memory_space<vmem>>, vector<1x256x512xf32>
    %78 = vector.shape_cast %77 : vector<1x256x512xf32> to vector<256x512xf32>
    %cst_57 = arith.constant dense<0.000000e+00> : vector<32x512xf32>
    %79 = tpu.matmul %39, %78, %cst_57 {dimension_numbers = #tpu.dot_dimension_numbers<[1], [0], [0], [1], [0, 0, 1, 1], [], []>} : vector<32x256xf32>, vector<256x512xf32>, vector<32x512xf32> -> vector<32x512xf32>
    %80 = arith.addf %76, %79 : vector<32x512xf32>
    %81 = vector.broadcast %40 : vector<1x512xf32> to vector<32x512xf32>
    %82 = arith.addf %80, %81 : vector<32x512xf32>
    %cst_58 = arith.constant 0.000000e+00 : f32
    %83 = vector.broadcast %cst_58 : f32 to vector<32x512xf32>
    %84 = arith.maximumf %82, %83 : vector<32x512xf32>
    %c0_59 = arith.constant 0 : index
    %85 = memref.load %arg6[%c0_59] : memref<6xf32, #tpu.memory_space<smem>>
    %c0_60 = arith.constant 0 : index
    %c0_61 = arith.constant 0 : index
    %86 = memref.load %arg5[%c0_60, %c0_61] : memref<6x8xf32, #tpu.memory_space<smem>>
    %87 = vector.extract_strided_slice %51 {offsets = [0, 0], sizes = [32, 64], strides = [1, 1]} : vector<32x512xf32> to vector<32x64xf32>
    %88 = vector.broadcast %86 : f32 to vector<32x64xf32>
    %89 = arith.mulf %88, %87 : vector<32x64xf32>
    %90 = vector.broadcast %85 : f32 to vector<32x64xf32>
    %91 = arith.addf %90, %89 : vector<32x64xf32>
    %c0_62 = arith.constant 0 : index
    %c1_63 = arith.constant 1 : index
    %92 = memref.load %arg5[%c0_62, %c1_63] : memref<6x8xf32, #tpu.memory_space<smem>>
    %93 = vector.extract_strided_slice %51 {offsets = [0, 64], sizes = [32, 64], strides = [1, 1]} : vector<32x512xf32> to vector<32x64xf32>
    %94 = vector.broadcast %92 : f32 to vector<32x64xf32>
    %95 = arith.mulf %94, %93 : vector<32x64xf32>
    %96 = arith.addf %91, %95 : vector<32x64xf32>
    %c0_64 = arith.constant 0 : index
    %c2_65 = arith.constant 2 : index
    %97 = memref.load %arg5[%c0_64, %c2_65] : memref<6x8xf32, #tpu.memory_space<smem>>
    %98 = vector.extract_strided_slice %51 {offsets = [0, 128], sizes = [32, 64], strides = [1, 1]} : vector<32x512xf32> to vector<32x64xf32>
    %99 = vector.broadcast %97 : f32 to vector<32x64xf32>
    %100 = arith.mulf %99, %98 : vector<32x64xf32>
    %101 = arith.addf %96, %100 : vector<32x64xf32>
    %c0_66 = arith.constant 0 : index
    %c3_67 = arith.constant 3 : index
    %102 = memref.load %arg5[%c0_66, %c3_67] : memref<6x8xf32, #tpu.memory_space<smem>>
    %103 = vector.extract_strided_slice %51 {offsets = [0, 192], sizes = [32, 64], strides = [1, 1]} : vector<32x512xf32> to vector<32x64xf32>
    %104 = vector.broadcast %102 : f32 to vector<32x64xf32>
    %105 = arith.mulf %104, %103 : vector<32x64xf32>
    %106 = arith.addf %101, %105 : vector<32x64xf32>
    %c0_68 = arith.constant 0 : index
    %c4 = arith.constant 4 : index
    %107 = memref.load %arg5[%c0_68, %c4] : memref<6x8xf32, #tpu.memory_space<smem>>
    %108 = vector.extract_strided_slice %51 {offsets = [0, 256], sizes = [32, 64], strides = [1, 1]} : vector<32x512xf32> to vector<32x64xf32>
    %109 = vector.broadcast %107 : f32 to vector<32x64xf32>
    %110 = arith.mulf %109, %108 : vector<32x64xf32>
    %111 = arith.addf %106, %110 : vector<32x64xf32>
    %c0_69 = arith.constant 0 : index
    %c5 = arith.constant 5 : index
    %112 = memref.load %arg5[%c0_69, %c5] : memref<6x8xf32, #tpu.memory_space<smem>>
    %113 = vector.extract_strided_slice %51 {offsets = [0, 320], sizes = [32, 64], strides = [1, 1]} : vector<32x512xf32> to vector<32x64xf32>
    %114 = vector.broadcast %112 : f32 to vector<32x64xf32>
    %115 = arith.mulf %114, %113 : vector<32x64xf32>
    %116 = arith.addf %111, %115 : vector<32x64xf32>
    %c0_70 = arith.constant 0 : index
    %c6 = arith.constant 6 : index
    %117 = memref.load %arg5[%c0_70, %c6] : memref<6x8xf32, #tpu.memory_space<smem>>
    %118 = vector.extract_strided_slice %51 {offsets = [0, 384], sizes = [32, 64], strides = [1, 1]} : vector<32x512xf32> to vector<32x64xf32>
    %119 = vector.broadcast %117 : f32 to vector<32x64xf32>
    %120 = arith.mulf %119, %118 : vector<32x64xf32>
    %121 = arith.addf %116, %120 : vector<32x64xf32>
    %c0_71 = arith.constant 0 : index
    %c7 = arith.constant 7 : index
    %122 = memref.load %arg5[%c0_71, %c7] : memref<6x8xf32, #tpu.memory_space<smem>>
    %123 = vector.extract_strided_slice %51 {offsets = [0, 448], sizes = [32, 64], strides = [1, 1]} : vector<32x512xf32> to vector<32x64xf32>
    %124 = vector.broadcast %122 : f32 to vector<32x64xf32>
    %125 = arith.mulf %124, %123 : vector<32x64xf32>
    %126 = arith.addf %121, %125 : vector<32x64xf32>
    %127 = vector.extract_strided_slice %126 {offsets = [0, 0], sizes = [16, 64], strides = [1, 1]} : vector<32x64xf32> to vector<16x64xf32>
    %c0_72 = arith.constant 0 : index
    %c0_73 = arith.constant 0 : index
    %c0_74 = arith.constant 0 : index
    %c0_75 = arith.constant 0 : index
    %c0_76 = arith.constant 0 : index
    %128 = vector.load %arg7[%c0_72, %c0_73, %c0_74, %c0_75, %c0_76] : memref<4x2x6x16x64xf32, #tpu.memory_space<vmem>>, vector<1x1x1x16x64xf32>
    %129 = vector.shape_cast %128 : vector<1x1x1x16x64xf32> to vector<16x64xf32>
    %130 = vector.shape_cast %127 : vector<16x64xf32> to vector<1x1x1x16x64xf32>
    tpu.vector_store %arg7[%c0_72, %c0_73, %c0_74, %c0_75, %c0_76], %130 {strides = array<i32>} : memref<4x2x6x16x64xf32, #tpu.memory_space<vmem>>, vector<1x1x1x16x64xf32>,
    %131 = vector.extract_strided_slice %126 {offsets = [16, 0], sizes = [16, 64], strides = [1, 1]} : vector<32x64xf32> to vector<16x64xf32>
    %c0_77 = arith.constant 0 : index
    %c1_78 = arith.constant 1 : index
    %c0_79 = arith.constant 0 : index
    %c0_80 = arith.constant 0 : index
    %c0_81 = arith.constant 0 : index
    %132 = vector.load %arg7[%c0_77, %c1_78, %c0_79, %c0_80, %c0_81] : memref<4x2x6x16x64xf32, #tpu.memory_space<vmem>>, vector<1x1x1x16x64xf32>
    %133 = vector.shape_cast %132 : vector<1x1x1x16x64xf32> to vector<16x64xf32>
    %134 = vector.shape_cast %131 : vector<16x64xf32> to vector<1x1x1x16x64xf32>
    tpu.vector_store %arg7[%c0_77, %c1_78, %c0_79, %c0_80, %c0_81], %134 {strides = array<i32>} : memref<4x2x6x16x64xf32, #tpu.memory_space<vmem>>, vector<1x1x1x16x64xf32>,
    %c1_82 = arith.constant 1 : index
    %135 = memref.load %arg6[%c1_82] : memref<6xf32, #tpu.memory_space<smem>>
    %c1_83 = arith.constant 1 : index
    %c0_84 = arith.constant 0 : index
    %136 = memref.load %arg5[%c1_83, %c0_84] : memref<6x8xf32, #tpu.memory_space<smem>>
    %137 = vector.extract_strided_slice %51 {offsets = [0, 0], sizes = [32, 64], strides = [1, 1]} : vector<32x512xf32> to vector<32x64xf32>
    %138 = vector.broadcast %136 : f32 to vector<32x64xf32>
    %139 = arith.mulf %138, %137 : vector<32x64xf32>
    %140 = vector.broadcast %135 : f32 to vector<32x64xf32>
    %141 = arith.addf %140, %139 : vector<32x64xf32>
    %c1_85 = arith.constant 1 : index
    %c1_86 = arith.constant 1 : index
    %142 = memref.load %arg5[%c1_85, %c1_86] : memref<6x8xf32, #tpu.memory_space<smem>>
    %143 = vector.extract_strided_slice %51 {offsets = [0, 64], sizes = [32, 64], strides = [1, 1]} : vector<32x512xf32> to vector<32x64xf32>
    %144 = vector.broadcast %142 : f32 to vector<32x64xf32>
    %145 = arith.mulf %144, %143 : vector<32x64xf32>
    %146 = arith.addf %141, %145 : vector<32x64xf32>
    %c1_87 = arith.constant 1 : index
    %c2_88 = arith.constant 2 : index
    %147 = memref.load %arg5[%c1_87, %c2_88] : memref<6x8xf32, #tpu.memory_space<smem>>
    %148 = vector.extract_strided_slice %51 {offsets = [0, 128], sizes = [32, 64], strides = [1, 1]} : vector<32x512xf32> to vector<32x64xf32>
    %149 = vector.broadcast %147 : f32 to vector<32x64xf32>
    %150 = arith.mulf %149, %148 : vector<32x64xf32>
    %151 = arith.addf %146, %150 : vector<32x64xf32>
    %c1_89 = arith.constant 1 : index
    %c3_90 = arith.constant 3 : index
    %152 = memref.load %arg5[%c1_89, %c3_90] : memref<6x8xf32, #tpu.memory_space<smem>>
    %153 = vector.extract_strided_slice %51 {offsets = [0, 192], sizes = [32, 64], strides = [1, 1]} : vector<32x512xf32> to vector<32x64xf32>
    %154 = vector.broadcast %152 : f32 to vector<32x64xf32>
    %155 = arith.mulf %154, %153 : vector<32x64xf32>
    %156 = arith.addf %151, %155 : vector<32x64xf32>
    %c1_91 = arith.constant 1 : index
    %c4_92 = arith.constant 4 : index
    %157 = memref.load %arg5[%c1_91, %c4_92] : memref<6x8xf32, #tpu.memory_space<smem>>
    %158 = vector.extract_strided_slice %51 {offsets = [0, 256], sizes = [32, 64], strides = [1, 1]} : vector<32x512xf32> to vector<32x64xf32>
    %159 = vector.broadcast %157 : f32 to vector<32x64xf32>
    %160 = arith.mulf %159, %158 : vector<32x64xf32>
    %161 = arith.addf %156, %160 : vector<32x64xf32>
    %c1_93 = arith.constant 1 : index
    %c5_94 = arith.constant 5 : index
    %162 = memref.load %arg5[%c1_93, %c5_94] : memref<6x8xf32, #tpu.memory_space<smem>>
    %163 = vector.extract_strided_slice %51 {offsets = [0, 320], sizes = [32, 64], strides = [1, 1]} : vector<32x512xf32> to vector<32x64xf32>
    %164 = vector.broadcast %162 : f32 to vector<32x64xf32>
    %165 = arith.mulf %164, %163 : vector<32x64xf32>
    %166 = arith.addf %161, %165 : vector<32x64xf32>
    %c1_95 = arith.constant 1 : index
    %c6_96 = arith.constant 6 : index
    %167 = memref.load %arg5[%c1_95, %c6_96] : memref<6x8xf32, #tpu.memory_space<smem>>
    %168 = vector.extract_strided_slice %51 {offsets = [0, 384], sizes = [32, 64], strides = [1, 1]} : vector<32x512xf32> to vector<32x64xf32>
    %169 = vector.broadcast %167 : f32 to vector<32x64xf32>
    %170 = arith.mulf %169, %168 : vector<32x64xf32>
    %171 = arith.addf %166, %170 : vector<32x64xf32>
    %c1_97 = arith.constant 1 : index
    %c7_98 = arith.constant 7 : index
    %172 = memref.load %arg5[%c1_97, %c7_98] : memref<6x8xf32, #tpu.memory_space<smem>>
    %173 = vector.extract_strided_slice %51 {offsets = [0, 448], sizes = [32, 64], strides = [1, 1]} : vector<32x512xf32> to vector<32x64xf32>
    %174 = vector.broadcast %172 : f32 to vector<32x64xf32>
    %175 = arith.mulf %174, %173 : vector<32x64xf32>
    %176 = arith.addf %171, %175 : vector<32x64xf32>
    %177 = vector.extract_strided_slice %176 {offsets = [0, 0], sizes = [16, 64], strides = [1, 1]} : vector<32x64xf32> to vector<16x64xf32>
    %c0_99 = arith.constant 0 : index
    %c0_100 = arith.constant 0 : index
    %c1_101 = arith.constant 1 : index
    %c0_102 = arith.constant 0 : index
    %c0_103 = arith.constant 0 : index
    %178 = vector.load %arg7[%c0_99, %c0_100, %c1_101, %c0_102, %c0_103] : memref<4x2x6x16x64xf32, #tpu.memory_space<vmem>>, vector<1x1x1x16x64xf32>
    %179 = vector.shape_cast %178 : vector<1x1x1x16x64xf32> to vector<16x64xf32>
    %180 = vector.shape_cast %177 : vector<16x64xf32> to vector<1x1x1x16x64xf32>
    tpu.vector_store %arg7[%c0_99, %c0_100, %c1_101, %c0_102, %c0_103], %180 {strides = array<i32>} : memref<4x2x6x16x64xf32, #tpu.memory_space<vmem>>, vector<1x1x1x16x64xf32>,
    %181 = vector.extract_strided_slice %176 {offsets = [16, 0], sizes = [16, 64], strides = [1, 1]} : vector<32x64xf32> to vector<16x64xf32>
    %c0_104 = arith.constant 0 : index
    %c1_105 = arith.constant 1 : index
    %c1_106 = arith.constant 1 : index
    %c0_107 = arith.constant 0 : index
    %c0_108 = arith.constant 0 : index
    %182 = vector.load %arg7[%c0_104, %c1_105, %c1_106, %c0_107, %c0_108] : memref<4x2x6x16x64xf32, #tpu.memory_space<vmem>>, vector<1x1x1x16x64xf32>
    %183 = vector.shape_cast %182 : vector<1x1x1x16x64xf32> to vector<16x64xf32>
    %184 = vector.shape_cast %181 : vector<16x64xf32> to vector<1x1x1x16x64xf32>
    tpu.vector_store %arg7[%c0_104, %c1_105, %c1_106, %c0_107, %c0_108], %184 {strides = array<i32>} : memref<4x2x6x16x64xf32, #tpu.memory_space<vmem>>, vector<1x1x1x16x64xf32>,
    %c2_109 = arith.constant 2 : index
    %185 = memref.load %arg6[%c2_109] : memref<6xf32, #tpu.memory_space<smem>>
    %c2_110 = arith.constant 2 : index
    %c0_111 = arith.constant 0 : index
    %186 = memref.load %arg5[%c2_110, %c0_111] : memref<6x8xf32, #tpu.memory_space<smem>>
    %187 = vector.extract_strided_slice %51 {offsets = [0, 0], sizes = [32, 64], strides = [1, 1]} : vector<32x512xf32> to vector<32x64xf32>
    %188 = vector.broadcast %186 : f32 to vector<32x64xf32>
    %189 = arith.mulf %188, %187 : vector<32x64xf32>
    %190 = vector.broadcast %185 : f32 to vector<32x64xf32>
    %191 = arith.addf %190, %189 : vector<32x64xf32>
    %c2_112 = arith.constant 2 : index
    %c1_113 = arith.constant 1 : index
    %192 = memref.load %arg5[%c2_112, %c1_113] : memref<6x8xf32, #tpu.memory_space<smem>>
    %193 = vector.extract_strided_slice %51 {offsets = [0, 64], sizes = [32, 64], strides = [1, 1]} : vector<32x512xf32> to vector<32x64xf32>
    %194 = vector.broadcast %192 : f32 to vector<32x64xf32>
    %195 = arith.mulf %194, %193 : vector<32x64xf32>
    %196 = arith.addf %191, %195 : vector<32x64xf32>
    %c2_114 = arith.constant 2 : index
    %c2_115 = arith.constant 2 : index
    %197 = memref.load %arg5[%c2_114, %c2_115] : memref<6x8xf32, #tpu.memory_space<smem>>
    %198 = vector.extract_strided_slice %51 {offsets = [0, 128], sizes = [32, 64], strides = [1, 1]} : vector<32x512xf32> to vector<32x64xf32>
    %199 = vector.broadcast %197 : f32 to vector<32x64xf32>
    %200 = arith.mulf %199, %198 : vector<32x64xf32>
    %201 = arith.addf %196, %200 : vector<32x64xf32>
    %c2_116 = arith.constant 2 : index
    %c3_117 = arith.constant 3 : index
    %202 = memref.load %arg5[%c2_116, %c3_117] : memref<6x8xf32, #tpu.memory_space<smem>>
    %203 = vector.extract_strided_slice %51 {offsets = [0, 192], sizes = [32, 64], strides = [1, 1]} : vector<32x512xf32> to vector<32x64xf32>
    %204 = vector.broadcast %202 : f32 to vector<32x64xf32>
    %205 = arith.mulf %204, %203 : vector<32x64xf32>
    %206 = arith.addf %201, %205 : vector<32x64xf32>
    %c2_118 = arith.constant 2 : index
    %c4_119 = arith.constant 4 : index
    %207 = memref.load %arg5[%c2_118, %c4_119] : memref<6x8xf32, #tpu.memory_space<smem>>
    %208 = vector.extract_strided_slice %51 {offsets = [0, 256], sizes = [32, 64], strides = [1, 1]} : vector<32x512xf32> to vector<32x64xf32>
    %209 = vector.broadcast %207 : f32 to vector<32x64xf32>
    %210 = arith.mulf %209, %208 : vector<32x64xf32>
    %211 = arith.addf %206, %210 : vector<32x64xf32>
    %c2_120 = arith.constant 2 : index
    %c5_121 = arith.constant 5 : index
    %212 = memref.load %arg5[%c2_120, %c5_121] : memref<6x8xf32, #tpu.memory_space<smem>>
    %213 = vector.extract_strided_slice %51 {offsets = [0, 320], sizes = [32, 64], strides = [1, 1]} : vector<32x512xf32> to vector<32x64xf32>
    %214 = vector.broadcast %212 : f32 to vector<32x64xf32>
    %215 = arith.mulf %214, %213 : vector<32x64xf32>
    %216 = arith.addf %211, %215 : vector<32x64xf32>
    %c2_122 = arith.constant 2 : index
    %c6_123 = arith.constant 6 : index
    %217 = memref.load %arg5[%c2_122, %c6_123] : memref<6x8xf32, #tpu.memory_space<smem>>
    %218 = vector.extract_strided_slice %51 {offsets = [0, 384], sizes = [32, 64], strides = [1, 1]} : vector<32x512xf32> to vector<32x64xf32>
    %219 = vector.broadcast %217 : f32 to vector<32x64xf32>
    %220 = arith.mulf %219, %218 : vector<32x64xf32>
    %221 = arith.addf %216, %220 : vector<32x64xf32>
    %c2_124 = arith.constant 2 : index
    %c7_125 = arith.constant 7 : index
    %222 = memref.load %arg5[%c2_124, %c7_125] : memref<6x8xf32, #tpu.memory_space<smem>>
    %223 = vector.extract_strided_slice %51 {offsets = [0, 448], sizes = [32, 64], strides = [1, 1]} : vector<32x512xf32> to vector<32x64xf32>
    %224 = vector.broadcast %222 : f32 to vector<32x64xf32>
    %225 = arith.mulf %224, %223 : vector<32x64xf32>
    %226 = arith.addf %221, %225 : vector<32x64xf32>
    %227 = vector.extract_strided_slice %226 {offsets = [0, 0], sizes = [16, 64], strides = [1, 1]} : vector<32x64xf32> to vector<16x64xf32>
    %c0_126 = arith.constant 0 : index
    %c0_127 = arith.constant 0 : index
    %c2_128 = arith.constant 2 : index
    %c0_129 = arith.constant 0 : index
    %c0_130 = arith.constant 0 : index
    %228 = vector.load %arg7[%c0_126, %c0_127, %c2_128, %c0_129, %c0_130] : memref<4x2x6x16x64xf32, #tpu.memory_space<vmem>>, vector<1x1x1x16x64xf32>
    %229 = vector.shape_cast %228 : vector<1x1x1x16x64xf32> to vector<16x64xf32>
    %230 = vector.shape_cast %227 : vector<16x64xf32> to vector<1x1x1x16x64xf32>
    tpu.vector_store %arg7[%c0_126, %c0_127, %c2_128, %c0_129, %c0_130], %230 {strides = array<i32>} : memref<4x2x6x16x64xf32, #tpu.memory_space<vmem>>, vector<1x1x1x16x64xf32>,
    %231 = vector.extract_strided_slice %226 {offsets = [16, 0], sizes = [16, 64], strides = [1, 1]} : vector<32x64xf32> to vector<16x64xf32>
    %c0_131 = arith.constant 0 : index
    %c1_132 = arith.constant 1 : index
    %c2_133 = arith.constant 2 : index
    %c0_134 = arith.constant 0 : index
    %c0_135 = arith.constant 0 : index
    %232 = vector.load %arg7[%c0_131, %c1_132, %c2_133, %c0_134, %c0_135] : memref<4x2x6x16x64xf32, #tpu.memory_space<vmem>>, vector<1x1x1x16x64xf32>
    %233 = vector.shape_cast %232 : vector<1x1x1x16x64xf32> to vector<16x64xf32>
    %234 = vector.shape_cast %231 : vector<16x64xf32> to vector<1x1x1x16x64xf32>
    tpu.vector_store %arg7[%c0_131, %c1_132, %c2_133, %c0_134, %c0_135], %234 {strides = array<i32>} : memref<4x2x6x16x64xf32, #tpu.memory_space<vmem>>, vector<1x1x1x16x64xf32>,
    %c3_136 = arith.constant 3 : index
    %235 = memref.load %arg6[%c3_136] : memref<6xf32, #tpu.memory_space<smem>>
    %c3_137 = arith.constant 3 : index
    %c0_138 = arith.constant 0 : index
    %236 = memref.load %arg5[%c3_137, %c0_138] : memref<6x8xf32, #tpu.memory_space<smem>>
    %237 = vector.extract_strided_slice %51 {offsets = [0, 0], sizes = [32, 64], strides = [1, 1]} : vector<32x512xf32> to vector<32x64xf32>
    %238 = vector.broadcast %236 : f32 to vector<32x64xf32>
    %239 = arith.mulf %238, %237 : vector<32x64xf32>
    %240 = vector.broadcast %235 : f32 to vector<32x64xf32>
    %241 = arith.addf %240, %239 : vector<32x64xf32>
    %c3_139 = arith.constant 3 : index
    %c1_140 = arith.constant 1 : index
    %242 = memref.load %arg5[%c3_139, %c1_140] : memref<6x8xf32, #tpu.memory_space<smem>>
    %243 = vector.extract_strided_slice %51 {offsets = [0, 64], sizes = [32, 64], strides = [1, 1]} : vector<32x512xf32> to vector<32x64xf32>
    %244 = vector.broadcast %242 : f32 to vector<32x64xf32>
    %245 = arith.mulf %244, %243 : vector<32x64xf32>
    %246 = arith.addf %241, %245 : vector<32x64xf32>
    %c3_141 = arith.constant 3 : index
    %c2_142 = arith.constant 2 : index
    %247 = memref.load %arg5[%c3_141, %c2_142] : memref<6x8xf32, #tpu.memory_space<smem>>
    %248 = vector.extract_strided_slice %51 {offsets = [0, 128], sizes = [32, 64], strides = [1, 1]} : vector<32x512xf32> to vector<32x64xf32>
    %249 = vector.broadcast %247 : f32 to vector<32x64xf32>
    %250 = arith.mulf %249, %248 : vector<32x64xf32>
    %251 = arith.addf %246, %250 : vector<32x64xf32>
    %c3_143 = arith.constant 3 : index
    %c3_144 = arith.constant 3 : index
    %252 = memref.load %arg5[%c3_143, %c3_144] : memref<6x8xf32, #tpu.memory_space<smem>>
    %253 = vector.extract_strided_slice %51 {offsets = [0, 192], sizes = [32, 64], strides = [1, 1]} : vector<32x512xf32> to vector<32x64xf32>
    %254 = vector.broadcast %252 : f32 to vector<32x64xf32>
    %255 = arith.mulf %254, %253 : vector<32x64xf32>
    %256 = arith.addf %251, %255 : vector<32x64xf32>
    %c3_145 = arith.constant 3 : index
    %c4_146 = arith.constant 4 : index
    %257 = memref.load %arg5[%c3_145, %c4_146] : memref<6x8xf32, #tpu.memory_space<smem>>
    %258 = vector.extract_strided_slice %51 {offsets = [0, 256], sizes = [32, 64], strides = [1, 1]} : vector<32x512xf32> to vector<32x64xf32>
    %259 = vector.broadcast %257 : f32 to vector<32x64xf32>
    %260 = arith.mulf %259, %258 : vector<32x64xf32>
    %261 = arith.addf %256, %260 : vector<32x64xf32>
    %c3_147 = arith.constant 3 : index
    %c5_148 = arith.constant 5 : index
    %262 = memref.load %arg5[%c3_147, %c5_148] : memref<6x8xf32, #tpu.memory_space<smem>>
    %263 = vector.extract_strided_slice %51 {offsets = [0, 320], sizes = [32, 64], strides = [1, 1]} : vector<32x512xf32> to vector<32x64xf32>
    %264 = vector.broadcast %262 : f32 to vector<32x64xf32>
    %265 = arith.mulf %264, %263 : vector<32x64xf32>
    %266 = arith.addf %261, %265 : vector<32x64xf32>
    %c3_149 = arith.constant 3 : index
    %c6_150 = arith.constant 6 : index
    %267 = memref.load %arg5[%c3_149, %c6_150] : memref<6x8xf32, #tpu.memory_space<smem>>
    %268 = vector.extract_strided_slice %51 {offsets = [0, 384], sizes = [32, 64], strides = [1, 1]} : vector<32x512xf32> to vector<32x64xf32>
    %269 = vector.broadcast %267 : f32 to vector<32x64xf32>
    %270 = arith.mulf %269, %268 : vector<32x64xf32>
    %271 = arith.addf %266, %270 : vector<32x64xf32>
    %c3_151 = arith.constant 3 : index
    %c7_152 = arith.constant 7 : index
    %272 = memref.load %arg5[%c3_151, %c7_152] : memref<6x8xf32, #tpu.memory_space<smem>>
    %273 = vector.extract_strided_slice %51 {offsets = [0, 448], sizes = [32, 64], strides = [1, 1]} : vector<32x512xf32> to vector<32x64xf32>
    %274 = vector.broadcast %272 : f32 to vector<32x64xf32>
    %275 = arith.mulf %274, %273 : vector<32x64xf32>
    %276 = arith.addf %271, %275 : vector<32x64xf32>
    %277 = vector.extract_strided_slice %276 {offsets = [0, 0], sizes = [16, 64], strides = [1, 1]} : vector<32x64xf32> to vector<16x64xf32>
    %c0_153 = arith.constant 0 : index
    %c0_154 = arith.constant 0 : index
    %c3_155 = arith.constant 3 : index
    %c0_156 = arith.constant 0 : index
    %c0_157 = arith.constant 0 : index
    %278 = vector.load %arg7[%c0_153, %c0_154, %c3_155, %c0_156, %c0_157] : memref<4x2x6x16x64xf32, #tpu.memory_space<vmem>>, vector<1x1x1x16x64xf32>
    %279 = vector.shape_cast %278 : vector<1x1x1x16x64xf32> to vector<16x64xf32>
    %280 = vector.shape_cast %277 : vector<16x64xf32> to vector<1x1x1x16x64xf32>
    tpu.vector_store %arg7[%c0_153, %c0_154, %c3_155, %c0_156, %c0_157], %280 {strides = array<i32>} : memref<4x2x6x16x64xf32, #tpu.memory_space<vmem>>, vector<1x1x1x16x64xf32>,
    %281 = vector.extract_strided_slice %276 {offsets = [16, 0], sizes = [16, 64], strides = [1, 1]} : vector<32x64xf32> to vector<16x64xf32>
    %c0_158 = arith.constant 0 : index
    %c1_159 = arith.constant 1 : index
    %c3_160 = arith.constant 3 : index
    %c0_161 = arith.constant 0 : index
    %c0_162 = arith.constant 0 : index
    %282 = vector.load %arg7[%c0_158, %c1_159, %c3_160, %c0_161, %c0_162] : memref<4x2x6x16x64xf32, #tpu.memory_space<vmem>>, vector<1x1x1x16x64xf32>
    %283 = vector.shape_cast %282 : vector<1x1x1x16x64xf32> to vector<16x64xf32>
    %284 = vector.shape_cast %281 : vector<16x64xf32> to vector<1x1x1x16x64xf32>
    tpu.vector_store %arg7[%c0_158, %c1_159, %c3_160, %c0_161, %c0_162], %284 {strides = array<i32>} : memref<4x2x6x16x64xf32, #tpu.memory_space<vmem>>, vector<1x1x1x16x64xf32>,
    %c4_163 = arith.constant 4 : index
    %285 = memref.load %arg6[%c4_163] : memref<6xf32, #tpu.memory_space<smem>>
    %c4_164 = arith.constant 4 : index
    %c0_165 = arith.constant 0 : index
    %286 = memref.load %arg5[%c4_164, %c0_165] : memref<6x8xf32, #tpu.memory_space<smem>>
    %287 = vector.extract_strided_slice %51 {offsets = [0, 0], sizes = [32, 64], strides = [1, 1]} : vector<32x512xf32> to vector<32x64xf32>
    %288 = vector.broadcast %286 : f32 to vector<32x64xf32>
    %289 = arith.mulf %288, %287 : vector<32x64xf32>
    %290 = vector.broadcast %285 : f32 to vector<32x64xf32>
    %291 = arith.addf %290, %289 : vector<32x64xf32>
    %c4_166 = arith.constant 4 : index
    %c1_167 = arith.constant 1 : index
    %292 = memref.load %arg5[%c4_166, %c1_167] : memref<6x8xf32, #tpu.memory_space<smem>>
    %293 = vector.extract_strided_slice %51 {offsets = [0, 64], sizes = [32, 64], strides = [1, 1]} : vector<32x512xf32> to vector<32x64xf32>
    %294 = vector.broadcast %292 : f32 to vector<32x64xf32>
    %295 = arith.mulf %294, %293 : vector<32x64xf32>
    %296 = arith.addf %291, %295 : vector<32x64xf32>
    %c4_168 = arith.constant 4 : index
    %c2_169 = arith.constant 2 : index
    %297 = memref.load %arg5[%c4_168, %c2_169] : memref<6x8xf32, #tpu.memory_space<smem>>
    %298 = vector.extract_strided_slice %51 {offsets = [0, 128], sizes = [32, 64], strides = [1, 1]} : vector<32x512xf32> to vector<32x64xf32>
    %299 = vector.broadcast %297 : f32 to vector<32x64xf32>
    %300 = arith.mulf %299, %298 : vector<32x64xf32>
    %301 = arith.addf %296, %300 : vector<32x64xf32>
    %c4_170 = arith.constant 4 : index
    %c3_171 = arith.constant 3 : index
    %302 = memref.load %arg5[%c4_170, %c3_171] : memref<6x8xf32, #tpu.memory_space<smem>>
    %303 = vector.extract_strided_slice %51 {offsets = [0, 192], sizes = [32, 64], strides = [1, 1]} : vector<32x512xf32> to vector<32x64xf32>
    %304 = vector.broadcast %302 : f32 to vector<32x64xf32>
    %305 = arith.mulf %304, %303 : vector<32x64xf32>
    %306 = arith.addf %301, %305 : vector<32x64xf32>
    %c4_172 = arith.constant 4 : index
    %c4_173 = arith.constant 4 : index
    %307 = memref.load %arg5[%c4_172, %c4_173] : memref<6x8xf32, #tpu.memory_space<smem>>
    %308 = vector.extract_strided_slice %51 {offsets = [0, 256], sizes = [32, 64], strides = [1, 1]} : vector<32x512xf32> to vector<32x64xf32>
    %309 = vector.broadcast %307 : f32 to vector<32x64xf32>
    %310 = arith.mulf %309, %308 : vector<32x64xf32>
    %311 = arith.addf %306, %310 : vector<32x64xf32>
    %c4_174 = arith.constant 4 : index
    %c5_175 = arith.constant 5 : index
    %312 = memref.load %arg5[%c4_174, %c5_175] : memref<6x8xf32, #tpu.memory_space<smem>>
    %313 = vector.extract_strided_slice %51 {offsets = [0, 320], sizes = [32, 64], strides = [1, 1]} : vector<32x512xf32> to vector<32x64xf32>
    %314 = vector.broadcast %312 : f32 to vector<32x64xf32>
    %315 = arith.mulf %314, %313 : vector<32x64xf32>
    %316 = arith.addf %311, %315 : vector<32x64xf32>
    %c4_176 = arith.constant 4 : index
    %c6_177 = arith.constant 6 : index
    %317 = memref.load %arg5[%c4_176, %c6_177] : memref<6x8xf32, #tpu.memory_space<smem>>
    %318 = vector.extract_strided_slice %51 {offsets = [0, 384], sizes = [32, 64], strides = [1, 1]} : vector<32x512xf32> to vector<32x64xf32>
    %319 = vector.broadcast %317 : f32 to vector<32x64xf32>
    %320 = arith.mulf %319, %318 : vector<32x64xf32>
    %321 = arith.addf %316, %320 : vector<32x64xf32>
    %c4_178 = arith.constant 4 : index
    %c7_179 = arith.constant 7 : index
    %322 = memref.load %arg5[%c4_178, %c7_179] : memref<6x8xf32, #tpu.memory_space<smem>>
    %323 = vector.extract_strided_slice %51 {offsets = [0, 448], sizes = [32, 64], strides = [1, 1]} : vector<32x512xf32> to vector<32x64xf32>
    %324 = vector.broadcast %322 : f32 to vector<32x64xf32>
    %325 = arith.mulf %324, %323 : vector<32x64xf32>
    %326 = arith.addf %321, %325 : vector<32x64xf32>
    %327 = vector.extract_strided_slice %326 {offsets = [0, 0], sizes = [16, 64], strides = [1, 1]} : vector<32x64xf32> to vector<16x64xf32>
    %c0_180 = arith.constant 0 : index
    %c0_181 = arith.constant 0 : index
    %c4_182 = arith.constant 4 : index
    %c0_183 = arith.constant 0 : index
    %c0_184 = arith.constant 0 : index
    %328 = vector.load %arg7[%c0_180, %c0_181, %c4_182, %c0_183, %c0_184] : memref<4x2x6x16x64xf32, #tpu.memory_space<vmem>>, vector<1x1x1x16x64xf32>
    %329 = vector.shape_cast %328 : vector<1x1x1x16x64xf32> to vector<16x64xf32>
    %330 = vector.shape_cast %327 : vector<16x64xf32> to vector<1x1x1x16x64xf32>
    tpu.vector_store %arg7[%c0_180, %c0_181, %c4_182, %c0_183, %c0_184], %330 {strides = array<i32>} : memref<4x2x6x16x64xf32, #tpu.memory_space<vmem>>, vector<1x1x1x16x64xf32>,
    %331 = vector.extract_strided_slice %326 {offsets = [16, 0], sizes = [16, 64], strides = [1, 1]} : vector<32x64xf32> to vector<16x64xf32>
    %c0_185 = arith.constant 0 : index
    %c1_186 = arith.constant 1 : index
    %c4_187 = arith.constant 4 : index
    %c0_188 = arith.constant 0 : index
    %c0_189 = arith.constant 0 : index
    %332 = vector.load %arg7[%c0_185, %c1_186, %c4_187, %c0_188, %c0_189] : memref<4x2x6x16x64xf32, #tpu.memory_space<vmem>>, vector<1x1x1x16x64xf32>
    %333 = vector.shape_cast %332 : vector<1x1x1x16x64xf32> to vector<16x64xf32>
    %334 = vector.shape_cast %331 : vector<16x64xf32> to vector<1x1x1x16x64xf32>
    tpu.vector_store %arg7[%c0_185, %c1_186, %c4_187, %c0_188, %c0_189], %334 {strides = array<i32>} : memref<4x2x6x16x64xf32, #tpu.memory_space<vmem>>, vector<1x1x1x16x64xf32>,
    %c5_190 = arith.constant 5 : index
    %335 = memref.load %arg6[%c5_190] : memref<6xf32, #tpu.memory_space<smem>>
    %c5_191 = arith.constant 5 : index
    %c0_192 = arith.constant 0 : index
    %336 = memref.load %arg5[%c5_191, %c0_192] : memref<6x8xf32, #tpu.memory_space<smem>>
    %337 = vector.extract_strided_slice %51 {offsets = [0, 0], sizes = [32, 64], strides = [1, 1]} : vector<32x512xf32> to vector<32x64xf32>
    %338 = vector.broadcast %336 : f32 to vector<32x64xf32>
    %339 = arith.mulf %338, %337 : vector<32x64xf32>
    %340 = vector.broadcast %335 : f32 to vector<32x64xf32>
    %341 = arith.addf %340, %339 : vector<32x64xf32>
    %c5_193 = arith.constant 5 : index
    %c1_194 = arith.constant 1 : index
    %342 = memref.load %arg5[%c5_193, %c1_194] : memref<6x8xf32, #tpu.memory_space<smem>>
    %343 = vector.extract_strided_slice %51 {offsets = [0, 64], sizes = [32, 64], strides = [1, 1]} : vector<32x512xf32> to vector<32x64xf32>
    %344 = vector.broadcast %342 : f32 to vector<32x64xf32>
    %345 = arith.mulf %344, %343 : vector<32x64xf32>
    %346 = arith.addf %341, %345 : vector<32x64xf32>
    %c5_195 = arith.constant 5 : index
    %c2_196 = arith.constant 2 : index
    %347 = memref.load %arg5[%c5_195, %c2_196] : memref<6x8xf32, #tpu.memory_space<smem>>
    %348 = vector.extract_strided_slice %51 {offsets = [0, 128], sizes = [32, 64], strides = [1, 1]} : vector<32x512xf32> to vector<32x64xf32>
    %349 = vector.broadcast %347 : f32 to vector<32x64xf32>
    %350 = arith.mulf %349, %348 : vector<32x64xf32>
    %351 = arith.addf %346, %350 : vector<32x64xf32>
    %c5_197 = arith.constant 5 : index
    %c3_198 = arith.constant 3 : index
    %352 = memref.load %arg5[%c5_197, %c3_198] : memref<6x8xf32, #tpu.memory_space<smem>>
    %353 = vector.extract_strided_slice %51 {offsets = [0, 192], sizes = [32, 64], strides = [1, 1]} : vector<32x512xf32> to vector<32x64xf32>
    %354 = vector.broadcast %352 : f32 to vector<32x64xf32>
    %355 = arith.mulf %354, %353 : vector<32x64xf32>
    %356 = arith.addf %351, %355 : vector<32x64xf32>
    %c5_199 = arith.constant 5 : index
    %c4_200 = arith.constant 4 : index
    %357 = memref.load %arg5[%c5_199, %c4_200] : memref<6x8xf32, #tpu.memory_space<smem>>
    %358 = vector.extract_strided_slice %51 {offsets = [0, 256], sizes = [32, 64], strides = [1, 1]} : vector<32x512xf32> to vector<32x64xf32>
    %359 = vector.broadcast %357 : f32 to vector<32x64xf32>
    %360 = arith.mulf %359, %358 : vector<32x64xf32>
    %361 = arith.addf %356, %360 : vector<32x64xf32>
    %c5_201 = arith.constant 5 : index
    %c5_202 = arith.constant 5 : index
    %362 = memref.load %arg5[%c5_201, %c5_202] : memref<6x8xf32, #tpu.memory_space<smem>>
    %363 = vector.extract_strided_slice %51 {offsets = [0, 320], sizes = [32, 64], strides = [1, 1]} : vector<32x512xf32> to vector<32x64xf32>
    %364 = vector.broadcast %362 : f32 to vector<32x64xf32>
    %365 = arith.mulf %364, %363 : vector<32x64xf32>
    %366 = arith.addf %361, %365 : vector<32x64xf32>
    %c5_203 = arith.constant 5 : index
    %c6_204 = arith.constant 6 : index
    %367 = memref.load %arg5[%c5_203, %c6_204] : memref<6x8xf32, #tpu.memory_space<smem>>
    %368 = vector.extract_strided_slice %51 {offsets = [0, 384], sizes = [32, 64], strides = [1, 1]} : vector<32x512xf32> to vector<32x64xf32>
    %369 = vector.broadcast %367 : f32 to vector<32x64xf32>
    %370 = arith.mulf %369, %368 : vector<32x64xf32>
    %371 = arith.addf %366, %370 : vector<32x64xf32>
    %c5_205 = arith.constant 5 : index
    %c7_206 = arith.constant 7 : index
    %372 = memref.load %arg5[%c5_205, %c7_206] : memref<6x8xf32, #tpu.memory_space<smem>>
    %373 = vector.extract_strided_slice %51 {offsets = [0, 448], sizes = [32, 64], strides = [1, 1]} : vector<32x512xf32> to vector<32x64xf32>
    %374 = vector.broadcast %372 : f32 to vector<32x64xf32>
    %375 = arith.mulf %374, %373 : vector<32x64xf32>
    %376 = arith.addf %371, %375 : vector<32x64xf32>
    %377 = vector.extract_strided_slice %376 {offsets = [0, 0], sizes = [16, 64], strides = [1, 1]} : vector<32x64xf32> to vector<16x64xf32>
    %c0_207 = arith.constant 0 : index
    %c0_208 = arith.constant 0 : index
    %c5_209 = arith.constant 5 : index
    %c0_210 = arith.constant 0 : index
    %c0_211 = arith.constant 0 : index
    %378 = vector.load %arg7[%c0_207, %c0_208, %c5_209, %c0_210, %c0_211] : memref<4x2x6x16x64xf32, #tpu.memory_space<vmem>>, vector<1x1x1x16x64xf32>
    %379 = vector.shape_cast %378 : vector<1x1x1x16x64xf32> to vector<16x64xf32>
    %380 = vector.shape_cast %377 : vector<16x64xf32> to vector<1x1x1x16x64xf32>
    tpu.vector_store %arg7[%c0_207, %c0_208, %c5_209, %c0_210, %c0_211], %380 {strides = array<i32>} : memref<4x2x6x16x64xf32, #tpu.memory_space<vmem>>, vector<1x1x1x16x64xf32>,
    %381 = vector.extract_strided_slice %376 {offsets = [16, 0], sizes = [16, 64], strides = [1, 1]} : vector<32x64xf32> to vector<16x64xf32>
    %c0_212 = arith.constant 0 : index
    %c1_213 = arith.constant 1 : index
    %c5_214 = arith.constant 5 : index
    %c0_215 = arith.constant 0 : index
    %c0_216 = arith.constant 0 : index
    %382 = vector.load %arg7[%c0_212, %c1_213, %c5_214, %c0_215, %c0_216] : memref<4x2x6x16x64xf32, #tpu.memory_space<vmem>>, vector<1x1x1x16x64xf32>
    %383 = vector.shape_cast %382 : vector<1x1x1x16x64xf32> to vector<16x64xf32>
    %384 = vector.shape_cast %381 : vector<16x64xf32> to vector<1x1x1x16x64xf32>
    tpu.vector_store %arg7[%c0_212, %c1_213, %c5_214, %c0_215, %c0_216], %384 {strides = array<i32>} : memref<4x2x6x16x64xf32, #tpu.memory_space<vmem>>, vector<1x1x1x16x64xf32>,
    %c0_217 = arith.constant 0 : index
    %385 = memref.load %arg6[%c0_217] : memref<6xf32, #tpu.memory_space<smem>>
    %c0_218 = arith.constant 0 : index
    %c0_219 = arith.constant 0 : index
    %386 = memref.load %arg5[%c0_218, %c0_219] : memref<6x8xf32, #tpu.memory_space<smem>>
    %387 = vector.extract_strided_slice %62 {offsets = [0, 0], sizes = [32, 64], strides = [1, 1]} : vector<32x512xf32> to vector<32x64xf32>
    %388 = vector.broadcast %386 : f32 to vector<32x64xf32>
    %389 = arith.mulf %388, %387 : vector<32x64xf32>
    %390 = vector.broadcast %385 : f32 to vector<32x64xf32>
    %391 = arith.addf %390, %389 : vector<32x64xf32>
    %c0_220 = arith.constant 0 : index
    %c1_221 = arith.constant 1 : index
    %392 = memref.load %arg5[%c0_220, %c1_221] : memref<6x8xf32, #tpu.memory_space<smem>>
    %393 = vector.extract_strided_slice %62 {offsets = [0, 64], sizes = [32, 64], strides = [1, 1]} : vector<32x512xf32> to vector<32x64xf32>
    %394 = vector.broadcast %392 : f32 to vector<32x64xf32>
    %395 = arith.mulf %394, %393 : vector<32x64xf32>
    %396 = arith.addf %391, %395 : vector<32x64xf32>
    %c0_222 = arith.constant 0 : index
    %c2_223 = arith.constant 2 : index
    %397 = memref.load %arg5[%c0_222, %c2_223] : memref<6x8xf32, #tpu.memory_space<smem>>
    %398 = vector.extract_strided_slice %62 {offsets = [0, 128], sizes = [32, 64], strides = [1, 1]} : vector<32x512xf32> to vector<32x64xf32>
    %399 = vector.broadcast %397 : f32 to vector<32x64xf32>
    %400 = arith.mulf %399, %398 : vector<32x64xf32>
    %401 = arith.addf %396, %400 : vector<32x64xf32>
    %c0_224 = arith.constant 0 : index
    %c3_225 = arith.constant 3 : index
    %402 = memref.load %arg5[%c0_224, %c3_225] : memref<6x8xf32, #tpu.memory_space<smem>>
    %403 = vector.extract_strided_slice %62 {offsets = [0, 192], sizes = [32, 64], strides = [1, 1]} : vector<32x512xf32> to vector<32x64xf32>
    %404 = vector.broadcast %402 : f32 to vector<32x64xf32>
    %405 = arith.mulf %404, %403 : vector<32x64xf32>
    %406 = arith.addf %401, %405 : vector<32x64xf32>
    %c0_226 = arith.constant 0 : index
    %c4_227 = arith.constant 4 : index
    %407 = memref.load %arg5[%c0_226, %c4_227] : memref<6x8xf32, #tpu.memory_space<smem>>
    %408 = vector.extract_strided_slice %62 {offsets = [0, 256], sizes = [32, 64], strides = [1, 1]} : vector<32x512xf32> to vector<32x64xf32>
    %409 = vector.broadcast %407 : f32 to vector<32x64xf32>
    %410 = arith.mulf %409, %408 : vector<32x64xf32>
    %411 = arith.addf %406, %410 : vector<32x64xf32>
    %c0_228 = arith.constant 0 : index
    %c5_229 = arith.constant 5 : index
    %412 = memref.load %arg5[%c0_228, %c5_229] : memref<6x8xf32, #tpu.memory_space<smem>>
    %413 = vector.extract_strided_slice %62 {offsets = [0, 320], sizes = [32, 64], strides = [1, 1]} : vector<32x512xf32> to vector<32x64xf32>
    %414 = vector.broadcast %412 : f32 to vector<32x64xf32>
    %415 = arith.mulf %414, %413 : vector<32x64xf32>
    %416 = arith.addf %411, %415 : vector<32x64xf32>
    %c0_230 = arith.constant 0 : index
    %c6_231 = arith.constant 6 : index
    %417 = memref.load %arg5[%c0_230, %c6_231] : memref<6x8xf32, #tpu.memory_space<smem>>
    %418 = vector.extract_strided_slice %62 {offsets = [0, 384], sizes = [32, 64], strides = [1, 1]} : vector<32x512xf32> to vector<32x64xf32>
    %419 = vector.broadcast %417 : f32 to vector<32x64xf32>
    %420 = arith.mulf %419, %418 : vector<32x64xf32>
    %421 = arith.addf %416, %420 : vector<32x64xf32>
    %c0_232 = arith.constant 0 : index
    %c7_233 = arith.constant 7 : index
    %422 = memref.load %arg5[%c0_232, %c7_233] : memref<6x8xf32, #tpu.memory_space<smem>>
    %423 = vector.extract_strided_slice %62 {offsets = [0, 448], sizes = [32, 64], strides = [1, 1]} : vector<32x512xf32> to vector<32x64xf32>
    %424 = vector.broadcast %422 : f32 to vector<32x64xf32>
    %425 = arith.mulf %424, %423 : vector<32x64xf32>
    %426 = arith.addf %421, %425 : vector<32x64xf32>
    %427 = vector.extract_strided_slice %426 {offsets = [0, 0], sizes = [16, 64], strides = [1, 1]} : vector<32x64xf32> to vector<16x64xf32>
    %c1_234 = arith.constant 1 : index
    %c0_235 = arith.constant 0 : index
    %c0_236 = arith.constant 0 : index
    %c0_237 = arith.constant 0 : index
    %c0_238 = arith.constant 0 : index
    %428 = vector.load %arg7[%c1_234, %c0_235, %c0_236, %c0_237, %c0_238] : memref<4x2x6x16x64xf32, #tpu.memory_space<vmem>>, vector<1x1x1x16x64xf32>
    %429 = vector.shape_cast %428 : vector<1x1x1x16x64xf32> to vector<16x64xf32>
    %430 = vector.shape_cast %427 : vector<16x64xf32> to vector<1x1x1x16x64xf32>
    tpu.vector_store %arg7[%c1_234, %c0_235, %c0_236, %c0_237, %c0_238], %430 {strides = array<i32>} : memref<4x2x6x16x64xf32, #tpu.memory_space<vmem>>, vector<1x1x1x16x64xf32>,
    %431 = vector.extract_strided_slice %426 {offsets = [16, 0], sizes = [16, 64], strides = [1, 1]} : vector<32x64xf32> to vector<16x64xf32>
    %c1_239 = arith.constant 1 : index
    %c1_240 = arith.constant 1 : index
    %c0_241 = arith.constant 0 : index
    %c0_242 = arith.constant 0 : index
    %c0_243 = arith.constant 0 : index
    %432 = vector.load %arg7[%c1_239, %c1_240, %c0_241, %c0_242, %c0_243] : memref<4x2x6x16x64xf32, #tpu.memory_space<vmem>>, vector<1x1x1x16x64xf32>
    %433 = vector.shape_cast %432 : vector<1x1x1x16x64xf32> to vector<16x64xf32>
    %434 = vector.shape_cast %431 : vector<16x64xf32> to vector<1x1x1x16x64xf32>
    tpu.vector_store %arg7[%c1_239, %c1_240, %c0_241, %c0_242, %c0_243], %434 {strides = array<i32>} : memref<4x2x6x16x64xf32, #tpu.memory_space<vmem>>, vector<1x1x1x16x64xf32>,
    %c1_244 = arith.constant 1 : index
    %435 = memref.load %arg6[%c1_244] : memref<6xf32, #tpu.memory_space<smem>>
    %c1_245 = arith.constant 1 : index
    %c0_246 = arith.constant 0 : index
    %436 = memref.load %arg5[%c1_245, %c0_246] : memref<6x8xf32, #tpu.memory_space<smem>>
    %437 = vector.extract_strided_slice %62 {offsets = [0, 0], sizes = [32, 64], strides = [1, 1]} : vector<32x512xf32> to vector<32x64xf32>
    %438 = vector.broadcast %436 : f32 to vector<32x64xf32>
    %439 = arith.mulf %438, %437 : vector<32x64xf32>
    %440 = vector.broadcast %435 : f32 to vector<32x64xf32>
    %441 = arith.addf %440, %439 : vector<32x64xf32>
    %c1_247 = arith.constant 1 : index
    %c1_248 = arith.constant 1 : index
    %442 = memref.load %arg5[%c1_247, %c1_248] : memref<6x8xf32, #tpu.memory_space<smem>>
    %443 = vector.extract_strided_slice %62 {offsets = [0, 64], sizes = [32, 64], strides = [1, 1]} : vector<32x512xf32> to vector<32x64xf32>
    %444 = vector.broadcast %442 : f32 to vector<32x64xf32>
    %445 = arith.mulf %444, %443 : vector<32x64xf32>
    %446 = arith.addf %441, %445 : vector<32x64xf32>
    %c1_249 = arith.constant 1 : index
    %c2_250 = arith.constant 2 : index
    %447 = memref.load %arg5[%c1_249, %c2_250] : memref<6x8xf32, #tpu.memory_space<smem>>
    %448 = vector.extract_strided_slice %62 {offsets = [0, 128], sizes = [32, 64], strides = [1, 1]} : vector<32x512xf32> to vector<32x64xf32>
    %449 = vector.broadcast %447 : f32 to vector<32x64xf32>
    %450 = arith.mulf %449, %448 : vector<32x64xf32>
    %451 = arith.addf %446, %450 : vector<32x64xf32>
    %c1_251 = arith.constant 1 : index
    %c3_252 = arith.constant 3 : index
    %452 = memref.load %arg5[%c1_251, %c3_252] : memref<6x8xf32, #tpu.memory_space<smem>>
    %453 = vector.extract_strided_slice %62 {offsets = [0, 192], sizes = [32, 64], strides = [1, 1]} : vector<32x512xf32> to vector<32x64xf32>
    %454 = vector.broadcast %452 : f32 to vector<32x64xf32>
    %455 = arith.mulf %454, %453 : vector<32x64xf32>
    %456 = arith.addf %451, %455 : vector<32x64xf32>
    %c1_253 = arith.constant 1 : index
    %c4_254 = arith.constant 4 : index
    %457 = memref.load %arg5[%c1_253, %c4_254] : memref<6x8xf32, #tpu.memory_space<smem>>
    %458 = vector.extract_strided_slice %62 {offsets = [0, 256], sizes = [32, 64], strides = [1, 1]} : vector<32x512xf32> to vector<32x64xf32>
    %459 = vector.broadcast %457 : f32 to vector<32x64xf32>
    %460 = arith.mulf %459, %458 : vector<32x64xf32>
    %461 = arith.addf %456, %460 : vector<32x64xf32>
    %c1_255 = arith.constant 1 : index
    %c5_256 = arith.constant 5 : index
    %462 = memref.load %arg5[%c1_255, %c5_256] : memref<6x8xf32, #tpu.memory_space<smem>>
    %463 = vector.extract_strided_slice %62 {offsets = [0, 320], sizes = [32, 64], strides = [1, 1]} : vector<32x512xf32> to vector<32x64xf32>
    %464 = vector.broadcast %462 : f32 to vector<32x64xf32>
    %465 = arith.mulf %464, %463 : vector<32x64xf32>
    %466 = arith.addf %461, %465 : vector<32x64xf32>
    %c1_257 = arith.constant 1 : index
    %c6_258 = arith.constant 6 : index
    %467 = memref.load %arg5[%c1_257, %c6_258] : memref<6x8xf32, #tpu.memory_space<smem>>
    %468 = vector.extract_strided_slice %62 {offsets = [0, 384], sizes = [32, 64], strides = [1, 1]} : vector<32x512xf32> to vector<32x64xf32>
    %469 = vector.broadcast %467 : f32 to vector<32x64xf32>
    %470 = arith.mulf %469, %468 : vector<32x64xf32>
    %471 = arith.addf %466, %470 : vector<32x64xf32>
    %c1_259 = arith.constant 1 : index
    %c7_260 = arith.constant 7 : index
    %472 = memref.load %arg5[%c1_259, %c7_260] : memref<6x8xf32, #tpu.memory_space<smem>>
    %473 = vector.extract_strided_slice %62 {offsets = [0, 448], sizes = [32, 64], strides = [1, 1]} : vector<32x512xf32> to vector<32x64xf32>
    %474 = vector.broadcast %472 : f32 to vector<32x64xf32>
    %475 = arith.mulf %474, %473 : vector<32x64xf32>
    %476 = arith.addf %471, %475 : vector<32x64xf32>
    %477 = vector.extract_strided_slice %476 {offsets = [0, 0], sizes = [16, 64], strides = [1, 1]} : vector<32x64xf32> to vector<16x64xf32>
    %c1_261 = arith.constant 1 : index
    %c0_262 = arith.constant 0 : index
    %c1_263 = arith.constant 1 : index
    %c0_264 = arith.constant 0 : index
    %c0_265 = arith.constant 0 : index
    %478 = vector.load %arg7[%c1_261, %c0_262, %c1_263, %c0_264, %c0_265] : memref<4x2x6x16x64xf32, #tpu.memory_space<vmem>>, vector<1x1x1x16x64xf32>
    %479 = vector.shape_cast %478 : vector<1x1x1x16x64xf32> to vector<16x64xf32>
    %480 = vector.shape_cast %477 : vector<16x64xf32> to vector<1x1x1x16x64xf32>
    tpu.vector_store %arg7[%c1_261, %c0_262, %c1_263, %c0_264, %c0_265], %480 {strides = array<i32>} : memref<4x2x6x16x64xf32, #tpu.memory_space<vmem>>, vector<1x1x1x16x64xf32>,
    %481 = vector.extract_strided_slice %476 {offsets = [16, 0], sizes = [16, 64], strides = [1, 1]} : vector<32x64xf32> to vector<16x64xf32>
    %c1_266 = arith.constant 1 : index
    %c1_267 = arith.constant 1 : index
    %c1_268 = arith.constant 1 : index
    %c0_269 = arith.constant 0 : index
    %c0_270 = arith.constant 0 : index
    %482 = vector.load %arg7[%c1_266, %c1_267, %c1_268, %c0_269, %c0_270] : memref<4x2x6x16x64xf32, #tpu.memory_space<vmem>>, vector<1x1x1x16x64xf32>
    %483 = vector.shape_cast %482 : vector<1x1x1x16x64xf32> to vector<16x64xf32>
    %484 = vector.shape_cast %481 : vector<16x64xf32> to vector<1x1x1x16x64xf32>
    tpu.vector_store %arg7[%c1_266, %c1_267, %c1_268, %c0_269, %c0_270], %484 {strides = array<i32>} : memref<4x2x6x16x64xf32, #tpu.memory_space<vmem>>, vector<1x1x1x16x64xf32>,
    %c2_271 = arith.constant 2 : index
    %485 = memref.load %arg6[%c2_271] : memref<6xf32, #tpu.memory_space<smem>>
    %c2_272 = arith.constant 2 : index
    %c0_273 = arith.constant 0 : index
    %486 = memref.load %arg5[%c2_272, %c0_273] : memref<6x8xf32, #tpu.memory_space<smem>>
    %487 = vector.extract_strided_slice %62 {offsets = [0, 0], sizes = [32, 64], strides = [1, 1]} : vector<32x512xf32> to vector<32x64xf32>
    %488 = vector.broadcast %486 : f32 to vector<32x64xf32>
    %489 = arith.mulf %488, %487 : vector<32x64xf32>
    %490 = vector.broadcast %485 : f32 to vector<32x64xf32>
    %491 = arith.addf %490, %489 : vector<32x64xf32>
    %c2_274 = arith.constant 2 : index
    %c1_275 = arith.constant 1 : index
    %492 = memref.load %arg5[%c2_274, %c1_275] : memref<6x8xf32, #tpu.memory_space<smem>>
    %493 = vector.extract_strided_slice %62 {offsets = [0, 64], sizes = [32, 64], strides = [1, 1]} : vector<32x512xf32> to vector<32x64xf32>
    %494 = vector.broadcast %492 : f32 to vector<32x64xf32>
    %495 = arith.mulf %494, %493 : vector<32x64xf32>
    %496 = arith.addf %491, %495 : vector<32x64xf32>
    %c2_276 = arith.constant 2 : index
    %c2_277 = arith.constant 2 : index
    %497 = memref.load %arg5[%c2_276, %c2_277] : memref<6x8xf32, #tpu.memory_space<smem>>
    %498 = vector.extract_strided_slice %62 {offsets = [0, 128], sizes = [32, 64], strides = [1, 1]} : vector<32x512xf32> to vector<32x64xf32>
    %499 = vector.broadcast %497 : f32 to vector<32x64xf32>
    %500 = arith.mulf %499, %498 : vector<32x64xf32>
    %501 = arith.addf %496, %500 : vector<32x64xf32>
    %c2_278 = arith.constant 2 : index
    %c3_279 = arith.constant 3 : index
    %502 = memref.load %arg5[%c2_278, %c3_279] : memref<6x8xf32, #tpu.memory_space<smem>>
    %503 = vector.extract_strided_slice %62 {offsets = [0, 192], sizes = [32, 64], strides = [1, 1]} : vector<32x512xf32> to vector<32x64xf32>
    %504 = vector.broadcast %502 : f32 to vector<32x64xf32>
    %505 = arith.mulf %504, %503 : vector<32x64xf32>
    %506 = arith.addf %501, %505 : vector<32x64xf32>
    %c2_280 = arith.constant 2 : index
    %c4_281 = arith.constant 4 : index
    %507 = memref.load %arg5[%c2_280, %c4_281] : memref<6x8xf32, #tpu.memory_space<smem>>
    %508 = vector.extract_strided_slice %62 {offsets = [0, 256], sizes = [32, 64], strides = [1, 1]} : vector<32x512xf32> to vector<32x64xf32>
    %509 = vector.broadcast %507 : f32 to vector<32x64xf32>
    %510 = arith.mulf %509, %508 : vector<32x64xf32>
    %511 = arith.addf %506, %510 : vector<32x64xf32>
    %c2_282 = arith.constant 2 : index
    %c5_283 = arith.constant 5 : index
    %512 = memref.load %arg5[%c2_282, %c5_283] : memref<6x8xf32, #tpu.memory_space<smem>>
    %513 = vector.extract_strided_slice %62 {offsets = [0, 320], sizes = [32, 64], strides = [1, 1]} : vector<32x512xf32> to vector<32x64xf32>
    %514 = vector.broadcast %512 : f32 to vector<32x64xf32>
    %515 = arith.mulf %514, %513 : vector<32x64xf32>
    %516 = arith.addf %511, %515 : vector<32x64xf32>
    %c2_284 = arith.constant 2 : index
    %c6_285 = arith.constant 6 : index
    %517 = memref.load %arg5[%c2_284, %c6_285] : memref<6x8xf32, #tpu.memory_space<smem>>
    %518 = vector.extract_strided_slice %62 {offsets = [0, 384], sizes = [32, 64], strides = [1, 1]} : vector<32x512xf32> to vector<32x64xf32>
    %519 = vector.broadcast %517 : f32 to vector<32x64xf32>
    %520 = arith.mulf %519, %518 : vector<32x64xf32>
    %521 = arith.addf %516, %520 : vector<32x64xf32>
    %c2_286 = arith.constant 2 : index
    %c7_287 = arith.constant 7 : index
    %522 = memref.load %arg5[%c2_286, %c7_287] : memref<6x8xf32, #tpu.memory_space<smem>>
    %523 = vector.extract_strided_slice %62 {offsets = [0, 448], sizes = [32, 64], strides = [1, 1]} : vector<32x512xf32> to vector<32x64xf32>
    %524 = vector.broadcast %522 : f32 to vector<32x64xf32>
    %525 = arith.mulf %524, %523 : vector<32x64xf32>
    %526 = arith.addf %521, %525 : vector<32x64xf32>
    %527 = vector.extract_strided_slice %526 {offsets = [0, 0], sizes = [16, 64], strides = [1, 1]} : vector<32x64xf32> to vector<16x64xf32>
    %c1_288 = arith.constant 1 : index
    %c0_289 = arith.constant 0 : index
    %c2_290 = arith.constant 2 : index
    %c0_291 = arith.constant 0 : index
    %c0_292 = arith.constant 0 : index
    %528 = vector.load %arg7[%c1_288, %c0_289, %c2_290, %c0_291, %c0_292] : memref<4x2x6x16x64xf32, #tpu.memory_space<vmem>>, vector<1x1x1x16x64xf32>
    %529 = vector.shape_cast %528 : vector<1x1x1x16x64xf32> to vector<16x64xf32>
    %530 = vector.shape_cast %527 : vector<16x64xf32> to vector<1x1x1x16x64xf32>
    tpu.vector_store %arg7[%c1_288, %c0_289, %c2_290, %c0_291, %c0_292], %530 {strides = array<i32>} : memref<4x2x6x16x64xf32, #tpu.memory_space<vmem>>, vector<1x1x1x16x64xf32>,
    %531 = vector.extract_strided_slice %526 {offsets = [16, 0], sizes = [16, 64], strides = [1, 1]} : vector<32x64xf32> to vector<16x64xf32>
    %c1_293 = arith.constant 1 : index
    %c1_294 = arith.constant 1 : index
    %c2_295 = arith.constant 2 : index
    %c0_296 = arith.constant 0 : index
    %c0_297 = arith.constant 0 : index
    %532 = vector.load %arg7[%c1_293, %c1_294, %c2_295, %c0_296, %c0_297] : memref<4x2x6x16x64xf32, #tpu.memory_space<vmem>>, vector<1x1x1x16x64xf32>
    %533 = vector.shape_cast %532 : vector<1x1x1x16x64xf32> to vector<16x64xf32>
    %534 = vector.shape_cast %531 : vector<16x64xf32> to vector<1x1x1x16x64xf32>
    tpu.vector_store %arg7[%c1_293, %c1_294, %c2_295, %c0_296, %c0_297], %534 {strides = array<i32>} : memref<4x2x6x16x64xf32, #tpu.memory_space<vmem>>, vector<1x1x1x16x64xf32>,
    %c3_298 = arith.constant 3 : index
    %535 = memref.load %arg6[%c3_298] : memref<6xf32, #tpu.memory_space<smem>>
    %c3_299 = arith.constant 3 : index
    %c0_300 = arith.constant 0 : index
    %536 = memref.load %arg5[%c3_299, %c0_300] : memref<6x8xf32, #tpu.memory_space<smem>>
    %537 = vector.extract_strided_slice %62 {offsets = [0, 0], sizes = [32, 64], strides = [1, 1]} : vector<32x512xf32> to vector<32x64xf32>
    %538 = vector.broadcast %536 : f32 to vector<32x64xf32>
    %539 = arith.mulf %538, %537 : vector<32x64xf32>
    %540 = vector.broadcast %535 : f32 to vector<32x64xf32>
    %541 = arith.addf %540, %539 : vector<32x64xf32>
    %c3_301 = arith.constant 3 : index
    %c1_302 = arith.constant 1 : index
    %542 = memref.load %arg5[%c3_301, %c1_302] : memref<6x8xf32, #tpu.memory_space<smem>>
    %543 = vector.extract_strided_slice %62 {offsets = [0, 64], sizes = [32, 64], strides = [1, 1]} : vector<32x512xf32> to vector<32x64xf32>
    %544 = vector.broadcast %542 : f32 to vector<32x64xf32>
    %545 = arith.mulf %544, %543 : vector<32x64xf32>
    %546 = arith.addf %541, %545 : vector<32x64xf32>
    %c3_303 = arith.constant 3 : index
    %c2_304 = arith.constant 2 : index
    %547 = memref.load %arg5[%c3_303, %c2_304] : memref<6x8xf32, #tpu.memory_space<smem>>
    %548 = vector.extract_strided_slice %62 {offsets = [0, 128], sizes = [32, 64], strides = [1, 1]} : vector<32x512xf32> to vector<32x64xf32>
    %549 = vector.broadcast %547 : f32 to vector<32x64xf32>
    %550 = arith.mulf %549, %548 : vector<32x64xf32>
    %551 = arith.addf %546, %550 : vector<32x64xf32>
    %c3_305 = arith.constant 3 : index
    %c3_306 = arith.constant 3 : index
    %552 = memref.load %arg5[%c3_305, %c3_306] : memref<6x8xf32, #tpu.memory_space<smem>>
    %553 = vector.extract_strided_slice %62 {offsets = [0, 192], sizes = [32, 64], strides = [1, 1]} : vector<32x512xf32> to vector<32x64xf32>
    %554 = vector.broadcast %552 : f32 to vector<32x64xf32>
    %555 = arith.mulf %554, %553 : vector<32x64xf32>
    %556 = arith.addf %551, %555 : vector<32x64xf32>
    %c3_307 = arith.constant 3 : index
    %c4_308 = arith.constant 4 : index
    %557 = memref.load %arg5[%c3_307, %c4_308] : memref<6x8xf32, #tpu.memory_space<smem>>
    %558 = vector.extract_strided_slice %62 {offsets = [0, 256], sizes = [32, 64], strides = [1, 1]} : vector<32x512xf32> to vector<32x64xf32>
    %559 = vector.broadcast %557 : f32 to vector<32x64xf32>
    %560 = arith.mulf %559, %558 : vector<32x64xf32>
    %561 = arith.addf %556, %560 : vector<32x64xf32>
    %c3_309 = arith.constant 3 : index
    %c5_310 = arith.constant 5 : index
    %562 = memref.load %arg5[%c3_309, %c5_310] : memref<6x8xf32, #tpu.memory_space<smem>>
    %563 = vector.extract_strided_slice %62 {offsets = [0, 320], sizes = [32, 64], strides = [1, 1]} : vector<32x512xf32> to vector<32x64xf32>
    %564 = vector.broadcast %562 : f32 to vector<32x64xf32>
    %565 = arith.mulf %564, %563 : vector<32x64xf32>
    %566 = arith.addf %561, %565 : vector<32x64xf32>
    %c3_311 = arith.constant 3 : index
    %c6_312 = arith.constant 6 : index
    %567 = memref.load %arg5[%c3_311, %c6_312] : memref<6x8xf32, #tpu.memory_space<smem>>
    %568 = vector.extract_strided_slice %62 {offsets = [0, 384], sizes = [32, 64], strides = [1, 1]} : vector<32x512xf32> to vector<32x64xf32>
    %569 = vector.broadcast %567 : f32 to vector<32x64xf32>
    %570 = arith.mulf %569, %568 : vector<32x64xf32>
    %571 = arith.addf %566, %570 : vector<32x64xf32>
    %c3_313 = arith.constant 3 : index
    %c7_314 = arith.constant 7 : index
    %572 = memref.load %arg5[%c3_313, %c7_314] : memref<6x8xf32, #tpu.memory_space<smem>>
    %573 = vector.extract_strided_slice %62 {offsets = [0, 448], sizes = [32, 64], strides = [1, 1]} : vector<32x512xf32> to vector<32x64xf32>
    %574 = vector.broadcast %572 : f32 to vector<32x64xf32>
    %575 = arith.mulf %574, %573 : vector<32x64xf32>
    %576 = arith.addf %571, %575 : vector<32x64xf32>
    %577 = vector.extract_strided_slice %576 {offsets = [0, 0], sizes = [16, 64], strides = [1, 1]} : vector<32x64xf32> to vector<16x64xf32>
    %c1_315 = arith.constant 1 : index
    %c0_316 = arith.constant 0 : index
    %c3_317 = arith.constant 3 : index
    %c0_318 = arith.constant 0 : index
    %c0_319 = arith.constant 0 : index
    %578 = vector.load %arg7[%c1_315, %c0_316, %c3_317, %c0_318, %c0_319] : memref<4x2x6x16x64xf32, #tpu.memory_space<vmem>>, vector<1x1x1x16x64xf32>
    %579 = vector.shape_cast %578 : vector<1x1x1x16x64xf32> to vector<16x64xf32>
    %580 = vector.shape_cast %577 : vector<16x64xf32> to vector<1x1x1x16x64xf32>
    tpu.vector_store %arg7[%c1_315, %c0_316, %c3_317, %c0_318, %c0_319], %580 {strides = array<i32>} : memref<4x2x6x16x64xf32, #tpu.memory_space<vmem>>, vector<1x1x1x16x64xf32>,
    %581 = vector.extract_strided_slice %576 {offsets = [16, 0], sizes = [16, 64], strides = [1, 1]} : vector<32x64xf32> to vector<16x64xf32>
    %c1_320 = arith.constant 1 : index
    %c1_321 = arith.constant 1 : index
    %c3_322 = arith.constant 3 : index
    %c0_323 = arith.constant 0 : index
    %c0_324 = arith.constant 0 : index
    %582 = vector.load %arg7[%c1_320, %c1_321, %c3_322, %c0_323, %c0_324] : memref<4x2x6x16x64xf32, #tpu.memory_space<vmem>>, vector<1x1x1x16x64xf32>
    %583 = vector.shape_cast %582 : vector<1x1x1x16x64xf32> to vector<16x64xf32>
    %584 = vector.shape_cast %581 : vector<16x64xf32> to vector<1x1x1x16x64xf32>
    tpu.vector_store %arg7[%c1_320, %c1_321, %c3_322, %c0_323, %c0_324], %584 {strides = array<i32>} : memref<4x2x6x16x64xf32, #tpu.memory_space<vmem>>, vector<1x1x1x16x64xf32>,
    %c4_325 = arith.constant 4 : index
    %585 = memref.load %arg6[%c4_325] : memref<6xf32, #tpu.memory_space<smem>>
    %c4_326 = arith.constant 4 : index
    %c0_327 = arith.constant 0 : index
    %586 = memref.load %arg5[%c4_326, %c0_327] : memref<6x8xf32, #tpu.memory_space<smem>>
    %587 = vector.extract_strided_slice %62 {offsets = [0, 0], sizes = [32, 64], strides = [1, 1]} : vector<32x512xf32> to vector<32x64xf32>
    %588 = vector.broadcast %586 : f32 to vector<32x64xf32>
    %589 = arith.mulf %588, %587 : vector<32x64xf32>
    %590 = vector.broadcast %585 : f32 to vector<32x64xf32>
    %591 = arith.addf %590, %589 : vector<32x64xf32>
    %c4_328 = arith.constant 4 : index
    %c1_329 = arith.constant 1 : index
    %592 = memref.load %arg5[%c4_328, %c1_329] : memref<6x8xf32, #tpu.memory_space<smem>>
    %593 = vector.extract_strided_slice %62 {offsets = [0, 64], sizes = [32, 64], strides = [1, 1]} : vector<32x512xf32> to vector<32x64xf32>
    %594 = vector.broadcast %592 : f32 to vector<32x64xf32>
    %595 = arith.mulf %594, %593 : vector<32x64xf32>
    %596 = arith.addf %591, %595 : vector<32x64xf32>
    %c4_330 = arith.constant 4 : index
    %c2_331 = arith.constant 2 : index
    %597 = memref.load %arg5[%c4_330, %c2_331] : memref<6x8xf32, #tpu.memory_space<smem>>
    %598 = vector.extract_strided_slice %62 {offsets = [0, 128], sizes = [32, 64], strides = [1, 1]} : vector<32x512xf32> to vector<32x64xf32>
    %599 = vector.broadcast %597 : f32 to vector<32x64xf32>
    %600 = arith.mulf %599, %598 : vector<32x64xf32>
    %601 = arith.addf %596, %600 : vector<32x64xf32>
    %c4_332 = arith.constant 4 : index
    %c3_333 = arith.constant 3 : index
    %602 = memref.load %arg5[%c4_332, %c3_333] : memref<6x8xf32, #tpu.memory_space<smem>>
    %603 = vector.extract_strided_slice %62 {offsets = [0, 192], sizes = [32, 64], strides = [1, 1]} : vector<32x512xf32> to vector<32x64xf32>
    %604 = vector.broadcast %602 : f32 to vector<32x64xf32>
    %605 = arith.mulf %604, %603 : vector<32x64xf32>
    %606 = arith.addf %601, %605 : vector<32x64xf32>
    %c4_334 = arith.constant 4 : index
    %c4_335 = arith.constant 4 : index
    %607 = memref.load %arg5[%c4_334, %c4_335] : memref<6x8xf32, #tpu.memory_space<smem>>
    %608 = vector.extract_strided_slice %62 {offsets = [0, 256], sizes = [32, 64], strides = [1, 1]} : vector<32x512xf32> to vector<32x64xf32>
    %609 = vector.broadcast %607 : f32 to vector<32x64xf32>
    %610 = arith.mulf %609, %608 : vector<32x64xf32>
    %611 = arith.addf %606, %610 : vector<32x64xf32>
    %c4_336 = arith.constant 4 : index
    %c5_337 = arith.constant 5 : index
    %612 = memref.load %arg5[%c4_336, %c5_337] : memref<6x8xf32, #tpu.memory_space<smem>>
    %613 = vector.extract_strided_slice %62 {offsets = [0, 320], sizes = [32, 64], strides = [1, 1]} : vector<32x512xf32> to vector<32x64xf32>
    %614 = vector.broadcast %612 : f32 to vector<32x64xf32>
    %615 = arith.mulf %614, %613 : vector<32x64xf32>
    %616 = arith.addf %611, %615 : vector<32x64xf32>
    %c4_338 = arith.constant 4 : index
    %c6_339 = arith.constant 6 : index
    %617 = memref.load %arg5[%c4_338, %c6_339] : memref<6x8xf32, #tpu.memory_space<smem>>
    %618 = vector.extract_strided_slice %62 {offsets = [0, 384], sizes = [32, 64], strides = [1, 1]} : vector<32x512xf32> to vector<32x64xf32>
    %619 = vector.broadcast %617 : f32 to vector<32x64xf32>
    %620 = arith.mulf %619, %618 : vector<32x64xf32>
    %621 = arith.addf %616, %620 : vector<32x64xf32>
    %c4_340 = arith.constant 4 : index
    %c7_341 = arith.constant 7 : index
    %622 = memref.load %arg5[%c4_340, %c7_341] : memref<6x8xf32, #tpu.memory_space<smem>>
    %623 = vector.extract_strided_slice %62 {offsets = [0, 448], sizes = [32, 64], strides = [1, 1]} : vector<32x512xf32> to vector<32x64xf32>
    %624 = vector.broadcast %622 : f32 to vector<32x64xf32>
    %625 = arith.mulf %624, %623 : vector<32x64xf32>
    %626 = arith.addf %621, %625 : vector<32x64xf32>
    %627 = vector.extract_strided_slice %626 {offsets = [0, 0], sizes = [16, 64], strides = [1, 1]} : vector<32x64xf32> to vector<16x64xf32>
    %c1_342 = arith.constant 1 : index
    %c0_343 = arith.constant 0 : index
    %c4_344 = arith.constant 4 : index
    %c0_345 = arith.constant 0 : index
    %c0_346 = arith.constant 0 : index
    %628 = vector.load %arg7[%c1_342, %c0_343, %c4_344, %c0_345, %c0_346] : memref<4x2x6x16x64xf32, #tpu.memory_space<vmem>>, vector<1x1x1x16x64xf32>
    %629 = vector.shape_cast %628 : vector<1x1x1x16x64xf32> to vector<16x64xf32>
    %630 = vector.shape_cast %627 : vector<16x64xf32> to vector<1x1x1x16x64xf32>
    tpu.vector_store %arg7[%c1_342, %c0_343, %c4_344, %c0_345, %c0_346], %630 {strides = array<i32>} : memref<4x2x6x16x64xf32, #tpu.memory_space<vmem>>, vector<1x1x1x16x64xf32>,
    %631 = vector.extract_strided_slice %626 {offsets = [16, 0], sizes = [16, 64], strides = [1, 1]} : vector<32x64xf32> to vector<16x64xf32>
    %c1_347 = arith.constant 1 : index
    %c1_348 = arith.constant 1 : index
    %c4_349 = arith.constant 4 : index
    %c0_350 = arith.constant 0 : index
    %c0_351 = arith.constant 0 : index
    %632 = vector.load %arg7[%c1_347, %c1_348, %c4_349, %c0_350, %c0_351] : memref<4x2x6x16x64xf32, #tpu.memory_space<vmem>>, vector<1x1x1x16x64xf32>
    %633 = vector.shape_cast %632 : vector<1x1x1x16x64xf32> to vector<16x64xf32>
    %634 = vector.shape_cast %631 : vector<16x64xf32> to vector<1x1x1x16x64xf32>
    tpu.vector_store %arg7[%c1_347, %c1_348, %c4_349, %c0_350, %c0_351], %634 {strides = array<i32>} : memref<4x2x6x16x64xf32, #tpu.memory_space<vmem>>, vector<1x1x1x16x64xf32>,
    %c5_352 = arith.constant 5 : index
    %635 = memref.load %arg6[%c5_352] : memref<6xf32, #tpu.memory_space<smem>>
    %c5_353 = arith.constant 5 : index
    %c0_354 = arith.constant 0 : index
    %636 = memref.load %arg5[%c5_353, %c0_354] : memref<6x8xf32, #tpu.memory_space<smem>>
    %637 = vector.extract_strided_slice %62 {offsets = [0, 0], sizes = [32, 64], strides = [1, 1]} : vector<32x512xf32> to vector<32x64xf32>
    %638 = vector.broadcast %636 : f32 to vector<32x64xf32>
    %639 = arith.mulf %638, %637 : vector<32x64xf32>
    %640 = vector.broadcast %635 : f32 to vector<32x64xf32>
    %641 = arith.addf %640, %639 : vector<32x64xf32>
    %c5_355 = arith.constant 5 : index
    %c1_356 = arith.constant 1 : index
    %642 = memref.load %arg5[%c5_355, %c1_356] : memref<6x8xf32, #tpu.memory_space<smem>>
    %643 = vector.extract_strided_slice %62 {offsets = [0, 64], sizes = [32, 64], strides = [1, 1]} : vector<32x512xf32> to vector<32x64xf32>
    %644 = vector.broadcast %642 : f32 to vector<32x64xf32>
    %645 = arith.mulf %644, %643 : vector<32x64xf32>
    %646 = arith.addf %641, %645 : vector<32x64xf32>
    %c5_357 = arith.constant 5 : index
    %c2_358 = arith.constant 2 : index
    %647 = memref.load %arg5[%c5_357, %c2_358] : memref<6x8xf32, #tpu.memory_space<smem>>
    %648 = vector.extract_strided_slice %62 {offsets = [0, 128], sizes = [32, 64], strides = [1, 1]} : vector<32x512xf32> to vector<32x64xf32>
    %649 = vector.broadcast %647 : f32 to vector<32x64xf32>
    %650 = arith.mulf %649, %648 : vector<32x64xf32>
    %651 = arith.addf %646, %650 : vector<32x64xf32>
    %c5_359 = arith.constant 5 : index
    %c3_360 = arith.constant 3 : index
    %652 = memref.load %arg5[%c5_359, %c3_360] : memref<6x8xf32, #tpu.memory_space<smem>>
    %653 = vector.extract_strided_slice %62 {offsets = [0, 192], sizes = [32, 64], strides = [1, 1]} : vector<32x512xf32> to vector<32x64xf32>
    %654 = vector.broadcast %652 : f32 to vector<32x64xf32>
    %655 = arith.mulf %654, %653 : vector<32x64xf32>
    %656 = arith.addf %651, %655 : vector<32x64xf32>
    %c5_361 = arith.constant 5 : index
    %c4_362 = arith.constant 4 : index
    %657 = memref.load %arg5[%c5_361, %c4_362] : memref<6x8xf32, #tpu.memory_space<smem>>
    %658 = vector.extract_strided_slice %62 {offsets = [0, 256], sizes = [32, 64], strides = [1, 1]} : vector<32x512xf32> to vector<32x64xf32>
    %659 = vector.broadcast %657 : f32 to vector<32x64xf32>
    %660 = arith.mulf %659, %658 : vector<32x64xf32>
    %661 = arith.addf %656, %660 : vector<32x64xf32>
    %c5_363 = arith.constant 5 : index
    %c5_364 = arith.constant 5 : index
    %662 = memref.load %arg5[%c5_363, %c5_364] : memref<6x8xf32, #tpu.memory_space<smem>>
    %663 = vector.extract_strided_slice %62 {offsets = [0, 320], sizes = [32, 64], strides = [1, 1]} : vector<32x512xf32> to vector<32x64xf32>
    %664 = vector.broadcast %662 : f32 to vector<32x64xf32>
    %665 = arith.mulf %664, %663 : vector<32x64xf32>
    %666 = arith.addf %661, %665 : vector<32x64xf32>
    %c5_365 = arith.constant 5 : index
    %c6_366 = arith.constant 6 : index
    %667 = memref.load %arg5[%c5_365, %c6_366] : memref<6x8xf32, #tpu.memory_space<smem>>
    %668 = vector.extract_strided_slice %62 {offsets = [0, 384], sizes = [32, 64], strides = [1, 1]} : vector<32x512xf32> to vector<32x64xf32>
    %669 = vector.broadcast %667 : f32 to vector<32x64xf32>
    %670 = arith.mulf %669, %668 : vector<32x64xf32>
    %671 = arith.addf %666, %670 : vector<32x64xf32>
    %c5_367 = arith.constant 5 : index
    %c7_368 = arith.constant 7 : index
    %672 = memref.load %arg5[%c5_367, %c7_368] : memref<6x8xf32, #tpu.memory_space<smem>>
    %673 = vector.extract_strided_slice %62 {offsets = [0, 448], sizes = [32, 64], strides = [1, 1]} : vector<32x512xf32> to vector<32x64xf32>
    %674 = vector.broadcast %672 : f32 to vector<32x64xf32>
    %675 = arith.mulf %674, %673 : vector<32x64xf32>
    %676 = arith.addf %671, %675 : vector<32x64xf32>
    %677 = vector.extract_strided_slice %676 {offsets = [0, 0], sizes = [16, 64], strides = [1, 1]} : vector<32x64xf32> to vector<16x64xf32>
    %c1_369 = arith.constant 1 : index
    %c0_370 = arith.constant 0 : index
    %c5_371 = arith.constant 5 : index
    %c0_372 = arith.constant 0 : index
    %c0_373 = arith.constant 0 : index
    %678 = vector.load %arg7[%c1_369, %c0_370, %c5_371, %c0_372, %c0_373] : memref<4x2x6x16x64xf32, #tpu.memory_space<vmem>>, vector<1x1x1x16x64xf32>
    %679 = vector.shape_cast %678 : vector<1x1x1x16x64xf32> to vector<16x64xf32>
    %680 = vector.shape_cast %677 : vector<16x64xf32> to vector<1x1x1x16x64xf32>
    tpu.vector_store %arg7[%c1_369, %c0_370, %c5_371, %c0_372, %c0_373], %680 {strides = array<i32>} : memref<4x2x6x16x64xf32, #tpu.memory_space<vmem>>, vector<1x1x1x16x64xf32>,
    %681 = vector.extract_strided_slice %676 {offsets = [16, 0], sizes = [16, 64], strides = [1, 1]} : vector<32x64xf32> to vector<16x64xf32>
    %c1_374 = arith.constant 1 : index
    %c1_375 = arith.constant 1 : index
    %c5_376 = arith.constant 5 : index
    %c0_377 = arith.constant 0 : index
    %c0_378 = arith.constant 0 : index
    %682 = vector.load %arg7[%c1_374, %c1_375, %c5_376, %c0_377, %c0_378] : memref<4x2x6x16x64xf32, #tpu.memory_space<vmem>>, vector<1x1x1x16x64xf32>
    %683 = vector.shape_cast %682 : vector<1x1x1x16x64xf32> to vector<16x64xf32>
    %684 = vector.shape_cast %681 : vector<16x64xf32> to vector<1x1x1x16x64xf32>
    tpu.vector_store %arg7[%c1_374, %c1_375, %c5_376, %c0_377, %c0_378], %684 {strides = array<i32>} : memref<4x2x6x16x64xf32, #tpu.memory_space<vmem>>, vector<1x1x1x16x64xf32>,
    %c0_379 = arith.constant 0 : index
    %685 = memref.load %arg6[%c0_379] : memref<6xf32, #tpu.memory_space<smem>>
    %c0_380 = arith.constant 0 : index
    %c0_381 = arith.constant 0 : index
    %686 = memref.load %arg5[%c0_380, %c0_381] : memref<6x8xf32, #tpu.memory_space<smem>>
    %687 = vector.extract_strided_slice %73 {offsets = [0, 0], sizes = [32, 64], strides = [1, 1]} : vector<32x512xf32> to vector<32x64xf32>
    %688 = vector.broadcast %686 : f32 to vector<32x64xf32>
    %689 = arith.mulf %688, %687 : vector<32x64xf32>
    %690 = vector.broadcast %685 : f32 to vector<32x64xf32>
    %691 = arith.addf %690, %689 : vector<32x64xf32>
    %c0_382 = arith.constant 0 : index
    %c1_383 = arith.constant 1 : index
    %692 = memref.load %arg5[%c0_382, %c1_383] : memref<6x8xf32, #tpu.memory_space<smem>>
    %693 = vector.extract_strided_slice %73 {offsets = [0, 64], sizes = [32, 64], strides = [1, 1]} : vector<32x512xf32> to vector<32x64xf32>
    %694 = vector.broadcast %692 : f32 to vector<32x64xf32>
    %695 = arith.mulf %694, %693 : vector<32x64xf32>
    %696 = arith.addf %691, %695 : vector<32x64xf32>
    %c0_384 = arith.constant 0 : index
    %c2_385 = arith.constant 2 : index
    %697 = memref.load %arg5[%c0_384, %c2_385] : memref<6x8xf32, #tpu.memory_space<smem>>
    %698 = vector.extract_strided_slice %73 {offsets = [0, 128], sizes = [32, 64], strides = [1, 1]} : vector<32x512xf32> to vector<32x64xf32>
    %699 = vector.broadcast %697 : f32 to vector<32x64xf32>
    %700 = arith.mulf %699, %698 : vector<32x64xf32>
    %701 = arith.addf %696, %700 : vector<32x64xf32>
    %c0_386 = arith.constant 0 : index
    %c3_387 = arith.constant 3 : index
    %702 = memref.load %arg5[%c0_386, %c3_387] : memref<6x8xf32, #tpu.memory_space<smem>>
    %703 = vector.extract_strided_slice %73 {offsets = [0, 192], sizes = [32, 64], strides = [1, 1]} : vector<32x512xf32> to vector<32x64xf32>
    %704 = vector.broadcast %702 : f32 to vector<32x64xf32>
    %705 = arith.mulf %704, %703 : vector<32x64xf32>
    %706 = arith.addf %701, %705 : vector<32x64xf32>
    %c0_388 = arith.constant 0 : index
    %c4_389 = arith.constant 4 : index
    %707 = memref.load %arg5[%c0_388, %c4_389] : memref<6x8xf32, #tpu.memory_space<smem>>
    %708 = vector.extract_strided_slice %73 {offsets = [0, 256], sizes = [32, 64], strides = [1, 1]} : vector<32x512xf32> to vector<32x64xf32>
    %709 = vector.broadcast %707 : f32 to vector<32x64xf32>
    %710 = arith.mulf %709, %708 : vector<32x64xf32>
    %711 = arith.addf %706, %710 : vector<32x64xf32>
    %c0_390 = arith.constant 0 : index
    %c5_391 = arith.constant 5 : index
    %712 = memref.load %arg5[%c0_390, %c5_391] : memref<6x8xf32, #tpu.memory_space<smem>>
    %713 = vector.extract_strided_slice %73 {offsets = [0, 320], sizes = [32, 64], strides = [1, 1]} : vector<32x512xf32> to vector<32x64xf32>
    %714 = vector.broadcast %712 : f32 to vector<32x64xf32>
    %715 = arith.mulf %714, %713 : vector<32x64xf32>
    %716 = arith.addf %711, %715 : vector<32x64xf32>
    %c0_392 = arith.constant 0 : index
    %c6_393 = arith.constant 6 : index
    %717 = memref.load %arg5[%c0_392, %c6_393] : memref<6x8xf32, #tpu.memory_space<smem>>
    %718 = vector.extract_strided_slice %73 {offsets = [0, 384], sizes = [32, 64], strides = [1, 1]} : vector<32x512xf32> to vector<32x64xf32>
    %719 = vector.broadcast %717 : f32 to vector<32x64xf32>
    %720 = arith.mulf %719, %718 : vector<32x64xf32>
    %721 = arith.addf %716, %720 : vector<32x64xf32>
    %c0_394 = arith.constant 0 : index
    %c7_395 = arith.constant 7 : index
    %722 = memref.load %arg5[%c0_394, %c7_395] : memref<6x8xf32, #tpu.memory_space<smem>>
    %723 = vector.extract_strided_slice %73 {offsets = [0, 448], sizes = [32, 64], strides = [1, 1]} : vector<32x512xf32> to vector<32x64xf32>
    %724 = vector.broadcast %722 : f32 to vector<32x64xf32>
    %725 = arith.mulf %724, %723 : vector<32x64xf32>
    %726 = arith.addf %721, %725 : vector<32x64xf32>
    %727 = vector.extract_strided_slice %726 {offsets = [0, 0], sizes = [16, 64], strides = [1, 1]} : vector<32x64xf32> to vector<16x64xf32>
    %c2_396 = arith.constant 2 : index
    %c0_397 = arith.constant 0 : index
    %c0_398 = arith.constant 0 : index
    %c0_399 = arith.constant 0 : index
    %c0_400 = arith.constant 0 : index
    %728 = vector.load %arg7[%c2_396, %c0_397, %c0_398, %c0_399, %c0_400] : memref<4x2x6x16x64xf32, #tpu.memory_space<vmem>>, vector<1x1x1x16x64xf32>
    %729 = vector.shape_cast %728 : vector<1x1x1x16x64xf32> to vector<16x64xf32>
    %730 = vector.shape_cast %727 : vector<16x64xf32> to vector<1x1x1x16x64xf32>
    tpu.vector_store %arg7[%c2_396, %c0_397, %c0_398, %c0_399, %c0_400], %730 {strides = array<i32>} : memref<4x2x6x16x64xf32, #tpu.memory_space<vmem>>, vector<1x1x1x16x64xf32>,
    %731 = vector.extract_strided_slice %726 {offsets = [16, 0], sizes = [16, 64], strides = [1, 1]} : vector<32x64xf32> to vector<16x64xf32>
    %c2_401 = arith.constant 2 : index
    %c1_402 = arith.constant 1 : index
    %c0_403 = arith.constant 0 : index
    %c0_404 = arith.constant 0 : index
    %c0_405 = arith.constant 0 : index
    %732 = vector.load %arg7[%c2_401, %c1_402, %c0_403, %c0_404, %c0_405] : memref<4x2x6x16x64xf32, #tpu.memory_space<vmem>>, vector<1x1x1x16x64xf32>
    %733 = vector.shape_cast %732 : vector<1x1x1x16x64xf32> to vector<16x64xf32>
    %734 = vector.shape_cast %731 : vector<16x64xf32> to vector<1x1x1x16x64xf32>
    tpu.vector_store %arg7[%c2_401, %c1_402, %c0_403, %c0_404, %c0_405], %734 {strides = array<i32>} : memref<4x2x6x16x64xf32, #tpu.memory_space<vmem>>, vector<1x1x1x16x64xf32>,
    %c1_406 = arith.constant 1 : index
    %735 = memref.load %arg6[%c1_406] : memref<6xf32, #tpu.memory_space<smem>>
    %c1_407 = arith.constant 1 : index
    %c0_408 = arith.constant 0 : index
    %736 = memref.load %arg5[%c1_407, %c0_408] : memref<6x8xf32, #tpu.memory_space<smem>>
    %737 = vector.extract_strided_slice %73 {offsets = [0, 0], sizes = [32, 64], strides = [1, 1]} : vector<32x512xf32> to vector<32x64xf32>
    %738 = vector.broadcast %736 : f32 to vector<32x64xf32>
    %739 = arith.mulf %738, %737 : vector<32x64xf32>
    %740 = vector.broadcast %735 : f32 to vector<32x64xf32>
    %741 = arith.addf %740, %739 : vector<32x64xf32>
    %c1_409 = arith.constant 1 : index
    %c1_410 = arith.constant 1 : index
    %742 = memref.load %arg5[%c1_409, %c1_410] : memref<6x8xf32, #tpu.memory_space<smem>>
    %743 = vector.extract_strided_slice %73 {offsets = [0, 64], sizes = [32, 64], strides = [1, 1]} : vector<32x512xf32> to vector<32x64xf32>
    %744 = vector.broadcast %742 : f32 to vector<32x64xf32>
    %745 = arith.mulf %744, %743 : vector<32x64xf32>
    %746 = arith.addf %741, %745 : vector<32x64xf32>
    %c1_411 = arith.constant 1 : index
    %c2_412 = arith.constant 2 : index
    %747 = memref.load %arg5[%c1_411, %c2_412] : memref<6x8xf32, #tpu.memory_space<smem>>
    %748 = vector.extract_strided_slice %73 {offsets = [0, 128], sizes = [32, 64], strides = [1, 1]} : vector<32x512xf32> to vector<32x64xf32>
    %749 = vector.broadcast %747 : f32 to vector<32x64xf32>
    %750 = arith.mulf %749, %748 : vector<32x64xf32>
    %751 = arith.addf %746, %750 : vector<32x64xf32>
    %c1_413 = arith.constant 1 : index
    %c3_414 = arith.constant 3 : index
    %752 = memref.load %arg5[%c1_413, %c3_414] : memref<6x8xf32, #tpu.memory_space<smem>>
    %753 = vector.extract_strided_slice %73 {offsets = [0, 192], sizes = [32, 64], strides = [1, 1]} : vector<32x512xf32> to vector<32x64xf32>
    %754 = vector.broadcast %752 : f32 to vector<32x64xf32>
    %755 = arith.mulf %754, %753 : vector<32x64xf32>
    %756 = arith.addf %751, %755 : vector<32x64xf32>
    %c1_415 = arith.constant 1 : index
    %c4_416 = arith.constant 4 : index
    %757 = memref.load %arg5[%c1_415, %c4_416] : memref<6x8xf32, #tpu.memory_space<smem>>
    %758 = vector.extract_strided_slice %73 {offsets = [0, 256], sizes = [32, 64], strides = [1, 1]} : vector<32x512xf32> to vector<32x64xf32>
    %759 = vector.broadcast %757 : f32 to vector<32x64xf32>
    %760 = arith.mulf %759, %758 : vector<32x64xf32>
    %761 = arith.addf %756, %760 : vector<32x64xf32>
    %c1_417 = arith.constant 1 : index
    %c5_418 = arith.constant 5 : index
    %762 = memref.load %arg5[%c1_417, %c5_418] : memref<6x8xf32, #tpu.memory_space<smem>>
    %763 = vector.extract_strided_slice %73 {offsets = [0, 320], sizes = [32, 64], strides = [1, 1]} : vector<32x512xf32> to vector<32x64xf32>
    %764 = vector.broadcast %762 : f32 to vector<32x64xf32>
    %765 = arith.mulf %764, %763 : vector<32x64xf32>
    %766 = arith.addf %761, %765 : vector<32x64xf32>
    %c1_419 = arith.constant 1 : index
    %c6_420 = arith.constant 6 : index
    %767 = memref.load %arg5[%c1_419, %c6_420] : memref<6x8xf32, #tpu.memory_space<smem>>
    %768 = vector.extract_strided_slice %73 {offsets = [0, 384], sizes = [32, 64], strides = [1, 1]} : vector<32x512xf32> to vector<32x64xf32>
    %769 = vector.broadcast %767 : f32 to vector<32x64xf32>
    %770 = arith.mulf %769, %768 : vector<32x64xf32>
    %771 = arith.addf %766, %770 : vector<32x64xf32>
    %c1_421 = arith.constant 1 : index
    %c7_422 = arith.constant 7 : index
    %772 = memref.load %arg5[%c1_421, %c7_422] : memref<6x8xf32, #tpu.memory_space<smem>>
    %773 = vector.extract_strided_slice %73 {offsets = [0, 448], sizes = [32, 64], strides = [1, 1]} : vector<32x512xf32> to vector<32x64xf32>
    %774 = vector.broadcast %772 : f32 to vector<32x64xf32>
    %775 = arith.mulf %774, %773 : vector<32x64xf32>
    %776 = arith.addf %771, %775 : vector<32x64xf32>
    %777 = vector.extract_strided_slice %776 {offsets = [0, 0], sizes = [16, 64], strides = [1, 1]} : vector<32x64xf32> to vector<16x64xf32>
    %c2_423 = arith.constant 2 : index
    %c0_424 = arith.constant 0 : index
    %c1_425 = arith.constant 1 : index
    %c0_426 = arith.constant 0 : index
    %c0_427 = arith.constant 0 : index
    %778 = vector.load %arg7[%c2_423, %c0_424, %c1_425, %c0_426, %c0_427] : memref<4x2x6x16x64xf32, #tpu.memory_space<vmem>>, vector<1x1x1x16x64xf32>
    %779 = vector.shape_cast %778 : vector<1x1x1x16x64xf32> to vector<16x64xf32>
    %780 = vector.shape_cast %777 : vector<16x64xf32> to vector<1x1x1x16x64xf32>
    tpu.vector_store %arg7[%c2_423, %c0_424, %c1_425, %c0_426, %c0_427], %780 {strides = array<i32>} : memref<4x2x6x16x64xf32, #tpu.memory_space<vmem>>, vector<1x1x1x16x64xf32>,
    %781 = vector.extract_strided_slice %776 {offsets = [16, 0], sizes = [16, 64], strides = [1, 1]} : vector<32x64xf32> to vector<16x64xf32>
    %c2_428 = arith.constant 2 : index
    %c1_429 = arith.constant 1 : index
    %c1_430 = arith.constant 1 : index
    %c0_431 = arith.constant 0 : index
    %c0_432 = arith.constant 0 : index
    %782 = vector.load %arg7[%c2_428, %c1_429, %c1_430, %c0_431, %c0_432] : memref<4x2x6x16x64xf32, #tpu.memory_space<vmem>>, vector<1x1x1x16x64xf32>
    %783 = vector.shape_cast %782 : vector<1x1x1x16x64xf32> to vector<16x64xf32>
    %784 = vector.shape_cast %781 : vector<16x64xf32> to vector<1x1x1x16x64xf32>
    tpu.vector_store %arg7[%c2_428, %c1_429, %c1_430, %c0_431, %c0_432], %784 {strides = array<i32>} : memref<4x2x6x16x64xf32, #tpu.memory_space<vmem>>, vector<1x1x1x16x64xf32>,
    %c2_433 = arith.constant 2 : index
    %785 = memref.load %arg6[%c2_433] : memref<6xf32, #tpu.memory_space<smem>>
    %c2_434 = arith.constant 2 : index
    %c0_435 = arith.constant 0 : index
    %786 = memref.load %arg5[%c2_434, %c0_435] : memref<6x8xf32, #tpu.memory_space<smem>>
    %787 = vector.extract_strided_slice %73 {offsets = [0, 0], sizes = [32, 64], strides = [1, 1]} : vector<32x512xf32> to vector<32x64xf32>
    %788 = vector.broadcast %786 : f32 to vector<32x64xf32>
    %789 = arith.mulf %788, %787 : vector<32x64xf32>
    %790 = vector.broadcast %785 : f32 to vector<32x64xf32>
    %791 = arith.addf %790, %789 : vector<32x64xf32>
    %c2_436 = arith.constant 2 : index
    %c1_437 = arith.constant 1 : index
    %792 = memref.load %arg5[%c2_436, %c1_437] : memref<6x8xf32, #tpu.memory_space<smem>>
    %793 = vector.extract_strided_slice %73 {offsets = [0, 64], sizes = [32, 64], strides = [1, 1]} : vector<32x512xf32> to vector<32x64xf32>
    %794 = vector.broadcast %792 : f32 to vector<32x64xf32>
    %795 = arith.mulf %794, %793 : vector<32x64xf32>
    %796 = arith.addf %791, %795 : vector<32x64xf32>
    %c2_438 = arith.constant 2 : index
    %c2_439 = arith.constant 2 : index
    %797 = memref.load %arg5[%c2_438, %c2_439] : memref<6x8xf32, #tpu.memory_space<smem>>
    %798 = vector.extract_strided_slice %73 {offsets = [0, 128], sizes = [32, 64], strides = [1, 1]} : vector<32x512xf32> to vector<32x64xf32>
    %799 = vector.broadcast %797 : f32 to vector<32x64xf32>
    %800 = arith.mulf %799, %798 : vector<32x64xf32>
    %801 = arith.addf %796, %800 : vector<32x64xf32>
    %c2_440 = arith.constant 2 : index
    %c3_441 = arith.constant 3 : index
    %802 = memref.load %arg5[%c2_440, %c3_441] : memref<6x8xf32, #tpu.memory_space<smem>>
    %803 = vector.extract_strided_slice %73 {offsets = [0, 192], sizes = [32, 64], strides = [1, 1]} : vector<32x512xf32> to vector<32x64xf32>
    %804 = vector.broadcast %802 : f32 to vector<32x64xf32>
    %805 = arith.mulf %804, %803 : vector<32x64xf32>
    %806 = arith.addf %801, %805 : vector<32x64xf32>
    %c2_442 = arith.constant 2 : index
    %c4_443 = arith.constant 4 : index
    %807 = memref.load %arg5[%c2_442, %c4_443] : memref<6x8xf32, #tpu.memory_space<smem>>
    %808 = vector.extract_strided_slice %73 {offsets = [0, 256], sizes = [32, 64], strides = [1, 1]} : vector<32x512xf32> to vector<32x64xf32>
    %809 = vector.broadcast %807 : f32 to vector<32x64xf32>
    %810 = arith.mulf %809, %808 : vector<32x64xf32>
    %811 = arith.addf %806, %810 : vector<32x64xf32>
    %c2_444 = arith.constant 2 : index
    %c5_445 = arith.constant 5 : index
    %812 = memref.load %arg5[%c2_444, %c5_445] : memref<6x8xf32, #tpu.memory_space<smem>>
    %813 = vector.extract_strided_slice %73 {offsets = [0, 320], sizes = [32, 64], strides = [1, 1]} : vector<32x512xf32> to vector<32x64xf32>
    %814 = vector.broadcast %812 : f32 to vector<32x64xf32>
    %815 = arith.mulf %814, %813 : vector<32x64xf32>
    %816 = arith.addf %811, %815 : vector<32x64xf32>
    %c2_446 = arith.constant 2 : index
    %c6_447 = arith.constant 6 : index
    %817 = memref.load %arg5[%c2_446, %c6_447] : memref<6x8xf32, #tpu.memory_space<smem>>
    %818 = vector.extract_strided_slice %73 {offsets = [0, 384], sizes = [32, 64], strides = [1, 1]} : vector<32x512xf32> to vector<32x64xf32>
    %819 = vector.broadcast %817 : f32 to vector<32x64xf32>
    %820 = arith.mulf %819, %818 : vector<32x64xf32>
    %821 = arith.addf %816, %820 : vector<32x64xf32>
    %c2_448 = arith.constant 2 : index
    %c7_449 = arith.constant 7 : index
    %822 = memref.load %arg5[%c2_448, %c7_449] : memref<6x8xf32, #tpu.memory_space<smem>>
    %823 = vector.extract_strided_slice %73 {offsets = [0, 448], sizes = [32, 64], strides = [1, 1]} : vector<32x512xf32> to vector<32x64xf32>
    %824 = vector.broadcast %822 : f32 to vector<32x64xf32>
    %825 = arith.mulf %824, %823 : vector<32x64xf32>
    %826 = arith.addf %821, %825 : vector<32x64xf32>
    %827 = vector.extract_strided_slice %826 {offsets = [0, 0], sizes = [16, 64], strides = [1, 1]} : vector<32x64xf32> to vector<16x64xf32>
    %c2_450 = arith.constant 2 : index
    %c0_451 = arith.constant 0 : index
    %c2_452 = arith.constant 2 : index
    %c0_453 = arith.constant 0 : index
    %c0_454 = arith.constant 0 : index
    %828 = vector.load %arg7[%c2_450, %c0_451, %c2_452, %c0_453, %c0_454] : memref<4x2x6x16x64xf32, #tpu.memory_space<vmem>>, vector<1x1x1x16x64xf32>
    %829 = vector.shape_cast %828 : vector<1x1x1x16x64xf32> to vector<16x64xf32>
    %830 = vector.shape_cast %827 : vector<16x64xf32> to vector<1x1x1x16x64xf32>
    tpu.vector_store %arg7[%c2_450, %c0_451, %c2_452, %c0_453, %c0_454], %830 {strides = array<i32>} : memref<4x2x6x16x64xf32, #tpu.memory_space<vmem>>, vector<1x1x1x16x64xf32>,
    %831 = vector.extract_strided_slice %826 {offsets = [16, 0], sizes = [16, 64], strides = [1, 1]} : vector<32x64xf32> to vector<16x64xf32>
    %c2_455 = arith.constant 2 : index
    %c1_456 = arith.constant 1 : index
    %c2_457 = arith.constant 2 : index
    %c0_458 = arith.constant 0 : index
    %c0_459 = arith.constant 0 : index
    %832 = vector.load %arg7[%c2_455, %c1_456, %c2_457, %c0_458, %c0_459] : memref<4x2x6x16x64xf32, #tpu.memory_space<vmem>>, vector<1x1x1x16x64xf32>
    %833 = vector.shape_cast %832 : vector<1x1x1x16x64xf32> to vector<16x64xf32>
    %834 = vector.shape_cast %831 : vector<16x64xf32> to vector<1x1x1x16x64xf32>
    tpu.vector_store %arg7[%c2_455, %c1_456, %c2_457, %c0_458, %c0_459], %834 {strides = array<i32>} : memref<4x2x6x16x64xf32, #tpu.memory_space<vmem>>, vector<1x1x1x16x64xf32>,
    %c3_460 = arith.constant 3 : index
    %835 = memref.load %arg6[%c3_460] : memref<6xf32, #tpu.memory_space<smem>>
    %c3_461 = arith.constant 3 : index
    %c0_462 = arith.constant 0 : index
    %836 = memref.load %arg5[%c3_461, %c0_462] : memref<6x8xf32, #tpu.memory_space<smem>>
    %837 = vector.extract_strided_slice %73 {offsets = [0, 0], sizes = [32, 64], strides = [1, 1]} : vector<32x512xf32> to vector<32x64xf32>
    %838 = vector.broadcast %836 : f32 to vector<32x64xf32>
    %839 = arith.mulf %838, %837 : vector<32x64xf32>
    %840 = vector.broadcast %835 : f32 to vector<32x64xf32>
    %841 = arith.addf %840, %839 : vector<32x64xf32>
    %c3_463 = arith.constant 3 : index
    %c1_464 = arith.constant 1 : index
    %842 = memref.load %arg5[%c3_463, %c1_464] : memref<6x8xf32, #tpu.memory_space<smem>>
    %843 = vector.extract_strided_slice %73 {offsets = [0, 64], sizes = [32, 64], strides = [1, 1]} : vector<32x512xf32> to vector<32x64xf32>
    %844 = vector.broadcast %842 : f32 to vector<32x64xf32>
    %845 = arith.mulf %844, %843 : vector<32x64xf32>
    %846 = arith.addf %841, %845 : vector<32x64xf32>
    %c3_465 = arith.constant 3 : index
    %c2_466 = arith.constant 2 : index
    %847 = memref.load %arg5[%c3_465, %c2_466] : memref<6x8xf32, #tpu.memory_space<smem>>
    %848 = vector.extract_strided_slice %73 {offsets = [0, 128], sizes = [32, 64], strides = [1, 1]} : vector<32x512xf32> to vector<32x64xf32>
    %849 = vector.broadcast %847 : f32 to vector<32x64xf32>
    %850 = arith.mulf %849, %848 : vector<32x64xf32>
    %851 = arith.addf %846, %850 : vector<32x64xf32>
    %c3_467 = arith.constant 3 : index
    %c3_468 = arith.constant 3 : index
    %852 = memref.load %arg5[%c3_467, %c3_468] : memref<6x8xf32, #tpu.memory_space<smem>>
    %853 = vector.extract_strided_slice %73 {offsets = [0, 192], sizes = [32, 64], strides = [1, 1]} : vector<32x512xf32> to vector<32x64xf32>
    %854 = vector.broadcast %852 : f32 to vector<32x64xf32>
    %855 = arith.mulf %854, %853 : vector<32x64xf32>
    %856 = arith.addf %851, %855 : vector<32x64xf32>
    %c3_469 = arith.constant 3 : index
    %c4_470 = arith.constant 4 : index
    %857 = memref.load %arg5[%c3_469, %c4_470] : memref<6x8xf32, #tpu.memory_space<smem>>
    %858 = vector.extract_strided_slice %73 {offsets = [0, 256], sizes = [32, 64], strides = [1, 1]} : vector<32x512xf32> to vector<32x64xf32>
    %859 = vector.broadcast %857 : f32 to vector<32x64xf32>
    %860 = arith.mulf %859, %858 : vector<32x64xf32>
    %861 = arith.addf %856, %860 : vector<32x64xf32>
    %c3_471 = arith.constant 3 : index
    %c5_472 = arith.constant 5 : index
    %862 = memref.load %arg5[%c3_471, %c5_472] : memref<6x8xf32, #tpu.memory_space<smem>>
    %863 = vector.extract_strided_slice %73 {offsets = [0, 320], sizes = [32, 64], strides = [1, 1]} : vector<32x512xf32> to vector<32x64xf32>
    %864 = vector.broadcast %862 : f32 to vector<32x64xf32>
    %865 = arith.mulf %864, %863 : vector<32x64xf32>
    %866 = arith.addf %861, %865 : vector<32x64xf32>
    %c3_473 = arith.constant 3 : index
    %c6_474 = arith.constant 6 : index
    %867 = memref.load %arg5[%c3_473, %c6_474] : memref<6x8xf32, #tpu.memory_space<smem>>
    %868 = vector.extract_strided_slice %73 {offsets = [0, 384], sizes = [32, 64], strides = [1, 1]} : vector<32x512xf32> to vector<32x64xf32>
    %869 = vector.broadcast %867 : f32 to vector<32x64xf32>
    %870 = arith.mulf %869, %868 : vector<32x64xf32>
    %871 = arith.addf %866, %870 : vector<32x64xf32>
    %c3_475 = arith.constant 3 : index
    %c7_476 = arith.constant 7 : index
    %872 = memref.load %arg5[%c3_475, %c7_476] : memref<6x8xf32, #tpu.memory_space<smem>>
    %873 = vector.extract_strided_slice %73 {offsets = [0, 448], sizes = [32, 64], strides = [1, 1]} : vector<32x512xf32> to vector<32x64xf32>
    %874 = vector.broadcast %872 : f32 to vector<32x64xf32>
    %875 = arith.mulf %874, %873 : vector<32x64xf32>
    %876 = arith.addf %871, %875 : vector<32x64xf32>
    %877 = vector.extract_strided_slice %876 {offsets = [0, 0], sizes = [16, 64], strides = [1, 1]} : vector<32x64xf32> to vector<16x64xf32>
    %c2_477 = arith.constant 2 : index
    %c0_478 = arith.constant 0 : index
    %c3_479 = arith.constant 3 : index
    %c0_480 = arith.constant 0 : index
    %c0_481 = arith.constant 0 : index
    %878 = vector.load %arg7[%c2_477, %c0_478, %c3_479, %c0_480, %c0_481] : memref<4x2x6x16x64xf32, #tpu.memory_space<vmem>>, vector<1x1x1x16x64xf32>
    %879 = vector.shape_cast %878 : vector<1x1x1x16x64xf32> to vector<16x64xf32>
    %880 = vector.shape_cast %877 : vector<16x64xf32> to vector<1x1x1x16x64xf32>
    tpu.vector_store %arg7[%c2_477, %c0_478, %c3_479, %c0_480, %c0_481], %880 {strides = array<i32>} : memref<4x2x6x16x64xf32, #tpu.memory_space<vmem>>, vector<1x1x1x16x64xf32>,
    %881 = vector.extract_strided_slice %876 {offsets = [16, 0], sizes = [16, 64], strides = [1, 1]} : vector<32x64xf32> to vector<16x64xf32>
    %c2_482 = arith.constant 2 : index
    %c1_483 = arith.constant 1 : index
    %c3_484 = arith.constant 3 : index
    %c0_485 = arith.constant 0 : index
    %c0_486 = arith.constant 0 : index
    %882 = vector.load %arg7[%c2_482, %c1_483, %c3_484, %c0_485, %c0_486] : memref<4x2x6x16x64xf32, #tpu.memory_space<vmem>>, vector<1x1x1x16x64xf32>
    %883 = vector.shape_cast %882 : vector<1x1x1x16x64xf32> to vector<16x64xf32>
    %884 = vector.shape_cast %881 : vector<16x64xf32> to vector<1x1x1x16x64xf32>
    tpu.vector_store %arg7[%c2_482, %c1_483, %c3_484, %c0_485, %c0_486], %884 {strides = array<i32>} : memref<4x2x6x16x64xf32, #tpu.memory_space<vmem>>, vector<1x1x1x16x64xf32>,
    %c4_487 = arith.constant 4 : index
    %885 = memref.load %arg6[%c4_487] : memref<6xf32, #tpu.memory_space<smem>>
    %c4_488 = arith.constant 4 : index
    %c0_489 = arith.constant 0 : index
    %886 = memref.load %arg5[%c4_488, %c0_489] : memref<6x8xf32, #tpu.memory_space<smem>>
    %887 = vector.extract_strided_slice %73 {offsets = [0, 0], sizes = [32, 64], strides = [1, 1]} : vector<32x512xf32> to vector<32x64xf32>
    %888 = vector.broadcast %886 : f32 to vector<32x64xf32>
    %889 = arith.mulf %888, %887 : vector<32x64xf32>
    %890 = vector.broadcast %885 : f32 to vector<32x64xf32>
    %891 = arith.addf %890, %889 : vector<32x64xf32>
    %c4_490 = arith.constant 4 : index
    %c1_491 = arith.constant 1 : index
    %892 = memref.load %arg5[%c4_490, %c1_491] : memref<6x8xf32, #tpu.memory_space<smem>>
    %893 = vector.extract_strided_slice %73 {offsets = [0, 64], sizes = [32, 64], strides = [1, 1]} : vector<32x512xf32> to vector<32x64xf32>
    %894 = vector.broadcast %892 : f32 to vector<32x64xf32>
    %895 = arith.mulf %894, %893 : vector<32x64xf32>
    %896 = arith.addf %891, %895 : vector<32x64xf32>
    %c4_492 = arith.constant 4 : index
    %c2_493 = arith.constant 2 : index
    %897 = memref.load %arg5[%c4_492, %c2_493] : memref<6x8xf32, #tpu.memory_space<smem>>
    %898 = vector.extract_strided_slice %73 {offsets = [0, 128], sizes = [32, 64], strides = [1, 1]} : vector<32x512xf32> to vector<32x64xf32>
    %899 = vector.broadcast %897 : f32 to vector<32x64xf32>
    %900 = arith.mulf %899, %898 : vector<32x64xf32>
    %901 = arith.addf %896, %900 : vector<32x64xf32>
    %c4_494 = arith.constant 4 : index
    %c3_495 = arith.constant 3 : index
    %902 = memref.load %arg5[%c4_494, %c3_495] : memref<6x8xf32, #tpu.memory_space<smem>>
    %903 = vector.extract_strided_slice %73 {offsets = [0, 192], sizes = [32, 64], strides = [1, 1]} : vector<32x512xf32> to vector<32x64xf32>
    %904 = vector.broadcast %902 : f32 to vector<32x64xf32>
    %905 = arith.mulf %904, %903 : vector<32x64xf32>
    %906 = arith.addf %901, %905 : vector<32x64xf32>
    %c4_496 = arith.constant 4 : index
    %c4_497 = arith.constant 4 : index
    %907 = memref.load %arg5[%c4_496, %c4_497] : memref<6x8xf32, #tpu.memory_space<smem>>
    %908 = vector.extract_strided_slice %73 {offsets = [0, 256], sizes = [32, 64], strides = [1, 1]} : vector<32x512xf32> to vector<32x64xf32>
    %909 = vector.broadcast %907 : f32 to vector<32x64xf32>
    %910 = arith.mulf %909, %908 : vector<32x64xf32>
    %911 = arith.addf %906, %910 : vector<32x64xf32>
    %c4_498 = arith.constant 4 : index
    %c5_499 = arith.constant 5 : index
    %912 = memref.load %arg5[%c4_498, %c5_499] : memref<6x8xf32, #tpu.memory_space<smem>>
    %913 = vector.extract_strided_slice %73 {offsets = [0, 320], sizes = [32, 64], strides = [1, 1]} : vector<32x512xf32> to vector<32x64xf32>
    %914 = vector.broadcast %912 : f32 to vector<32x64xf32>
    %915 = arith.mulf %914, %913 : vector<32x64xf32>
    %916 = arith.addf %911, %915 : vector<32x64xf32>
    %c4_500 = arith.constant 4 : index
    %c6_501 = arith.constant 6 : index
    %917 = memref.load %arg5[%c4_500, %c6_501] : memref<6x8xf32, #tpu.memory_space<smem>>
    %918 = vector.extract_strided_slice %73 {offsets = [0, 384], sizes = [32, 64], strides = [1, 1]} : vector<32x512xf32> to vector<32x64xf32>
    %919 = vector.broadcast %917 : f32 to vector<32x64xf32>
    %920 = arith.mulf %919, %918 : vector<32x64xf32>
    %921 = arith.addf %916, %920 : vector<32x64xf32>
    %c4_502 = arith.constant 4 : index
    %c7_503 = arith.constant 7 : index
    %922 = memref.load %arg5[%c4_502, %c7_503] : memref<6x8xf32, #tpu.memory_space<smem>>
    %923 = vector.extract_strided_slice %73 {offsets = [0, 448], sizes = [32, 64], strides = [1, 1]} : vector<32x512xf32> to vector<32x64xf32>
    %924 = vector.broadcast %922 : f32 to vector<32x64xf32>
    %925 = arith.mulf %924, %923 : vector<32x64xf32>
    %926 = arith.addf %921, %925 : vector<32x64xf32>
    %927 = vector.extract_strided_slice %926 {offsets = [0, 0], sizes = [16, 64], strides = [1, 1]} : vector<32x64xf32> to vector<16x64xf32>
    %c2_504 = arith.constant 2 : index
    %c0_505 = arith.constant 0 : index
    %c4_506 = arith.constant 4 : index
    %c0_507 = arith.constant 0 : index
    %c0_508 = arith.constant 0 : index
    %928 = vector.load %arg7[%c2_504, %c0_505, %c4_506, %c0_507, %c0_508] : memref<4x2x6x16x64xf32, #tpu.memory_space<vmem>>, vector<1x1x1x16x64xf32>
    %929 = vector.shape_cast %928 : vector<1x1x1x16x64xf32> to vector<16x64xf32>
    %930 = vector.shape_cast %927 : vector<16x64xf32> to vector<1x1x1x16x64xf32>
    tpu.vector_store %arg7[%c2_504, %c0_505, %c4_506, %c0_507, %c0_508], %930 {strides = array<i32>} : memref<4x2x6x16x64xf32, #tpu.memory_space<vmem>>, vector<1x1x1x16x64xf32>,
    %931 = vector.extract_strided_slice %926 {offsets = [16, 0], sizes = [16, 64], strides = [1, 1]} : vector<32x64xf32> to vector<16x64xf32>
    %c2_509 = arith.constant 2 : index
    %c1_510 = arith.constant 1 : index
    %c4_511 = arith.constant 4 : index
    %c0_512 = arith.constant 0 : index
    %c0_513 = arith.constant 0 : index
    %932 = vector.load %arg7[%c2_509, %c1_510, %c4_511, %c0_512, %c0_513] : memref<4x2x6x16x64xf32, #tpu.memory_space<vmem>>, vector<1x1x1x16x64xf32>
    %933 = vector.shape_cast %932 : vector<1x1x1x16x64xf32> to vector<16x64xf32>
    %934 = vector.shape_cast %931 : vector<16x64xf32> to vector<1x1x1x16x64xf32>
    tpu.vector_store %arg7[%c2_509, %c1_510, %c4_511, %c0_512, %c0_513], %934 {strides = array<i32>} : memref<4x2x6x16x64xf32, #tpu.memory_space<vmem>>, vector<1x1x1x16x64xf32>,
    %c5_514 = arith.constant 5 : index
    %935 = memref.load %arg6[%c5_514] : memref<6xf32, #tpu.memory_space<smem>>
    %c5_515 = arith.constant 5 : index
    %c0_516 = arith.constant 0 : index
    %936 = memref.load %arg5[%c5_515, %c0_516] : memref<6x8xf32, #tpu.memory_space<smem>>
    %937 = vector.extract_strided_slice %73 {offsets = [0, 0], sizes = [32, 64], strides = [1, 1]} : vector<32x512xf32> to vector<32x64xf32>
    %938 = vector.broadcast %936 : f32 to vector<32x64xf32>
    %939 = arith.mulf %938, %937 : vector<32x64xf32>
    %940 = vector.broadcast %935 : f32 to vector<32x64xf32>
    %941 = arith.addf %940, %939 : vector<32x64xf32>
    %c5_517 = arith.constant 5 : index
    %c1_518 = arith.constant 1 : index
    %942 = memref.load %arg5[%c5_517, %c1_518] : memref<6x8xf32, #tpu.memory_space<smem>>
    %943 = vector.extract_strided_slice %73 {offsets = [0, 64], sizes = [32, 64], strides = [1, 1]} : vector<32x512xf32> to vector<32x64xf32>
    %944 = vector.broadcast %942 : f32 to vector<32x64xf32>
    %945 = arith.mulf %944, %943 : vector<32x64xf32>
    %946 = arith.addf %941, %945 : vector<32x64xf32>
    %c5_519 = arith.constant 5 : index
    %c2_520 = arith.constant 2 : index
    %947 = memref.load %arg5[%c5_519, %c2_520] : memref<6x8xf32, #tpu.memory_space<smem>>
    %948 = vector.extract_strided_slice %73 {offsets = [0, 128], sizes = [32, 64], strides = [1, 1]} : vector<32x512xf32> to vector<32x64xf32>
    %949 = vector.broadcast %947 : f32 to vector<32x64xf32>
    %950 = arith.mulf %949, %948 : vector<32x64xf32>
    %951 = arith.addf %946, %950 : vector<32x64xf32>
    %c5_521 = arith.constant 5 : index
    %c3_522 = arith.constant 3 : index
    %952 = memref.load %arg5[%c5_521, %c3_522] : memref<6x8xf32, #tpu.memory_space<smem>>
    %953 = vector.extract_strided_slice %73 {offsets = [0, 192], sizes = [32, 64], strides = [1, 1]} : vector<32x512xf32> to vector<32x64xf32>
    %954 = vector.broadcast %952 : f32 to vector<32x64xf32>
    %955 = arith.mulf %954, %953 : vector<32x64xf32>
    %956 = arith.addf %951, %955 : vector<32x64xf32>
    %c5_523 = arith.constant 5 : index
    %c4_524 = arith.constant 4 : index
    %957 = memref.load %arg5[%c5_523, %c4_524] : memref<6x8xf32, #tpu.memory_space<smem>>
    %958 = vector.extract_strided_slice %73 {offsets = [0, 256], sizes = [32, 64], strides = [1, 1]} : vector<32x512xf32> to vector<32x64xf32>
    %959 = vector.broadcast %957 : f32 to vector<32x64xf32>
    %960 = arith.mulf %959, %958 : vector<32x64xf32>
    %961 = arith.addf %956, %960 : vector<32x64xf32>
    %c5_525 = arith.constant 5 : index
    %c5_526 = arith.constant 5 : index
    %962 = memref.load %arg5[%c5_525, %c5_526] : memref<6x8xf32, #tpu.memory_space<smem>>
    %963 = vector.extract_strided_slice %73 {offsets = [0, 320], sizes = [32, 64], strides = [1, 1]} : vector<32x512xf32> to vector<32x64xf32>
    %964 = vector.broadcast %962 : f32 to vector<32x64xf32>
    %965 = arith.mulf %964, %963 : vector<32x64xf32>
    %966 = arith.addf %961, %965 : vector<32x64xf32>
    %c5_527 = arith.constant 5 : index
    %c6_528 = arith.constant 6 : index
    %967 = memref.load %arg5[%c5_527, %c6_528] : memref<6x8xf32, #tpu.memory_space<smem>>
    %968 = vector.extract_strided_slice %73 {offsets = [0, 384], sizes = [32, 64], strides = [1, 1]} : vector<32x512xf32> to vector<32x64xf32>
    %969 = vector.broadcast %967 : f32 to vector<32x64xf32>
    %970 = arith.mulf %969, %968 : vector<32x64xf32>
    %971 = arith.addf %966, %970 : vector<32x64xf32>
    %c5_529 = arith.constant 5 : index
    %c7_530 = arith.constant 7 : index
    %972 = memref.load %arg5[%c5_529, %c7_530] : memref<6x8xf32, #tpu.memory_space<smem>>
    %973 = vector.extract_strided_slice %73 {offsets = [0, 448], sizes = [32, 64], strides = [1, 1]} : vector<32x512xf32> to vector<32x64xf32>
    %974 = vector.broadcast %972 : f32 to vector<32x64xf32>
    %975 = arith.mulf %974, %973 : vector<32x64xf32>
    %976 = arith.addf %971, %975 : vector<32x64xf32>
    %977 = vector.extract_strided_slice %976 {offsets = [0, 0], sizes = [16, 64], strides = [1, 1]} : vector<32x64xf32> to vector<16x64xf32>
    %c2_531 = arith.constant 2 : index
    %c0_532 = arith.constant 0 : index
    %c5_533 = arith.constant 5 : index
    %c0_534 = arith.constant 0 : index
    %c0_535 = arith.constant 0 : index
    %978 = vector.load %arg7[%c2_531, %c0_532, %c5_533, %c0_534, %c0_535] : memref<4x2x6x16x64xf32, #tpu.memory_space<vmem>>, vector<1x1x1x16x64xf32>
    %979 = vector.shape_cast %978 : vector<1x1x1x16x64xf32> to vector<16x64xf32>
    %980 = vector.shape_cast %977 : vector<16x64xf32> to vector<1x1x1x16x64xf32>
    tpu.vector_store %arg7[%c2_531, %c0_532, %c5_533, %c0_534, %c0_535], %980 {strides = array<i32>} : memref<4x2x6x16x64xf32, #tpu.memory_space<vmem>>, vector<1x1x1x16x64xf32>,
    %981 = vector.extract_strided_slice %976 {offsets = [16, 0], sizes = [16, 64], strides = [1, 1]} : vector<32x64xf32> to vector<16x64xf32>
    %c2_536 = arith.constant 2 : index
    %c1_537 = arith.constant 1 : index
    %c5_538 = arith.constant 5 : index
    %c0_539 = arith.constant 0 : index
    %c0_540 = arith.constant 0 : index
    %982 = vector.load %arg7[%c2_536, %c1_537, %c5_538, %c0_539, %c0_540] : memref<4x2x6x16x64xf32, #tpu.memory_space<vmem>>, vector<1x1x1x16x64xf32>
    %983 = vector.shape_cast %982 : vector<1x1x1x16x64xf32> to vector<16x64xf32>
    %984 = vector.shape_cast %981 : vector<16x64xf32> to vector<1x1x1x16x64xf32>
    tpu.vector_store %arg7[%c2_536, %c1_537, %c5_538, %c0_539, %c0_540], %984 {strides = array<i32>} : memref<4x2x6x16x64xf32, #tpu.memory_space<vmem>>, vector<1x1x1x16x64xf32>,
    %c0_541 = arith.constant 0 : index
    %985 = memref.load %arg6[%c0_541] : memref<6xf32, #tpu.memory_space<smem>>
    %c0_542 = arith.constant 0 : index
    %c0_543 = arith.constant 0 : index
    %986 = memref.load %arg5[%c0_542, %c0_543] : memref<6x8xf32, #tpu.memory_space<smem>>
    %987 = vector.extract_strided_slice %84 {offsets = [0, 0], sizes = [32, 64], strides = [1, 1]} : vector<32x512xf32> to vector<32x64xf32>
    %988 = vector.broadcast %986 : f32 to vector<32x64xf32>
    %989 = arith.mulf %988, %987 : vector<32x64xf32>
    %990 = vector.broadcast %985 : f32 to vector<32x64xf32>
    %991 = arith.addf %990, %989 : vector<32x64xf32>
    %c0_544 = arith.constant 0 : index
    %c1_545 = arith.constant 1 : index
    %992 = memref.load %arg5[%c0_544, %c1_545] : memref<6x8xf32, #tpu.memory_space<smem>>
    %993 = vector.extract_strided_slice %84 {offsets = [0, 64], sizes = [32, 64], strides = [1, 1]} : vector<32x512xf32> to vector<32x64xf32>
    %994 = vector.broadcast %992 : f32 to vector<32x64xf32>
    %995 = arith.mulf %994, %993 : vector<32x64xf32>
    %996 = arith.addf %991, %995 : vector<32x64xf32>
    %c0_546 = arith.constant 0 : index
    %c2_547 = arith.constant 2 : index
    %997 = memref.load %arg5[%c0_546, %c2_547] : memref<6x8xf32, #tpu.memory_space<smem>>
    %998 = vector.extract_strided_slice %84 {offsets = [0, 128], sizes = [32, 64], strides = [1, 1]} : vector<32x512xf32> to vector<32x64xf32>
    %999 = vector.broadcast %997 : f32 to vector<32x64xf32>
    %1000 = arith.mulf %999, %998 : vector<32x64xf32>
    %1001 = arith.addf %996, %1000 : vector<32x64xf32>
    %c0_548 = arith.constant 0 : index
    %c3_549 = arith.constant 3 : index
    %1002 = memref.load %arg5[%c0_548, %c3_549] : memref<6x8xf32, #tpu.memory_space<smem>>
    %1003 = vector.extract_strided_slice %84 {offsets = [0, 192], sizes = [32, 64], strides = [1, 1]} : vector<32x512xf32> to vector<32x64xf32>
    %1004 = vector.broadcast %1002 : f32 to vector<32x64xf32>
    %1005 = arith.mulf %1004, %1003 : vector<32x64xf32>
    %1006 = arith.addf %1001, %1005 : vector<32x64xf32>
    %c0_550 = arith.constant 0 : index
    %c4_551 = arith.constant 4 : index
    %1007 = memref.load %arg5[%c0_550, %c4_551] : memref<6x8xf32, #tpu.memory_space<smem>>
    %1008 = vector.extract_strided_slice %84 {offsets = [0, 256], sizes = [32, 64], strides = [1, 1]} : vector<32x512xf32> to vector<32x64xf32>
    %1009 = vector.broadcast %1007 : f32 to vector<32x64xf32>
    %1010 = arith.mulf %1009, %1008 : vector<32x64xf32>
    %1011 = arith.addf %1006, %1010 : vector<32x64xf32>
    %c0_552 = arith.constant 0 : index
    %c5_553 = arith.constant 5 : index
    %1012 = memref.load %arg5[%c0_552, %c5_553] : memref<6x8xf32, #tpu.memory_space<smem>>
    %1013 = vector.extract_strided_slice %84 {offsets = [0, 320], sizes = [32, 64], strides = [1, 1]} : vector<32x512xf32> to vector<32x64xf32>
    %1014 = vector.broadcast %1012 : f32 to vector<32x64xf32>
    %1015 = arith.mulf %1014, %1013 : vector<32x64xf32>
    %1016 = arith.addf %1011, %1015 : vector<32x64xf32>
    %c0_554 = arith.constant 0 : index
    %c6_555 = arith.constant 6 : index
    %1017 = memref.load %arg5[%c0_554, %c6_555] : memref<6x8xf32, #tpu.memory_space<smem>>
    %1018 = vector.extract_strided_slice %84 {offsets = [0, 384], sizes = [32, 64], strides = [1, 1]} : vector<32x512xf32> to vector<32x64xf32>
    %1019 = vector.broadcast %1017 : f32 to vector<32x64xf32>
    %1020 = arith.mulf %1019, %1018 : vector<32x64xf32>
    %1021 = arith.addf %1016, %1020 : vector<32x64xf32>
    %c0_556 = arith.constant 0 : index
    %c7_557 = arith.constant 7 : index
    %1022 = memref.load %arg5[%c0_556, %c7_557] : memref<6x8xf32, #tpu.memory_space<smem>>
    %1023 = vector.extract_strided_slice %84 {offsets = [0, 448], sizes = [32, 64], strides = [1, 1]} : vector<32x512xf32> to vector<32x64xf32>
    %1024 = vector.broadcast %1022 : f32 to vector<32x64xf32>
    %1025 = arith.mulf %1024, %1023 : vector<32x64xf32>
    %1026 = arith.addf %1021, %1025 : vector<32x64xf32>
    %1027 = vector.extract_strided_slice %1026 {offsets = [0, 0], sizes = [16, 64], strides = [1, 1]} : vector<32x64xf32> to vector<16x64xf32>
    %c3_558 = arith.constant 3 : index
    %c0_559 = arith.constant 0 : index
    %c0_560 = arith.constant 0 : index
    %c0_561 = arith.constant 0 : index
    %c0_562 = arith.constant 0 : index
    %1028 = vector.load %arg7[%c3_558, %c0_559, %c0_560, %c0_561, %c0_562] : memref<4x2x6x16x64xf32, #tpu.memory_space<vmem>>, vector<1x1x1x16x64xf32>
    %1029 = vector.shape_cast %1028 : vector<1x1x1x16x64xf32> to vector<16x64xf32>
    %1030 = vector.shape_cast %1027 : vector<16x64xf32> to vector<1x1x1x16x64xf32>
    tpu.vector_store %arg7[%c3_558, %c0_559, %c0_560, %c0_561, %c0_562], %1030 {strides = array<i32>} : memref<4x2x6x16x64xf32, #tpu.memory_space<vmem>>, vector<1x1x1x16x64xf32>,
    %1031 = vector.extract_strided_slice %1026 {offsets = [16, 0], sizes = [16, 64], strides = [1, 1]} : vector<32x64xf32> to vector<16x64xf32>
    %c3_563 = arith.constant 3 : index
    %c1_564 = arith.constant 1 : index
    %c0_565 = arith.constant 0 : index
    %c0_566 = arith.constant 0 : index
    %c0_567 = arith.constant 0 : index
    %1032 = vector.load %arg7[%c3_563, %c1_564, %c0_565, %c0_566, %c0_567] : memref<4x2x6x16x64xf32, #tpu.memory_space<vmem>>, vector<1x1x1x16x64xf32>
    %1033 = vector.shape_cast %1032 : vector<1x1x1x16x64xf32> to vector<16x64xf32>
    %1034 = vector.shape_cast %1031 : vector<16x64xf32> to vector<1x1x1x16x64xf32>
    tpu.vector_store %arg7[%c3_563, %c1_564, %c0_565, %c0_566, %c0_567], %1034 {strides = array<i32>} : memref<4x2x6x16x64xf32, #tpu.memory_space<vmem>>, vector<1x1x1x16x64xf32>,
    %c1_568 = arith.constant 1 : index
    %1035 = memref.load %arg6[%c1_568] : memref<6xf32, #tpu.memory_space<smem>>
    %c1_569 = arith.constant 1 : index
    %c0_570 = arith.constant 0 : index
    %1036 = memref.load %arg5[%c1_569, %c0_570] : memref<6x8xf32, #tpu.memory_space<smem>>
    %1037 = vector.extract_strided_slice %84 {offsets = [0, 0], sizes = [32, 64], strides = [1, 1]} : vector<32x512xf32> to vector<32x64xf32>
    %1038 = vector.broadcast %1036 : f32 to vector<32x64xf32>
    %1039 = arith.mulf %1038, %1037 : vector<32x64xf32>
    %1040 = vector.broadcast %1035 : f32 to vector<32x64xf32>
    %1041 = arith.addf %1040, %1039 : vector<32x64xf32>
    %c1_571 = arith.constant 1 : index
    %c1_572 = arith.constant 1 : index
    %1042 = memref.load %arg5[%c1_571, %c1_572] : memref<6x8xf32, #tpu.memory_space<smem>>
    %1043 = vector.extract_strided_slice %84 {offsets = [0, 64], sizes = [32, 64], strides = [1, 1]} : vector<32x512xf32> to vector<32x64xf32>
    %1044 = vector.broadcast %1042 : f32 to vector<32x64xf32>
    %1045 = arith.mulf %1044, %1043 : vector<32x64xf32>
    %1046 = arith.addf %1041, %1045 : vector<32x64xf32>
    %c1_573 = arith.constant 1 : index
    %c2_574 = arith.constant 2 : index
    %1047 = memref.load %arg5[%c1_573, %c2_574] : memref<6x8xf32, #tpu.memory_space<smem>>
    %1048 = vector.extract_strided_slice %84 {offsets = [0, 128], sizes = [32, 64], strides = [1, 1]} : vector<32x512xf32> to vector<32x64xf32>
    %1049 = vector.broadcast %1047 : f32 to vector<32x64xf32>
    %1050 = arith.mulf %1049, %1048 : vector<32x64xf32>
    %1051 = arith.addf %1046, %1050 : vector<32x64xf32>
    %c1_575 = arith.constant 1 : index
    %c3_576 = arith.constant 3 : index
    %1052 = memref.load %arg5[%c1_575, %c3_576] : memref<6x8xf32, #tpu.memory_space<smem>>
    %1053 = vector.extract_strided_slice %84 {offsets = [0, 192], sizes = [32, 64], strides = [1, 1]} : vector<32x512xf32> to vector<32x64xf32>
    %1054 = vector.broadcast %1052 : f32 to vector<32x64xf32>
    %1055 = arith.mulf %1054, %1053 : vector<32x64xf32>
    %1056 = arith.addf %1051, %1055 : vector<32x64xf32>
    %c1_577 = arith.constant 1 : index
    %c4_578 = arith.constant 4 : index
    %1057 = memref.load %arg5[%c1_577, %c4_578] : memref<6x8xf32, #tpu.memory_space<smem>>
    %1058 = vector.extract_strided_slice %84 {offsets = [0, 256], sizes = [32, 64], strides = [1, 1]} : vector<32x512xf32> to vector<32x64xf32>
    %1059 = vector.broadcast %1057 : f32 to vector<32x64xf32>
    %1060 = arith.mulf %1059, %1058 : vector<32x64xf32>
    %1061 = arith.addf %1056, %1060 : vector<32x64xf32>
    %c1_579 = arith.constant 1 : index
    %c5_580 = arith.constant 5 : index
    %1062 = memref.load %arg5[%c1_579, %c5_580] : memref<6x8xf32, #tpu.memory_space<smem>>
    %1063 = vector.extract_strided_slice %84 {offsets = [0, 320], sizes = [32, 64], strides = [1, 1]} : vector<32x512xf32> to vector<32x64xf32>
    %1064 = vector.broadcast %1062 : f32 to vector<32x64xf32>
    %1065 = arith.mulf %1064, %1063 : vector<32x64xf32>
    %1066 = arith.addf %1061, %1065 : vector<32x64xf32>
    %c1_581 = arith.constant 1 : index
    %c6_582 = arith.constant 6 : index
    %1067 = memref.load %arg5[%c1_581, %c6_582] : memref<6x8xf32, #tpu.memory_space<smem>>
    %1068 = vector.extract_strided_slice %84 {offsets = [0, 384], sizes = [32, 64], strides = [1, 1]} : vector<32x512xf32> to vector<32x64xf32>
    %1069 = vector.broadcast %1067 : f32 to vector<32x64xf32>
    %1070 = arith.mulf %1069, %1068 : vector<32x64xf32>
    %1071 = arith.addf %1066, %1070 : vector<32x64xf32>
    %c1_583 = arith.constant 1 : index
    %c7_584 = arith.constant 7 : index
    %1072 = memref.load %arg5[%c1_583, %c7_584] : memref<6x8xf32, #tpu.memory_space<smem>>
    %1073 = vector.extract_strided_slice %84 {offsets = [0, 448], sizes = [32, 64], strides = [1, 1]} : vector<32x512xf32> to vector<32x64xf32>
    %1074 = vector.broadcast %1072 : f32 to vector<32x64xf32>
    %1075 = arith.mulf %1074, %1073 : vector<32x64xf32>
    %1076 = arith.addf %1071, %1075 : vector<32x64xf32>
    %1077 = vector.extract_strided_slice %1076 {offsets = [0, 0], sizes = [16, 64], strides = [1, 1]} : vector<32x64xf32> to vector<16x64xf32>
    %c3_585 = arith.constant 3 : index
    %c0_586 = arith.constant 0 : index
    %c1_587 = arith.constant 1 : index
    %c0_588 = arith.constant 0 : index
    %c0_589 = arith.constant 0 : index
    %1078 = vector.load %arg7[%c3_585, %c0_586, %c1_587, %c0_588, %c0_589] : memref<4x2x6x16x64xf32, #tpu.memory_space<vmem>>, vector<1x1x1x16x64xf32>
    %1079 = vector.shape_cast %1078 : vector<1x1x1x16x64xf32> to vector<16x64xf32>
    %1080 = vector.shape_cast %1077 : vector<16x64xf32> to vector<1x1x1x16x64xf32>
    tpu.vector_store %arg7[%c3_585, %c0_586, %c1_587, %c0_588, %c0_589], %1080 {strides = array<i32>} : memref<4x2x6x16x64xf32, #tpu.memory_space<vmem>>, vector<1x1x1x16x64xf32>,
    %1081 = vector.extract_strided_slice %1076 {offsets = [16, 0], sizes = [16, 64], strides = [1, 1]} : vector<32x64xf32> to vector<16x64xf32>
    %c3_590 = arith.constant 3 : index
    %c1_591 = arith.constant 1 : index
    %c1_592 = arith.constant 1 : index
    %c0_593 = arith.constant 0 : index
    %c0_594 = arith.constant 0 : index
    %1082 = vector.load %arg7[%c3_590, %c1_591, %c1_592, %c0_593, %c0_594] : memref<4x2x6x16x64xf32, #tpu.memory_space<vmem>>, vector<1x1x1x16x64xf32>
    %1083 = vector.shape_cast %1082 : vector<1x1x1x16x64xf32> to vector<16x64xf32>
    %1084 = vector.shape_cast %1081 : vector<16x64xf32> to vector<1x1x1x16x64xf32>
    tpu.vector_store %arg7[%c3_590, %c1_591, %c1_592, %c0_593, %c0_594], %1084 {strides = array<i32>} : memref<4x2x6x16x64xf32, #tpu.memory_space<vmem>>, vector<1x1x1x16x64xf32>,
    %c2_595 = arith.constant 2 : index
    %1085 = memref.load %arg6[%c2_595] : memref<6xf32, #tpu.memory_space<smem>>
    %c2_596 = arith.constant 2 : index
    %c0_597 = arith.constant 0 : index
    %1086 = memref.load %arg5[%c2_596, %c0_597] : memref<6x8xf32, #tpu.memory_space<smem>>
    %1087 = vector.extract_strided_slice %84 {offsets = [0, 0], sizes = [32, 64], strides = [1, 1]} : vector<32x512xf32> to vector<32x64xf32>
    %1088 = vector.broadcast %1086 : f32 to vector<32x64xf32>
    %1089 = arith.mulf %1088, %1087 : vector<32x64xf32>
    %1090 = vector.broadcast %1085 : f32 to vector<32x64xf32>
    %1091 = arith.addf %1090, %1089 : vector<32x64xf32>
    %c2_598 = arith.constant 2 : index
    %c1_599 = arith.constant 1 : index
    %1092 = memref.load %arg5[%c2_598, %c1_599] : memref<6x8xf32, #tpu.memory_space<smem>>
    %1093 = vector.extract_strided_slice %84 {offsets = [0, 64], sizes = [32, 64], strides = [1, 1]} : vector<32x512xf32> to vector<32x64xf32>
    %1094 = vector.broadcast %1092 : f32 to vector<32x64xf32>
    %1095 = arith.mulf %1094, %1093 : vector<32x64xf32>
    %1096 = arith.addf %1091, %1095 : vector<32x64xf32>
    %c2_600 = arith.constant 2 : index
    %c2_601 = arith.constant 2 : index
    %1097 = memref.load %arg5[%c2_600, %c2_601] : memref<6x8xf32, #tpu.memory_space<smem>>
    %1098 = vector.extract_strided_slice %84 {offsets = [0, 128], sizes = [32, 64], strides = [1, 1]} : vector<32x512xf32> to vector<32x64xf32>
    %1099 = vector.broadcast %1097 : f32 to vector<32x64xf32>
    %1100 = arith.mulf %1099, %1098 : vector<32x64xf32>
    %1101 = arith.addf %1096, %1100 : vector<32x64xf32>
    %c2_602 = arith.constant 2 : index
    %c3_603 = arith.constant 3 : index
    %1102 = memref.load %arg5[%c2_602, %c3_603] : memref<6x8xf32, #tpu.memory_space<smem>>
    %1103 = vector.extract_strided_slice %84 {offsets = [0, 192], sizes = [32, 64], strides = [1, 1]} : vector<32x512xf32> to vector<32x64xf32>
    %1104 = vector.broadcast %1102 : f32 to vector<32x64xf32>
    %1105 = arith.mulf %1104, %1103 : vector<32x64xf32>
    %1106 = arith.addf %1101, %1105 : vector<32x64xf32>
    %c2_604 = arith.constant 2 : index
    %c4_605 = arith.constant 4 : index
    %1107 = memref.load %arg5[%c2_604, %c4_605] : memref<6x8xf32, #tpu.memory_space<smem>>
    %1108 = vector.extract_strided_slice %84 {offsets = [0, 256], sizes = [32, 64], strides = [1, 1]} : vector<32x512xf32> to vector<32x64xf32>
    %1109 = vector.broadcast %1107 : f32 to vector<32x64xf32>
    %1110 = arith.mulf %1109, %1108 : vector<32x64xf32>
    %1111 = arith.addf %1106, %1110 : vector<32x64xf32>
    %c2_606 = arith.constant 2 : index
    %c5_607 = arith.constant 5 : index
    %1112 = memref.load %arg5[%c2_606, %c5_607] : memref<6x8xf32, #tpu.memory_space<smem>>
    %1113 = vector.extract_strided_slice %84 {offsets = [0, 320], sizes = [32, 64], strides = [1, 1]} : vector<32x512xf32> to vector<32x64xf32>
    %1114 = vector.broadcast %1112 : f32 to vector<32x64xf32>
    %1115 = arith.mulf %1114, %1113 : vector<32x64xf32>
    %1116 = arith.addf %1111, %1115 : vector<32x64xf32>
    %c2_608 = arith.constant 2 : index
    %c6_609 = arith.constant 6 : index
    %1117 = memref.load %arg5[%c2_608, %c6_609] : memref<6x8xf32, #tpu.memory_space<smem>>
    %1118 = vector.extract_strided_slice %84 {offsets = [0, 384], sizes = [32, 64], strides = [1, 1]} : vector<32x512xf32> to vector<32x64xf32>
    %1119 = vector.broadcast %1117 : f32 to vector<32x64xf32>
    %1120 = arith.mulf %1119, %1118 : vector<32x64xf32>
    %1121 = arith.addf %1116, %1120 : vector<32x64xf32>
    %c2_610 = arith.constant 2 : index
    %c7_611 = arith.constant 7 : index
    %1122 = memref.load %arg5[%c2_610, %c7_611] : memref<6x8xf32, #tpu.memory_space<smem>>
    %1123 = vector.extract_strided_slice %84 {offsets = [0, 448], sizes = [32, 64], strides = [1, 1]} : vector<32x512xf32> to vector<32x64xf32>
    %1124 = vector.broadcast %1122 : f32 to vector<32x64xf32>
    %1125 = arith.mulf %1124, %1123 : vector<32x64xf32>
    %1126 = arith.addf %1121, %1125 : vector<32x64xf32>
    %1127 = vector.extract_strided_slice %1126 {offsets = [0, 0], sizes = [16, 64], strides = [1, 1]} : vector<32x64xf32> to vector<16x64xf32>
    %c3_612 = arith.constant 3 : index
    %c0_613 = arith.constant 0 : index
    %c2_614 = arith.constant 2 : index
    %c0_615 = arith.constant 0 : index
    %c0_616 = arith.constant 0 : index
    %1128 = vector.load %arg7[%c3_612, %c0_613, %c2_614, %c0_615, %c0_616] : memref<4x2x6x16x64xf32, #tpu.memory_space<vmem>>, vector<1x1x1x16x64xf32>
    %1129 = vector.shape_cast %1128 : vector<1x1x1x16x64xf32> to vector<16x64xf32>
    %1130 = vector.shape_cast %1127 : vector<16x64xf32> to vector<1x1x1x16x64xf32>
    tpu.vector_store %arg7[%c3_612, %c0_613, %c2_614, %c0_615, %c0_616], %1130 {strides = array<i32>} : memref<4x2x6x16x64xf32, #tpu.memory_space<vmem>>, vector<1x1x1x16x64xf32>,
    %1131 = vector.extract_strided_slice %1126 {offsets = [16, 0], sizes = [16, 64], strides = [1, 1]} : vector<32x64xf32> to vector<16x64xf32>
    %c3_617 = arith.constant 3 : index
    %c1_618 = arith.constant 1 : index
    %c2_619 = arith.constant 2 : index
    %c0_620 = arith.constant 0 : index
    %c0_621 = arith.constant 0 : index
    %1132 = vector.load %arg7[%c3_617, %c1_618, %c2_619, %c0_620, %c0_621] : memref<4x2x6x16x64xf32, #tpu.memory_space<vmem>>, vector<1x1x1x16x64xf32>
    %1133 = vector.shape_cast %1132 : vector<1x1x1x16x64xf32> to vector<16x64xf32>
    %1134 = vector.shape_cast %1131 : vector<16x64xf32> to vector<1x1x1x16x64xf32>
    tpu.vector_store %arg7[%c3_617, %c1_618, %c2_619, %c0_620, %c0_621], %1134 {strides = array<i32>} : memref<4x2x6x16x64xf32, #tpu.memory_space<vmem>>, vector<1x1x1x16x64xf32>,
    %c3_622 = arith.constant 3 : index
    %1135 = memref.load %arg6[%c3_622] : memref<6xf32, #tpu.memory_space<smem>>
    %c3_623 = arith.constant 3 : index
    %c0_624 = arith.constant 0 : index
    %1136 = memref.load %arg5[%c3_623, %c0_624] : memref<6x8xf32, #tpu.memory_space<smem>>
    %1137 = vector.extract_strided_slice %84 {offsets = [0, 0], sizes = [32, 64], strides = [1, 1]} : vector<32x512xf32> to vector<32x64xf32>
    %1138 = vector.broadcast %1136 : f32 to vector<32x64xf32>
    %1139 = arith.mulf %1138, %1137 : vector<32x64xf32>
    %1140 = vector.broadcast %1135 : f32 to vector<32x64xf32>
    %1141 = arith.addf %1140, %1139 : vector<32x64xf32>
    %c3_625 = arith.constant 3 : index
    %c1_626 = arith.constant 1 : index
    %1142 = memref.load %arg5[%c3_625, %c1_626] : memref<6x8xf32, #tpu.memory_space<smem>>
    %1143 = vector.extract_strided_slice %84 {offsets = [0, 64], sizes = [32, 64], strides = [1, 1]} : vector<32x512xf32> to vector<32x64xf32>
    %1144 = vector.broadcast %1142 : f32 to vector<32x64xf32>
    %1145 = arith.mulf %1144, %1143 : vector<32x64xf32>
    %1146 = arith.addf %1141, %1145 : vector<32x64xf32>
    %c3_627 = arith.constant 3 : index
    %c2_628 = arith.constant 2 : index
    %1147 = memref.load %arg5[%c3_627, %c2_628] : memref<6x8xf32, #tpu.memory_space<smem>>
    %1148 = vector.extract_strided_slice %84 {offsets = [0, 128], sizes = [32, 64], strides = [1, 1]} : vector<32x512xf32> to vector<32x64xf32>
    %1149 = vector.broadcast %1147 : f32 to vector<32x64xf32>
    %1150 = arith.mulf %1149, %1148 : vector<32x64xf32>
    %1151 = arith.addf %1146, %1150 : vector<32x64xf32>
    %c3_629 = arith.constant 3 : index
    %c3_630 = arith.constant 3 : index
    %1152 = memref.load %arg5[%c3_629, %c3_630] : memref<6x8xf32, #tpu.memory_space<smem>>
    %1153 = vector.extract_strided_slice %84 {offsets = [0, 192], sizes = [32, 64], strides = [1, 1]} : vector<32x512xf32> to vector<32x64xf32>
    %1154 = vector.broadcast %1152 : f32 to vector<32x64xf32>
    %1155 = arith.mulf %1154, %1153 : vector<32x64xf32>
    %1156 = arith.addf %1151, %1155 : vector<32x64xf32>
    %c3_631 = arith.constant 3 : index
    %c4_632 = arith.constant 4 : index
    %1157 = memref.load %arg5[%c3_631, %c4_632] : memref<6x8xf32, #tpu.memory_space<smem>>
    %1158 = vector.extract_strided_slice %84 {offsets = [0, 256], sizes = [32, 64], strides = [1, 1]} : vector<32x512xf32> to vector<32x64xf32>
    %1159 = vector.broadcast %1157 : f32 to vector<32x64xf32>
    %1160 = arith.mulf %1159, %1158 : vector<32x64xf32>
    %1161 = arith.addf %1156, %1160 : vector<32x64xf32>
    %c3_633 = arith.constant 3 : index
    %c5_634 = arith.constant 5 : index
    %1162 = memref.load %arg5[%c3_633, %c5_634] : memref<6x8xf32, #tpu.memory_space<smem>>
    %1163 = vector.extract_strided_slice %84 {offsets = [0, 320], sizes = [32, 64], strides = [1, 1]} : vector<32x512xf32> to vector<32x64xf32>
    %1164 = vector.broadcast %1162 : f32 to vector<32x64xf32>
    %1165 = arith.mulf %1164, %1163 : vector<32x64xf32>
    %1166 = arith.addf %1161, %1165 : vector<32x64xf32>
    %c3_635 = arith.constant 3 : index
    %c6_636 = arith.constant 6 : index
    %1167 = memref.load %arg5[%c3_635, %c6_636] : memref<6x8xf32, #tpu.memory_space<smem>>
    %1168 = vector.extract_strided_slice %84 {offsets = [0, 384], sizes = [32, 64], strides = [1, 1]} : vector<32x512xf32> to vector<32x64xf32>
    %1169 = vector.broadcast %1167 : f32 to vector<32x64xf32>
    %1170 = arith.mulf %1169, %1168 : vector<32x64xf32>
    %1171 = arith.addf %1166, %1170 : vector<32x64xf32>
    %c3_637 = arith.constant 3 : index
    %c7_638 = arith.constant 7 : index
    %1172 = memref.load %arg5[%c3_637, %c7_638] : memref<6x8xf32, #tpu.memory_space<smem>>
    %1173 = vector.extract_strided_slice %84 {offsets = [0, 448], sizes = [32, 64], strides = [1, 1]} : vector<32x512xf32> to vector<32x64xf32>
    %1174 = vector.broadcast %1172 : f32 to vector<32x64xf32>
    %1175 = arith.mulf %1174, %1173 : vector<32x64xf32>
    %1176 = arith.addf %1171, %1175 : vector<32x64xf32>
    %1177 = vector.extract_strided_slice %1176 {offsets = [0, 0], sizes = [16, 64], strides = [1, 1]} : vector<32x64xf32> to vector<16x64xf32>
    %c3_639 = arith.constant 3 : index
    %c0_640 = arith.constant 0 : index
    %c3_641 = arith.constant 3 : index
    %c0_642 = arith.constant 0 : index
    %c0_643 = arith.constant 0 : index
    %1178 = vector.load %arg7[%c3_639, %c0_640, %c3_641, %c0_642, %c0_643] : memref<4x2x6x16x64xf32, #tpu.memory_space<vmem>>, vector<1x1x1x16x64xf32>
    %1179 = vector.shape_cast %1178 : vector<1x1x1x16x64xf32> to vector<16x64xf32>
    %1180 = vector.shape_cast %1177 : vector<16x64xf32> to vector<1x1x1x16x64xf32>
    tpu.vector_store %arg7[%c3_639, %c0_640, %c3_641, %c0_642, %c0_643], %1180 {strides = array<i32>} : memref<4x2x6x16x64xf32, #tpu.memory_space<vmem>>, vector<1x1x1x16x64xf32>,
    %1181 = vector.extract_strided_slice %1176 {offsets = [16, 0], sizes = [16, 64], strides = [1, 1]} : vector<32x64xf32> to vector<16x64xf32>
    %c3_644 = arith.constant 3 : index
    %c1_645 = arith.constant 1 : index
    %c3_646 = arith.constant 3 : index
    %c0_647 = arith.constant 0 : index
    %c0_648 = arith.constant 0 : index
    %1182 = vector.load %arg7[%c3_644, %c1_645, %c3_646, %c0_647, %c0_648] : memref<4x2x6x16x64xf32, #tpu.memory_space<vmem>>, vector<1x1x1x16x64xf32>
    %1183 = vector.shape_cast %1182 : vector<1x1x1x16x64xf32> to vector<16x64xf32>
    %1184 = vector.shape_cast %1181 : vector<16x64xf32> to vector<1x1x1x16x64xf32>
    tpu.vector_store %arg7[%c3_644, %c1_645, %c3_646, %c0_647, %c0_648], %1184 {strides = array<i32>} : memref<4x2x6x16x64xf32, #tpu.memory_space<vmem>>, vector<1x1x1x16x64xf32>,
    %c4_649 = arith.constant 4 : index
    %1185 = memref.load %arg6[%c4_649] : memref<6xf32, #tpu.memory_space<smem>>
    %c4_650 = arith.constant 4 : index
    %c0_651 = arith.constant 0 : index
    %1186 = memref.load %arg5[%c4_650, %c0_651] : memref<6x8xf32, #tpu.memory_space<smem>>
    %1187 = vector.extract_strided_slice %84 {offsets = [0, 0], sizes = [32, 64], strides = [1, 1]} : vector<32x512xf32> to vector<32x64xf32>
    %1188 = vector.broadcast %1186 : f32 to vector<32x64xf32>
    %1189 = arith.mulf %1188, %1187 : vector<32x64xf32>
    %1190 = vector.broadcast %1185 : f32 to vector<32x64xf32>
    %1191 = arith.addf %1190, %1189 : vector<32x64xf32>
    %c4_652 = arith.constant 4 : index
    %c1_653 = arith.constant 1 : index
    %1192 = memref.load %arg5[%c4_652, %c1_653] : memref<6x8xf32, #tpu.memory_space<smem>>
    %1193 = vector.extract_strided_slice %84 {offsets = [0, 64], sizes = [32, 64], strides = [1, 1]} : vector<32x512xf32> to vector<32x64xf32>
    %1194 = vector.broadcast %1192 : f32 to vector<32x64xf32>
    %1195 = arith.mulf %1194, %1193 : vector<32x64xf32>
    %1196 = arith.addf %1191, %1195 : vector<32x64xf32>
    %c4_654 = arith.constant 4 : index
    %c2_655 = arith.constant 2 : index
    %1197 = memref.load %arg5[%c4_654, %c2_655] : memref<6x8xf32, #tpu.memory_space<smem>>
    %1198 = vector.extract_strided_slice %84 {offsets = [0, 128], sizes = [32, 64], strides = [1, 1]} : vector<32x512xf32> to vector<32x64xf32>
    %1199 = vector.broadcast %1197 : f32 to vector<32x64xf32>
    %1200 = arith.mulf %1199, %1198 : vector<32x64xf32>
    %1201 = arith.addf %1196, %1200 : vector<32x64xf32>
    %c4_656 = arith.constant 4 : index
    %c3_657 = arith.constant 3 : index
    %1202 = memref.load %arg5[%c4_656, %c3_657] : memref<6x8xf32, #tpu.memory_space<smem>>
    %1203 = vector.extract_strided_slice %84 {offsets = [0, 192], sizes = [32, 64], strides = [1, 1]} : vector<32x512xf32> to vector<32x64xf32>
    %1204 = vector.broadcast %1202 : f32 to vector<32x64xf32>
    %1205 = arith.mulf %1204, %1203 : vector<32x64xf32>
    %1206 = arith.addf %1201, %1205 : vector<32x64xf32>
    %c4_658 = arith.constant 4 : index
    %c4_659 = arith.constant 4 : index
    %1207 = memref.load %arg5[%c4_658, %c4_659] : memref<6x8xf32, #tpu.memory_space<smem>>
    %1208 = vector.extract_strided_slice %84 {offsets = [0, 256], sizes = [32, 64], strides = [1, 1]} : vector<32x512xf32> to vector<32x64xf32>
    %1209 = vector.broadcast %1207 : f32 to vector<32x64xf32>
    %1210 = arith.mulf %1209, %1208 : vector<32x64xf32>
    %1211 = arith.addf %1206, %1210 : vector<32x64xf32>
    %c4_660 = arith.constant 4 : index
    %c5_661 = arith.constant 5 : index
    %1212 = memref.load %arg5[%c4_660, %c5_661] : memref<6x8xf32, #tpu.memory_space<smem>>
    %1213 = vector.extract_strided_slice %84 {offsets = [0, 320], sizes = [32, 64], strides = [1, 1]} : vector<32x512xf32> to vector<32x64xf32>
    %1214 = vector.broadcast %1212 : f32 to vector<32x64xf32>
    %1215 = arith.mulf %1214, %1213 : vector<32x64xf32>
    %1216 = arith.addf %1211, %1215 : vector<32x64xf32>
    %c4_662 = arith.constant 4 : index
    %c6_663 = arith.constant 6 : index
    %1217 = memref.load %arg5[%c4_662, %c6_663] : memref<6x8xf32, #tpu.memory_space<smem>>
    %1218 = vector.extract_strided_slice %84 {offsets = [0, 384], sizes = [32, 64], strides = [1, 1]} : vector<32x512xf32> to vector<32x64xf32>
    %1219 = vector.broadcast %1217 : f32 to vector<32x64xf32>
    %1220 = arith.mulf %1219, %1218 : vector<32x64xf32>
    %1221 = arith.addf %1216, %1220 : vector<32x64xf32>
    %c4_664 = arith.constant 4 : index
    %c7_665 = arith.constant 7 : index
    %1222 = memref.load %arg5[%c4_664, %c7_665] : memref<6x8xf32, #tpu.memory_space<smem>>
    %1223 = vector.extract_strided_slice %84 {offsets = [0, 448], sizes = [32, 64], strides = [1, 1]} : vector<32x512xf32> to vector<32x64xf32>
    %1224 = vector.broadcast %1222 : f32 to vector<32x64xf32>
    %1225 = arith.mulf %1224, %1223 : vector<32x64xf32>
    %1226 = arith.addf %1221, %1225 : vector<32x64xf32>
    %1227 = vector.extract_strided_slice %1226 {offsets = [0, 0], sizes = [16, 64], strides = [1, 1]} : vector<32x64xf32> to vector<16x64xf32>
    %c3_666 = arith.constant 3 : index
    %c0_667 = arith.constant 0 : index
    %c4_668 = arith.constant 4 : index
    %c0_669 = arith.constant 0 : index
    %c0_670 = arith.constant 0 : index
    %1228 = vector.load %arg7[%c3_666, %c0_667, %c4_668, %c0_669, %c0_670] : memref<4x2x6x16x64xf32, #tpu.memory_space<vmem>>, vector<1x1x1x16x64xf32>
    %1229 = vector.shape_cast %1228 : vector<1x1x1x16x64xf32> to vector<16x64xf32>
    %1230 = vector.shape_cast %1227 : vector<16x64xf32> to vector<1x1x1x16x64xf32>
    tpu.vector_store %arg7[%c3_666, %c0_667, %c4_668, %c0_669, %c0_670], %1230 {strides = array<i32>} : memref<4x2x6x16x64xf32, #tpu.memory_space<vmem>>, vector<1x1x1x16x64xf32>,
    %1231 = vector.extract_strided_slice %1226 {offsets = [16, 0], sizes = [16, 64], strides = [1, 1]} : vector<32x64xf32> to vector<16x64xf32>
    %c3_671 = arith.constant 3 : index
    %c1_672 = arith.constant 1 : index
    %c4_673 = arith.constant 4 : index
    %c0_674 = arith.constant 0 : index
    %c0_675 = arith.constant 0 : index
    %1232 = vector.load %arg7[%c3_671, %c1_672, %c4_673, %c0_674, %c0_675] : memref<4x2x6x16x64xf32, #tpu.memory_space<vmem>>, vector<1x1x1x16x64xf32>
    %1233 = vector.shape_cast %1232 : vector<1x1x1x16x64xf32> to vector<16x64xf32>
    %1234 = vector.shape_cast %1231 : vector<16x64xf32> to vector<1x1x1x16x64xf32>
    tpu.vector_store %arg7[%c3_671, %c1_672, %c4_673, %c0_674, %c0_675], %1234 {strides = array<i32>} : memref<4x2x6x16x64xf32, #tpu.memory_space<vmem>>, vector<1x1x1x16x64xf32>,
    %c5_676 = arith.constant 5 : index
    %1235 = memref.load %arg6[%c5_676] : memref<6xf32, #tpu.memory_space<smem>>
    %c5_677 = arith.constant 5 : index
    %c0_678 = arith.constant 0 : index
    %1236 = memref.load %arg5[%c5_677, %c0_678] : memref<6x8xf32, #tpu.memory_space<smem>>
    %1237 = vector.extract_strided_slice %84 {offsets = [0, 0], sizes = [32, 64], strides = [1, 1]} : vector<32x512xf32> to vector<32x64xf32>
    %1238 = vector.broadcast %1236 : f32 to vector<32x64xf32>
    %1239 = arith.mulf %1238, %1237 : vector<32x64xf32>
    %1240 = vector.broadcast %1235 : f32 to vector<32x64xf32>
    %1241 = arith.addf %1240, %1239 : vector<32x64xf32>
    %c5_679 = arith.constant 5 : index
    %c1_680 = arith.constant 1 : index
    %1242 = memref.load %arg5[%c5_679, %c1_680] : memref<6x8xf32, #tpu.memory_space<smem>>
    %1243 = vector.extract_strided_slice %84 {offsets = [0, 64], sizes = [32, 64], strides = [1, 1]} : vector<32x512xf32> to vector<32x64xf32>
    %1244 = vector.broadcast %1242 : f32 to vector<32x64xf32>
    %1245 = arith.mulf %1244, %1243 : vector<32x64xf32>
    %1246 = arith.addf %1241, %1245 : vector<32x64xf32>
    %c5_681 = arith.constant 5 : index
    %c2_682 = arith.constant 2 : index
    %1247 = memref.load %arg5[%c5_681, %c2_682] : memref<6x8xf32, #tpu.memory_space<smem>>
    %1248 = vector.extract_strided_slice %84 {offsets = [0, 128], sizes = [32, 64], strides = [1, 1]} : vector<32x512xf32> to vector<32x64xf32>
    %1249 = vector.broadcast %1247 : f32 to vector<32x64xf32>
    %1250 = arith.mulf %1249, %1248 : vector<32x64xf32>
    %1251 = arith.addf %1246, %1250 : vector<32x64xf32>
    %c5_683 = arith.constant 5 : index
    %c3_684 = arith.constant 3 : index
    %1252 = memref.load %arg5[%c5_683, %c3_684] : memref<6x8xf32, #tpu.memory_space<smem>>
    %1253 = vector.extract_strided_slice %84 {offsets = [0, 192], sizes = [32, 64], strides = [1, 1]} : vector<32x512xf32> to vector<32x64xf32>
    %1254 = vector.broadcast %1252 : f32 to vector<32x64xf32>
    %1255 = arith.mulf %1254, %1253 : vector<32x64xf32>
    %1256 = arith.addf %1251, %1255 : vector<32x64xf32>
    %c5_685 = arith.constant 5 : index
    %c4_686 = arith.constant 4 : index
    %1257 = memref.load %arg5[%c5_685, %c4_686] : memref<6x8xf32, #tpu.memory_space<smem>>
    %1258 = vector.extract_strided_slice %84 {offsets = [0, 256], sizes = [32, 64], strides = [1, 1]} : vector<32x512xf32> to vector<32x64xf32>
    %1259 = vector.broadcast %1257 : f32 to vector<32x64xf32>
    %1260 = arith.mulf %1259, %1258 : vector<32x64xf32>
    %1261 = arith.addf %1256, %1260 : vector<32x64xf32>
    %c5_687 = arith.constant 5 : index
    %c5_688 = arith.constant 5 : index
    %1262 = memref.load %arg5[%c5_687, %c5_688] : memref<6x8xf32, #tpu.memory_space<smem>>
    %1263 = vector.extract_strided_slice %84 {offsets = [0, 320], sizes = [32, 64], strides = [1, 1]} : vector<32x512xf32> to vector<32x64xf32>
    %1264 = vector.broadcast %1262 : f32 to vector<32x64xf32>
    %1265 = arith.mulf %1264, %1263 : vector<32x64xf32>
    %1266 = arith.addf %1261, %1265 : vector<32x64xf32>
    %c5_689 = arith.constant 5 : index
    %c6_690 = arith.constant 6 : index
    %1267 = memref.load %arg5[%c5_689, %c6_690] : memref<6x8xf32, #tpu.memory_space<smem>>
    %1268 = vector.extract_strided_slice %84 {offsets = [0, 384], sizes = [32, 64], strides = [1, 1]} : vector<32x512xf32> to vector<32x64xf32>
    %1269 = vector.broadcast %1267 : f32 to vector<32x64xf32>
    %1270 = arith.mulf %1269, %1268 : vector<32x64xf32>
    %1271 = arith.addf %1266, %1270 : vector<32x64xf32>
    %c5_691 = arith.constant 5 : index
    %c7_692 = arith.constant 7 : index
    %1272 = memref.load %arg5[%c5_691, %c7_692] : memref<6x8xf32, #tpu.memory_space<smem>>
    %1273 = vector.extract_strided_slice %84 {offsets = [0, 448], sizes = [32, 64], strides = [1, 1]} : vector<32x512xf32> to vector<32x64xf32>
    %1274 = vector.broadcast %1272 : f32 to vector<32x64xf32>
    %1275 = arith.mulf %1274, %1273 : vector<32x64xf32>
    %1276 = arith.addf %1271, %1275 : vector<32x64xf32>
    %1277 = vector.extract_strided_slice %1276 {offsets = [0, 0], sizes = [16, 64], strides = [1, 1]} : vector<32x64xf32> to vector<16x64xf32>
    %c3_693 = arith.constant 3 : index
    %c0_694 = arith.constant 0 : index
    %c5_695 = arith.constant 5 : index
    %c0_696 = arith.constant 0 : index
    %c0_697 = arith.constant 0 : index
    %1278 = vector.load %arg7[%c3_693, %c0_694, %c5_695, %c0_696, %c0_697] : memref<4x2x6x16x64xf32, #tpu.memory_space<vmem>>, vector<1x1x1x16x64xf32>
    %1279 = vector.shape_cast %1278 : vector<1x1x1x16x64xf32> to vector<16x64xf32>
    %1280 = vector.shape_cast %1277 : vector<16x64xf32> to vector<1x1x1x16x64xf32>
    tpu.vector_store %arg7[%c3_693, %c0_694, %c5_695, %c0_696, %c0_697], %1280 {strides = array<i32>} : memref<4x2x6x16x64xf32, #tpu.memory_space<vmem>>, vector<1x1x1x16x64xf32>,
    %1281 = vector.extract_strided_slice %1276 {offsets = [16, 0], sizes = [16, 64], strides = [1, 1]} : vector<32x64xf32> to vector<16x64xf32>
    %c3_698 = arith.constant 3 : index
    %c1_699 = arith.constant 1 : index
    %c5_700 = arith.constant 5 : index
    %c0_701 = arith.constant 0 : index
    %c0_702 = arith.constant 0 : index
    %1282 = vector.load %arg7[%c3_698, %c1_699, %c5_700, %c0_701, %c0_702] : memref<4x2x6x16x64xf32, #tpu.memory_space<vmem>>, vector<1x1x1x16x64xf32>
    %1283 = vector.shape_cast %1282 : vector<1x1x1x16x64xf32> to vector<16x64xf32>
    %1284 = vector.shape_cast %1281 : vector<16x64xf32> to vector<1x1x1x16x64xf32>
    tpu.vector_store %arg7[%c3_698, %c1_699, %c5_700, %c0_701, %c0_702], %1284 {strides = array<i32>} : memref<4x2x6x16x64xf32, #tpu.memory_space<vmem>>, vector<1x1x1x16x64xf32>,
    return
  }
}

</mosaic_0001>

<llo_original>
// kernel: ae_simple_head_forward.1
$region0: #{ae_simple_head_forward.1}
  #allocation0 [shape = 'u32[]', space=smem, size = 0x4, offset = 0x4, fixed_abs, tag = 'smem constant byte address 0x4 - core index']
  #allocation1 [shape = 'u32[144,128]{1,0:T(1,128)}', space=vmem, size = 0x12000, scoped, tag = 'internal scratch']
  %s0 = inlined_call_operand.vmem [shape: f32[32,64], index: 0, kind: input, shape index: {}]
  %s1 = inlined_call_operand.hbm [shape: f32[4,64,256], index: 1, kind: input, shape index: {}]
  %s2 = inlined_call_operand.hbm [shape: f32[1,256], index: 2, kind: input, shape index: {}]
  %s3 = inlined_call_operand.hbm [shape: f32[4,256,512], index: 3, kind: input, shape index: {}]
  %s4 = inlined_call_operand.hbm [shape: f32[1,512], index: 4, kind: input, shape index: {}]
  %s5 = inlined_call_operand.hbm [shape: f32[6,8], index: 5, kind: input, shape index: {}]
  %s6 = inlined_call_operand.hbm [shape: f32[6], index: 6, kind: input, shape index: {}]
  %s7 = inlined_call_operand.vmem [shape: f32[4,2,6,16,64], index: 7, kind: output, shape index: {}]
  %s8 = sld [smem:[#allocation0]]
  $region62: #{ae_simple_head_forward.1} parent=0
    _
  %s10 = ssub.s32 1, %s8
  %s11 = scalar_select 0, %s10, %s8
  $region1: #{ae_simple_head_forward.1} parent=0
    #allocation2 [shape = 'u8[262144]{0}', space=vmem, size = 0x40000, scoped, tag = 'input window, operand 1, single buffered']
    #allocation3 [shape = 's32[1]{0}', space=sflag, size = 0x4, scoped, tag = 'scoped memory for ae_simple_head_forward.1']
    #allocation4 [shape = 's32[1]{0}', space=sflag, size = 0x4, scoped, tag = 'scoped memory for ae_simple_head_forward.1']
    #allocation5 [shape = 'u8[1024]{0}', space=vmem, size = 0x400, scoped, tag = 'input window, operand 2, single buffered']
    #allocation6 [shape = 's32[1]{0}', space=sflag, size = 0x4, scoped, tag = 'scoped memory for ae_simple_head_forward.1']
    #allocation7 [shape = 'u8[2097152]{0}', space=vmem, size = 0x200000, scoped, tag = 'input window, operand 3, single buffered']
    #allocation8 [shape = 'u8[2048]{0}', space=vmem, size = 0x800, scoped, tag = 'input window, operand 4, single buffered']
    #allocation9 [shape = 's32[1]{0}', space=sflag, size = 0x4, scoped, tag = 'scoped memory for ae_simple_head_forward.1']
    #allocation10 [shape = 'u8[4096]{0}', space=smem, size = 0x1000, scoped, tag = 'input window, operand 5, single buffered']
    #allocation11 [shape = 'u8[512]{0}', space=smem, size = 0x200, scoped, tag = 'input window, operand 6, single buffered']
    #allocation12 [shape = 's32[1]{0}', space=sflag, size = 0x4, scoped, tag = 'scoped memory for ae_simple_head_forward.1']
    %12 = vsyncpa [#allocation3], 0
    %13 = vsyncpa [#allocation6], 0
    %14 = vsyncpa [#allocation9], 0
    %15 = vsyncpa [#allocation4], 0
    %16 = vsyncpa [#allocation12], 0
    // Predicated region
    $region2: #{ae_simple_head_forward.1} parent=1 // pred_check
      _
    $region3: #{ae_simple_head_forward.1} parent=1 // pred_check_branch
      %18 = sbr.rel (0) target = $region5
    $region4: #{ae_simple_head_forward.1} parent=1 // pred_region
      _
    $region5: #{ae_simple_head_forward.1} parent=1 // pred_fallthru
      _
    // Predicated region
    $region6: #{ae_simple_head_forward.1} parent=1 // pred_check
      _
    $region7: #{ae_simple_head_forward.1} parent=1 // pred_check_branch
      %20 = sbr.rel (0) target = $region9
    $region8: #{ae_simple_head_forward.1} parent=1 // pred_region
      %s22 = ssub.s32 8192, 8192
      %23 = vsyncadd [#allocation3], %s22
      %s24 = sshll.u32 [#allocation2], 4
      %s25 = int_to_ptr.vmem [resolvable:$true] %s24
      %30 = dma.hbm_to_vmem [thread:$0]  %s1, 8192, %s25, [#allocation3], 256, 256, 16
    $region9: #{ae_simple_head_forward.1} parent=1 // pred_fallthru
      _
    // Predicated region
    $region10: #{ae_simple_head_forward.1} parent=1 // pred_check
      _
    $region11: #{ae_simple_head_forward.1} parent=1 // pred_check_branch
      %32 = sbr.rel (0) target = $region13
    $region12: #{ae_simple_head_forward.1} parent=1 // pred_region
      %s34 = ssub.s32 32, 32
      %35 = vsyncadd [#allocation6], %s34
      %s37 = sshll.u32 [#allocation5], 4
      %s38 = int_to_ptr.vmem [resolvable:$true] %s37
      %40 = dma.hbm_to_vmem [thread:$0]  %s2, 32, %s38, [#allocation6]
    $region13: #{ae_simple_head_forward.1} parent=1 // pred_fallthru
      _
    // Predicated region
    $region14: #{ae_simple_head_forward.1} parent=1 // pred_check
      _
    $region15: #{ae_simple_head_forward.1} parent=1 // pred_check_branch
      %42 = sbr.rel (0) target = $region17
    $region16: #{ae_simple_head_forward.1} parent=1 // pred_region
      %s44 = ssub.s32 65536, 65536
      %45 = vsyncadd [#allocation6], %s44
      %s46 = sshll.u32 [#allocation7], 4
      %s47 = int_to_ptr.vmem [resolvable:$true] %s46
      %52 = dma.hbm_to_vmem [thread:$0]  %s3, 65536, %s47, [#allocation6], 512, 512, 32
    $region17: #{ae_simple_head_forward.1} parent=1 // pred_fallthru
      _
    // Predicated region
    $region18: #{ae_simple_head_forward.1} parent=1 // pred_check
      _
    $region19: #{ae_simple_head_forward.1} parent=1 // pred_check_branch
      %54 = sbr.rel (0) target = $region21
    $region20: #{ae_simple_head_forward.1} parent=1 // pred_region
      %s56 = ssub.s32 64, 64
      %57 = vsyncadd [#allocation9], %s56
      %s59 = sshll.u32 [#allocation8], 4
      %s60 = int_to_ptr.vmem [resolvable:$true] %s59
      %62 = dma.hbm_to_vmem [thread:$0]  %s4, 64, %s60, [#allocation9]
    $region21: #{ae_simple_head_forward.1} parent=1 // pred_fallthru
      _
    // Predicated region
    $region22: #{ae_simple_head_forward.1} parent=1 // pred_check
      _
    $region23: #{ae_simple_head_forward.1} parent=1 // pred_check_branch
      %64 = sbr.rel (0) target = $region25
    $region24: #{ae_simple_head_forward.1} parent=1 // pred_region
      %s66 = ssub.s32 128, 128
      %67 = vsyncadd [#allocation4], %s66
      %70 = dma.hbm_to_smem %s5, 128, [#allocation10], [#allocation4]
    $region25: #{ae_simple_head_forward.1} parent=1 // pred_fallthru
      _
    // Predicated region
    $region26: #{ae_simple_head_forward.1} parent=1 // pred_check
      _
    $region27: #{ae_simple_head_forward.1} parent=1 // pred_check_branch
      %72 = sbr.rel (0) target = $region29
    $region28: #{ae_simple_head_forward.1} parent=1 // pred_region
      %s74 = ssub.s32 16, 16
      %75 = vsyncadd [#allocation12], %s74
      %78 = dma.hbm_to_smem %s6, 16, [#allocation11], [#allocation12]
    $region29: #{ae_simple_head_forward.1} parent=1 // pred_fallthru
      _
    // Predicated region
    $region30: #{ae_simple_head_forward.1} parent=1 // pred_check
      _
    $region31: #{ae_simple_head_forward.1} parent=1 // pred_check_branch
      %80 = sbr.rel (0) target = $region33
    $region32: #{ae_simple_head_forward.1} parent=1 // pred_region
      %81 = dma.done [#allocation3], 8192
    $region33: #{ae_simple_head_forward.1} parent=1 // pred_fallthru
      _
    // Predicated region
    $region34: #{ae_simple_head_forward.1} parent=1 // pred_check
      _
    $region35: #{ae_simple_head_forward.1} parent=1 // pred_check_branch
      %83 = sbr.rel (0) target = $region37
    $region36: #{ae_simple_head_forward.1} parent=1 // pred_region
      %84 = dma.done [#allocation6], 32
    $region37: #{ae_simple_head_forward.1} parent=1 // pred_fallthru
      _
    // Predicated region
    $region38: #{ae_simple_head_forward.1} parent=1 // pred_check
      _
    $region39: #{ae_simple_head_forward.1} parent=1 // pred_check_branch
      %86 = sbr.rel (0) target = $region41
    $region40: #{ae_simple_head_forward.1} parent=1 // pred_region
      %87 = dma.done [#allocation6], 65536
    $region41: #{ae_simple_head_forward.1} parent=1 // pred_fallthru
      _
    // Predicated region
    $region42: #{ae_simple_head_forward.1} parent=1 // pred_check
      _
    $region43: #{ae_simple_head_forward.1} parent=1 // pred_check_branch
      %89 = sbr.rel (0) target = $region45
    $region44: #{ae_simple_head_forward.1} parent=1 // pred_region
      %90 = dma.done [#allocation9], 64
    $region45: #{ae_simple_head_forward.1} parent=1 // pred_fallthru
      _
    // Predicated region
    $region46: #{ae_simple_head_forward.1} parent=1 // pred_check
      _
    $region47: #{ae_simple_head_forward.1} parent=1 // pred_check_branch
      %92 = sbr.rel (0) target = $region49
    $region48: #{ae_simple_head_forward.1} parent=1 // pred_region
      %93 = dma.done [#allocation4], 128
    $region49: #{ae_simple_head_forward.1} parent=1 // pred_fallthru
      _
    // Predicated region
    $region50: #{ae_simple_head_forward.1} parent=1 // pred_check
      _
    $region51: #{ae_simple_head_forward.1} parent=1 // pred_check_branch
      %95 = sbr.rel (0) target = $region53
    $region52: #{ae_simple_head_forward.1} parent=1 // pred_region
      %96 = dma.done [#allocation12], 16
    $region53: #{ae_simple_head_forward.1} parent=1 // pred_fallthru
      _
    %97 = sfence
    %v98 = vld [vmem:[%s0] sm:$0xff]
    %v99 = vld [vmem:[%s0 + $0x8] sm:$0xff]
    %v100 = vld [vmem:[%s0 + $0x10] sm:$0xff]
    %v101 = vld [vmem:[%s0 + $0x18] sm:$0xff]
    %vm104 = vcmask 1040384
    %v105 = vrot.slane %v98, 7
    %v106 = vrot.slane %v99, 7
    %v107 = vsel %vm104, %v105, %v106
    %v111 = vrot.slane %v100, 7
    %v112 = vrot.slane %v101, 7
    %v113 = vsel %vm104, %v111, %v112
    %v115 = vsel %vm104, 0.0, %v105
    %v116 = vsel %vm104, 0.0, %v111
    %vm117 = vcmask 1046528
    %v118 = vrot.slane %v98, 1
    %v119 = vrot.slane %v99, 1
    %v120 = vsel %vm117, %v118, %v119
    %v122 = vrot.slane %v100, 1
    %v123 = vrot.slane %v101, 1
    %v124 = vsel %vm117, %v122, %v123
    %v126 = vsel %vm117, %v119, 0.0
    %v127 = vsel %vm117, %v123, 0.0
    %v128 = vld [vmem:[#allocation5] sm:$0x3]
    %v129 = vld [vmem:[#allocation2] sm:$0xff]
    %v130 = vld [vmem:[#allocation2 + $0x8] sm:$0xff]
    %v131 = vld [vmem:[#allocation2 + $0x10] sm:$0xff]
    %v132 = vld [vmem:[#allocation2 + $0x18] sm:$0xff]
    %v133 = vld [vmem:[#allocation2 + $0x20] sm:$0xff]
    %v134 = vld [vmem:[#allocation2 + $0x28] sm:$0xff]
    %v135 = vld [vmem:[#allocation2 + $0x30] sm:$0xff]
    %v136 = vld [vmem:[#allocation2 + $0x38] sm:$0xff]
    %v137 = vld [vmem:[#allocation2 + $0x40] sm:$0xff]
    %v138 = vld [vmem:[#allocation2 + $0x48] sm:$0xff]
    %v139 = vld [vmem:[#allocation2 + $0x50] sm:$0xff]
    %v140 = vld [vmem:[#allocation2 + $0x58] sm:$0xff]
    %v141 = vld [vmem:[#allocation2 + $0x60] sm:$0xff]
    %v142 = vld [vmem:[#allocation2 + $0x68] sm:$0xff]
    %v143 = vld [vmem:[#allocation2 + $0x70] sm:$0xff]
    %v144 = vld [vmem:[#allocation2 + $0x78] sm:$0xff]
    %s145 = scalar_lea.vmem [#allocation2], 128
    %v146 = vld [vmem:[%s145] sm:$0xff]
    %v147 = vld [vmem:[%s145 + $0x8] sm:$0xff]
    %v148 = vld [vmem:[%s145 + $0x10] sm:$0xff]
    %v149 = vld [vmem:[%s145 + $0x18] sm:$0xff]
    %v150 = vld [vmem:[%s145 + $0x20] sm:$0xff]
    %v151 = vld [vmem:[%s145 + $0x28] sm:$0xff]
    %v152 = vld [vmem:[%s145 + $0x30] sm:$0xff]
    %v153 = vld [vmem:[%s145 + $0x38] sm:$0xff]
    %v154 = vld [vmem:[%s145 + $0x40] sm:$0xff]
    %v155 = vld [vmem:[%s145 + $0x48] sm:$0xff]
    %v156 = vld [vmem:[%s145 + $0x50] sm:$0xff]
    %v157 = vld [vmem:[%s145 + $0x58] sm:$0xff]
    %v158 = vld [vmem:[%s145 + $0x60] sm:$0xff]
    %v159 = vld [vmem:[%s145 + $0x68] sm:$0xff]
    %v160 = vld [vmem:[%s145 + $0x70] sm:$0xff]
    %v161 = vld [vmem:[%s145 + $0x78] sm:$0xff]
    %vm162 = vcmask 523264
    %v163 = vsel %vm162, %v98, 0
    %v165 = vsel %vm162, %v99, 0
    %v167 = vsel %vm162, %v100, 0
    %v169 = vsel %vm162, %v101, 0
    %171 = vmatprep.subr.mxu0 0.0
    %172 = vmatpush1.msra.mxu0 0.0
    %173 = vmatprep.subr.mxu0 0.0
    %174 = vmatpush1.msra.mxu0 0.0
    %175 = vmatprep.subr.mxu0 0.0
    %176 = vmatpush1.msra.mxu0 0.0
    %177 = vmatprep.subr.mxu0 0.0
    %178 = vmatpush1.msra.mxu0 0.0
    %179 = vmatprep.subr.mxu0 0.0
    %180 = vmatpush1.msra.mxu0 0.0
    %181 = vmatprep.subr.mxu0 0.0
    %182 = vmatpush1.msra.mxu0 0.0
    %183 = vmatprep.subr.mxu0 0.0
    %184 = vmatpush1.msra.mxu0 0.0
    %185 = vmatprep.subr.mxu0 0.0
    %186 = vmatpush1.msra.mxu0 0.0
    %187 = vmatprep.subr.mxu0 %v161
    %188 = vmatpush1.msra.mxu0 %v160
    %189 = vmatprep.subr.mxu0 %v159
    %190 = vmatpush1.msra.mxu0 %v158
    %191 = vmatprep.subr.mxu0 %v157
    %192 = vmatpush1.msra.mxu0 %v156
    %193 = vmatprep.subr.mxu0 %v155
    %194 = vmatpush1.msra.mxu0 %v154
    %195 = vmatprep.subr.mxu0 %v153
    %196 = vmatpush1.msra.mxu0 %v152
    %197 = vmatprep.subr.mxu0 %v151
    %198 = vmatpush1.msra.mxu0 %v150
    %199 = vmatprep.subr.mxu0 %v149
    %200 = vmatpush1.msra.mxu0 %v148
    %201 = vmatprep.subr.mxu0 %v147
    %202 = vmatpush1.msra.mxu0 %v146
    %203 = vmatprep.subr.mxu0 0.0
    %204 = vmatpush2.msra.mxu0 0.0
    %205 = vmatprep.subr.mxu0 0.0
    %206 = vmatpush2.msra.mxu0 0.0
    %207 = vmatprep.subr.mxu0 0.0
    %208 = vmatpush2.msra.mxu0 0.0
    %209 = vmatprep.subr.mxu0 0.0
    %210 = vmatpush2.msra.mxu0 0.0
    %211 = vmatprep.subr.mxu0 0.0
    %212 = vmatpush2.msra.mxu0 0.0
    %213 = vmatprep.subr.mxu0 0.0
    %214 = vmatpush2.msra.mxu0 0.0
    %215 = vmatprep.subr.mxu0 0.0
    %216 = vmatpush2.msra.mxu0 0.0
    %217 = vmatprep.subr.mxu0 0.0
    %218 = vmatpush2.msra.mxu0 0.0
    %219 = vmatprep.subr.mxu0 0.0
    %220 = vmatpush2.msra.mxu0 0.0
    %221 = vmatprep.subr.mxu0 0.0
    %222 = vmatpush2.msra.mxu0 0.0
    %223 = vmatprep.subr.mxu0 0.0
    %224 = vmatpush2.msra.mxu0 0.0
    %225 = vmatprep.subr.mxu0 0.0
    %226 = vmatpush2.msra.mxu0 0.0
    %227 = vmatprep.subr.mxu0 0.0
    %228 = vmatpush2.msra.mxu0 0.0
    %229 = vmatprep.subr.mxu0 0.0
    %230 = vmatpush2.msra.mxu0 0.0
    %231 = vmatprep.subr.mxu0 0.0
    %232 = vmatpush2.msra.mxu0 0.0
    %233 = vmatprep.subr.mxu0 0.0
    %234 = vmatpush2.msra.mxu0 0.0
    %235 = vmatprep.mubr.f32.mxu0 0.0
    %236 = vmatmul.mubr.f32.gmra.mxu0 %v163
    %v237 = vpop.f32.mrf.mxu0
    %v238 = vadd.f32 0.0, %v237
    %v239 = vpop.f32.mrf.mxu0
    %v240 = vadd.f32 0.0, %v239
    %241 = vmatprep.mubr.f32.mxu0 0.0
    %242 = vmatmul.mubr.f32.gmra.mxu0 %v165
    %v243 = vpop.f32.mrf.mxu0
    %v244 = vadd.f32 0.0, %v243
    %v245 = vpop.f32.mrf.mxu0
    %v246 = vadd.f32 0.0, %v245
    %247 = vmatprep.mubr.f32.mxu0 0.0
    %248 = vmatmul.mubr.f32.gmra.mxu0 %v167
    %v249 = vpop.f32.mrf.mxu0
    %v250 = vadd.f32 0.0, %v249
    %v251 = vpop.f32.mrf.mxu0
    %v252 = vadd.f32 0.0, %v251
    %253 = vmatprep.mubr.f32.mxu0 0.0
    %254 = vmatmul.mubr.f32.gmra.mxu0 %v169
    %v255 = vpop.f32.mrf.mxu0
    %v256 = vadd.f32 0.0, %v255
    %v257 = vpop.f32.mrf.mxu0
    %v258 = vadd.f32 0.0, %v257
    %259 = vdwg.mxu0
    %v261 = vsel %vm162, %v115, 0
    %v263 = vsel %vm162, %v107, 0
    %v266 = vsel %vm162, %v116, 0
    %v268 = vsel %vm162, %v113, 0
    %270 = vmatprep.subr.mxu0 0.0
    %271 = vmatpush1.msra.mxu0 0.0
    %272 = vmatprep.subr.mxu0 0.0
    %273 = vmatpush1.msra.mxu0 0.0
    %274 = vmatprep.subr.mxu0 0.0
    %275 = vmatpush1.msra.mxu0 0.0
    %276 = vmatprep.subr.mxu0 0.0
    %277 = vmatpush1.msra.mxu0 0.0
    %278 = vmatprep.subr.mxu0 0.0
    %279 = vmatpush1.msra.mxu0 0.0
    %280 = vmatprep.subr.mxu0 0.0
    %281 = vmatpush1.msra.mxu0 0.0
    %282 = vmatprep.subr.mxu0 0.0
    %283 = vmatpush1.msra.mxu0 0.0
    %284 = vmatprep.subr.mxu0 0.0
    %285 = vmatpush1.msra.mxu0 0.0
    %286 = vmatprep.subr.mxu0 %v144
    %287 = vmatpush1.msra.mxu0 %v143
    %288 = vmatprep.subr.mxu0 %v142
    %289 = vmatpush1.msra.mxu0 %v141
    %290 = vmatprep.subr.mxu0 %v140
    %291 = vmatpush1.msra.mxu0 %v139
    %292 = vmatprep.subr.mxu0 %v138
    %293 = vmatpush1.msra.mxu0 %v137
    %294 = vmatprep.subr.mxu0 %v136
    %295 = vmatpush1.msra.mxu0 %v135
    %296 = vmatprep.subr.mxu0 %v134
    %297 = vmatpush1.msra.mxu0 %v133
    %298 = vmatprep.subr.mxu0 %v132
    %299 = vmatpush1.msra.mxu0 %v131
    %300 = vmatprep.subr.mxu0 %v130
    %301 = vmatpush1.msra.mxu0 %v129
    %302 = vmatprep.subr.mxu0 0.0
    %303 = vmatpush2.msra.mxu0 0.0
    %304 = vmatprep.subr.mxu0 0.0
    %305 = vmatpush2.msra.mxu0 0.0
    %306 = vmatprep.subr.mxu0 0.0
    %307 = vmatpush2.msra.mxu0 0.0
    %308 = vmatprep.subr.mxu0 0.0
    %309 = vmatpush2.msra.mxu0 0.0
    %310 = vmatprep.subr.mxu0 0.0
    %311 = vmatpush2.msra.mxu0 0.0
    %312 = vmatprep.subr.mxu0 0.0
    %313 = vmatpush2.msra.mxu0 0.0
    %314 = vmatprep.subr.mxu0 0.0
    %315 = vmatpush2.msra.mxu0 0.0
    %316 = vmatprep.subr.mxu0 0.0
    %317 = vmatpush2.msra.mxu0 0.0
    %318 = vmatprep.subr.mxu0 0.0
    %319 = vmatpush2.msra.mxu0 0.0
    %320 = vmatprep.subr.mxu0 0.0
    %321 = vmatpush2.msra.mxu0 0.0
    %322 = vmatprep.subr.mxu0 0.0
    %323 = vmatpush2.msra.mxu0 0.0
    %324 = vmatprep.subr.mxu0 0.0
    %325 = vmatpush2.msra.mxu0 0.0
    %326 = vmatprep.subr.mxu0 0.0
    %327 = vmatpush2.msra.mxu0 0.0
    %328 = vmatprep.subr.mxu0 0.0
    %329 = vmatpush2.msra.mxu0 0.0
    %330 = vmatprep.subr.mxu0 0.0
    %331 = vmatpush2.msra.mxu0 0.0
    %332 = vmatprep.subr.mxu0 0.0
    %333 = vmatpush2.msra.mxu0 0.0
    %334 = vmatprep.mubr.f32.mxu0 0.0
    %335 = vmatmul.mubr.f32.gmra.mxu0 %v261
    %v336 = vpop.f32.mrf.mxu0
    %v337 = vadd.f32 %v238, %v336
    %v338 = vpop.f32.mrf.mxu0
    %v339 = vadd.f32 %v240, %v338
    %340 = vmatprep.mubr.f32.mxu0 0.0
    %341 = vmatmul.mubr.f32.gmra.mxu0 %v263
    %v342 = vpop.f32.mrf.mxu0
    %v343 = vadd.f32 %v244, %v342
    %v344 = vpop.f32.mrf.mxu0
    %v345 = vadd.f32 %v246, %v344
    %346 = vmatprep.mubr.f32.mxu0 0.0
    %347 = vmatmul.mubr.f32.gmra.mxu0 %v266
    %v348 = vpop.f32.mrf.mxu0
    %v349 = vadd.f32 %v250, %v348
    %v350 = vpop.f32.mrf.mxu0
    %v351 = vadd.f32 %v252, %v350
    %352 = vmatprep.mubr.f32.mxu0 0.0
    %353 = vmatmul.mubr.f32.gmra.mxu0 %v268
    %v354 = vpop.f32.mrf.mxu0
    %v355 = vadd.f32 %v256, %v354
    %v356 = vpop.f32.mrf.mxu0
    %v357 = vadd.f32 %v258, %v356
    %358 = vdwg.mxu0
    %v360 = vlaneseq
    %v361 = vshrl.u32 %v360, 7
    %v362 = vsub.s32 0, %v361
    %v363 = vrot.slane %v128, %v362
    %v364 = vlaneseq
    %v365 = vshrl.u32 %v364, 7
    %v366 = vsub.s32 1, %v365
    %v367 = vrot.slane %v128, %v366
    %v370 = vadd.f32 %v337, %v363
    %v371 = vadd.f32 %v339, %v367
    %v372 = vadd.f32 %v343, %v363
    %v373 = vadd.f32 %v345, %v367
    %v374 = vadd.f32 %v349, %v363
    %v375 = vadd.f32 %v351, %v367
    %v376 = vadd.f32 %v355, %v363
    %v377 = vadd.f32 %v357, %v367
    %v378 = vmax.f32 %v370, 0.0
    %v379 = vmax.f32 %v371, 0.0
    %v380 = vmax.f32 %v372, 0.0
    %v381 = vmax.f32 %v373, 0.0
    %v382 = vmax.f32 %v374, 0.0
    %v383 = vmax.f32 %v375, 0.0
    %v384 = vmax.f32 %v376, 0.0
    %v385 = vmax.f32 %v377, 0.0
    %s386 = scalar_lea.vmem [#allocation2], 256
    %v387 = vld [vmem:[%s386] sm:$0xff]
    %v388 = vld [vmem:[%s386 + $0x8] sm:$0xff]
    %v389 = vld [vmem:[%s386 + $0x10] sm:$0xff]
    %v390 = vld [vmem:[%s386 + $0x18] sm:$0xff]
    %v391 = vld [vmem:[%s386 + $0x20] sm:$0xff]
    %v392 = vld [vmem:[%s386 + $0x28] sm:$0xff]
    %v393 = vld [vmem:[%s386 + $0x30] sm:$0xff]
    %v394 = vld [vmem:[%s386 + $0x38] sm:$0xff]
    %v395 = vld [vmem:[%s386 + $0x40] sm:$0xff]
    %v396 = vld [vmem:[%s386 + $0x48] sm:$0xff]
    %v397 = vld [vmem:[%s386 + $0x50] sm:$0xff]
    %v398 = vld [vmem:[%s386 + $0x58] sm:$0xff]
    %v399 = vld [vmem:[%s386 + $0x60] sm:$0xff]
    %v400 = vld [vmem:[%s386 + $0x68] sm:$0xff]
    %v401 = vld [vmem:[%s386 + $0x70] sm:$0xff]
    %v402 = vld [vmem:[%s386 + $0x78] sm:$0xff]
    %s403 = scalar_lea.vmem [#allocation2], 384
    %v404 = vld [vmem:[%s403] sm:$0xff]
    %v405 = vld [vmem:[%s403 + $0x8] sm:$0xff]
    %v406 = vld [vmem:[%s403 + $0x10] sm:$0xff]
    %v407 = vld [vmem:[%s403 + $0x18] sm:$0xff]
    %v408 = vld [vmem:[%s403 + $0x20] sm:$0xff]
    %v409 = vld [vmem:[%s403 + $0x28] sm:$0xff]
    %v410 = vld [vmem:[%s403 + $0x30] sm:$0xff]
    %v411 = vld [vmem:[%s403 + $0x38] sm:$0xff]
    %v412 = vld [vmem:[%s403 + $0x40] sm:$0xff]
    %v413 = vld [vmem:[%s403 + $0x48] sm:$0xff]
    %v414 = vld [vmem:[%s403 + $0x50] sm:$0xff]
    %v415 = vld [vmem:[%s403 + $0x58] sm:$0xff]
    %v416 = vld [vmem:[%s403 + $0x60] sm:$0xff]
    %v417 = vld [vmem:[%s403 + $0x68] sm:$0xff]
    %v418 = vld [vmem:[%s403 + $0x70] sm:$0xff]
    %v419 = vld [vmem:[%s403 + $0x78] sm:$0xff]
    %v420 = vsel %vm162, %v120, 0
    %v423 = vsel %vm162, %v126, 0
    %v425 = vsel %vm162, %v124, 0
    %v428 = vsel %vm162, %v127, 0
    %430 = vmatprep.subr.mxu0 0.0
    %431 = vmatpush1.msra.mxu0 0.0
    %432 = vmatprep.subr.mxu0 0.0
    %433 = vmatpush1.msra.mxu0 0.0
    %434 = vmatprep.subr.mxu0 0.0
    %435 = vmatpush1.msra.mxu0 0.0
    %436 = vmatprep.subr.mxu0 0.0
    %437 = vmatpush1.msra.mxu0 0.0
    %438 = vmatprep.subr.mxu0 0.0
    %439 = vmatpush1.msra.mxu0 0.0
    %440 = vmatprep.subr.mxu0 0.0
    %441 = vmatpush1.msra.mxu0 0.0
    %442 = vmatprep.subr.mxu0 0.0
    %443 = vmatpush1.msra.mxu0 0.0
    %444 = vmatprep.subr.mxu0 0.0
    %445 = vmatpush1.msra.mxu0 0.0
    %446 = vmatprep.subr.mxu0 %v419
    %447 = vmatpush1.msra.mxu0 %v418
    %448 = vmatprep.subr.mxu0 %v417
    %449 = vmatpush1.msra.mxu0 %v416
    %450 = vmatprep.subr.mxu0 %v415
    %451 = vmatpush1.msra.mxu0 %v414
    %452 = vmatprep.subr.mxu0 %v413
    %453 = vmatpush1.msra.mxu0 %v412
    %454 = vmatprep.subr.mxu0 %v411
    %455 = vmatpush1.msra.mxu0 %v410
    %456 = vmatprep.subr.mxu0 %v409
    %457 = vmatpush1.msra.mxu0 %v408
    %458 = vmatprep.subr.mxu0 %v407
    %459 = vmatpush1.msra.mxu0 %v406
    %460 = vmatprep.subr.mxu0 %v405
    %461 = vmatpush1.msra.mxu0 %v404
    %462 = vmatprep.subr.mxu0 0.0
    %463 = vmatpush2.msra.mxu0 0.0
    %464 = vmatprep.subr.mxu0 0.0
    %465 = vmatpush2.msra.mxu0 0.0
    %466 = vmatprep.subr.mxu0 0.0
    %467 = vmatpush2.msra.mxu0 0.0
    %468 = vmatprep.subr.mxu0 0.0
    %469 = vmatpush2.msra.mxu0 0.0
    %470 = vmatprep.subr.mxu0 0.0
    %471 = vmatpush2.msra.mxu0 0.0
    %472 = vmatprep.subr.mxu0 0.0
    %473 = vmatpush2.msra.mxu0 0.0
    %474 = vmatprep.subr.mxu0 0.0
    %475 = vmatpush2.msra.mxu0 0.0
    %476 = vmatprep.subr.mxu0 0.0
    %477 = vmatpush2.msra.mxu0 0.0
    %478 = vmatprep.subr.mxu0 0.0
    %479 = vmatpush2.msra.mxu0 0.0
    %480 = vmatprep.subr.mxu0 0.0
    %481 = vmatpush2.msra.mxu0 0.0
    %482 = vmatprep.subr.mxu0 0.0
    %483 = vmatpush2.msra.mxu0 0.0
    %484 = vmatprep.subr.mxu0 0.0
    %485 = vmatpush2.msra.mxu0 0.0
    %486 = vmatprep.subr.mxu0 0.0
    %487 = vmatpush2.msra.mxu0 0.0
    %488 = vmatprep.subr.mxu0 0.0
    %489 = vmatpush2.msra.mxu0 0.0
    %490 = vmatprep.subr.mxu0 0.0
    %491 = vmatpush2.msra.mxu0 0.0
    %492 = vmatprep.subr.mxu0 0.0
    %493 = vmatpush2.msra.mxu0 0.0
    %494 = vmatprep.mubr.f32.mxu0 0.0
    %495 = vmatmul.mubr.f32.gmra.mxu0 %v420
    %v496 = vpop.f32.mrf.mxu0
    %v497 = vadd.f32 0.0, %v496
    %v498 = vpop.f32.mrf.mxu0
    %v499 = vadd.f32 0.0, %v498
    %500 = vmatprep.mubr.f32.mxu0 0.0
    %501 = vmatmul.mubr.f32.gmra.mxu0 %v423
    %v502 = vpop.f32.mrf.mxu0
    %v503 = vadd.f32 0.0, %v502
    %v504 = vpop.f32.mrf.mxu0
    %v505 = vadd.f32 0.0, %v504
    %506 = vmatprep.mubr.f32.mxu0 0.0
    %507 = vmatmul.mubr.f32.gmra.mxu0 %v425
    %v508 = vpop.f32.mrf.mxu0
    %v509 = vadd.f32 0.0, %v508
    %v510 = vpop.f32.mrf.mxu0
    %v511 = vadd.f32 0.0, %v510
    %512 = vmatprep.mubr.f32.mxu0 0.0
    %513 = vmatmul.mubr.f32.gmra.mxu0 %v428
    %v514 = vpop.f32.mrf.mxu0
    %v515 = vadd.f32 0.0, %v514
    %v516 = vpop.f32.mrf.mxu0
    %v517 = vadd.f32 0.0, %v516
    %518 = vdwg.mxu0
    %519 = vmatprep.subr.mxu0 0.0
    %520 = vmatpush1.msra.mxu0 0.0
    %521 = vmatprep.subr.mxu0 0.0
    %522 = vmatpush1.msra.mxu0 0.0
    %523 = vmatprep.subr.mxu0 0.0
    %524 = vmatpush1.msra.mxu0 0.0
    %525 = vmatprep.subr.mxu0 0.0
    %526 = vmatpush1.msra.mxu0 0.0
    %527 = vmatprep.subr.mxu0 0.0
    %528 = vmatpush1.msra.mxu0 0.0
    %529 = vmatprep.subr.mxu0 0.0
    %530 = vmatpush1.msra.mxu0 0.0
    %531 = vmatprep.subr.mxu0 0.0
    %532 = vmatpush1.msra.mxu0 0.0
    %533 = vmatprep.subr.mxu0 0.0
    %534 = vmatpush1.msra.mxu0 0.0
    %535 = vmatprep.subr.mxu0 %v402
    %536 = vmatpush1.msra.mxu0 %v401
    %537 = vmatprep.subr.mxu0 %v400
    %538 = vmatpush1.msra.mxu0 %v399
    %539 = vmatprep.subr.mxu0 %v398
    %540 = vmatpush1.msra.mxu0 %v397
    %541 = vmatprep.subr.mxu0 %v396
    %542 = vmatpush1.msra.mxu0 %v395
    %543 = vmatprep.subr.mxu0 %v394
    %544 = vmatpush1.msra.mxu0 %v393
    %545 = vmatprep.subr.mxu0 %v392
    %546 = vmatpush1.msra.mxu0 %v391
    %547 = vmatprep.subr.mxu0 %v390
    %548 = vmatpush1.msra.mxu0 %v389
    %549 = vmatprep.subr.mxu0 %v388
    %550 = vmatpush1.msra.mxu0 %v387
    %551 = vmatprep.subr.mxu0 0.0
    %552 = vmatpush2.msra.mxu0 0.0
    %553 = vmatprep.subr.mxu0 0.0
    %554 = vmatpush2.msra.mxu0 0.0
    %555 = vmatprep.subr.mxu0 0.0
    %556 = vmatpush2.msra.mxu0 0.0
    %557 = vmatprep.subr.mxu0 0.0
    %558 = vmatpush2.msra.mxu0 0.0
    %559 = vmatprep.subr.mxu0 0.0
    %560 = vmatpush2.msra.mxu0 0.0
    %561 = vmatprep.subr.mxu0 0.0
    %562 = vmatpush2.msra.mxu0 0.0
    %563 = vmatprep.subr.mxu0 0.0
    %564 = vmatpush2.msra.mxu0 0.0
    %565 = vmatprep.subr.mxu0 0.0
    %566 = vmatpush2.msra.mxu0 0.0
    %567 = vmatprep.subr.mxu0 0.0
    %568 = vmatpush2.msra.mxu0 0.0
    %569 = vmatprep.subr.mxu0 0.0
    %570 = vmatpush2.msra.mxu0 0.0
    %571 = vmatprep.subr.mxu0 0.0
    %572 = vmatpush2.msra.mxu0 0.0
    %573 = vmatprep.subr.mxu0 0.0
    %574 = vmatpush2.msra.mxu0 0.0
    %575 = vmatprep.subr.mxu0 0.0
    %576 = vmatpush2.msra.mxu0 0.0
    %577 = vmatprep.subr.mxu0 0.0
    %578 = vmatpush2.msra.mxu0 0.0
    %579 = vmatprep.subr.mxu0 0.0
    %580 = vmatpush2.msra.mxu0 0.0
    %581 = vmatprep.subr.mxu0 0.0
    %582 = vmatpush2.msra.mxu0 0.0
    %583 = vmatprep.mubr.f32.mxu0 0.0
    %584 = vmatmul.mubr.f32.gmra.mxu0 %v163
    %v585 = vpop.f32.mrf.mxu0
    %v586 = vadd.f32 %v497, %v585
    %v587 = vpop.f32.mrf.mxu0
    %v588 = vadd.f32 %v499, %v587
    %589 = vmatprep.mubr.f32.mxu0 0.0
    %590 = vmatmul.mubr.f32.gmra.mxu0 %v165
    %v591 = vpop.f32.mrf.mxu0
    %v592 = vadd.f32 %v503, %v591
    %v593 = vpop.f32.mrf.mxu0
    %v594 = vadd.f32 %v505, %v593
    %595 = vmatprep.mubr.f32.mxu0 0.0
    %596 = vmatmul.mubr.f32.gmra.mxu0 %v167
    %v597 = vpop.f32.mrf.mxu0
    %v598 = vadd.f32 %v509, %v597
    %v599 = vpop.f32.mrf.mxu0
    %v600 = vadd.f32 %v511, %v599
    %601 = vmatprep.mubr.f32.mxu0 0.0
    %602 = vmatmul.mubr.f32.gmra.mxu0 %v169
    %v603 = vpop.f32.mrf.mxu0
    %v604 = vadd.f32 %v515, %v603
    %v605 = vpop.f32.mrf.mxu0
    %v606 = vadd.f32 %v517, %v605
    %607 = vdwg.mxu0
    %v608 = vadd.f32 %v586, %v363
    %v609 = vadd.f32 %v588, %v367
    %v610 = vadd.f32 %v592, %v363
    %v611 = vadd.f32 %v594, %v367
    %v612 = vadd.f32 %v598, %v363
    %v613 = vadd.f32 %v600, %v367
    %v614 = vadd.f32 %v604, %v363
    %v615 = vadd.f32 %v606, %v367
    %v616 = vmax.f32 %v608, 0.0
    %v617 = vmax.f32 %v609, 0.0
    %v618 = vmax.f32 %v610, 0.0
    %v619 = vmax.f32 %v611, 0.0
    %v620 = vmax.f32 %v612, 0.0
    %v621 = vmax.f32 %v613, 0.0
    %v622 = vmax.f32 %v614, 0.0
    %v623 = vmax.f32 %v615, 0.0
    %v628 = vrot.slane %v616, 7
    %v629 = vrot.slane %v617, 7
    %v630 = vrot.slane %v618, 7
    %v631 = vsel %vm104, %v628, %v630
    %v632 = vrot.slane %v619, 7
    %v633 = vsel %vm104, %v629, %v632
    %v642 = vrot.slane %v620, 7
    %v643 = vrot.slane %v621, 7
    %v644 = vrot.slane %v622, 7
    %v645 = vsel %vm104, %v642, %v644
    %v646 = vrot.slane %v623, 7
    %v647 = vsel %vm104, %v643, %v646
    %v652 = vsel %vm104, 0.0, %v628
    %v653 = vsel %vm104, 0.0, %v629
    %v654 = vsel %vm104, 0.0, %v642
    %v655 = vsel %vm104, 0.0, %v643
    %v660 = vrot.slane %v378, 1
    %v661 = vrot.slane %v380, 1
    %v662 = vsel %vm117, %v660, %v661
    %v663 = vrot.slane %v379, 1
    %v664 = vrot.slane %v381, 1
    %v665 = vsel %vm117, %v663, %v664
    %v674 = vrot.slane %v382, 1
    %v675 = vrot.slane %v384, 1
    %v676 = vsel %vm117, %v674, %v675
    %v677 = vrot.slane %v383, 1
    %v678 = vrot.slane %v385, 1
    %v679 = vsel %vm117, %v677, %v678
    %v684 = vsel %vm117, %v661, 0.0
    %v685 = vsel %vm117, %v664, 0.0
    %v686 = vsel %vm117, %v675, 0.0
    %v687 = vsel %vm117, %v678, 0.0
    %v688 = vld [vmem:[#allocation8] sm:$0xf]
    %v689 = vld [vmem:[#allocation7] sm:$0xff]
    %v690 = vld [vmem:[#allocation7 + $0x8] sm:$0xff]
    %v691 = vld [vmem:[#allocation7 + $0x10] sm:$0xff]
    %v692 = vld [vmem:[#allocation7 + $0x18] sm:$0xff]
    %v693 = vld [vmem:[#allocation7 + $0x20] sm:$0xff]
    %v694 = vld [vmem:[#allocation7 + $0x28] sm:$0xff]
    %v695 = vld [vmem:[#allocation7 + $0x30] sm:$0xff]
    %v696 = vld [vmem:[#allocation7 + $0x38] sm:$0xff]
    %v697 = vld [vmem:[#allocation7 + $0x40] sm:$0xff]
    %v698 = vld [vmem:[#allocation7 + $0x48] sm:$0xff]
    %v699 = vld [vmem:[#allocation7 + $0x50] sm:$0xff]
    %v700 = vld [vmem:[#allocation7 + $0x58] sm:$0xff]
    %v701 = vld [vmem:[#allocation7 + $0x60] sm:$0xff]
    %v702 = vld [vmem:[#allocation7 + $0x68] sm:$0xff]
    %v703 = vld [vmem:[#allocation7 + $0x70] sm:$0xff]
    %v704 = vld [vmem:[#allocation7 + $0x78] sm:$0xff]
    %v705 = vld [vmem:[#allocation7 + $0x80] sm:$0xff]
    %v706 = vld [vmem:[#allocation7 + $0x88] sm:$0xff]
    %v707 = vld [vmem:[#allocation7 + $0x90] sm:$0xff]
    %v708 = vld [vmem:[#allocation7 + $0x98] sm:$0xff]
    %v709 = vld [vmem:[#allocation7 + $0xa0] sm:$0xff]
    %v710 = vld [vmem:[#allocation7 + $0xa8] sm:$0xff]
    %v711 = vld [vmem:[#allocation7 + $0xb0] sm:$0xff]
    %v712 = vld [vmem:[#allocation7 + $0xb8] sm:$0xff]
    %v713 = vld [vmem:[#allocation7 + $0xc0] sm:$0xff]
    %v714 = vld [vmem:[#allocation7 + $0xc8] sm:$0xff]
    %v715 = vld [vmem:[#allocation7 + $0xd0] sm:$0xff]
    %v716 = vld [vmem:[#allocation7 + $0xd8] sm:$0xff]
    %v717 = vld [vmem:[#allocation7 + $0xe0] sm:$0xff]
    %v718 = vld [vmem:[#allocation7 + $0xe8] sm:$0xff]
    %v719 = vld [vmem:[#allocation7 + $0xf0] sm:$0xff]
    %v720 = vld [vmem:[#allocation7 + $0xf8] sm:$0xff]
    %v721 = vld [vmem:[#allocation7 + $0x100] sm:$0xff]
    %v722 = vld [vmem:[#allocation7 + $0x108] sm:$0xff]
    %v723 = vld [vmem:[#allocation7 + $0x110] sm:$0xff]
    %v724 = vld [vmem:[#allocation7 + $0x118] sm:$0xff]
    %v725 = vld [vmem:[#allocation7 + $0x120] sm:$0xff]
    %v726 = vld [vmem:[#allocation7 + $0x128] sm:$0xff]
    %v727 = vld [vmem:[#allocation7 + $0x130] sm:$0xff]
    %v728 = vld [vmem:[#allocation7 + $0x138] sm:$0xff]
    %v729 = vld [vmem:[#allocation7 + $0x140] sm:$0xff]
    %v730 = vld [vmem:[#allocation7 + $0x148] sm:$0xff]
    %v731 = vld [vmem:[#allocation7 + $0x150] sm:$0xff]
    %v732 = vld [vmem:[#allocation7 + $0x158] sm:$0xff]
    %v733 = vld [vmem:[#allocation7 + $0x160] sm:$0xff]
    %v734 = vld [vmem:[#allocation7 + $0x168] sm:$0xff]
    %v735 = vld [vmem:[#allocation7 + $0x170] sm:$0xff]
    %v736 = vld [vmem:[#allocation7 + $0x178] sm:$0xff]
    %v737 = vld [vmem:[#allocation7 + $0x180] sm:$0xff]
    %v738 = vld [vmem:[#allocation7 + $0x188] sm:$0xff]
    %v739 = vld [vmem:[#allocation7 + $0x190] sm:$0xff]
    %v740 = vld [vmem:[#allocation7 + $0x198] sm:$0xff]
    %v741 = vld [vmem:[#allocation7 + $0x1a0] sm:$0xff]
    %v742 = vld [vmem:[#allocation7 + $0x1a8] sm:$0xff]
    %v743 = vld [vmem:[#allocation7 + $0x1b0] sm:$0xff]
    %v744 = vld [vmem:[#allocation7 + $0x1b8] sm:$0xff]
    %v745 = vld [vmem:[#allocation7 + $0x1c0] sm:$0xff]
    %v746 = vld [vmem:[#allocation7 + $0x1c8] sm:$0xff]
    %v747 = vld [vmem:[#allocation7 + $0x1d0] sm:$0xff]
    %v748 = vld [vmem:[#allocation7 + $0x1d8] sm:$0xff]
    %v749 = vld [vmem:[#allocation7 + $0x1e0] sm:$0xff]
    %v750 = vld [vmem:[#allocation7 + $0x1e8] sm:$0xff]
    %v751 = vld [vmem:[#allocation7 + $0x1f0] sm:$0xff]
    %v752 = vld [vmem:[#allocation7 + $0x1f8] sm:$0xff]
    %v753 = vld [vmem:[#allocation7 + $0x200] sm:$0xff]
    %v754 = vld [vmem:[#allocation7 + $0x208] sm:$0xff]
    %v755 = vld [vmem:[#allocation7 + $0x210] sm:$0xff]
    %v756 = vld [vmem:[#allocation7 + $0x218] sm:$0xff]
    %v757 = vld [vmem:[#allocation7 + $0x220] sm:$0xff]
    %v758 = vld [vmem:[#allocation7 + $0x228] sm:$0xff]
    %v759 = vld [vmem:[#allocation7 + $0x230] sm:$0xff]
    %v760 = vld [vmem:[#allocation7 + $0x238] sm:$0xff]
    %v761 = vld [vmem:[#allocation7 + $0x240] sm:$0xff]
    %v762 = vld [vmem:[#allocation7 + $0x248] sm:$0xff]
    %v763 = vld [vmem:[#allocation7 + $0x250] sm:$0xff]
    %v764 = vld [vmem:[#allocation7 + $0x258] sm:$0xff]
    %v765 = vld [vmem:[#allocation7 + $0x260] sm:$0xff]
    %v766 = vld [vmem:[#allocation7 + $0x268] sm:$0xff]
    %v767 = vld [vmem:[#allocation7 + $0x270] sm:$0xff]
    %v768 = vld [vmem:[#allocation7 + $0x278] sm:$0xff]
    %v769 = vld [vmem:[#allocation7 + $0x280] sm:$0xff]
    %v770 = vld [vmem:[#allocation7 + $0x288] sm:$0xff]
    %v771 = vld [vmem:[#allocation7 + $0x290] sm:$0xff]
    %v772 = vld [vmem:[#allocation7 + $0x298] sm:$0xff]
    %v773 = vld [vmem:[#allocation7 + $0x2a0] sm:$0xff]
    %v774 = vld [vmem:[#allocation7 + $0x2a8] sm:$0xff]
    %v775 = vld [vmem:[#allocation7 + $0x2b0] sm:$0xff]
    %v776 = vld [vmem:[#allocation7 + $0x2b8] sm:$0xff]
    %v777 = vld [vmem:[#allocation7 + $0x2c0] sm:$0xff]
    %v778 = vld [vmem:[#allocation7 + $0x2c8] sm:$0xff]
    %v779 = vld [vmem:[#allocation7 + $0x2d0] sm:$0xff]
    %v780 = vld [vmem:[#allocation7 + $0x2d8] sm:$0xff]
    %v781 = vld [vmem:[#allocation7 + $0x2e0] sm:$0xff]
    %v782 = vld [vmem:[#allocation7 + $0x2e8] sm:$0xff]
    %v783 = vld [vmem:[#allocation7 + $0x2f0] sm:$0xff]
    %v784 = vld [vmem:[#allocation7 + $0x2f8] sm:$0xff]
    %v785 = vld [vmem:[#allocation7 + $0x300] sm:$0xff]
    %v786 = vld [vmem:[#allocation7 + $0x308] sm:$0xff]
    %v787 = vld [vmem:[#allocation7 + $0x310] sm:$0xff]
    %v788 = vld [vmem:[#allocation7 + $0x318] sm:$0xff]
    %v789 = vld [vmem:[#allocation7 + $0x320] sm:$0xff]
    %v790 = vld [vmem:[#allocation7 + $0x328] sm:$0xff]
    %v791 = vld [vmem:[#allocation7 + $0x330] sm:$0xff]
    %v792 = vld [vmem:[#allocation7 + $0x338] sm:$0xff]
    %v793 = vld [vmem:[#allocation7 + $0x340] sm:$0xff]
    %v794 = vld [vmem:[#allocation7 + $0x348] sm:$0xff]
    %v795 = vld [vmem:[#allocation7 + $0x350] sm:$0xff]
    %v796 = vld [vmem:[#allocation7 + $0x358] sm:$0xff]
    %v797 = vld [vmem:[#allocation7 + $0x360] sm:$0xff]
    %v798 = vld [vmem:[#allocation7 + $0x368] sm:$0xff]
    %v799 = vld [vmem:[#allocation7 + $0x370] sm:$0xff]
    %v800 = vld [vmem:[#allocation7 + $0x378] sm:$0xff]
    %v801 = vld [vmem:[#allocation7 + $0x380] sm:$0xff]
    %v802 = vld [vmem:[#allocation7 + $0x388] sm:$0xff]
    %v803 = vld [vmem:[#allocation7 + $0x390] sm:$0xff]
    %v804 = vld [vmem:[#allocation7 + $0x398] sm:$0xff]
    %v805 = vld [vmem:[#allocation7 + $0x3a0] sm:$0xff]
    %v806 = vld [vmem:[#allocation7 + $0x3a8] sm:$0xff]
    %v807 = vld [vmem:[#allocation7 + $0x3b0] sm:$0xff]
    %v808 = vld [vmem:[#allocation7 + $0x3b8] sm:$0xff]
    %v809 = vld [vmem:[#allocation7 + $0x3c0] sm:$0xff]
    %v810 = vld [vmem:[#allocation7 + $0x3c8] sm:$0xff]
    %v811 = vld [vmem:[#allocation7 + $0x3d0] sm:$0xff]
    %v812 = vld [vmem:[#allocation7 + $0x3d8] sm:$0xff]
    %v813 = vld [vmem:[#allocation7 + $0x3e0] sm:$0xff]
    %v814 = vld [vmem:[#allocation7 + $0x3e8] sm:$0xff]
    %v815 = vld [vmem:[#allocation7 + $0x3f0] sm:$0xff]
    %v816 = vld [vmem:[#allocation7 + $0x3f8] sm:$0xff]
    %s817 = scalar_lea.vmem [#allocation7], 1024
    %v818 = vld [vmem:[%s817] sm:$0xff]
    %v819 = vld [vmem:[%s817 + $0x8] sm:$0xff]
    %v820 = vld [vmem:[%s817 + $0x10] sm:$0xff]
    %v821 = vld [vmem:[%s817 + $0x18] sm:$0xff]
    %v822 = vld [vmem:[%s817 + $0x20] sm:$0xff]
    %v823 = vld [vmem:[%s817 + $0x28] sm:$0xff]
    %v824 = vld [vmem:[%s817 + $0x30] sm:$0xff]
    %v825 = vld [vmem:[%s817 + $0x38] sm:$0xff]
    %v826 = vld [vmem:[%s817 + $0x40] sm:$0xff]
    %v827 = vld [vmem:[%s817 + $0x48] sm:$0xff]
    %v828 = vld [vmem:[%s817 + $0x50] sm:$0xff]
    %v829 = vld [vmem:[%s817 + $0x58] sm:$0xff]
    %v830 = vld [vmem:[%s817 + $0x60] sm:$0xff]
    %v831 = vld [vmem:[%s817 + $0x68] sm:$0xff]
    %v832 = vld [vmem:[%s817 + $0x70] sm:$0xff]
    %v833 = vld [vmem:[%s817 + $0x78] sm:$0xff]
    %v834 = vld [vmem:[%s817 + $0x80] sm:$0xff]
    %v835 = vld [vmem:[%s817 + $0x88] sm:$0xff]
    %v836 = vld [vmem:[%s817 + $0x90] sm:$0xff]
    %v837 = vld [vmem:[%s817 + $0x98] sm:$0xff]
    %v838 = vld [vmem:[%s817 + $0xa0] sm:$0xff]
    %v839 = vld [vmem:[%s817 + $0xa8] sm:$0xff]
    %v840 = vld [vmem:[%s817 + $0xb0] sm:$0xff]
    %v841 = vld [vmem:[%s817 + $0xb8] sm:$0xff]
    %v842 = vld [vmem:[%s817 + $0xc0] sm:$0xff]
    %v843 = vld [vmem:[%s817 + $0xc8] sm:$0xff]
    %v844 = vld [vmem:[%s817 + $0xd0] sm:$0xff]
    %v845 = vld [vmem:[%s817 + $0xd8] sm:$0xff]
    %v846 = vld [vmem:[%s817 + $0xe0] sm:$0xff]
    %v847 = vld [vmem:[%s817 + $0xe8] sm:$0xff]
    %v848 = vld [vmem:[%s817 + $0xf0] sm:$0xff]
    %v849 = vld [vmem:[%s817 + $0xf8] sm:$0xff]
    %v850 = vld [vmem:[%s817 + $0x100] sm:$0xff]
    %v851 = vld [vmem:[%s817 + $0x108] sm:$0xff]
    %v852 = vld [vmem:[%s817 + $0x110] sm:$0xff]
    %v853 = vld [vmem:[%s817 + $0x118] sm:$0xff]
    %v854 = vld [vmem:[%s817 + $0x120] sm:$0xff]
    %v855 = vld [vmem:[%s817 + $0x128] sm:$0xff]
    %v856 = vld [vmem:[%s817 + $0x130] sm:$0xff]
    %v857 = vld [vmem:[%s817 + $0x138] sm:$0xff]
    %v858 = vld [vmem:[%s817 + $0x140] sm:$0xff]
    %v859 = vld [vmem:[%s817 + $0x148] sm:$0xff]
    %v860 = vld [vmem:[%s817 + $0x150] sm:$0xff]
    %v861 = vld [vmem:[%s817 + $0x158] sm:$0xff]
    %v862 = vld [vmem:[%s817 + $0x160] sm:$0xff]
    %v863 = vld [vmem:[%s817 + $0x168] sm:$0xff]
    %v864 = vld [vmem:[%s817 + $0x170] sm:$0xff]
    %v865 = vld [vmem:[%s817 + $0x178] sm:$0xff]
    %v866 = vld [vmem:[%s817 + $0x180] sm:$0xff]
    %v867 = vld [vmem:[%s817 + $0x188] sm:$0xff]
    %v868 = vld [vmem:[%s817 + $0x190] sm:$0xff]
    %v869 = vld [vmem:[%s817 + $0x198] sm:$0xff]
    %v870 = vld [vmem:[%s817 + $0x1a0] sm:$0xff]
    %v871 = vld [vmem:[%s817 + $0x1a8] sm:$0xff]
    %v872 = vld [vmem:[%s817 + $0x1b0] sm:$0xff]
    %v873 = vld [vmem:[%s817 + $0x1b8] sm:$0xff]
    %v874 = vld [vmem:[%s817 + $0x1c0] sm:$0xff]
    %v875 = vld [vmem:[%s817 + $0x1c8] sm:$0xff]
    %v876 = vld [vmem:[%s817 + $0x1d0] sm:$0xff]
    %v877 = vld [vmem:[%s817 + $0x1d8] sm:$0xff]
    %v878 = vld [vmem:[%s817 + $0x1e0] sm:$0xff]
    %v879 = vld [vmem:[%s817 + $0x1e8] sm:$0xff]
    %v880 = vld [vmem:[%s817 + $0x1f0] sm:$0xff]
    %v881 = vld [vmem:[%s817 + $0x1f8] sm:$0xff]
    %v882 = vld [vmem:[%s817 + $0x200] sm:$0xff]
    %v883 = vld [vmem:[%s817 + $0x208] sm:$0xff]
    %v884 = vld [vmem:[%s817 + $0x210] sm:$0xff]
    %v885 = vld [vmem:[%s817 + $0x218] sm:$0xff]
    %v886 = vld [vmem:[%s817 + $0x220] sm:$0xff]
    %v887 = vld [vmem:[%s817 + $0x228] sm:$0xff]
    %v888 = vld [vmem:[%s817 + $0x230] sm:$0xff]
    %v889 = vld [vmem:[%s817 + $0x238] sm:$0xff]
    %v890 = vld [vmem:[%s817 + $0x240] sm:$0xff]
    %v891 = vld [vmem:[%s817 + $0x248] sm:$0xff]
    %v892 = vld [vmem:[%s817 + $0x250] sm:$0xff]
    %v893 = vld [vmem:[%s817 + $0x258] sm:$0xff]
    %v894 = vld [vmem:[%s817 + $0x260] sm:$0xff]
    %v895 = vld [vmem:[%s817 + $0x268] sm:$0xff]
    %v896 = vld [vmem:[%s817 + $0x270] sm:$0xff]
    %v897 = vld [vmem:[%s817 + $0x278] sm:$0xff]
    %v898 = vld [vmem:[%s817 + $0x280] sm:$0xff]
    %v899 = vld [vmem:[%s817 + $0x288] sm:$0xff]
    %v900 = vld [vmem:[%s817 + $0x290] sm:$0xff]
    %v901 = vld [vmem:[%s817 + $0x298] sm:$0xff]
    %v902 = vld [vmem:[%s817 + $0x2a0] sm:$0xff]
    %v903 = vld [vmem:[%s817 + $0x2a8] sm:$0xff]
    %v904 = vld [vmem:[%s817 + $0x2b0] sm:$0xff]
    %v905 = vld [vmem:[%s817 + $0x2b8] sm:$0xff]
    %v906 = vld [vmem:[%s817 + $0x2c0] sm:$0xff]
    %v907 = vld [vmem:[%s817 + $0x2c8] sm:$0xff]
    %v908 = vld [vmem:[%s817 + $0x2d0] sm:$0xff]
    %v909 = vld [vmem:[%s817 + $0x2d8] sm:$0xff]
    %v910 = vld [vmem:[%s817 + $0x2e0] sm:$0xff]
    %v911 = vld [vmem:[%s817 + $0x2e8] sm:$0xff]
    %v912 = vld [vmem:[%s817 + $0x2f0] sm:$0xff]
    %v913 = vld [vmem:[%s817 + $0x2f8] sm:$0xff]
    %v914 = vld [vmem:[%s817 + $0x300] sm:$0xff]
    %v915 = vld [vmem:[%s817 + $0x308] sm:$0xff]
    %v916 = vld [vmem:[%s817 + $0x310] sm:$0xff]
    %v917 = vld [vmem:[%s817 + $0x318] sm:$0xff]
    %v918 = vld [vmem:[%s817 + $0x320] sm:$0xff]
    %v919 = vld [vmem:[%s817 + $0x328] sm:$0xff]
    %v920 = vld [vmem:[%s817 + $0x330] sm:$0xff]
    %v921 = vld [vmem:[%s817 + $0x338] sm:$0xff]
    %v922 = vld [vmem:[%s817 + $0x340] sm:$0xff]
    %v923 = vld [vmem:[%s817 + $0x348] sm:$0xff]
    %v924 = vld [vmem:[%s817 + $0x350] sm:$0xff]
    %v925 = vld [vmem:[%s817 + $0x358] sm:$0xff]
    %v926 = vld [vmem:[%s817 + $0x360] sm:$0xff]
    %v927 = vld [vmem:[%s817 + $0x368] sm:$0xff]
    %v928 = vld [vmem:[%s817 + $0x370] sm:$0xff]
    %v929 = vld [vmem:[%s817 + $0x378] sm:$0xff]
    %v930 = vld [vmem:[%s817 + $0x380] sm:$0xff]
    %v931 = vld [vmem:[%s817 + $0x388] sm:$0xff]
    %v932 = vld [vmem:[%s817 + $0x390] sm:$0xff]
    %v933 = vld [vmem:[%s817 + $0x398] sm:$0xff]
    %v934 = vld [vmem:[%s817 + $0x3a0] sm:$0xff]
    %v935 = vld [vmem:[%s817 + $0x3a8] sm:$0xff]
    %v936 = vld [vmem:[%s817 + $0x3b0] sm:$0xff]
    %v937 = vld [vmem:[%s817 + $0x3b8] sm:$0xff]
    %v938 = vld [vmem:[%s817 + $0x3c0] sm:$0xff]
    %v939 = vld [vmem:[%s817 + $0x3c8] sm:$0xff]
    %v940 = vld [vmem:[%s817 + $0x3d0] sm:$0xff]
    %v941 = vld [vmem:[%s817 + $0x3d8] sm:$0xff]
    %v942 = vld [vmem:[%s817 + $0x3e0] sm:$0xff]
    %v943 = vld [vmem:[%s817 + $0x3e8] sm:$0xff]
    %v944 = vld [vmem:[%s817 + $0x3f0] sm:$0xff]
    %v945 = vld [vmem:[%s817 + $0x3f8] sm:$0xff]
    %946 = vmatprep.subr.mxu0 %v879
    %947 = vmatpush1.msra.mxu0 %v878
    %948 = vmatprep.subr.mxu0 %v875
    %949 = vmatpush1.msra.mxu0 %v874
    %950 = vmatprep.subr.mxu0 %v871
    %951 = vmatpush1.msra.mxu0 %v870
    %952 = vmatprep.subr.mxu0 %v867
    %953 = vmatpush1.msra.mxu0 %v866
    %954 = vmatprep.subr.mxu0 %v863
    %955 = vmatpush1.msra.mxu0 %v862
    %956 = vmatprep.subr.mxu0 %v859
    %957 = vmatpush1.msra.mxu0 %v858
    %958 = vmatprep.subr.mxu0 %v855
    %959 = vmatpush1.msra.mxu0 %v854
    %960 = vmatprep.subr.mxu0 %v851
    %961 = vmatpush1.msra.mxu0 %v850
    %962 = vmatprep.subr.mxu0 %v847
    %963 = vmatpush1.msra.mxu0 %v846
    %964 = vmatprep.subr.mxu0 %v843
    %965 = vmatpush1.msra.mxu0 %v842
    %966 = vmatprep.subr.mxu0 %v839
    %967 = vmatpush1.msra.mxu0 %v838
    %968 = vmatprep.subr.mxu0 %v835
    %969 = vmatpush1.msra.mxu0 %v834
    %970 = vmatprep.subr.mxu0 %v831
    %971 = vmatpush1.msra.mxu0 %v830
    %972 = vmatprep.subr.mxu0 %v827
    %973 = vmatpush1.msra.mxu0 %v826
    %974 = vmatprep.subr.mxu0 %v823
    %975 = vmatpush1.msra.mxu0 %v822
    %976 = vmatprep.subr.mxu0 %v819
    %977 = vmatpush1.msra.mxu0 %v818
    %978 = vmatprep.subr.mxu0 %v943
    %979 = vmatpush2.msra.mxu0 %v942
    %980 = vmatprep.subr.mxu0 %v939
    %981 = vmatpush2.msra.mxu0 %v938
    %982 = vmatprep.subr.mxu0 %v935
    %983 = vmatpush2.msra.mxu0 %v934
    %984 = vmatprep.subr.mxu0 %v931
    %985 = vmatpush2.msra.mxu0 %v930
    %986 = vmatprep.subr.mxu0 %v927
    %987 = vmatpush2.msra.mxu0 %v926
    %988 = vmatprep.subr.mxu0 %v923
    %989 = vmatpush2.msra.mxu0 %v922
    %990 = vmatprep.subr.mxu0 %v919
    %991 = vmatpush2.msra.mxu0 %v918
    %992 = vmatprep.subr.mxu0 %v915
    %993 = vmatpush2.msra.mxu0 %v914
    %994 = vmatprep.subr.mxu0 %v911
    %995 = vmatpush2.msra.mxu0 %v910
    %996 = vmatprep.subr.mxu0 %v907
    %997 = vmatpush2.msra.mxu0 %v906
    %998 = vmatprep.subr.mxu0 %v903
    %999 = vmatpush2.msra.mxu0 %v902
    %1000 = vmatprep.subr.mxu0 %v899
    %1001 = vmatpush2.msra.mxu0 %v898
    %1002 = vmatprep.subr.mxu0 %v895
    %1003 = vmatpush2.msra.mxu0 %v894
    %1004 = vmatprep.subr.mxu0 %v891
    %1005 = vmatpush2.msra.mxu0 %v890
    %1006 = vmatprep.subr.mxu0 %v887
    %1007 = vmatpush2.msra.mxu0 %v886
    %1008 = vmatprep.subr.mxu0 %v883
    %1009 = vmatpush2.msra.mxu0 %v882
    %1010 = vmatprep.mubr.f32.mxu0 %v379
    %1011 = vmatmul.mubr.f32.gmra.mxu0 %v378
    %v1012 = vpop.f32.mrf.mxu0
    %v1013 = vadd.f32 0.0, %v1012
    %v1014 = vpop.f32.mrf.mxu0
    %v1015 = vadd.f32 0.0, %v1014
    %1016 = vmatprep.mubr.f32.mxu0 %v381
    %1017 = vmatmul.mubr.f32.gmra.mxu0 %v380
    %v1018 = vpop.f32.mrf.mxu0
    %v1019 = vadd.f32 0.0, %v1018
    %v1020 = vpop.f32.mrf.mxu0
    %v1021 = vadd.f32 0.0, %v1020
    %1022 = vmatprep.mubr.f32.mxu0 %v383
    %1023 = vmatmul.mubr.f32.gmra.mxu0 %v382
    %v1024 = vpop.f32.mrf.mxu0
    %v1025 = vadd.f32 0.0, %v1024
    %v1026 = vpop.f32.mrf.mxu0
    %v1027 = vadd.f32 0.0, %v1026
    %1028 = vmatprep.mubr.f32.mxu0 %v385
    %1029 = vmatmul.mubr.f32.gmra.mxu0 %v384
    %v1030 = vpop.f32.mrf.mxu0
    %v1031 = vadd.f32 0.0, %v1030
    %v1032 = vpop.f32.mrf.mxu0
    %v1033 = vadd.f32 0.0, %v1032
    %1034 = vdwg.mxu0
    %1035 = vmatprep.subr.mxu0 %v881
    %1036 = vmatpush1.msra.mxu0 %v880
    %1037 = vmatprep.subr.mxu0 %v877
    %1038 = vmatpush1.msra.mxu0 %v876
    %1039 = vmatprep.subr.mxu0 %v873
    %1040 = vmatpush1.msra.mxu0 %v872
    %1041 = vmatprep.subr.mxu0 %v869
    %1042 = vmatpush1.msra.mxu0 %v868
    %1043 = vmatprep.subr.mxu0 %v865
    %1044 = vmatpush1.msra.mxu0 %v864
    %1045 = vmatprep.subr.mxu0 %v861
    %1046 = vmatpush1.msra.mxu0 %v860
    %1047 = vmatprep.subr.mxu0 %v857
    %1048 = vmatpush1.msra.mxu0 %v856
    %1049 = vmatprep.subr.mxu0 %v853
    %1050 = vmatpush1.msra.mxu0 %v852
    %1051 = vmatprep.subr.mxu0 %v849
    %1052 = vmatpush1.msra.mxu0 %v848
    %1053 = vmatprep.subr.mxu0 %v845
    %1054 = vmatpush1.msra.mxu0 %v844
    %1055 = vmatprep.subr.mxu0 %v841
    %1056 = vmatpush1.msra.mxu0 %v840
    %1057 = vmatprep.subr.mxu0 %v837
    %1058 = vmatpush1.msra.mxu0 %v836
    %1059 = vmatprep.subr.mxu0 %v833
    %1060 = vmatpush1.msra.mxu0 %v832
    %1061 = vmatprep.subr.mxu0 %v829
    %1062 = vmatpush1.msra.mxu0 %v828
    %1063 = vmatprep.subr.mxu0 %v825
    %1064 = vmatpush1.msra.mxu0 %v824
    %1065 = vmatprep.subr.mxu0 %v821
    %1066 = vmatpush1.msra.mxu0 %v820
    %1067 = vmatprep.subr.mxu0 %v945
    %1068 = vmatpush2.msra.mxu0 %v944
    %1069 = vmatprep.subr.mxu0 %v941
    %1070 = vmatpush2.msra.mxu0 %v940
    %1071 = vmatprep.subr.mxu0 %v937
    %1072 = vmatpush2.msra.mxu0 %v936
    %1073 = vmatprep.subr.mxu0 %v933
    %1074 = vmatpush2.msra.mxu0 %v932
    %1075 = vmatprep.subr.mxu0 %v929
    %1076 = vmatpush2.msra.mxu0 %v928
    %1077 = vmatprep.subr.mxu0 %v925
    %1078 = vmatpush2.msra.mxu0 %v924
    %1079 = vmatprep.subr.mxu0 %v921
    %1080 = vmatpush2.msra.mxu0 %v920
    %1081 = vmatprep.subr.mxu0 %v917
    %1082 = vmatpush2.msra.mxu0 %v916
    %1083 = vmatprep.subr.mxu0 %v913
    %1084 = vmatpush2.msra.mxu0 %v912
    %1085 = vmatprep.subr.mxu0 %v909
    %1086 = vmatpush2.msra.mxu0 %v908
    %1087 = vmatprep.subr.mxu0 %v905
    %1088 = vmatpush2.msra.mxu0 %v904
    %1089 = vmatprep.subr.mxu0 %v901
    %1090 = vmatpush2.msra.mxu0 %v900
    %1091 = vmatprep.subr.mxu0 %v897
    %1092 = vmatpush2.msra.mxu0 %v896
    %1093 = vmatprep.subr.mxu0 %v893
    %1094 = vmatpush2.msra.mxu0 %v892
    %1095 = vmatprep.subr.mxu0 %v889
    %1096 = vmatpush2.msra.mxu0 %v888
    %1097 = vmatprep.subr.mxu0 %v885
    %1098 = vmatpush2.msra.mxu0 %v884
    %1099 = vmatprep.mubr.f32.mxu0 %v379
    %1100 = vmatmul.mubr.f32.gmra.mxu0 %v378
    %v1101 = vpop.f32.mrf.mxu0
    %v1102 = vadd.f32 0.0, %v1101
    %v1103 = vpop.f32.mrf.mxu0
    %v1104 = vadd.f32 0.0, %v1103
    %1105 = vmatprep.mubr.f32.mxu0 %v381
    %1106 = vmatmul.mubr.f32.gmra.mxu0 %v380
    %v1107 = vpop.f32.mrf.mxu0
    %v1108 = vadd.f32 0.0, %v1107
    %v1109 = vpop.f32.mrf.mxu0
    %v1110 = vadd.f32 0.0, %v1109
    %1111 = vmatprep.mubr.f32.mxu0 %v383
    %1112 = vmatmul.mubr.f32.gmra.mxu0 %v382
    %v1113 = vpop.f32.mrf.mxu0
    %v1114 = vadd.f32 0.0, %v1113
    %v1115 = vpop.f32.mrf.mxu0
    %v1116 = vadd.f32 0.0, %v1115
    %1117 = vmatprep.mubr.f32.mxu0 %v385
    %1118 = vmatmul.mubr.f32.gmra.mxu0 %v384
    %v1119 = vpop.f32.mrf.mxu0
    %v1120 = vadd.f32 0.0, %v1119
    %v1121 = vpop.f32.mrf.mxu0
    %v1122 = vadd.f32 0.0, %v1121
    %1123 = vdwg.mxu0
    %1124 = vmatprep.subr.mxu0 %v750
    %1125 = vmatpush1.msra.mxu0 %v749
    %1126 = vmatprep.subr.mxu0 %v746
    %1127 = vmatpush1.msra.mxu0 %v745
    %1128 = vmatprep.subr.mxu0 %v742
    %1129 = vmatpush1.msra.mxu0 %v741
    %1130 = vmatprep.subr.mxu0 %v738
    %1131 = vmatpush1.msra.mxu0 %v737
    %1132 = vmatprep.subr.mxu0 %v734
    %1133 = vmatpush1.msra.mxu0 %v733
    %1134 = vmatprep.subr.mxu0 %v730
    %1135 = vmatpush1.msra.mxu0 %v729
    %1136 = vmatprep.subr.mxu0 %v726
    %1137 = vmatpush1.msra.mxu0 %v725
    %1138 = vmatprep.subr.mxu0 %v722
    %1139 = vmatpush1.msra.mxu0 %v721
    %1140 = vmatprep.subr.mxu0 %v718
    %1141 = vmatpush1.msra.mxu0 %v717
    %1142 = vmatprep.subr.mxu0 %v714
    %1143 = vmatpush1.msra.mxu0 %v713
    %1144 = vmatprep.subr.mxu0 %v710
    %1145 = vmatpush1.msra.mxu0 %v709
    %1146 = vmatprep.subr.mxu0 %v706
    %1147 = vmatpush1.msra.mxu0 %v705
    %1148 = vmatprep.subr.mxu0 %v702
    %1149 = vmatpush1.msra.mxu0 %v701
    %1150 = vmatprep.subr.mxu0 %v698
    %1151 = vmatpush1.msra.mxu0 %v697
    %1152 = vmatprep.subr.mxu0 %v694
    %1153 = vmatpush1.msra.mxu0 %v693
    %1154 = vmatprep.subr.mxu0 %v690
    %1155 = vmatpush1.msra.mxu0 %v689
    %1156 = vmatprep.subr.mxu0 %v814
    %1157 = vmatpush2.msra.mxu0 %v813
    %1158 = vmatprep.subr.mxu0 %v810
    %1159 = vmatpush2.msra.mxu0 %v809
    %1160 = vmatprep.subr.mxu0 %v806
    %1161 = vmatpush2.msra.mxu0 %v805
    %1162 = vmatprep.subr.mxu0 %v802
    %1163 = vmatpush2.msra.mxu0 %v801
    %1164 = vmatprep.subr.mxu0 %v798
    %1165 = vmatpush2.msra.mxu0 %v797
    %1166 = vmatprep.subr.mxu0 %v794
    %1167 = vmatpush2.msra.mxu0 %v793
    %1168 = vmatprep.subr.mxu0 %v790
    %1169 = vmatpush2.msra.mxu0 %v789
    %1170 = vmatprep.subr.mxu0 %v786
    %1171 = vmatpush2.msra.mxu0 %v785
    %1172 = vmatprep.subr.mxu0 %v782
    %1173 = vmatpush2.msra.mxu0 %v781
    %1174 = vmatprep.subr.mxu0 %v778
    %1175 = vmatpush2.msra.mxu0 %v777
    %1176 = vmatprep.subr.mxu0 %v774
    %1177 = vmatpush2.msra.mxu0 %v773
    %1178 = vmatprep.subr.mxu0 %v770
    %1179 = vmatpush2.msra.mxu0 %v769
    %1180 = vmatprep.subr.mxu0 %v766
    %1181 = vmatpush2.msra.mxu0 %v765
    %1182 = vmatprep.subr.mxu0 %v762
    %1183 = vmatpush2.msra.mxu0 %v761
    %1184 = vmatprep.subr.mxu0 %v758
    %1185 = vmatpush2.msra.mxu0 %v757
    %1186 = vmatprep.subr.mxu0 %v754
    %1187 = vmatpush2.msra.mxu0 %v753
    %1188 = vmatprep.mubr.f32.mxu0 %v653
    %1189 = vmatmul.mubr.f32.gmra.mxu0 %v652
    %v1190 = vpop.f32.mrf.mxu0
    %v1191 = vadd.f32 %v1013, %v1190
    %v1192 = vpop.f32.mrf.mxu0
    %v1193 = vadd.f32 %v1015, %v1192
    %1194 = vmatprep.mubr.f32.mxu0 %v633
    %1195 = vmatmul.mubr.f32.gmra.mxu0 %v631
    %v1196 = vpop.f32.mrf.mxu0
    %v1197 = vadd.f32 %v1019, %v1196
    %v1198 = vpop.f32.mrf.mxu0
    %v1199 = vadd.f32 %v1021, %v1198
    %1200 = vmatprep.mubr.f32.mxu0 %v655
    %1201 = vmatmul.mubr.f32.gmra.mxu0 %v654
    %v1202 = vpop.f32.mrf.mxu0
    %v1203 = vadd.f32 %v1025, %v1202
    %v1204 = vpop.f32.mrf.mxu0
    %v1205 = vadd.f32 %v1027, %v1204
    %1206 = vmatprep.mubr.f32.mxu0 %v647
    %1207 = vmatmul.mubr.f32.gmra.mxu0 %v645
    %v1208 = vpop.f32.mrf.mxu0
    %v1209 = vadd.f32 %v1031, %v1208
    %v1210 = vpop.f32.mrf.mxu0
    %v1211 = vadd.f32 %v1033, %v1210
    %1212 = vdwg.mxu0
    %1213 = vmatprep.subr.mxu0 %v752
    %1214 = vmatpush1.msra.mxu0 %v751
    %1215 = vmatprep.subr.mxu0 %v748
    %1216 = vmatpush1.msra.mxu0 %v747
    %1217 = vmatprep.subr.mxu0 %v744
    %1218 = vmatpush1.msra.mxu0 %v743
    %1219 = vmatprep.subr.mxu0 %v740
    %1220 = vmatpush1.msra.mxu0 %v739
    %1221 = vmatprep.subr.mxu0 %v736
    %1222 = vmatpush1.msra.mxu0 %v735
    %1223 = vmatprep.subr.mxu0 %v732
    %1224 = vmatpush1.msra.mxu0 %v731
    %1225 = vmatprep.subr.mxu0 %v728
    %1226 = vmatpush1.msra.mxu0 %v727
    %1227 = vmatprep.subr.mxu0 %v724
    %1228 = vmatpush1.msra.mxu0 %v723
    %1229 = vmatprep.subr.mxu0 %v720
    %1230 = vmatpush1.msra.mxu0 %v719
    %1231 = vmatprep.subr.mxu0 %v716
    %1232 = vmatpush1.msra.mxu0 %v715
    %1233 = vmatprep.subr.mxu0 %v712
    %1234 = vmatpush1.msra.mxu0 %v711
    %1235 = vmatprep.subr.mxu0 %v708
    %1236 = vmatpush1.msra.mxu0 %v707
    %1237 = vmatprep.subr.mxu0 %v704
    %1238 = vmatpush1.msra.mxu0 %v703
    %1239 = vmatprep.subr.mxu0 %v700
    %1240 = vmatpush1.msra.mxu0 %v699
    %1241 = vmatprep.subr.mxu0 %v696
    %1242 = vmatpush1.msra.mxu0 %v695
    %1243 = vmatprep.subr.mxu0 %v692
    %1244 = vmatpush1.msra.mxu0 %v691
    %1245 = vmatprep.subr.mxu0 %v816
    %1246 = vmatpush2.msra.mxu0 %v815
    %1247 = vmatprep.subr.mxu0 %v812
    %1248 = vmatpush2.msra.mxu0 %v811
    %1249 = vmatprep.subr.mxu0 %v808
    %1250 = vmatpush2.msra.mxu0 %v807
    %1251 = vmatprep.subr.mxu0 %v804
    %1252 = vmatpush2.msra.mxu0 %v803
    %1253 = vmatprep.subr.mxu0 %v800
    %1254 = vmatpush2.msra.mxu0 %v799
    %1255 = vmatprep.subr.mxu0 %v796
    %1256 = vmatpush2.msra.mxu0 %v795
    %1257 = vmatprep.subr.mxu0 %v792
    %1258 = vmatpush2.msra.mxu0 %v791
    %1259 = vmatprep.subr.mxu0 %v788
    %1260 = vmatpush2.msra.mxu0 %v787
    %1261 = vmatprep.subr.mxu0 %v784
    %1262 = vmatpush2.msra.mxu0 %v783
    %1263 = vmatprep.subr.mxu0 %v780
    %1264 = vmatpush2.msra.mxu0 %v779
    %1265 = vmatprep.subr.mxu0 %v776
    %1266 = vmatpush2.msra.mxu0 %v775
    %1267 = vmatprep.subr.mxu0 %v772
    %1268 = vmatpush2.msra.mxu0 %v771
    %1269 = vmatprep.subr.mxu0 %v768
    %1270 = vmatpush2.msra.mxu0 %v767
    %1271 = vmatprep.subr.mxu0 %v764
    %1272 = vmatpush2.msra.mxu0 %v763
    %1273 = vmatprep.subr.mxu0 %v760
    %1274 = vmatpush2.msra.mxu0 %v759
    %1275 = vmatprep.subr.mxu0 %v756
    %1276 = vmatpush2.msra.mxu0 %v755
    %1277 = vmatprep.mubr.f32.mxu0 %v653
    %1278 = vmatmul.mubr.f32.gmra.mxu0 %v652
    %v1279 = vpop.f32.mrf.mxu0
    %v1280 = vadd.f32 %v1102, %v1279
    %v1281 = vpop.f32.mrf.mxu0
    %v1282 = vadd.f32 %v1104, %v1281
    %1283 = vmatprep.mubr.f32.mxu0 %v633
    %1284 = vmatmul.mubr.f32.gmra.mxu0 %v631
    %v1285 = vpop.f32.mrf.mxu0
    %v1286 = vadd.f32 %v1108, %v1285
    %v1287 = vpop.f32.mrf.mxu0
    %v1288 = vadd.f32 %v1110, %v1287
    %1289 = vmatprep.mubr.f32.mxu0 %v655
    %1290 = vmatmul.mubr.f32.gmra.mxu0 %v654
    %v1291 = vpop.f32.mrf.mxu0
    %v1292 = vadd.f32 %v1114, %v1291
    %v1293 = vpop.f32.mrf.mxu0
    %v1294 = vadd.f32 %v1116, %v1293
    %1295 = vmatprep.mubr.f32.mxu0 %v647
    %1296 = vmatmul.mubr.f32.gmra.mxu0 %v645
    %v1297 = vpop.f32.mrf.mxu0
    %v1298 = vadd.f32 %v1120, %v1297
    %v1299 = vpop.f32.mrf.mxu0
    %v1300 = vadd.f32 %v1122, %v1299
    %1301 = vdwg.mxu0
    %v1303 = vlaneseq
    %v1304 = vshrl.u32 %v1303, 7
    %v1305 = vsub.s32 0, %v1304
    %v1306 = vrot.slane %v688, %v1305
    %v1307 = vlaneseq
    %v1308 = vshrl.u32 %v1307, 7
    %v1309 = vsub.s32 1, %v1308
    %v1310 = vrot.slane %v688, %v1309
    %v1311 = vlaneseq
    %v1312 = vshrl.u32 %v1311, 7
    %v1313 = vsub.s32 2, %v1312
    %v1314 = vrot.slane %v688, %v1313
    %v1315 = vlaneseq
    %v1316 = vshrl.u32 %v1315, 7
    %v1317 = vsub.s32 3, %v1316
    %v1318 = vrot.slane %v688, %v1317
    %v1323 = vadd.f32 %v1191, %v1306
    %v1324 = vadd.f32 %v1193, %v1310
    %v1325 = vadd.f32 %v1280, %v1314
    %v1326 = vadd.f32 %v1282, %v1318
    %v1327 = vadd.f32 %v1197, %v1306
    %v1328 = vadd.f32 %v1199, %v1310
    %v1329 = vadd.f32 %v1286, %v1314
    %v1330 = vadd.f32 %v1288, %v1318
    %v1331 = vadd.f32 %v1203, %v1306
    %v1332 = vadd.f32 %v1205, %v1310
    %v1333 = vadd.f32 %v1292, %v1314
    %v1334 = vadd.f32 %v1294, %v1318
    %v1335 = vadd.f32 %v1209, %v1306
    %v1336 = vadd.f32 %v1211, %v1310
    %v1337 = vadd.f32 %v1298, %v1314
    %v1338 = vadd.f32 %v1300, %v1318
    %v1339 = vmax.f32 %v1323, 0.0
    %v1340 = vmax.f32 %v1324, 0.0
    %v1341 = vmax.f32 %v1325, 0.0
    %v1342 = vmax.f32 %v1326, 0.0
    %v1343 = vmax.f32 %v1327, 0.0
    %v1344 = vmax.f32 %v1328, 0.0
    %v1345 = vmax.f32 %v1329, 0.0
    %v1346 = vmax.f32 %v1330, 0.0
    %v1347 = vmax.f32 %v1331, 0.0
    %v1348 = vmax.f32 %v1332, 0.0
    %v1349 = vmax.f32 %v1333, 0.0
    %v1350 = vmax.f32 %v1334, 0.0
    %v1351 = vmax.f32 %v1335, 0.0
    %v1352 = vmax.f32 %v1336, 0.0
    %v1353 = vmax.f32 %v1337, 0.0
    %v1354 = vmax.f32 %v1338, 0.0
    %s1355 = scalar_lea.vmem [#allocation7], 2048
    %v1356 = vld [vmem:[%s1355] sm:$0xff]
    %v1357 = vld [vmem:[%s1355 + $0x8] sm:$0xff]
    %v1358 = vld [vmem:[%s1355 + $0x10] sm:$0xff]
    %v1359 = vld [vmem:[%s1355 + $0x18] sm:$0xff]
    %v1360 = vld [vmem:[%s1355 + $0x20] sm:$0xff]
    %v1361 = vld [vmem:[%s1355 + $0x28] sm:$0xff]
    %v1362 = vld [vmem:[%s1355 + $0x30] sm:$0xff]
    %v1363 = vld [vmem:[%s1355 + $0x38] sm:$0xff]
    %v1364 = vld [vmem:[%s1355 + $0x40] sm:$0xff]
    %v1365 = vld [vmem:[%s1355 + $0x48] sm:$0xff]
    %v1366 = vld [vmem:[%s1355 + $0x50] sm:$0xff]
    %v1367 = vld [vmem:[%s1355 + $0x58] sm:$0xff]
    %v1368 = vld [vmem:[%s1355 + $0x60] sm:$0xff]
    %v1369 = vld [vmem:[%s1355 + $0x68] sm:$0xff]
    %v1370 = vld [vmem:[%s1355 + $0x70] sm:$0xff]
    %v1371 = vld [vmem:[%s1355 + $0x78] sm:$0xff]
    %v1372 = vld [vmem:[%s1355 + $0x80] sm:$0xff]
    %v1373 = vld [vmem:[%s1355 + $0x88] sm:$0xff]
    %v1374 = vld [vmem:[%s1355 + $0x90] sm:$0xff]
    %v1375 = vld [vmem:[%s1355 + $0x98] sm:$0xff]
    %v1376 = vld [vmem:[%s1355 + $0xa0] sm:$0xff]
    %v1377 = vld [vmem:[%s1355 + $0xa8] sm:$0xff]
    %v1378 = vld [vmem:[%s1355 + $0xb0] sm:$0xff]
    %v1379 = vld [vmem:[%s1355 + $0xb8] sm:$0xff]
    %v1380 = vld [vmem:[%s1355 + $0xc0] sm:$0xff]
    %v1381 = vld [vmem:[%s1355 + $0xc8] sm:$0xff]
    %v1382 = vld [vmem:[%s1355 + $0xd0] sm:$0xff]
    %v1383 = vld [vmem:[%s1355 + $0xd8] sm:$0xff]
    %v1384 = vld [vmem:[%s1355 + $0xe0] sm:$0xff]
    %v1385 = vld [vmem:[%s1355 + $0xe8] sm:$0xff]
    %v1386 = vld [vmem:[%s1355 + $0xf0] sm:$0xff]
    %v1387 = vld [vmem:[%s1355 + $0xf8] sm:$0xff]
    %v1388 = vld [vmem:[%s1355 + $0x100] sm:$0xff]
    %v1389 = vld [vmem:[%s1355 + $0x108] sm:$0xff]
    %v1390 = vld [vmem:[%s1355 + $0x110] sm:$0xff]
    %v1391 = vld [vmem:[%s1355 + $0x118] sm:$0xff]
    %v1392 = vld [vmem:[%s1355 + $0x120] sm:$0xff]
    %v1393 = vld [vmem:[%s1355 + $0x128] sm:$0xff]
    %v1394 = vld [vmem:[%s1355 + $0x130] sm:$0xff]
    %v1395 = vld [vmem:[%s1355 + $0x138] sm:$0xff]
    %v1396 = vld [vmem:[%s1355 + $0x140] sm:$0xff]
    %v1397 = vld [vmem:[%s1355 + $0x148] sm:$0xff]
    %v1398 = vld [vmem:[%s1355 + $0x150] sm:$0xff]
    %v1399 = vld [vmem:[%s1355 + $0x158] sm:$0xff]
    %v1400 = vld [vmem:[%s1355 + $0x160] sm:$0xff]
    %v1401 = vld [vmem:[%s1355 + $0x168] sm:$0xff]
    %v1402 = vld [vmem:[%s1355 + $0x170] sm:$0xff]
    %v1403 = vld [vmem:[%s1355 + $0x178] sm:$0xff]
    %v1404 = vld [vmem:[%s1355 + $0x180] sm:$0xff]
    %v1405 = vld [vmem:[%s1355 + $0x188] sm:$0xff]
    %v1406 = vld [vmem:[%s1355 + $0x190] sm:$0xff]
    %v1407 = vld [vmem:[%s1355 + $0x198] sm:$0xff]
    %v1408 = vld [vmem:[%s1355 + $0x1a0] sm:$0xff]
    %v1409 = vld [vmem:[%s1355 + $0x1a8] sm:$0xff]
    %v1410 = vld [vmem:[%s1355 + $0x1b0] sm:$0xff]
    %v1411 = vld [vmem:[%s1355 + $0x1b8] sm:$0xff]
    %v1412 = vld [vmem:[%s1355 + $0x1c0] sm:$0xff]
    %v1413 = vld [vmem:[%s1355 + $0x1c8] sm:$0xff]
    %v1414 = vld [vmem:[%s1355 + $0x1d0] sm:$0xff]
    %v1415 = vld [vmem:[%s1355 + $0x1d8] sm:$0xff]
    %v1416 = vld [vmem:[%s1355 + $0x1e0] sm:$0xff]
    %v1417 = vld [vmem:[%s1355 + $0x1e8] sm:$0xff]
    %v1418 = vld [vmem:[%s1355 + $0x1f0] sm:$0xff]
    %v1419 = vld [vmem:[%s1355 + $0x1f8] sm:$0xff]
    %v1420 = vld [vmem:[%s1355 + $0x200] sm:$0xff]
    %v1421 = vld [vmem:[%s1355 + $0x208] sm:$0xff]
    %v1422 = vld [vmem:[%s1355 + $0x210] sm:$0xff]
    %v1423 = vld [vmem:[%s1355 + $0x218] sm:$0xff]
    %v1424 = vld [vmem:[%s1355 + $0x220] sm:$0xff]
    %v1425 = vld [vmem:[%s1355 + $0x228] sm:$0xff]
    %v1426 = vld [vmem:[%s1355 + $0x230] sm:$0xff]
    %v1427 = vld [vmem:[%s1355 + $0x238] sm:$0xff]
    %v1428 = vld [vmem:[%s1355 + $0x240] sm:$0xff]
    %v1429 = vld [vmem:[%s1355 + $0x248] sm:$0xff]
    %v1430 = vld [vmem:[%s1355 + $0x250] sm:$0xff]
    %v1431 = vld [vmem:[%s1355 + $0x258] sm:$0xff]
    %v1432 = vld [vmem:[%s1355 + $0x260] sm:$0xff]
    %v1433 = vld [vmem:[%s1355 + $0x268] sm:$0xff]
    %v1434 = vld [vmem:[%s1355 + $0x270] sm:$0xff]
    %v1435 = vld [vmem:[%s1355 + $0x278] sm:$0xff]
    %v1436 = vld [vmem:[%s1355 + $0x280] sm:$0xff]
    %v1437 = vld [vmem:[%s1355 + $0x288] sm:$0xff]
    %v1438 = vld [vmem:[%s1355 + $0x290] sm:$0xff]
    %v1439 = vld [vmem:[%s1355 + $0x298] sm:$0xff]
    %v1440 = vld [vmem:[%s1355 + $0x2a0] sm:$0xff]
    %v1441 = vld [vmem:[%s1355 + $0x2a8] sm:$0xff]
    %v1442 = vld [vmem:[%s1355 + $0x2b0] sm:$0xff]
    %v1443 = vld [vmem:[%s1355 + $0x2b8] sm:$0xff]
    %v1444 = vld [vmem:[%s1355 + $0x2c0] sm:$0xff]
    %v1445 = vld [vmem:[%s1355 + $0x2c8] sm:$0xff]
    %v1446 = vld [vmem:[%s1355 + $0x2d0] sm:$0xff]
    %v1447 = vld [vmem:[%s1355 + $0x2d8] sm:$0xff]
    %v1448 = vld [vmem:[%s1355 + $0x2e0] sm:$0xff]
    %v1449 = vld [vmem:[%s1355 + $0x2e8] sm:$0xff]
    %v1450 = vld [vmem:[%s1355 + $0x2f0] sm:$0xff]
    %v1451 = vld [vmem:[%s1355 + $0x2f8] sm:$0xff]
    %v1452 = vld [vmem:[%s1355 + $0x300] sm:$0xff]
    %v1453 = vld [vmem:[%s1355 + $0x308] sm:$0xff]
    %v1454 = vld [vmem:[%s1355 + $0x310] sm:$0xff]
    %v1455 = vld [vmem:[%s1355 + $0x318] sm:$0xff]
    %v1456 = vld [vmem:[%s1355 + $0x320] sm:$0xff]
    %v1457 = vld [vmem:[%s1355 + $0x328] sm:$0xff]
    %v1458 = vld [vmem:[%s1355 + $0x330] sm:$0xff]
    %v1459 = vld [vmem:[%s1355 + $0x338] sm:$0xff]
    %v1460 = vld [vmem:[%s1355 + $0x340] sm:$0xff]
    %v1461 = vld [vmem:[%s1355 + $0x348] sm:$0xff]
    %v1462 = vld [vmem:[%s1355 + $0x350] sm:$0xff]
    %v1463 = vld [vmem:[%s1355 + $0x358] sm:$0xff]
    %v1464 = vld [vmem:[%s1355 + $0x360] sm:$0xff]
    %v1465 = vld [vmem:[%s1355 + $0x368] sm:$0xff]
    %v1466 = vld [vmem:[%s1355 + $0x370] sm:$0xff]
    %v1467 = vld [vmem:[%s1355 + $0x378] sm:$0xff]
    %v1468 = vld [vmem:[%s1355 + $0x380] sm:$0xff]
    %v1469 = vld [vmem:[%s1355 + $0x388] sm:$0xff]
    %v1470 = vld [vmem:[%s1355 + $0x390] sm:$0xff]
    %v1471 = vld [vmem:[%s1355 + $0x398] sm:$0xff]
    %v1472 = vld [vmem:[%s1355 + $0x3a0] sm:$0xff]
    %v1473 = vld [vmem:[%s1355 + $0x3a8] sm:$0xff]
    %v1474 = vld [vmem:[%s1355 + $0x3b0] sm:$0xff]
    %v1475 = vld [vmem:[%s1355 + $0x3b8] sm:$0xff]
    %v1476 = vld [vmem:[%s1355 + $0x3c0] sm:$0xff]
    %v1477 = vld [vmem:[%s1355 + $0x3c8] sm:$0xff]
    %v1478 = vld [vmem:[%s1355 + $0x3d0] sm:$0xff]
    %v1479 = vld [vmem:[%s1355 + $0x3d8] sm:$0xff]
    %v1480 = vld [vmem:[%s1355 + $0x3e0] sm:$0xff]
    %v1481 = vld [vmem:[%s1355 + $0x3e8] sm:$0xff]
    %v1482 = vld [vmem:[%s1355 + $0x3f0] sm:$0xff]
    %v1483 = vld [vmem:[%s1355 + $0x3f8] sm:$0xff]
    %s1484 = scalar_lea.vmem [#allocation7], 3072
    %v1485 = vld [vmem:[%s1484] sm:$0xff]
    %v1486 = vld [vmem:[%s1484 + $0x8] sm:$0xff]
    %v1487 = vld [vmem:[%s1484 + $0x10] sm:$0xff]
    %v1488 = vld [vmem:[%s1484 + $0x18] sm:$0xff]
    %v1489 = vld [vmem:[%s1484 + $0x20] sm:$0xff]
    %v1490 = vld [vmem:[%s1484 + $0x28] sm:$0xff]
    %v1491 = vld [vmem:[%s1484 + $0x30] sm:$0xff]
    %v1492 = vld [vmem:[%s1484 + $0x38] sm:$0xff]
    %v1493 = vld [vmem:[%s1484 + $0x40] sm:$0xff]
    %v1494 = vld [vmem:[%s1484 + $0x48] sm:$0xff]
    %v1495 = vld [vmem:[%s1484 + $0x50] sm:$0xff]
    %v1496 = vld [vmem:[%s1484 + $0x58] sm:$0xff]
    %v1497 = vld [vmem:[%s1484 + $0x60] sm:$0xff]
    %v1498 = vld [vmem:[%s1484 + $0x68] sm:$0xff]
    %v1499 = vld [vmem:[%s1484 + $0x70] sm:$0xff]
    %v1500 = vld [vmem:[%s1484 + $0x78] sm:$0xff]
    %v1501 = vld [vmem:[%s1484 + $0x80] sm:$0xff]
    %v1502 = vld [vmem:[%s1484 + $0x88] sm:$0xff]
    %v1503 = vld [vmem:[%s1484 + $0x90] sm:$0xff]
    %v1504 = vld [vmem:[%s1484 + $0x98] sm:$0xff]
    %v1505 = vld [vmem:[%s1484 + $0xa0] sm:$0xff]
    %v1506 = vld [vmem:[%s1484 + $0xa8] sm:$0xff]
    %v1507 = vld [vmem:[%s1484 + $0xb0] sm:$0xff]
    %v1508 = vld [vmem:[%s1484 + $0xb8] sm:$0xff]
    %v1509 = vld [vmem:[%s1484 + $0xc0] sm:$0xff]
    %v1510 = vld [vmem:[%s1484 + $0xc8] sm:$0xff]
    %v1511 = vld [vmem:[%s1484 + $0xd0] sm:$0xff]
    %v1512 = vld [vmem:[%s1484 + $0xd8] sm:$0xff]
    %v1513 = vld [vmem:[%s1484 + $0xe0] sm:$0xff]
    %v1514 = vld [vmem:[%s1484 + $0xe8] sm:$0xff]
    %v1515 = vld [vmem:[%s1484 + $0xf0] sm:$0xff]
    %v1516 = vld [vmem:[%s1484 + $0xf8] sm:$0xff]
    %v1517 = vld [vmem:[%s1484 + $0x100] sm:$0xff]
    %v1518 = vld [vmem:[%s1484 + $0x108] sm:$0xff]
    %v1519 = vld [vmem:[%s1484 + $0x110] sm:$0xff]
    %v1520 = vld [vmem:[%s1484 + $0x118] sm:$0xff]
    %v1521 = vld [vmem:[%s1484 + $0x120] sm:$0xff]
    %v1522 = vld [vmem:[%s1484 + $0x128] sm:$0xff]
    %v1523 = vld [vmem:[%s1484 + $0x130] sm:$0xff]
    %v1524 = vld [vmem:[%s1484 + $0x138] sm:$0xff]
    %v1525 = vld [vmem:[%s1484 + $0x140] sm:$0xff]
    %v1526 = vld [vmem:[%s1484 + $0x148] sm:$0xff]
    %v1527 = vld [vmem:[%s1484 + $0x150] sm:$0xff]
    %v1528 = vld [vmem:[%s1484 + $0x158] sm:$0xff]
    %v1529 = vld [vmem:[%s1484 + $0x160] sm:$0xff]
    %v1530 = vld [vmem:[%s1484 + $0x168] sm:$0xff]
    %v1531 = vld [vmem:[%s1484 + $0x170] sm:$0xff]
    %v1532 = vld [vmem:[%s1484 + $0x178] sm:$0xff]
    %v1533 = vld [vmem:[%s1484 + $0x180] sm:$0xff]
    %v1534 = vld [vmem:[%s1484 + $0x188] sm:$0xff]
    %v1535 = vld [vmem:[%s1484 + $0x190] sm:$0xff]
    %v1536 = vld [vmem:[%s1484 + $0x198] sm:$0xff]
    %v1537 = vld [vmem:[%s1484 + $0x1a0] sm:$0xff]
    %v1538 = vld [vmem:[%s1484 + $0x1a8] sm:$0xff]
    %v1539 = vld [vmem:[%s1484 + $0x1b0] sm:$0xff]
    %v1540 = vld [vmem:[%s1484 + $0x1b8] sm:$0xff]
    %v1541 = vld [vmem:[%s1484 + $0x1c0] sm:$0xff]
    %v1542 = vld [vmem:[%s1484 + $0x1c8] sm:$0xff]
    %v1543 = vld [vmem:[%s1484 + $0x1d0] sm:$0xff]
    %v1544 = vld [vmem:[%s1484 + $0x1d8] sm:$0xff]
    %v1545 = vld [vmem:[%s1484 + $0x1e0] sm:$0xff]
    %v1546 = vld [vmem:[%s1484 + $0x1e8] sm:$0xff]
    %v1547 = vld [vmem:[%s1484 + $0x1f0] sm:$0xff]
    %v1548 = vld [vmem:[%s1484 + $0x1f8] sm:$0xff]
    %v1549 = vld [vmem:[%s1484 + $0x200] sm:$0xff]
    %v1550 = vld [vmem:[%s1484 + $0x208] sm:$0xff]
    %v1551 = vld [vmem:[%s1484 + $0x210] sm:$0xff]
    %v1552 = vld [vmem:[%s1484 + $0x218] sm:$0xff]
    %v1553 = vld [vmem:[%s1484 + $0x220] sm:$0xff]
    %v1554 = vld [vmem:[%s1484 + $0x228] sm:$0xff]
    %v1555 = vld [vmem:[%s1484 + $0x230] sm:$0xff]
    %v1556 = vld [vmem:[%s1484 + $0x238] sm:$0xff]
    %v1557 = vld [vmem:[%s1484 + $0x240] sm:$0xff]
    %v1558 = vld [vmem:[%s1484 + $0x248] sm:$0xff]
    %v1559 = vld [vmem:[%s1484 + $0x250] sm:$0xff]
    %v1560 = vld [vmem:[%s1484 + $0x258] sm:$0xff]
    %v1561 = vld [vmem:[%s1484 + $0x260] sm:$0xff]
    %v1562 = vld [vmem:[%s1484 + $0x268] sm:$0xff]
    %v1563 = vld [vmem:[%s1484 + $0x270] sm:$0xff]
    %v1564 = vld [vmem:[%s1484 + $0x278] sm:$0xff]
    %v1565 = vld [vmem:[%s1484 + $0x280] sm:$0xff]
    %v1566 = vld [vmem:[%s1484 + $0x288] sm:$0xff]
    %v1567 = vld [vmem:[%s1484 + $0x290] sm:$0xff]
    %v1568 = vld [vmem:[%s1484 + $0x298] sm:$0xff]
    %v1569 = vld [vmem:[%s1484 + $0x2a0] sm:$0xff]
    %v1570 = vld [vmem:[%s1484 + $0x2a8] sm:$0xff]
    %v1571 = vld [vmem:[%s1484 + $0x2b0] sm:$0xff]
    %v1572 = vld [vmem:[%s1484 + $0x2b8] sm:$0xff]
    %v1573 = vld [vmem:[%s1484 + $0x2c0] sm:$0xff]
    %v1574 = vld [vmem:[%s1484 + $0x2c8] sm:$0xff]
    %v1575 = vld [vmem:[%s1484 + $0x2d0] sm:$0xff]
    %v1576 = vld [vmem:[%s1484 + $0x2d8] sm:$0xff]
    %v1577 = vld [vmem:[%s1484 + $0x2e0] sm:$0xff]
    %v1578 = vld [vmem:[%s1484 + $0x2e8] sm:$0xff]
    %v1579 = vld [vmem:[%s1484 + $0x2f0] sm:$0xff]
    %v1580 = vld [vmem:[%s1484 + $0x2f8] sm:$0xff]
    %v1581 = vld [vmem:[%s1484 + $0x300] sm:$0xff]
    %v1582 = vld [vmem:[%s1484 + $0x308] sm:$0xff]
    %v1583 = vld [vmem:[%s1484 + $0x310] sm:$0xff]
    %v1584 = vld [vmem:[%s1484 + $0x318] sm:$0xff]
    %v1585 = vld [vmem:[%s1484 + $0x320] sm:$0xff]
    %v1586 = vld [vmem:[%s1484 + $0x328] sm:$0xff]
    %v1587 = vld [vmem:[%s1484 + $0x330] sm:$0xff]
    %v1588 = vld [vmem:[%s1484 + $0x338] sm:$0xff]
    %v1589 = vld [vmem:[%s1484 + $0x340] sm:$0xff]
    %v1590 = vld [vmem:[%s1484 + $0x348] sm:$0xff]
    %v1591 = vld [vmem:[%s1484 + $0x350] sm:$0xff]
    %v1592 = vld [vmem:[%s1484 + $0x358] sm:$0xff]
    %v1593 = vld [vmem:[%s1484 + $0x360] sm:$0xff]
    %v1594 = vld [vmem:[%s1484 + $0x368] sm:$0xff]
    %v1595 = vld [vmem:[%s1484 + $0x370] sm:$0xff]
    %v1596 = vld [vmem:[%s1484 + $0x378] sm:$0xff]
    %v1597 = vld [vmem:[%s1484 + $0x380] sm:$0xff]
    %v1598 = vld [vmem:[%s1484 + $0x388] sm:$0xff]
    %v1599 = vld [vmem:[%s1484 + $0x390] sm:$0xff]
    %v1600 = vld [vmem:[%s1484 + $0x398] sm:$0xff]
    %v1601 = vld [vmem:[%s1484 + $0x3a0] sm:$0xff]
    %v1602 = vld [vmem:[%s1484 + $0x3a8] sm:$0xff]
    %v1603 = vld [vmem:[%s1484 + $0x3b0] sm:$0xff]
    %v1604 = vld [vmem:[%s1484 + $0x3b8] sm:$0xff]
    %v1605 = vld [vmem:[%s1484 + $0x3c0] sm:$0xff]
    %v1606 = vld [vmem:[%s1484 + $0x3c8] sm:$0xff]
    %v1607 = vld [vmem:[%s1484 + $0x3d0] sm:$0xff]
    %v1608 = vld [vmem:[%s1484 + $0x3d8] sm:$0xff]
    %v1609 = vld [vmem:[%s1484 + $0x3e0] sm:$0xff]
    %v1610 = vld [vmem:[%s1484 + $0x3e8] sm:$0xff]
    %v1611 = vld [vmem:[%s1484 + $0x3f0] sm:$0xff]
    %v1612 = vld [vmem:[%s1484 + $0x3f8] sm:$0xff]
    %1613 = vmatprep.subr.mxu0 %v1546
    %1614 = vmatpush1.msra.mxu0 %v1545
    %1615 = vmatprep.subr.mxu0 %v1542
    %1616 = vmatpush1.msra.mxu0 %v1541
    %1617 = vmatprep.subr.mxu0 %v1538
    %1618 = vmatpush1.msra.mxu0 %v1537
    %1619 = vmatprep.subr.mxu0 %v1534
    %1620 = vmatpush1.msra.mxu0 %v1533
    %1621 = vmatprep.subr.mxu0 %v1530
    %1622 = vmatpush1.msra.mxu0 %v1529
    %1623 = vmatprep.subr.mxu0 %v1526
    %1624 = vmatpush1.msra.mxu0 %v1525
    %1625 = vmatprep.subr.mxu0 %v1522
    %1626 = vmatpush1.msra.mxu0 %v1521
    %1627 = vmatprep.subr.mxu0 %v1518
    %1628 = vmatpush1.msra.mxu0 %v1517
    %1629 = vmatprep.subr.mxu0 %v1514
    %1630 = vmatpush1.msra.mxu0 %v1513
    %1631 = vmatprep.subr.mxu0 %v1510
    %1632 = vmatpush1.msra.mxu0 %v1509
    %1633 = vmatprep.subr.mxu0 %v1506
    %1634 = vmatpush1.msra.mxu0 %v1505
    %1635 = vmatprep.subr.mxu0 %v1502
    %1636 = vmatpush1.msra.mxu0 %v1501
    %1637 = vmatprep.subr.mxu0 %v1498
    %1638 = vmatpush1.msra.mxu0 %v1497
    %1639 = vmatprep.subr.mxu0 %v1494
    %1640 = vmatpush1.msra.mxu0 %v1493
    %1641 = vmatprep.subr.mxu0 %v1490
    %1642 = vmatpush1.msra.mxu0 %v1489
    %1643 = vmatprep.subr.mxu0 %v1486
    %1644 = vmatpush1.msra.mxu0 %v1485
    %1645 = vmatprep.subr.mxu0 %v1610
    %1646 = vmatpush2.msra.mxu0 %v1609
    %1647 = vmatprep.subr.mxu0 %v1606
    %1648 = vmatpush2.msra.mxu0 %v1605
    %1649 = vmatprep.subr.mxu0 %v1602
    %1650 = vmatpush2.msra.mxu0 %v1601
    %1651 = vmatprep.subr.mxu0 %v1598
    %1652 = vmatpush2.msra.mxu0 %v1597
    %1653 = vmatprep.subr.mxu0 %v1594
    %1654 = vmatpush2.msra.mxu0 %v1593
    %1655 = vmatprep.subr.mxu0 %v1590
    %1656 = vmatpush2.msra.mxu0 %v1589
    %1657 = vmatprep.subr.mxu0 %v1586
    %1658 = vmatpush2.msra.mxu0 %v1585
    %1659 = vmatprep.subr.mxu0 %v1582
    %1660 = vmatpush2.msra.mxu0 %v1581
    %1661 = vmatprep.subr.mxu0 %v1578
    %1662 = vmatpush2.msra.mxu0 %v1577
    %1663 = vmatprep.subr.mxu0 %v1574
    %1664 = vmatpush2.msra.mxu0 %v1573
    %1665 = vmatprep.subr.mxu0 %v1570
    %1666 = vmatpush2.msra.mxu0 %v1569
    %1667 = vmatprep.subr.mxu0 %v1566
    %1668 = vmatpush2.msra.mxu0 %v1565
    %1669 = vmatprep.subr.mxu0 %v1562
    %1670 = vmatpush2.msra.mxu0 %v1561
    %1671 = vmatprep.subr.mxu0 %v1558
    %1672 = vmatpush2.msra.mxu0 %v1557
    %1673 = vmatprep.subr.mxu0 %v1554
    %1674 = vmatpush2.msra.mxu0 %v1553
    %1675 = vmatprep.subr.mxu0 %v1550
    %1676 = vmatpush2.msra.mxu0 %v1549
    %1677 = vmatprep.mubr.f32.mxu0 %v617
    %1678 = vmatmul.mubr.f32.gmra.mxu0 %v616
    %v1679 = vpop.f32.mrf.mxu0
    %v1680 = vadd.f32 0.0, %v1679
    %v1681 = vpop.f32.mrf.mxu0
    %v1682 = vadd.f32 0.0, %v1681
    %1683 = vmatprep.mubr.f32.mxu0 %v619
    %1684 = vmatmul.mubr.f32.gmra.mxu0 %v618
    %v1685 = vpop.f32.mrf.mxu0
    %v1686 = vadd.f32 0.0, %v1685
    %v1687 = vpop.f32.mrf.mxu0
    %v1688 = vadd.f32 0.0, %v1687
    %1689 = vmatprep.mubr.f32.mxu0 %v621
    %1690 = vmatmul.mubr.f32.gmra.mxu0 %v620
    %v1691 = vpop.f32.mrf.mxu0
    %v1692 = vadd.f32 0.0, %v1691
    %v1693 = vpop.f32.mrf.mxu0
    %v1694 = vadd.f32 0.0, %v1693
    %1695 = vmatprep.mubr.f32.mxu0 %v623
    %1696 = vmatmul.mubr.f32.gmra.mxu0 %v622
    %v1697 = vpop.f32.mrf.mxu0
    %v1698 = vadd.f32 0.0, %v1697
    %v1699 = vpop.f32.mrf.mxu0
    %v1700 = vadd.f32 0.0, %v1699
    %1701 = vdwg.mxu0
    %1702 = vmatprep.subr.mxu0 %v1548
    %1703 = vmatpush1.msra.mxu0 %v1547
    %1704 = vmatprep.subr.mxu0 %v1544
    %1705 = vmatpush1.msra.mxu0 %v1543
    %1706 = vmatprep.subr.mxu0 %v1540
    %1707 = vmatpush1.msra.mxu0 %v1539
    %1708 = vmatprep.subr.mxu0 %v1536
    %1709 = vmatpush1.msra.mxu0 %v1535
    %1710 = vmatprep.subr.mxu0 %v1532
    %1711 = vmatpush1.msra.mxu0 %v1531
    %1712 = vmatprep.subr.mxu0 %v1528
    %1713 = vmatpush1.msra.mxu0 %v1527
    %1714 = vmatprep.subr.mxu0 %v1524
    %1715 = vmatpush1.msra.mxu0 %v1523
    %1716 = vmatprep.subr.mxu0 %v1520
    %1717 = vmatpush1.msra.mxu0 %v1519
    %1718 = vmatprep.subr.mxu0 %v1516
    %1719 = vmatpush1.msra.mxu0 %v1515
    %1720 = vmatprep.subr.mxu0 %v1512
    %1721 = vmatpush1.msra.mxu0 %v1511
    %1722 = vmatprep.subr.mxu0 %v1508
    %1723 = vmatpush1.msra.mxu0 %v1507
    %1724 = vmatprep.subr.mxu0 %v1504
    %1725 = vmatpush1.msra.mxu0 %v1503
    %1726 = vmatprep.subr.mxu0 %v1500
    %1727 = vmatpush1.msra.mxu0 %v1499
    %1728 = vmatprep.subr.mxu0 %v1496
    %1729 = vmatpush1.msra.mxu0 %v1495
    %1730 = vmatprep.subr.mxu0 %v1492
    %1731 = vmatpush1.msra.mxu0 %v1491
    %1732 = vmatprep.subr.mxu0 %v1488
    %1733 = vmatpush1.msra.mxu0 %v1487
    %1734 = vmatprep.subr.mxu0 %v1612
    %1735 = vmatpush2.msra.mxu0 %v1611
    %1736 = vmatprep.subr.mxu0 %v1608
    %1737 = vmatpush2.msra.mxu0 %v1607
    %1738 = vmatprep.subr.mxu0 %v1604
    %1739 = vmatpush2.msra.mxu0 %v1603
    %1740 = vmatprep.subr.mxu0 %v1600
    %1741 = vmatpush2.msra.mxu0 %v1599
    %1742 = vmatprep.subr.mxu0 %v1596
    %1743 = vmatpush2.msra.mxu0 %v1595
    %1744 = vmatprep.subr.mxu0 %v1592
    %1745 = vmatpush2.msra.mxu0 %v1591
    %1746 = vmatprep.subr.mxu0 %v1588
    %1747 = vmatpush2.msra.mxu0 %v1587
    %1748 = vmatprep.subr.mxu0 %v1584
    %1749 = vmatpush2.msra.mxu0 %v1583
    %1750 = vmatprep.subr.mxu0 %v1580
    %1751 = vmatpush2.msra.mxu0 %v1579
    %1752 = vmatprep.subr.mxu0 %v1576
    %1753 = vmatpush2.msra.mxu0 %v1575
    %1754 = vmatprep.subr.mxu0 %v1572
    %1755 = vmatpush2.msra.mxu0 %v1571
    %1756 = vmatprep.subr.mxu0 %v1568
    %1757 = vmatpush2.msra.mxu0 %v1567
    %1758 = vmatprep.subr.mxu0 %v1564
    %1759 = vmatpush2.msra.mxu0 %v1563
    %1760 = vmatprep.subr.mxu0 %v1560
    %1761 = vmatpush2.msra.mxu0 %v1559
    %1762 = vmatprep.subr.mxu0 %v1556
    %1763 = vmatpush2.msra.mxu0 %v1555
    %1764 = vmatprep.subr.mxu0 %v1552
    %1765 = vmatpush2.msra.mxu0 %v1551
    %1766 = vmatprep.mubr.f32.mxu0 %v617
    %1767 = vmatmul.mubr.f32.gmra.mxu0 %v616
    %v1768 = vpop.f32.mrf.mxu0
    %v1769 = vadd.f32 0.0, %v1768
    %v1770 = vpop.f32.mrf.mxu0
    %v1771 = vadd.f32 0.0, %v1770
    %1772 = vmatprep.mubr.f32.mxu0 %v619
    %1773 = vmatmul.mubr.f32.gmra.mxu0 %v618
    %v1774 = vpop.f32.mrf.mxu0
    %v1775 = vadd.f32 0.0, %v1774
    %v1776 = vpop.f32.mrf.mxu0
    %v1777 = vadd.f32 0.0, %v1776
    %1778 = vmatprep.mubr.f32.mxu0 %v621
    %1779 = vmatmul.mubr.f32.gmra.mxu0 %v620
    %v1780 = vpop.f32.mrf.mxu0
    %v1781 = vadd.f32 0.0, %v1780
    %v1782 = vpop.f32.mrf.mxu0
    %v1783 = vadd.f32 0.0, %v1782
    %1784 = vmatprep.mubr.f32.mxu0 %v623
    %1785 = vmatmul.mubr.f32.gmra.mxu0 %v622
    %v1786 = vpop.f32.mrf.mxu0
    %v1787 = vadd.f32 0.0, %v1786
    %v1788 = vpop.f32.mrf.mxu0
    %v1789 = vadd.f32 0.0, %v1788
    %1790 = vdwg.mxu0
    %1791 = vmatprep.subr.mxu0 %v1417
    %1792 = vmatpush1.msra.mxu0 %v1416
    %1793 = vmatprep.subr.mxu0 %v1413
    %1794 = vmatpush1.msra.mxu0 %v1412
    %1795 = vmatprep.subr.mxu0 %v1409
    %1796 = vmatpush1.msra.mxu0 %v1408
    %1797 = vmatprep.subr.mxu0 %v1405
    %1798 = vmatpush1.msra.mxu0 %v1404
    %1799 = vmatprep.subr.mxu0 %v1401
    %1800 = vmatpush1.msra.mxu0 %v1400
    %1801 = vmatprep.subr.mxu0 %v1397
    %1802 = vmatpush1.msra.mxu0 %v1396
    %1803 = vmatprep.subr.mxu0 %v1393
    %1804 = vmatpush1.msra.mxu0 %v1392
    %1805 = vmatprep.subr.mxu0 %v1389
    %1806 = vmatpush1.msra.mxu0 %v1388
    %1807 = vmatprep.subr.mxu0 %v1385
    %1808 = vmatpush1.msra.mxu0 %v1384
    %1809 = vmatprep.subr.mxu0 %v1381
    %1810 = vmatpush1.msra.mxu0 %v1380
    %1811 = vmatprep.subr.mxu0 %v1377
    %1812 = vmatpush1.msra.mxu0 %v1376
    %1813 = vmatprep.subr.mxu0 %v1373
    %1814 = vmatpush1.msra.mxu0 %v1372
    %1815 = vmatprep.subr.mxu0 %v1369
    %1816 = vmatpush1.msra.mxu0 %v1368
    %1817 = vmatprep.subr.mxu0 %v1365
    %1818 = vmatpush1.msra.mxu0 %v1364
    %1819 = vmatprep.subr.mxu0 %v1361
    %1820 = vmatpush1.msra.mxu0 %v1360
    %1821 = vmatprep.subr.mxu0 %v1357
    %1822 = vmatpush1.msra.mxu0 %v1356
    %1823 = vmatprep.subr.mxu0 %v1481
    %1824 = vmatpush2.msra.mxu0 %v1480
    %1825 = vmatprep.subr.mxu0 %v1477
    %1826 = vmatpush2.msra.mxu0 %v1476
    %1827 = vmatprep.subr.mxu0 %v1473
    %1828 = vmatpush2.msra.mxu0 %v1472
    %1829 = vmatprep.subr.mxu0 %v1469
    %1830 = vmatpush2.msra.mxu0 %v1468
    %1831 = vmatprep.subr.mxu0 %v1465
    %1832 = vmatpush2.msra.mxu0 %v1464
    %1833 = vmatprep.subr.mxu0 %v1461
    %1834 = vmatpush2.msra.mxu0 %v1460
    %1835 = vmatprep.subr.mxu0 %v1457
    %1836 = vmatpush2.msra.mxu0 %v1456
    %1837 = vmatprep.subr.mxu0 %v1453
    %1838 = vmatpush2.msra.mxu0 %v1452
    %1839 = vmatprep.subr.mxu0 %v1449
    %1840 = vmatpush2.msra.mxu0 %v1448
    %1841 = vmatprep.subr.mxu0 %v1445
    %1842 = vmatpush2.msra.mxu0 %v1444
    %1843 = vmatprep.subr.mxu0 %v1441
    %1844 = vmatpush2.msra.mxu0 %v1440
    %1845 = vmatprep.subr.mxu0 %v1437
    %1846 = vmatpush2.msra.mxu0 %v1436
    %1847 = vmatprep.subr.mxu0 %v1433
    %1848 = vmatpush2.msra.mxu0 %v1432
    %1849 = vmatprep.subr.mxu0 %v1429
    %1850 = vmatpush2.msra.mxu0 %v1428
    %1851 = vmatprep.subr.mxu0 %v1425
    %1852 = vmatpush2.msra.mxu0 %v1424
    %1853 = vmatprep.subr.mxu0 %v1421
    %1854 = vmatpush2.msra.mxu0 %v1420
    %1855 = vmatprep.mubr.f32.mxu0 %v379
    %1856 = vmatmul.mubr.f32.gmra.mxu0 %v378
    %v1857 = vpop.f32.mrf.mxu0
    %v1858 = vadd.f32 %v1680, %v1857
    %v1859 = vpop.f32.mrf.mxu0
    %v1860 = vadd.f32 %v1682, %v1859
    %1861 = vmatprep.mubr.f32.mxu0 %v381
    %1862 = vmatmul.mubr.f32.gmra.mxu0 %v380
    %v1863 = vpop.f32.mrf.mxu0
    %v1864 = vadd.f32 %v1686, %v1863
    %v1865 = vpop.f32.mrf.mxu0
    %v1866 = vadd.f32 %v1688, %v1865
    %1867 = vmatprep.mubr.f32.mxu0 %v383
    %1868 = vmatmul.mubr.f32.gmra.mxu0 %v382
    %v1869 = vpop.f32.mrf.mxu0
    %v1870 = vadd.f32 %v1692, %v1869
    %v1871 = vpop.f32.mrf.mxu0
    %v1872 = vadd.f32 %v1694, %v1871
    %1873 = vmatprep.mubr.f32.mxu0 %v385
    %1874 = vmatmul.mubr.f32.gmra.mxu0 %v384
    %v1875 = vpop.f32.mrf.mxu0
    %v1876 = vadd.f32 %v1698, %v1875
    %v1877 = vpop.f32.mrf.mxu0
    %v1878 = vadd.f32 %v1700, %v1877
    %1879 = vdwg.mxu0
    %1880 = vmatprep.subr.mxu0 %v1419
    %1881 = vmatpush1.msra.mxu0 %v1418
    %1882 = vmatprep.subr.mxu0 %v1415
    %1883 = vmatpush1.msra.mxu0 %v1414
    %1884 = vmatprep.subr.mxu0 %v1411
    %1885 = vmatpush1.msra.mxu0 %v1410
    %1886 = vmatprep.subr.mxu0 %v1407
    %1887 = vmatpush1.msra.mxu0 %v1406
    %1888 = vmatprep.subr.mxu0 %v1403
    %1889 = vmatpush1.msra.mxu0 %v1402
    %1890 = vmatprep.subr.mxu0 %v1399
    %1891 = vmatpush1.msra.mxu0 %v1398
    %1892 = vmatprep.subr.mxu0 %v1395
    %1893 = vmatpush1.msra.mxu0 %v1394
    %1894 = vmatprep.subr.mxu0 %v1391
    %1895 = vmatpush1.msra.mxu0 %v1390
    %1896 = vmatprep.subr.mxu0 %v1387
    %1897 = vmatpush1.msra.mxu0 %v1386
    %1898 = vmatprep.subr.mxu0 %v1383
    %1899 = vmatpush1.msra.mxu0 %v1382
    %1900 = vmatprep.subr.mxu0 %v1379
    %1901 = vmatpush1.msra.mxu0 %v1378
    %1902 = vmatprep.subr.mxu0 %v1375
    %1903 = vmatpush1.msra.mxu0 %v1374
    %1904 = vmatprep.subr.mxu0 %v1371
    %1905 = vmatpush1.msra.mxu0 %v1370
    %1906 = vmatprep.subr.mxu0 %v1367
    %1907 = vmatpush1.msra.mxu0 %v1366
    %1908 = vmatprep.subr.mxu0 %v1363
    %1909 = vmatpush1.msra.mxu0 %v1362
    %1910 = vmatprep.subr.mxu0 %v1359
    %1911 = vmatpush1.msra.mxu0 %v1358
    %1912 = vmatprep.subr.mxu0 %v1483
    %1913 = vmatpush2.msra.mxu0 %v1482
    %1914 = vmatprep.subr.mxu0 %v1479
    %1915 = vmatpush2.msra.mxu0 %v1478
    %1916 = vmatprep.subr.mxu0 %v1475
    %1917 = vmatpush2.msra.mxu0 %v1474
    %1918 = vmatprep.subr.mxu0 %v1471
    %1919 = vmatpush2.msra.mxu0 %v1470
    %1920 = vmatprep.subr.mxu0 %v1467
    %1921 = vmatpush2.msra.mxu0 %v1466
    %1922 = vmatprep.subr.mxu0 %v1463
    %1923 = vmatpush2.msra.mxu0 %v1462
    %1924 = vmatprep.subr.mxu0 %v1459
    %1925 = vmatpush2.msra.mxu0 %v1458
    %1926 = vmatprep.subr.mxu0 %v1455
    %1927 = vmatpush2.msra.mxu0 %v1454
    %1928 = vmatprep.subr.mxu0 %v1451
    %1929 = vmatpush2.msra.mxu0 %v1450
    %1930 = vmatprep.subr.mxu0 %v1447
    %1931 = vmatpush2.msra.mxu0 %v1446
    %1932 = vmatprep.subr.mxu0 %v1443
    %1933 = vmatpush2.msra.mxu0 %v1442
    %1934 = vmatprep.subr.mxu0 %v1439
    %1935 = vmatpush2.msra.mxu0 %v1438
    %1936 = vmatprep.subr.mxu0 %v1435
    %1937 = vmatpush2.msra.mxu0 %v1434
    %1938 = vmatprep.subr.mxu0 %v1431
    %1939 = vmatpush2.msra.mxu0 %v1430
    %1940 = vmatprep.subr.mxu0 %v1427
    %1941 = vmatpush2.msra.mxu0 %v1426
    %1942 = vmatprep.subr.mxu0 %v1423
    %1943 = vmatpush2.msra.mxu0 %v1422
    %1944 = vmatprep.mubr.f32.mxu0 %v379
    %1945 = vmatmul.mubr.f32.gmra.mxu0 %v378
    %v1946 = vpop.f32.mrf.mxu0
    %v1947 = vadd.f32 %v1769, %v1946
    %v1948 = vpop.f32.mrf.mxu0
    %v1949 = vadd.f32 %v1771, %v1948
    %1950 = vmatprep.mubr.f32.mxu0 %v381
    %1951 = vmatmul.mubr.f32.gmra.mxu0 %v380
    %v1952 = vpop.f32.mrf.mxu0
    %v1953 = vadd.f32 %v1775, %v1952
    %v1954 = vpop.f32.mrf.mxu0
    %v1955 = vadd.f32 %v1777, %v1954
    %1956 = vmatprep.mubr.f32.mxu0 %v383
    %1957 = vmatmul.mubr.f32.gmra.mxu0 %v382
    %v1958 = vpop.f32.mrf.mxu0
    %v1959 = vadd.f32 %v1781, %v1958
    %v1960 = vpop.f32.mrf.mxu0
    %v1961 = vadd.f32 %v1783, %v1960
    %1962 = vmatprep.mubr.f32.mxu0 %v385
    %1963 = vmatmul.mubr.f32.gmra.mxu0 %v384
    %v1964 = vpop.f32.mrf.mxu0
    %v1965 = vadd.f32 %v1787, %v1964
    %v1966 = vpop.f32.mrf.mxu0
    %v1967 = vadd.f32 %v1789, %v1966
    %1968 = vdwg.mxu0
    %v1969 = vadd.f32 %v1858, %v1306
    %v1970 = vadd.f32 %v1860, %v1310
    %v1971 = vadd.f32 %v1947, %v1314
    %v1972 = vadd.f32 %v1949, %v1318
    %v1973 = vadd.f32 %v1864, %v1306
    %v1974 = vadd.f32 %v1866, %v1310
    %v1975 = vadd.f32 %v1953, %v1314
    %v1976 = vadd.f32 %v1955, %v1318
    %v1977 = vadd.f32 %v1870, %v1306
    %v1978 = vadd.f32 %v1872, %v1310
    %v1979 = vadd.f32 %v1959, %v1314
    %v1980 = vadd.f32 %v1961, %v1318
    %v1981 = vadd.f32 %v1876, %v1306
    %v1982 = vadd.f32 %v1878, %v1310
    %v1983 = vadd.f32 %v1965, %v1314
    %v1984 = vadd.f32 %v1967, %v1318
    %v1985 = vmax.f32 %v1969, 0.0
    %v1986 = vmax.f32 %v1970, 0.0
    %v1987 = vmax.f32 %v1971, 0.0
    %v1988 = vmax.f32 %v1972, 0.0
    %v1989 = vmax.f32 %v1973, 0.0
    %v1990 = vmax.f32 %v1974, 0.0
    %v1991 = vmax.f32 %v1975, 0.0
    %v1992 = vmax.f32 %v1976, 0.0
    %v1993 = vmax.f32 %v1977, 0.0
    %v1994 = vmax.f32 %v1978, 0.0
    %v1995 = vmax.f32 %v1979, 0.0
    %v1996 = vmax.f32 %v1980, 0.0
    %v1997 = vmax.f32 %v1981, 0.0
    %v1998 = vmax.f32 %v1982, 0.0
    %v1999 = vmax.f32 %v1983, 0.0
    %v2000 = vmax.f32 %v1984, 0.0
    %2001 = vmatprep.subr.mxu0 %v879
    %2002 = vmatpush1.msra.mxu0 %v878
    %2003 = vmatprep.subr.mxu0 %v875
    %2004 = vmatpush1.msra.mxu0 %v874
    %2005 = vmatprep.subr.mxu0 %v871
    %2006 = vmatpush1.msra.mxu0 %v870
    %2007 = vmatprep.subr.mxu0 %v867
    %2008 = vmatpush1.msra.mxu0 %v866
    %2009 = vmatprep.subr.mxu0 %v863
    %2010 = vmatpush1.msra.mxu0 %v862
    %2011 = vmatprep.subr.mxu0 %v859
    %2012 = vmatpush1.msra.mxu0 %v858
    %2013 = vmatprep.subr.mxu0 %v855
    %2014 = vmatpush1.msra.mxu0 %v854
    %2015 = vmatprep.subr.mxu0 %v851
    %2016 = vmatpush1.msra.mxu0 %v850
    %2017 = vmatprep.subr.mxu0 %v847
    %2018 = vmatpush1.msra.mxu0 %v846
    %2019 = vmatprep.subr.mxu0 %v843
    %2020 = vmatpush1.msra.mxu0 %v842
    %2021 = vmatprep.subr.mxu0 %v839
    %2022 = vmatpush1.msra.mxu0 %v838
    %2023 = vmatprep.subr.mxu0 %v835
    %2024 = vmatpush1.msra.mxu0 %v834
    %2025 = vmatprep.subr.mxu0 %v831
    %2026 = vmatpush1.msra.mxu0 %v830
    %2027 = vmatprep.subr.mxu0 %v827
    %2028 = vmatpush1.msra.mxu0 %v826
    %2029 = vmatprep.subr.mxu0 %v823
    %2030 = vmatpush1.msra.mxu0 %v822
    %2031 = vmatprep.subr.mxu0 %v819
    %2032 = vmatpush1.msra.mxu0 %v818
    %2033 = vmatprep.subr.mxu0 %v943
    %2034 = vmatpush2.msra.mxu0 %v942
    %2035 = vmatprep.subr.mxu0 %v939
    %2036 = vmatpush2.msra.mxu0 %v938
    %2037 = vmatprep.subr.mxu0 %v935
    %2038 = vmatpush2.msra.mxu0 %v934
    %2039 = vmatprep.subr.mxu0 %v931
    %2040 = vmatpush2.msra.mxu0 %v930
    %2041 = vmatprep.subr.mxu0 %v927
    %2042 = vmatpush2.msra.mxu0 %v926
    %2043 = vmatprep.subr.mxu0 %v923
    %2044 = vmatpush2.msra.mxu0 %v922
    %2045 = vmatprep.subr.mxu0 %v919
    %2046 = vmatpush2.msra.mxu0 %v918
    %2047 = vmatprep.subr.mxu0 %v915
    %2048 = vmatpush2.msra.mxu0 %v914
    %2049 = vmatprep.subr.mxu0 %v911
    %2050 = vmatpush2.msra.mxu0 %v910
    %2051 = vmatprep.subr.mxu0 %v907
    %2052 = vmatpush2.msra.mxu0 %v906
    %2053 = vmatprep.subr.mxu0 %v903
    %2054 = vmatpush2.msra.mxu0 %v902
    %2055 = vmatprep.subr.mxu0 %v899
    %2056 = vmatpush2.msra.mxu0 %v898
    %2057 = vmatprep.subr.mxu0 %v895
    %2058 = vmatpush2.msra.mxu0 %v894
    %2059 = vmatprep.subr.mxu0 %v891
    %2060 = vmatpush2.msra.mxu0 %v890
    %2061 = vmatprep.subr.mxu0 %v887
    %2062 = vmatpush2.msra.mxu0 %v886
    %2063 = vmatprep.subr.mxu0 %v883
    %2064 = vmatpush2.msra.mxu0 %v882
    %2065 = vmatprep.mubr.f32.mxu0 %v617
    %2066 = vmatmul.mubr.f32.gmra.mxu0 %v616
    %v2067 = vpop.f32.mrf.mxu0
    %v2068 = vadd.f32 0.0, %v2067
    %v2069 = vpop.f32.mrf.mxu0
    %v2070 = vadd.f32 0.0, %v2069
    %2071 = vmatprep.mubr.f32.mxu0 %v619
    %2072 = vmatmul.mubr.f32.gmra.mxu0 %v618
    %v2073 = vpop.f32.mrf.mxu0
    %v2074 = vadd.f32 0.0, %v2073
    %v2075 = vpop.f32.mrf.mxu0
    %v2076 = vadd.f32 0.0, %v2075
    %2077 = vmatprep.mubr.f32.mxu0 %v621
    %2078 = vmatmul.mubr.f32.gmra.mxu0 %v620
    %v2079 = vpop.f32.mrf.mxu0
    %v2080 = vadd.f32 0.0, %v2079
    %v2081 = vpop.f32.mrf.mxu0
    %v2082 = vadd.f32 0.0, %v2081
    %2083 = vmatprep.mubr.f32.mxu0 %v623
    %2084 = vmatmul.mubr.f32.gmra.mxu0 %v622
    %v2085 = vpop.f32.mrf.mxu0
    %v2086 = vadd.f32 0.0, %v2085
    %v2087 = vpop.f32.mrf.mxu0
    %v2088 = vadd.f32 0.0, %v2087
    %2089 = vdwg.mxu0
    %2090 = vmatprep.subr.mxu0 %v881
    %2091 = vmatpush1.msra.mxu0 %v880
    %2092 = vmatprep.subr.mxu0 %v877
    %2093 = vmatpush1.msra.mxu0 %v876
    %2094 = vmatprep.subr.mxu0 %v873
    %2095 = vmatpush1.msra.mxu0 %v872
    %2096 = vmatprep.subr.mxu0 %v869
    %2097 = vmatpush1.msra.mxu0 %v868
    %2098 = vmatprep.subr.mxu0 %v865
    %2099 = vmatpush1.msra.mxu0 %v864
    %2100 = vmatprep.subr.mxu0 %v861
    %2101 = vmatpush1.msra.mxu0 %v860
    %2102 = vmatprep.subr.mxu0 %v857
    %2103 = vmatpush1.msra.mxu0 %v856
    %2104 = vmatprep.subr.mxu0 %v853
    %2105 = vmatpush1.msra.mxu0 %v852
    %2106 = vmatprep.subr.mxu0 %v849
    %2107 = vmatpush1.msra.mxu0 %v848
    %2108 = vmatprep.subr.mxu0 %v845
    %2109 = vmatpush1.msra.mxu0 %v844
    %2110 = vmatprep.subr.mxu0 %v841
    %2111 = vmatpush1.msra.mxu0 %v840
    %2112 = vmatprep.subr.mxu0 %v837
    %2113 = vmatpush1.msra.mxu0 %v836
    %2114 = vmatprep.subr.mxu0 %v833
    %2115 = vmatpush1.msra.mxu0 %v832
    %2116 = vmatprep.subr.mxu0 %v829
    %2117 = vmatpush1.msra.mxu0 %v828
    %2118 = vmatprep.subr.mxu0 %v825
    %2119 = vmatpush1.msra.mxu0 %v824
    %2120 = vmatprep.subr.mxu0 %v821
    %2121 = vmatpush1.msra.mxu0 %v820
    %2122 = vmatprep.subr.mxu0 %v945
    %2123 = vmatpush2.msra.mxu0 %v944
    %2124 = vmatprep.subr.mxu0 %v941
    %2125 = vmatpush2.msra.mxu0 %v940
    %2126 = vmatprep.subr.mxu0 %v937
    %2127 = vmatpush2.msra.mxu0 %v936
    %2128 = vmatprep.subr.mxu0 %v933
    %2129 = vmatpush2.msra.mxu0 %v932
    %2130 = vmatprep.subr.mxu0 %v929
    %2131 = vmatpush2.msra.mxu0 %v928
    %2132 = vmatprep.subr.mxu0 %v925
    %2133 = vmatpush2.msra.mxu0 %v924
    %2134 = vmatprep.subr.mxu0 %v921
    %2135 = vmatpush2.msra.mxu0 %v920
    %2136 = vmatprep.subr.mxu0 %v917
    %2137 = vmatpush2.msra.mxu0 %v916
    %2138 = vmatprep.subr.mxu0 %v913
    %2139 = vmatpush2.msra.mxu0 %v912
    %2140 = vmatprep.subr.mxu0 %v909
    %2141 = vmatpush2.msra.mxu0 %v908
    %2142 = vmatprep.subr.mxu0 %v905
    %2143 = vmatpush2.msra.mxu0 %v904
    %2144 = vmatprep.subr.mxu0 %v901
    %2145 = vmatpush2.msra.mxu0 %v900
    %2146 = vmatprep.subr.mxu0 %v897
    %2147 = vmatpush2.msra.mxu0 %v896
    %2148 = vmatprep.subr.mxu0 %v893
    %2149 = vmatpush2.msra.mxu0 %v892
    %2150 = vmatprep.subr.mxu0 %v889
    %2151 = vmatpush2.msra.mxu0 %v888
    %2152 = vmatprep.subr.mxu0 %v885
    %2153 = vmatpush2.msra.mxu0 %v884
    %2154 = vmatprep.mubr.f32.mxu0 %v617
    %2155 = vmatmul.mubr.f32.gmra.mxu0 %v616
    %v2156 = vpop.f32.mrf.mxu0
    %v2157 = vadd.f32 0.0, %v2156
    %v2158 = vpop.f32.mrf.mxu0
    %v2159 = vadd.f32 0.0, %v2158
    %2160 = vmatprep.mubr.f32.mxu0 %v619
    %2161 = vmatmul.mubr.f32.gmra.mxu0 %v618
    %v2162 = vpop.f32.mrf.mxu0
    %v2163 = vadd.f32 0.0, %v2162
    %v2164 = vpop.f32.mrf.mxu0
    %v2165 = vadd.f32 0.0, %v2164
    %2166 = vmatprep.mubr.f32.mxu0 %v621
    %2167 = vmatmul.mubr.f32.gmra.mxu0 %v620
    %v2168 = vpop.f32.mrf.mxu0
    %v2169 = vadd.f32 0.0, %v2168
    %v2170 = vpop.f32.mrf.mxu0
    %v2171 = vadd.f32 0.0, %v2170
    %2172 = vmatprep.mubr.f32.mxu0 %v623
    %2173 = vmatmul.mubr.f32.gmra.mxu0 %v622
    %v2174 = vpop.f32.mrf.mxu0
    %v2175 = vadd.f32 0.0, %v2174
    %v2176 = vpop.f32.mrf.mxu0
    %v2177 = vadd.f32 0.0, %v2176
    %2178 = vdwg.mxu0
    %2179 = vmatprep.subr.mxu0 %v750
    %2180 = vmatpush1.msra.mxu0 %v749
    %2181 = vmatprep.subr.mxu0 %v746
    %2182 = vmatpush1.msra.mxu0 %v745
    %2183 = vmatprep.subr.mxu0 %v742
    %2184 = vmatpush1.msra.mxu0 %v741
    %2185 = vmatprep.subr.mxu0 %v738
    %2186 = vmatpush1.msra.mxu0 %v737
    %2187 = vmatprep.subr.mxu0 %v734
    %2188 = vmatpush1.msra.mxu0 %v733
    %2189 = vmatprep.subr.mxu0 %v730
    %2190 = vmatpush1.msra.mxu0 %v729
    %2191 = vmatprep.subr.mxu0 %v726
    %2192 = vmatpush1.msra.mxu0 %v725
    %2193 = vmatprep.subr.mxu0 %v722
    %2194 = vmatpush1.msra.mxu0 %v721
    %2195 = vmatprep.subr.mxu0 %v718
    %2196 = vmatpush1.msra.mxu0 %v717
    %2197 = vmatprep.subr.mxu0 %v714
    %2198 = vmatpush1.msra.mxu0 %v713
    %2199 = vmatprep.subr.mxu0 %v710
    %2200 = vmatpush1.msra.mxu0 %v709
    %2201 = vmatprep.subr.mxu0 %v706
    %2202 = vmatpush1.msra.mxu0 %v705
    %2203 = vmatprep.subr.mxu0 %v702
    %2204 = vmatpush1.msra.mxu0 %v701
    %2205 = vmatprep.subr.mxu0 %v698
    %2206 = vmatpush1.msra.mxu0 %v697
    %2207 = vmatprep.subr.mxu0 %v694
    %2208 = vmatpush1.msra.mxu0 %v693
    %2209 = vmatprep.subr.mxu0 %v690
    %2210 = vmatpush1.msra.mxu0 %v689
    %2211 = vmatprep.subr.mxu0 %v814
    %2212 = vmatpush2.msra.mxu0 %v813
    %2213 = vmatprep.subr.mxu0 %v810
    %2214 = vmatpush2.msra.mxu0 %v809
    %2215 = vmatprep.subr.mxu0 %v806
    %2216 = vmatpush2.msra.mxu0 %v805
    %2217 = vmatprep.subr.mxu0 %v802
    %2218 = vmatpush2.msra.mxu0 %v801
    %2219 = vmatprep.subr.mxu0 %v798
    %2220 = vmatpush2.msra.mxu0 %v797
    %2221 = vmatprep.subr.mxu0 %v794
    %2222 = vmatpush2.msra.mxu0 %v793
    %2223 = vmatprep.subr.mxu0 %v790
    %2224 = vmatpush2.msra.mxu0 %v789
    %2225 = vmatprep.subr.mxu0 %v786
    %2226 = vmatpush2.msra.mxu0 %v785
    %2227 = vmatprep.subr.mxu0 %v782
    %2228 = vmatpush2.msra.mxu0 %v781
    %2229 = vmatprep.subr.mxu0 %v778
    %2230 = vmatpush2.msra.mxu0 %v777
    %2231 = vmatprep.subr.mxu0 %v774
    %2232 = vmatpush2.msra.mxu0 %v773
    %2233 = vmatprep.subr.mxu0 %v770
    %2234 = vmatpush2.msra.mxu0 %v769
    %2235 = vmatprep.subr.mxu0 %v766
    %2236 = vmatpush2.msra.mxu0 %v765
    %2237 = vmatprep.subr.mxu0 %v762
    %2238 = vmatpush2.msra.mxu0 %v761
    %2239 = vmatprep.subr.mxu0 %v758
    %2240 = vmatpush2.msra.mxu0 %v757
    %2241 = vmatprep.subr.mxu0 %v754
    %2242 = vmatpush2.msra.mxu0 %v753
    %2243 = vmatprep.mubr.f32.mxu0 %v379
    %2244 = vmatmul.mubr.f32.gmra.mxu0 %v378
    %v2245 = vpop.f32.mrf.mxu0
    %v2246 = vadd.f32 %v2068, %v2245
    %v2247 = vpop.f32.mrf.mxu0
    %v2248 = vadd.f32 %v2070, %v2247
    %2249 = vmatprep.mubr.f32.mxu0 %v381
    %2250 = vmatmul.mubr.f32.gmra.mxu0 %v380
    %v2251 = vpop.f32.mrf.mxu0
    %v2252 = vadd.f32 %v2074, %v2251
    %v2253 = vpop.f32.mrf.mxu0
    %v2254 = vadd.f32 %v2076, %v2253
    %2255 = vmatprep.mubr.f32.mxu0 %v383
    %2256 = vmatmul.mubr.f32.gmra.mxu0 %v382
    %v2257 = vpop.f32.mrf.mxu0
    %v2258 = vadd.f32 %v2080, %v2257
    %v2259 = vpop.f32.mrf.mxu0
    %v2260 = vadd.f32 %v2082, %v2259
    %2261 = vmatprep.mubr.f32.mxu0 %v385
    %2262 = vmatmul.mubr.f32.gmra.mxu0 %v384
    %v2263 = vpop.f32.mrf.mxu0
    %v2264 = vadd.f32 %v2086, %v2263
    %v2265 = vpop.f32.mrf.mxu0
    %v2266 = vadd.f32 %v2088, %v2265
    %2267 = vdwg.mxu0
    %2268 = vmatprep.subr.mxu0 %v752
    %2269 = vmatpush1.msra.mxu0 %v751
    %2270 = vmatprep.subr.mxu0 %v748
    %2271 = vmatpush1.msra.mxu0 %v747
    %2272 = vmatprep.subr.mxu0 %v744
    %2273 = vmatpush1.msra.mxu0 %v743
    %2274 = vmatprep.subr.mxu0 %v740
    %2275 = vmatpush1.msra.mxu0 %v739
    %2276 = vmatprep.subr.mxu0 %v736
    %2277 = vmatpush1.msra.mxu0 %v735
    %2278 = vmatprep.subr.mxu0 %v732
    %2279 = vmatpush1.msra.mxu0 %v731
    %2280 = vmatprep.subr.mxu0 %v728
    %2281 = vmatpush1.msra.mxu0 %v727
    %2282 = vmatprep.subr.mxu0 %v724
    %2283 = vmatpush1.msra.mxu0 %v723
    %2284 = vmatprep.subr.mxu0 %v720
    %2285 = vmatpush1.msra.mxu0 %v719
    %2286 = vmatprep.subr.mxu0 %v716
    %2287 = vmatpush1.msra.mxu0 %v715
    %2288 = vmatprep.subr.mxu0 %v712
    %2289 = vmatpush1.msra.mxu0 %v711
    %2290 = vmatprep.subr.mxu0 %v708
    %2291 = vmatpush1.msra.mxu0 %v707
    %2292 = vmatprep.subr.mxu0 %v704
    %2293 = vmatpush1.msra.mxu0 %v703
    %2294 = vmatprep.subr.mxu0 %v700
    %2295 = vmatpush1.msra.mxu0 %v699
    %2296 = vmatprep.subr.mxu0 %v696
    %2297 = vmatpush1.msra.mxu0 %v695
    %2298 = vmatprep.subr.mxu0 %v692
    %2299 = vmatpush1.msra.mxu0 %v691
    %2300 = vmatprep.subr.mxu0 %v816
    %2301 = vmatpush2.msra.mxu0 %v815
    %2302 = vmatprep.subr.mxu0 %v812
    %2303 = vmatpush2.msra.mxu0 %v811
    %2304 = vmatprep.subr.mxu0 %v808
    %2305 = vmatpush2.msra.mxu0 %v807
    %2306 = vmatprep.subr.mxu0 %v804
    %2307 = vmatpush2.msra.mxu0 %v803
    %2308 = vmatprep.subr.mxu0 %v800
    %2309 = vmatpush2.msra.mxu0 %v799
    %2310 = vmatprep.subr.mxu0 %v796
    %2311 = vmatpush2.msra.mxu0 %v795
    %2312 = vmatprep.subr.mxu0 %v792
    %2313 = vmatpush2.msra.mxu0 %v791
    %2314 = vmatprep.subr.mxu0 %v788
    %2315 = vmatpush2.msra.mxu0 %v787
    %2316 = vmatprep.subr.mxu0 %v784
    %2317 = vmatpush2.msra.mxu0 %v783
    %2318 = vmatprep.subr.mxu0 %v780
    %2319 = vmatpush2.msra.mxu0 %v779
    %2320 = vmatprep.subr.mxu0 %v776
    %2321 = vmatpush2.msra.mxu0 %v775
    %2322 = vmatprep.subr.mxu0 %v772
    %2323 = vmatpush2.msra.mxu0 %v771
    %2324 = vmatprep.subr.mxu0 %v768
    %2325 = vmatpush2.msra.mxu0 %v767
    %2326 = vmatprep.subr.mxu0 %v764
    %2327 = vmatpush2.msra.mxu0 %v763
    %2328 = vmatprep.subr.mxu0 %v760
    %2329 = vmatpush2.msra.mxu0 %v759
    %2330 = vmatprep.subr.mxu0 %v756
    %2331 = vmatpush2.msra.mxu0 %v755
    %2332 = vmatprep.mubr.f32.mxu0 %v379
    %2333 = vmatmul.mubr.f32.gmra.mxu0 %v378
    %v2334 = vpop.f32.mrf.mxu0
    %v2335 = vadd.f32 %v2157, %v2334
    %v2336 = vpop.f32.mrf.mxu0
    %v2337 = vadd.f32 %v2159, %v2336
    %2338 = vmatprep.mubr.f32.mxu0 %v381
    %2339 = vmatmul.mubr.f32.gmra.mxu0 %v380
    %v2340 = vpop.f32.mrf.mxu0
    %v2341 = vadd.f32 %v2163, %v2340
    %v2342 = vpop.f32.mrf.mxu0
    %v2343 = vadd.f32 %v2165, %v2342
    %2344 = vmatprep.mubr.f32.mxu0 %v383
    %2345 = vmatmul.mubr.f32.gmra.mxu0 %v382
    %v2346 = vpop.f32.mrf.mxu0
    %v2347 = vadd.f32 %v2169, %v2346
    %v2348 = vpop.f32.mrf.mxu0
    %v2349 = vadd.f32 %v2171, %v2348
    %2350 = vmatprep.mubr.f32.mxu0 %v385
    %2351 = vmatmul.mubr.f32.gmra.mxu0 %v384
    %v2352 = vpop.f32.mrf.mxu0
    %v2353 = vadd.f32 %v2175, %v2352
    %v2354 = vpop.f32.mrf.mxu0
    %v2355 = vadd.f32 %v2177, %v2354
    %2356 = vdwg.mxu0
    %v2357 = vadd.f32 %v2246, %v1306
    %v2358 = vadd.f32 %v2248, %v1310
    %v2359 = vadd.f32 %v2335, %v1314
    %v2360 = vadd.f32 %v2337, %v1318
    %v2361 = vadd.f32 %v2252, %v1306
    %v2362 = vadd.f32 %v2254, %v1310
    %v2363 = vadd.f32 %v2341, %v1314
    %v2364 = vadd.f32 %v2343, %v1318
    %v2365 = vadd.f32 %v2258, %v1306
    %v2366 = vadd.f32 %v2260, %v1310
    %v2367 = vadd.f32 %v2347, %v1314
    %v2368 = vadd.f32 %v2349, %v1318
    %v2369 = vadd.f32 %v2264, %v1306
    %v2370 = vadd.f32 %v2266, %v1310
    %v2371 = vadd.f32 %v2353, %v1314
    %v2372 = vadd.f32 %v2355, %v1318
    %v2373 = vmax.f32 %v2357, 0.0
    %v2374 = vmax.f32 %v2358, 0.0
    %v2375 = vmax.f32 %v2359, 0.0
    %v2376 = vmax.f32 %v2360, 0.0
    %v2377 = vmax.f32 %v2361, 0.0
    %v2378 = vmax.f32 %v2362, 0.0
    %v2379 = vmax.f32 %v2363, 0.0
    %v2380 = vmax.f32 %v2364, 0.0
    %v2381 = vmax.f32 %v2365, 0.0
    %v2382 = vmax.f32 %v2366, 0.0
    %v2383 = vmax.f32 %v2367, 0.0
    %v2384 = vmax.f32 %v2368, 0.0
    %v2385 = vmax.f32 %v2369, 0.0
    %v2386 = vmax.f32 %v2370, 0.0
    %v2387 = vmax.f32 %v2371, 0.0
    %v2388 = vmax.f32 %v2372, 0.0
    %2389 = vmatprep.subr.mxu0 %v1546
    %2390 = vmatpush1.msra.mxu0 %v1545
    %2391 = vmatprep.subr.mxu0 %v1542
    %2392 = vmatpush1.msra.mxu0 %v1541
    %2393 = vmatprep.subr.mxu0 %v1538
    %2394 = vmatpush1.msra.mxu0 %v1537
    %2395 = vmatprep.subr.mxu0 %v1534
    %2396 = vmatpush1.msra.mxu0 %v1533
    %2397 = vmatprep.subr.mxu0 %v1530
    %2398 = vmatpush1.msra.mxu0 %v1529
    %2399 = vmatprep.subr.mxu0 %v1526
    %2400 = vmatpush1.msra.mxu0 %v1525
    %2401 = vmatprep.subr.mxu0 %v1522
    %2402 = vmatpush1.msra.mxu0 %v1521
    %2403 = vmatprep.subr.mxu0 %v1518
    %2404 = vmatpush1.msra.mxu0 %v1517
    %2405 = vmatprep.subr.mxu0 %v1514
    %2406 = vmatpush1.msra.mxu0 %v1513
    %2407 = vmatprep.subr.mxu0 %v1510
    %2408 = vmatpush1.msra.mxu0 %v1509
    %2409 = vmatprep.subr.mxu0 %v1506
    %2410 = vmatpush1.msra.mxu0 %v1505
    %2411 = vmatprep.subr.mxu0 %v1502
    %2412 = vmatpush1.msra.mxu0 %v1501
    %2413 = vmatprep.subr.mxu0 %v1498
    %2414 = vmatpush1.msra.mxu0 %v1497
    %2415 = vmatprep.subr.mxu0 %v1494
    %2416 = vmatpush1.msra.mxu0 %v1493
    %2417 = vmatprep.subr.mxu0 %v1490
    %2418 = vmatpush1.msra.mxu0 %v1489
    %2419 = vmatprep.subr.mxu0 %v1486
    %2420 = vmatpush1.msra.mxu0 %v1485
    %2421 = vmatprep.subr.mxu0 %v1610
    %2422 = vmatpush2.msra.mxu0 %v1609
    %2423 = vmatprep.subr.mxu0 %v1606
    %2424 = vmatpush2.msra.mxu0 %v1605
    %2425 = vmatprep.subr.mxu0 %v1602
    %2426 = vmatpush2.msra.mxu0 %v1601
    %2427 = vmatprep.subr.mxu0 %v1598
    %2428 = vmatpush2.msra.mxu0 %v1597
    %2429 = vmatprep.subr.mxu0 %v1594
    %2430 = vmatpush2.msra.mxu0 %v1593
    %2431 = vmatprep.subr.mxu0 %v1590
    %2432 = vmatpush2.msra.mxu0 %v1589
    %2433 = vmatprep.subr.mxu0 %v1586
    %2434 = vmatpush2.msra.mxu0 %v1585
    %2435 = vmatprep.subr.mxu0 %v1582
    %2436 = vmatpush2.msra.mxu0 %v1581
    %2437 = vmatprep.subr.mxu0 %v1578
    %2438 = vmatpush2.msra.mxu0 %v1577
    %2439 = vmatprep.subr.mxu0 %v1574
    %2440 = vmatpush2.msra.mxu0 %v1573
    %2441 = vmatprep.subr.mxu0 %v1570
    %2442 = vmatpush2.msra.mxu0 %v1569
    %2443 = vmatprep.subr.mxu0 %v1566
    %2444 = vmatpush2.msra.mxu0 %v1565
    %2445 = vmatprep.subr.mxu0 %v1562
    %2446 = vmatpush2.msra.mxu0 %v1561
    %2447 = vmatprep.subr.mxu0 %v1558
    %2448 = vmatpush2.msra.mxu0 %v1557
    %2449 = vmatprep.subr.mxu0 %v1554
    %2450 = vmatpush2.msra.mxu0 %v1553
    %2451 = vmatprep.subr.mxu0 %v1550
    %2452 = vmatpush2.msra.mxu0 %v1549
    %2453 = vmatprep.mubr.f32.mxu0 %v665
    %2454 = vmatmul.mubr.f32.gmra.mxu0 %v662
    %v2455 = vpop.f32.mrf.mxu0
    %v2456 = vadd.f32 0.0, %v2455
    %v2457 = vpop.f32.mrf.mxu0
    %v2458 = vadd.f32 0.0, %v2457
    %2459 = vmatprep.mubr.f32.mxu0 %v685
    %2460 = vmatmul.mubr.f32.gmra.mxu0 %v684
    %v2461 = vpop.f32.mrf.mxu0
    %v2462 = vadd.f32 0.0, %v2461
    %v2463 = vpop.f32.mrf.mxu0
    %v2464 = vadd.f32 0.0, %v2463
    %2465 = vmatprep.mubr.f32.mxu0 %v679
    %2466 = vmatmul.mubr.f32.gmra.mxu0 %v676
    %v2467 = vpop.f32.mrf.mxu0
    %v2468 = vadd.f32 0.0, %v2467
    %v2469 = vpop.f32.mrf.mxu0
    %v2470 = vadd.f32 0.0, %v2469
    %2471 = vmatprep.mubr.f32.mxu0 %v687
    %2472 = vmatmul.mubr.f32.gmra.mxu0 %v686
    %v2473 = vpop.f32.mrf.mxu0
    %v2474 = vadd.f32 0.0, %v2473
    %v2475 = vpop.f32.mrf.mxu0
    %v2476 = vadd.f32 0.0, %v2475
    %2477 = vdwg.mxu0
    %2478 = vmatprep.subr.mxu0 %v1548
    %2479 = vmatpush1.msra.mxu0 %v1547
    %2480 = vmatprep.subr.mxu0 %v1544
    %2481 = vmatpush1.msra.mxu0 %v1543
    %2482 = vmatprep.subr.mxu0 %v1540
    %2483 = vmatpush1.msra.mxu0 %v1539
    %2484 = vmatprep.subr.mxu0 %v1536
    %2485 = vmatpush1.msra.mxu0 %v1535
    %2486 = vmatprep.subr.mxu0 %v1532
    %2487 = vmatpush1.msra.mxu0 %v1531
    %2488 = vmatprep.subr.mxu0 %v1528
    %2489 = vmatpush1.msra.mxu0 %v1527
    %2490 = vmatprep.subr.mxu0 %v1524
    %2491 = vmatpush1.msra.mxu0 %v1523
    %2492 = vmatprep.subr.mxu0 %v1520
    %2493 = vmatpush1.msra.mxu0 %v1519
    %2494 = vmatprep.subr.mxu0 %v1516
    %2495 = vmatpush1.msra.mxu0 %v1515
    %2496 = vmatprep.subr.mxu0 %v1512
    %2497 = vmatpush1.msra.mxu0 %v1511
    %2498 = vmatprep.subr.mxu0 %v1508
    %2499 = vmatpush1.msra.mxu0 %v1507
    %2500 = vmatprep.subr.mxu0 %v1504
    %2501 = vmatpush1.msra.mxu0 %v1503
    %2502 = vmatprep.subr.mxu0 %v1500
    %2503 = vmatpush1.msra.mxu0 %v1499
    %2504 = vmatprep.subr.mxu0 %v1496
    %2505 = vmatpush1.msra.mxu0 %v1495
    %2506 = vmatprep.subr.mxu0 %v1492
    %2507 = vmatpush1.msra.mxu0 %v1491
    %2508 = vmatprep.subr.mxu0 %v1488
    %2509 = vmatpush1.msra.mxu0 %v1487
    %2510 = vmatprep.subr.mxu0 %v1612
    %2511 = vmatpush2.msra.mxu0 %v1611
    %2512 = vmatprep.subr.mxu0 %v1608
    %2513 = vmatpush2.msra.mxu0 %v1607
    %2514 = vmatprep.subr.mxu0 %v1604
    %2515 = vmatpush2.msra.mxu0 %v1603
    %2516 = vmatprep.subr.mxu0 %v1600
    %2517 = vmatpush2.msra.mxu0 %v1599
    %2518 = vmatprep.subr.mxu0 %v1596
    %2519 = vmatpush2.msra.mxu0 %v1595
    %2520 = vmatprep.subr.mxu0 %v1592
    %2521 = vmatpush2.msra.mxu0 %v1591
    %2522 = vmatprep.subr.mxu0 %v1588
    %2523 = vmatpush2.msra.mxu0 %v1587
    %2524 = vmatprep.subr.mxu0 %v1584
    %2525 = vmatpush2.msra.mxu0 %v1583
    %2526 = vmatprep.subr.mxu0 %v1580
    %2527 = vmatpush2.msra.mxu0 %v1579
    %2528 = vmatprep.subr.mxu0 %v1576
    %2529 = vmatpush2.msra.mxu0 %v1575
    %2530 = vmatprep.subr.mxu0 %v1572
    %2531 = vmatpush2.msra.mxu0 %v1571
    %2532 = vmatprep.subr.mxu0 %v1568
    %2533 = vmatpush2.msra.mxu0 %v1567
    %2534 = vmatprep.subr.mxu0 %v1564
    %2535 = vmatpush2.msra.mxu0 %v1563
    %2536 = vmatprep.subr.mxu0 %v1560
    %2537 = vmatpush2.msra.mxu0 %v1559
    %2538 = vmatprep.subr.mxu0 %v1556
    %2539 = vmatpush2.msra.mxu0 %v1555
    %2540 = vmatprep.subr.mxu0 %v1552
    %2541 = vmatpush2.msra.mxu0 %v1551
    %2542 = vmatprep.mubr.f32.mxu0 %v665
    %2543 = vmatmul.mubr.f32.gmra.mxu0 %v662
    %v2544 = vpop.f32.mrf.mxu0
    %v2545 = vadd.f32 0.0, %v2544
    %v2546 = vpop.f32.mrf.mxu0
    %v2547 = vadd.f32 0.0, %v2546
    %2548 = vmatprep.mubr.f32.mxu0 %v685
    %2549 = vmatmul.mubr.f32.gmra.mxu0 %v684
    %v2550 = vpop.f32.mrf.mxu0
    %v2551 = vadd.f32 0.0, %v2550
    %v2552 = vpop.f32.mrf.mxu0
    %v2553 = vadd.f32 0.0, %v2552
    %2554 = vmatprep.mubr.f32.mxu0 %v679
    %2555 = vmatmul.mubr.f32.gmra.mxu0 %v676
    %v2556 = vpop.f32.mrf.mxu0
    %v2557 = vadd.f32 0.0, %v2556
    %v2558 = vpop.f32.mrf.mxu0
    %v2559 = vadd.f32 0.0, %v2558
    %2560 = vmatprep.mubr.f32.mxu0 %v687
    %2561 = vmatmul.mubr.f32.gmra.mxu0 %v686
    %v2562 = vpop.f32.mrf.mxu0
    %v2563 = vadd.f32 0.0, %v2562
    %v2564 = vpop.f32.mrf.mxu0
    %v2565 = vadd.f32 0.0, %v2564
    %2566 = vdwg.mxu0
    %2567 = vmatprep.subr.mxu0 %v1417
    %2568 = vmatpush1.msra.mxu0 %v1416
    %2569 = vmatprep.subr.mxu0 %v1413
    %2570 = vmatpush1.msra.mxu0 %v1412
    %2571 = vmatprep.subr.mxu0 %v1409
    %2572 = vmatpush1.msra.mxu0 %v1408
    %2573 = vmatprep.subr.mxu0 %v1405
    %2574 = vmatpush1.msra.mxu0 %v1404
    %2575 = vmatprep.subr.mxu0 %v1401
    %2576 = vmatpush1.msra.mxu0 %v1400
    %2577 = vmatprep.subr.mxu0 %v1397
    %2578 = vmatpush1.msra.mxu0 %v1396
    %2579 = vmatprep.subr.mxu0 %v1393
    %2580 = vmatpush1.msra.mxu0 %v1392
    %2581 = vmatprep.subr.mxu0 %v1389
    %2582 = vmatpush1.msra.mxu0 %v1388
    %2583 = vmatprep.subr.mxu0 %v1385
    %2584 = vmatpush1.msra.mxu0 %v1384
    %2585 = vmatprep.subr.mxu0 %v1381
    %2586 = vmatpush1.msra.mxu0 %v1380
    %2587 = vmatprep.subr.mxu0 %v1377
    %2588 = vmatpush1.msra.mxu0 %v1376
    %2589 = vmatprep.subr.mxu0 %v1373
    %2590 = vmatpush1.msra.mxu0 %v1372
    %2591 = vmatprep.subr.mxu0 %v1369
    %2592 = vmatpush1.msra.mxu0 %v1368
    %2593 = vmatprep.subr.mxu0 %v1365
    %2594 = vmatpush1.msra.mxu0 %v1364
    %2595 = vmatprep.subr.mxu0 %v1361
    %2596 = vmatpush1.msra.mxu0 %v1360
    %2597 = vmatprep.subr.mxu0 %v1357
    %2598 = vmatpush1.msra.mxu0 %v1356
    %2599 = vmatprep.subr.mxu0 %v1481
    %2600 = vmatpush2.msra.mxu0 %v1480
    %2601 = vmatprep.subr.mxu0 %v1477
    %2602 = vmatpush2.msra.mxu0 %v1476
    %2603 = vmatprep.subr.mxu0 %v1473
    %2604 = vmatpush2.msra.mxu0 %v1472
    %2605 = vmatprep.subr.mxu0 %v1469
    %2606 = vmatpush2.msra.mxu0 %v1468
    %2607 = vmatprep.subr.mxu0 %v1465
    %2608 = vmatpush2.msra.mxu0 %v1464
    %2609 = vmatprep.subr.mxu0 %v1461
    %2610 = vmatpush2.msra.mxu0 %v1460
    %2611 = vmatprep.subr.mxu0 %v1457
    %2612 = vmatpush2.msra.mxu0 %v1456
    %2613 = vmatprep.subr.mxu0 %v1453
    %2614 = vmatpush2.msra.mxu0 %v1452
    %2615 = vmatprep.subr.mxu0 %v1449
    %2616 = vmatpush2.msra.mxu0 %v1448
    %2617 = vmatprep.subr.mxu0 %v1445
    %2618 = vmatpush2.msra.mxu0 %v1444
    %2619 = vmatprep.subr.mxu0 %v1441
    %2620 = vmatpush2.msra.mxu0 %v1440
    %2621 = vmatprep.subr.mxu0 %v1437
    %2622 = vmatpush2.msra.mxu0 %v1436
    %2623 = vmatprep.subr.mxu0 %v1433
    %2624 = vmatpush2.msra.mxu0 %v1432
    %2625 = vmatprep.subr.mxu0 %v1429
    %2626 = vmatpush2.msra.mxu0 %v1428
    %2627 = vmatprep.subr.mxu0 %v1425
    %2628 = vmatpush2.msra.mxu0 %v1424
    %2629 = vmatprep.subr.mxu0 %v1421
    %2630 = vmatpush2.msra.mxu0 %v1420
    %2631 = vmatprep.mubr.f32.mxu0 %v617
    %2632 = vmatmul.mubr.f32.gmra.mxu0 %v616
    %v2633 = vpop.f32.mrf.mxu0
    %v2634 = vadd.f32 %v2456, %v2633
    %v2635 = vpop.f32.mrf.mxu0
    %v2636 = vadd.f32 %v2458, %v2635
    %2637 = vmatprep.mubr.f32.mxu0 %v619
    %2638 = vmatmul.mubr.f32.gmra.mxu0 %v618
    %v2639 = vpop.f32.mrf.mxu0
    %v2640 = vadd.f32 %v2462, %v2639
    %v2641 = vpop.f32.mrf.mxu0
    %v2642 = vadd.f32 %v2464, %v2641
    %2643 = vmatprep.mubr.f32.mxu0 %v621
    %2644 = vmatmul.mubr.f32.gmra.mxu0 %v620
    %v2645 = vpop.f32.mrf.mxu0
    %v2646 = vadd.f32 %v2468, %v2645
    %v2647 = vpop.f32.mrf.mxu0
    %v2648 = vadd.f32 %v2470, %v2647
    %2649 = vmatprep.mubr.f32.mxu0 %v623
    %2650 = vmatmul.mubr.f32.gmra.mxu0 %v622
    %v2651 = vpop.f32.mrf.mxu0
    %v2652 = vadd.f32 %v2474, %v2651
    %v2653 = vpop.f32.mrf.mxu0
    %v2654 = vadd.f32 %v2476, %v2653
    %2655 = vdwg.mxu0
    %2656 = vmatprep.subr.mxu0 %v1419
    %2657 = vmatpush1.msra.mxu0 %v1418
    %2658 = vmatprep.subr.mxu0 %v1415
    %2659 = vmatpush1.msra.mxu0 %v1414
    %2660 = vmatprep.subr.mxu0 %v1411
    %2661 = vmatpush1.msra.mxu0 %v1410
    %2662 = vmatprep.subr.mxu0 %v1407
    %2663 = vmatpush1.msra.mxu0 %v1406
    %2664 = vmatprep.subr.mxu0 %v1403
    %2665 = vmatpush1.msra.mxu0 %v1402
    %2666 = vmatprep.subr.mxu0 %v1399
    %2667 = vmatpush1.msra.mxu0 %v1398
    %2668 = vmatprep.subr.mxu0 %v1395
    %2669 = vmatpush1.msra.mxu0 %v1394
    %2670 = vmatprep.subr.mxu0 %v1391
    %2671 = vmatpush1.msra.mxu0 %v1390
    %2672 = vmatprep.subr.mxu0 %v1387
    %2673 = vmatpush1.msra.mxu0 %v1386
    %2674 = vmatprep.subr.mxu0 %v1383
    %2675 = vmatpush1.msra.mxu0 %v1382
    %2676 = vmatprep.subr.mxu0 %v1379
    %2677 = vmatpush1.msra.mxu0 %v1378
    %2678 = vmatprep.subr.mxu0 %v1375
    %2679 = vmatpush1.msra.mxu0 %v1374
    %2680 = vmatprep.subr.mxu0 %v1371
    %2681 = vmatpush1.msra.mxu0 %v1370
    %2682 = vmatprep.subr.mxu0 %v1367
    %2683 = vmatpush1.msra.mxu0 %v1366
    %2684 = vmatprep.subr.mxu0 %v1363
    %2685 = vmatpush1.msra.mxu0 %v1362
    %2686 = vmatprep.subr.mxu0 %v1359
    %2687 = vmatpush1.msra.mxu0 %v1358
    %2688 = vmatprep.subr.mxu0 %v1483
    %2689 = vmatpush2.msra.mxu0 %v1482
    %2690 = vmatprep.subr.mxu0 %v1479
    %2691 = vmatpush2.msra.mxu0 %v1478
    %2692 = vmatprep.subr.mxu0 %v1475
    %2693 = vmatpush2.msra.mxu0 %v1474
    %2694 = vmatprep.subr.mxu0 %v1471
    %2695 = vmatpush2.msra.mxu0 %v1470
    %2696 = vmatprep.subr.mxu0 %v1467
    %2697 = vmatpush2.msra.mxu0 %v1466
    %2698 = vmatprep.subr.mxu0 %v1463
    %2699 = vmatpush2.msra.mxu0 %v1462
    %2700 = vmatprep.subr.mxu0 %v1459
    %2701 = vmatpush2.msra.mxu0 %v1458
    %2702 = vmatprep.subr.mxu0 %v1455
    %2703 = vmatpush2.msra.mxu0 %v1454
    %2704 = vmatprep.subr.mxu0 %v1451
    %2705 = vmatpush2.msra.mxu0 %v1450
    %2706 = vmatprep.subr.mxu0 %v1447
    %2707 = vmatpush2.msra.mxu0 %v1446
    %2708 = vmatprep.subr.mxu0 %v1443
    %2709 = vmatpush2.msra.mxu0 %v1442
    %2710 = vmatprep.subr.mxu0 %v1439
    %2711 = vmatpush2.msra.mxu0 %v1438
    %2712 = vmatprep.subr.mxu0 %v1435
    %2713 = vmatpush2.msra.mxu0 %v1434
    %2714 = vmatprep.subr.mxu0 %v1431
    %2715 = vmatpush2.msra.mxu0 %v1430
    %2716 = vmatprep.subr.mxu0 %v1427
    %2717 = vmatpush2.msra.mxu0 %v1426
    %2718 = vmatprep.subr.mxu0 %v1423
    %2719 = vmatpush2.msra.mxu0 %v1422
    %2720 = vmatprep.mubr.f32.mxu0 %v617
    %2721 = vmatmul.mubr.f32.gmra.mxu0 %v616
    %v2722 = vpop.f32.mrf.mxu0
    %v2723 = vadd.f32 %v2545, %v2722
    %v2724 = vpop.f32.mrf.mxu0
    %v2725 = vadd.f32 %v2547, %v2724
    %2726 = vmatprep.mubr.f32.mxu0 %v619
    %2727 = vmatmul.mubr.f32.gmra.mxu0 %v618
    %v2728 = vpop.f32.mrf.mxu0
    %v2729 = vadd.f32 %v2551, %v2728
    %v2730 = vpop.f32.mrf.mxu0
    %v2731 = vadd.f32 %v2553, %v2730
    %2732 = vmatprep.mubr.f32.mxu0 %v621
    %2733 = vmatmul.mubr.f32.gmra.mxu0 %v620
    %v2734 = vpop.f32.mrf.mxu0
    %v2735 = vadd.f32 %v2557, %v2734
    %v2736 = vpop.f32.mrf.mxu0
    %v2737 = vadd.f32 %v2559, %v2736
    %2738 = vmatprep.mubr.f32.mxu0 %v623
    %2739 = vmatmul.mubr.f32.gmra.mxu0 %v622
    %v2740 = vpop.f32.mrf.mxu0
    %v2741 = vadd.f32 %v2563, %v2740
    %v2742 = vpop.f32.mrf.mxu0
    %v2743 = vadd.f32 %v2565, %v2742
    %2744 = vdwg.mxu0
    %v2745 = vadd.f32 %v2634, %v1306
    %v2746 = vadd.f32 %v2636, %v1310
    %v2747 = vadd.f32 %v2723, %v1314
    %v2748 = vadd.f32 %v2725, %v1318
    %v2749 = vadd.f32 %v2640, %v1306
    %v2750 = vadd.f32 %v2642, %v1310
    %v2751 = vadd.f32 %v2729, %v1314
    %v2752 = vadd.f32 %v2731, %v1318
    %v2753 = vadd.f32 %v2646, %v1306
    %v2754 = vadd.f32 %v2648, %v1310
    %v2755 = vadd.f32 %v2735, %v1314
    %v2756 = vadd.f32 %v2737, %v1318
    %v2757 = vadd.f32 %v2652, %v1306
    %v2758 = vadd.f32 %v2654, %v1310
    %v2759 = vadd.f32 %v2741, %v1314
    %v2760 = vadd.f32 %v2743, %v1318
    %v2761 = vmax.f32 %v2745, 0.0
    %v2762 = vmax.f32 %v2746, 0.0
    %v2763 = vmax.f32 %v2747, 0.0
    %v2764 = vmax.f32 %v2748, 0.0
    %v2765 = vmax.f32 %v2749, 0.0
    %v2766 = vmax.f32 %v2750, 0.0
    %v2767 = vmax.f32 %v2751, 0.0
    %v2768 = vmax.f32 %v2752, 0.0
    %v2769 = vmax.f32 %v2753, 0.0
    %v2770 = vmax.f32 %v2754, 0.0
    %v2771 = vmax.f32 %v2755, 0.0
    %v2772 = vmax.f32 %v2756, 0.0
    %v2773 = vmax.f32 %v2757, 0.0
    %v2774 = vmax.f32 %v2758, 0.0
    %v2775 = vmax.f32 %v2759, 0.0
    %v2776 = vmax.f32 %v2760, 0.0
    %s2777 = sld [smem:[#allocation11]]
    %s2778 = sld [smem:[#allocation10]]
    %v2779 = vstv %s2778
    %v2780 = vmul.f32 %v2779, %v1339
    %v2781 = vmul.f32 %v2779, %v1343
    %v2782 = vmul.f32 %v2779, %v1347
    %v2783 = vmul.f32 %v2779, %v1351
    %v2784 = vstv %s2777
    %v2785 = vadd.f32 %v2784, %v2780
    %v2786 = vadd.f32 %v2784, %v2781
    %v2787 = vadd.f32 %v2784, %v2782
    %v2788 = vadd.f32 %v2784, %v2783
    %s2789 = sld [smem:[#allocation10 + $0x1]]
    %v2790 = vstv %s2789
    %v2791 = vmul.f32 %v2790, %v1339
    %v2792 = vmul.f32 %v2790, %v1343
    %v2793 = vmul.f32 %v2790, %v1347
    %v2794 = vmul.f32 %v2790, %v1351
    %2799 = vrot.lane.b32.xlu0 %v2791, 64
    %v2800 = vpop.permute.xlu0 %2799
    %2801 = vrot.lane.b32.xlu0 %v2792, 64
    %v2802 = vpop.permute.xlu0 %2801
    %2803 = vrot.lane.b32.xlu0 %v2793, 64
    %v2804 = vpop.permute.xlu0 %2803
    %2805 = vrot.lane.b32.xlu0 %v2794, 64
    %v2806 = vpop.permute.xlu0 %2805
    %v2811 = vadd.f32 %v2785, %v2800
    %v2812 = vadd.f32 %v2786, %v2802
    %v2813 = vadd.f32 %v2787, %v2804
    %v2814 = vadd.f32 %v2788, %v2806
    %s2815 = sld [smem:[#allocation10 + $0x2]]
    %v2816 = vstv %s2815
    %v2817 = vmul.f32 %v2816, %v1340
    %v2818 = vmul.f32 %v2816, %v1344
    %v2819 = vmul.f32 %v2816, %v1348
    %v2820 = vmul.f32 %v2816, %v1352
    %v2821 = vadd.f32 %v2811, %v2817
    %v2822 = vadd.f32 %v2812, %v2818
    %v2823 = vadd.f32 %v2813, %v2819
    %v2824 = vadd.f32 %v2814, %v2820
    %s2825 = sld [smem:[#allocation10 + $0x3]]
    %v2826 = vstv %s2825
    %v2827 = vmul.f32 %v2826, %v1340
    %v2828 = vmul.f32 %v2826, %v1344
    %v2829 = vmul.f32 %v2826, %v1348
    %v2830 = vmul.f32 %v2826, %v1352
    %2835 = vrot.lane.b32.xlu0 %v2827, 64
    %v2836 = vpop.permute.xlu0 %2835
    %2837 = vrot.lane.b32.xlu0 %v2828, 64
    %v2838 = vpop.permute.xlu0 %2837
    %2839 = vrot.lane.b32.xlu0 %v2829, 64
    %v2840 = vpop.permute.xlu0 %2839
    %2841 = vrot.lane.b32.xlu0 %v2830, 64
    %v2842 = vpop.permute.xlu0 %2841
    %v2847 = vadd.f32 %v2821, %v2836
    %v2848 = vadd.f32 %v2822, %v2838
    %v2849 = vadd.f32 %v2823, %v2840
    %v2850 = vadd.f32 %v2824, %v2842
    %s2851 = sld [smem:[#allocation10 + $0x4]]
    %v2852 = vstv %s2851
    %v2853 = vmul.f32 %v2852, %v1341
    %v2854 = vmul.f32 %v2852, %v1345
    %v2855 = vmul.f32 %v2852, %v1349
    %v2856 = vmul.f32 %v2852, %v1353
    %v2857 = vadd.f32 %v2847, %v2853
    %v2858 = vadd.f32 %v2848, %v2854
    %v2859 = vadd.f32 %v2849, %v2855
    %v2860 = vadd.f32 %v2850, %v2856
    %s2861 = sld [smem:[#allocation10 + $0x5]]
    %v2862 = vstv %s2861
    %v2863 = vmul.f32 %v2862, %v1341
    %v2864 = vmul.f32 %v2862, %v1345
    %v2865 = vmul.f32 %v2862, %v1349
    %v2866 = vmul.f32 %v2862, %v1353
    %2871 = vrot.lane.b32.xlu0 %v2863, 64
    %v2872 = vpop.permute.xlu0 %2871
    %2873 = vrot.lane.b32.xlu0 %v2864, 64
    %v2874 = vpop.permute.xlu0 %2873
    %2875 = vrot.lane.b32.xlu0 %v2865, 64
    %v2876 = vpop.permute.xlu0 %2875
    %2877 = vrot.lane.b32.xlu0 %v2866, 64
    %v2878 = vpop.permute.xlu0 %2877
    %v2883 = vadd.f32 %v2857, %v2872
    %v2884 = vadd.f32 %v2858, %v2874
    %v2885 = vadd.f32 %v2859, %v2876
    %v2886 = vadd.f32 %v2860, %v2878
    %s2887 = sld [smem:[#allocation10 + $0x6]]
    %v2888 = vstv %s2887
    %v2889 = vmul.f32 %v2888, %v1342
    %v2890 = vmul.f32 %v2888, %v1346
    %v2891 = vmul.f32 %v2888, %v1350
    %v2892 = vmul.f32 %v2888, %v1354
    %v2893 = vadd.f32 %v2883, %v2889
    %v2894 = vadd.f32 %v2884, %v2890
    %v2895 = vadd.f32 %v2885, %v2891
    %v2896 = vadd.f32 %v2886, %v2892
    %s2897 = sld [smem:[#allocation10 + $0x7]]
    %v2898 = vstv %s2897
    %v2899 = vmul.f32 %v2898, %v1342
    %v2900 = vmul.f32 %v2898, %v1346
    %v2901 = vmul.f32 %v2898, %v1350
    %v2902 = vmul.f32 %v2898, %v1354
    %2907 = vrot.lane.b32.xlu0 %v2899, 64
    %v2908 = vpop.permute.xlu0 %2907
    %2909 = vrot.lane.b32.xlu0 %v2900, 64
    %v2910 = vpop.permute.xlu0 %2909
    %2911 = vrot.lane.b32.xlu0 %v2901, 64
    %v2912 = vpop.permute.xlu0 %2911
    %2913 = vrot.lane.b32.xlu0 %v2902, 64
    %v2914 = vpop.permute.xlu0 %2913
    %v2919 = vadd.f32 %v2893, %v2908
    %v2920 = vadd.f32 %v2894, %v2910
    %v2921 = vadd.f32 %v2895, %v2912
    %v2922 = vadd.f32 %v2896, %v2914
    %2923 = vst.msk [vmem:[%s7] sm:$0xff] %vm162, %v2919
    %2924 = vst.msk [vmem:[%s7 + $0x8] sm:$0xff] %vm162, %v2920
    %s2925 = scalar_lea.vmem %s7, 96
    %2926 = vst.msk [vmem:[%s2925] sm:$0xff] %vm162, %v2921
    %2927 = vst.msk [vmem:[%s2925 + $0x8] sm:$0xff] %vm162, %v2922
    %s2928 = sld [smem:[#allocation11 + $0x1]]
    %s2929 = sld [smem:[#allocation10 + $0x80]]
    %v2930 = vstv %s2929
    %v2931 = vmul.f32 %v2930, %v1339
    %v2932 = vmul.f32 %v2930, %v1343
    %v2933 = vmul.f32 %v2930, %v1347
    %v2934 = vmul.f32 %v2930, %v1351
    %v2935 = vstv %s2928
    %v2936 = vadd.f32 %v2935, %v2931
    %v2937 = vadd.f32 %v2935, %v2932
    %v2938 = vadd.f32 %v2935, %v2933
    %v2939 = vadd.f32 %v2935, %v2934
    %s2940 = sld [smem:[#allocation10 + $0x81]]
    %v2941 = vstv %s2940
    %v2942 = vmul.f32 %v2941, %v1339
    %v2943 = vmul.f32 %v2941, %v1343
    %v2944 = vmul.f32 %v2941, %v1347
    %v2945 = vmul.f32 %v2941, %v1351
    %2950 = vrot.lane.b32.xlu0 %v2942, 64
    %v2951 = vpop.permute.xlu0 %2950
    %2952 = vrot.lane.b32.xlu0 %v2943, 64
    %v2953 = vpop.permute.xlu0 %2952
    %2954 = vrot.lane.b32.xlu0 %v2944, 64
    %v2955 = vpop.permute.xlu0 %2954
    %2956 = vrot.lane.b32.xlu0 %v2945, 64
    %v2957 = vpop.permute.xlu0 %2956
    %v2962 = vadd.f32 %v2936, %v2951
    %v2963 = vadd.f32 %v2937, %v2953
    %v2964 = vadd.f32 %v2938, %v2955
    %v2965 = vadd.f32 %v2939, %v2957
    %s2966 = sld [smem:[#allocation10 + $0x82]]
    %v2967 = vstv %s2966
    %v2968 = vmul.f32 %v2967, %v1340
    %v2969 = vmul.f32 %v2967, %v1344
    %v2970 = vmul.f32 %v2967, %v1348
    %v2971 = vmul.f32 %v2967, %v1352
    %v2972 = vadd.f32 %v2962, %v2968
    %v2973 = vadd.f32 %v2963, %v2969
    %v2974 = vadd.f32 %v2964, %v2970
    %v2975 = vadd.f32 %v2965, %v2971
    %s2976 = sld [smem:[#allocation10 + $0x83]]
    %v2977 = vstv %s2976
    %v2978 = vmul.f32 %v2977, %v1340
    %v2979 = vmul.f32 %v2977, %v1344
    %v2980 = vmul.f32 %v2977, %v1348
    %v2981 = vmul.f32 %v2977, %v1352
    %2986 = vrot.lane.b32.xlu0 %v2978, 64
    %v2987 = vpop.permute.xlu0 %2986
    %2988 = vrot.lane.b32.xlu0 %v2979, 64
    %v2989 = vpop.permute.xlu0 %2988
    %2990 = vrot.lane.b32.xlu0 %v2980, 64
    %v2991 = vpop.permute.xlu0 %2990
    %2992 = vrot.lane.b32.xlu0 %v2981, 64
    %v2993 = vpop.permute.xlu0 %2992
    %v2998 = vadd.f32 %v2972, %v2987
    %v2999 = vadd.f32 %v2973, %v2989
    %v3000 = vadd.f32 %v2974, %v2991
    %v3001 = vadd.f32 %v2975, %v2993
    %s3002 = sld [smem:[#allocation10 + $0x84]]
    %v3003 = vstv %s3002
    %v3004 = vmul.f32 %v3003, %v1341
    %v3005 = vmul.f32 %v3003, %v1345
    %v3006 = vmul.f32 %v3003, %v1349
    %v3007 = vmul.f32 %v3003, %v1353
    %v3008 = vadd.f32 %v2998, %v3004
    %v3009 = vadd.f32 %v2999, %v3005
    %v3010 = vadd.f32 %v3000, %v3006
    %v3011 = vadd.f32 %v3001, %v3007
    %s3012 = sld [smem:[#allocation10 + $0x85]]
    %v3013 = vstv %s3012
    %v3014 = vmul.f32 %v3013, %v1341
    %v3015 = vmul.f32 %v3013, %v1345
    %v3016 = vmul.f32 %v3013, %v1349
    %v3017 = vmul.f32 %v3013, %v1353
    %3022 = vrot.lane.b32.xlu0 %v3014, 64
    %v3023 = vpop.permute.xlu0 %3022
    %3024 = vrot.lane.b32.xlu0 %v3015, 64
    %v3025 = vpop.permute.xlu0 %3024
    %3026 = vrot.lane.b32.xlu0 %v3016, 64
    %v3027 = vpop.permute.xlu0 %3026
    %3028 = vrot.lane.b32.xlu0 %v3017, 64
    %v3029 = vpop.permute.xlu0 %3028
    %v3034 = vadd.f32 %v3008, %v3023
    %v3035 = vadd.f32 %v3009, %v3025
    %v3036 = vadd.f32 %v3010, %v3027
    %v3037 = vadd.f32 %v3011, %v3029
    %s3038 = sld [smem:[#allocation10 + $0x86]]
    %v3039 = vstv %s3038
    %v3040 = vmul.f32 %v3039, %v1342
    %v3041 = vmul.f32 %v3039, %v1346
    %v3042 = vmul.f32 %v3039, %v1350
    %v3043 = vmul.f32 %v3039, %v1354
    %v3044 = vadd.f32 %v3034, %v3040
    %v3045 = vadd.f32 %v3035, %v3041
    %v3046 = vadd.f32 %v3036, %v3042
    %v3047 = vadd.f32 %v3037, %v3043
    %s3048 = sld [smem:[#allocation10 + $0x87]]
    %v3049 = vstv %s3048
    %v3050 = vmul.f32 %v3049, %v1342
    %v3051 = vmul.f32 %v3049, %v1346
    %v3052 = vmul.f32 %v3049, %v1350
    %v3053 = vmul.f32 %v3049, %v1354
    %3058 = vrot.lane.b32.xlu0 %v3050, 64
    %v3059 = vpop.permute.xlu0 %3058
    %3060 = vrot.lane.b32.xlu0 %v3051, 64
    %v3061 = vpop.permute.xlu0 %3060
    %3062 = vrot.lane.b32.xlu0 %v3052, 64
    %v3063 = vpop.permute.xlu0 %3062
    %3064 = vrot.lane.b32.xlu0 %v3053, 64
    %v3065 = vpop.permute.xlu0 %3064
    %v3070 = vadd.f32 %v3044, %v3059
    %v3071 = vadd.f32 %v3045, %v3061
    %v3072 = vadd.f32 %v3046, %v3063
    %v3073 = vadd.f32 %v3047, %v3065
    %s3074 = scalar_lea.vmem %s7, 16
    %3075 = vst.msk [vmem:[%s3074] sm:$0xff] %vm162, %v3070
    %3076 = vst.msk [vmem:[%s3074 + $0x8] sm:$0xff] %vm162, %v3071
    %s3077 = scalar_lea.vmem %s7, 112
    %3078 = vst.msk [vmem:[%s3077] sm:$0xff] %vm162, %v3072
    %3079 = vst.msk [vmem:[%s3077 + $0x8] sm:$0xff] %vm162, %v3073
    %s3080 = sld [smem:[#allocation11 + $0x2]]
    %s3081 = sld [smem:[#allocation10 + $0x100]]
    %v3082 = vstv %s3081
    %v3083 = vmul.f32 %v3082, %v1339
    %v3084 = vmul.f32 %v3082, %v1343
    %v3085 = vmul.f32 %v3082, %v1347
    %v3086 = vmul.f32 %v3082, %v1351
    %v3087 = vstv %s3080
    %v3088 = vadd.f32 %v3087, %v3083
    %v3089 = vadd.f32 %v3087, %v3084
    %v3090 = vadd.f32 %v3087, %v3085
    %v3091 = vadd.f32 %v3087, %v3086
    %s3092 = sld [smem:[#allocation10 + $0x101]]
    %v3093 = vstv %s3092
    %v3094 = vmul.f32 %v3093, %v1339
    %v3095 = vmul.f32 %v3093, %v1343
    %v3096 = vmul.f32 %v3093, %v1347
    %v3097 = vmul.f32 %v3093, %v1351
    %3102 = vrot.lane.b32.xlu0 %v3094, 64
    %v3103 = vpop.permute.xlu0 %3102
    %3104 = vrot.lane.b32.xlu0 %v3095, 64
    %v3105 = vpop.permute.xlu0 %3104
    %3106 = vrot.lane.b32.xlu0 %v3096, 64
    %v3107 = vpop.permute.xlu0 %3106
    %3108 = vrot.lane.b32.xlu0 %v3097, 64
    %v3109 = vpop.permute.xlu0 %3108
    %v3114 = vadd.f32 %v3088, %v3103
    %v3115 = vadd.f32 %v3089, %v3105
    %v3116 = vadd.f32 %v3090, %v3107
    %v3117 = vadd.f32 %v3091, %v3109
    %s3118 = sld [smem:[#allocation10 + $0x102]]
    %v3119 = vstv %s3118
    %v3120 = vmul.f32 %v3119, %v1340
    %v3121 = vmul.f32 %v3119, %v1344
    %v3122 = vmul.f32 %v3119, %v1348
    %v3123 = vmul.f32 %v3119, %v1352
    %v3124 = vadd.f32 %v3114, %v3120
    %v3125 = vadd.f32 %v3115, %v3121
    %v3126 = vadd.f32 %v3116, %v3122
    %v3127 = vadd.f32 %v3117, %v3123
    %s3128 = sld [smem:[#allocation10 + $0x103]]
    %v3129 = vstv %s3128
    %v3130 = vmul.f32 %v3129, %v1340
    %v3131 = vmul.f32 %v3129, %v1344
    %v3132 = vmul.f32 %v3129, %v1348
    %v3133 = vmul.f32 %v3129, %v1352
    %3138 = vrot.lane.b32.xlu0 %v3130, 64
    %v3139 = vpop.permute.xlu0 %3138
    %3140 = vrot.lane.b32.xlu0 %v3131, 64
    %v3141 = vpop.permute.xlu0 %3140
    %3142 = vrot.lane.b32.xlu0 %v3132, 64
    %v3143 = vpop.permute.xlu0 %3142
    %3144 = vrot.lane.b32.xlu0 %v3133, 64
    %v3145 = vpop.permute.xlu0 %3144
    %v3150 = vadd.f32 %v3124, %v3139
    %v3151 = vadd.f32 %v3125, %v3141
    %v3152 = vadd.f32 %v3126, %v3143
    %v3153 = vadd.f32 %v3127, %v3145
    %s3154 = sld [smem:[#allocation10 + $0x104]]
    %v3155 = vstv %s3154
    %v3156 = vmul.f32 %v3155, %v1341
    %v3157 = vmul.f32 %v3155, %v1345
    %v3158 = vmul.f32 %v3155, %v1349
    %v3159 = vmul.f32 %v3155, %v1353
    %v3160 = vadd.f32 %v3150, %v3156
    %v3161 = vadd.f32 %v3151, %v3157
    %v3162 = vadd.f32 %v3152, %v3158
    %v3163 = vadd.f32 %v3153, %v3159
    %s3164 = sld [smem:[#allocation10 + $0x105]]
    %v3165 = vstv %s3164
    %v3166 = vmul.f32 %v3165, %v1341
    %v3167 = vmul.f32 %v3165, %v1345
    %v3168 = vmul.f32 %v3165, %v1349
    %v3169 = vmul.f32 %v3165, %v1353
    %3174 = vrot.lane.b32.xlu0 %v3166, 64
    %v3175 = vpop.permute.xlu0 %3174
    %3176 = vrot.lane.b32.xlu0 %v3167, 64
    %v3177 = vpop.permute.xlu0 %3176
    %3178 = vrot.lane.b32.xlu0 %v3168, 64
    %v3179 = vpop.permute.xlu0 %3178
    %3180 = vrot.lane.b32.xlu0 %v3169, 64
    %v3181 = vpop.permute.xlu0 %3180
    %v3186 = vadd.f32 %v3160, %v3175
    %v3187 = vadd.f32 %v3161, %v3177
    %v3188 = vadd.f32 %v3162, %v3179
    %v3189 = vadd.f32 %v3163, %v3181
    %s3190 = sld [smem:[#allocation10 + $0x106]]
    %v3191 = vstv %s3190
    %v3192 = vmul.f32 %v3191, %v1342
    %v3193 = vmul.f32 %v3191, %v1346
    %v3194 = vmul.f32 %v3191, %v1350
    %v3195 = vmul.f32 %v3191, %v1354
    %v3196 = vadd.f32 %v3186, %v3192
    %v3197 = vadd.f32 %v3187, %v3193
    %v3198 = vadd.f32 %v3188, %v3194
    %v3199 = vadd.f32 %v3189, %v3195
    %s3200 = sld [smem:[#allocation10 + $0x107]]
    %v3201 = vstv %s3200
    %v3202 = vmul.f32 %v3201, %v1342
    %v3203 = vmul.f32 %v3201, %v1346
    %v3204 = vmul.f32 %v3201, %v1350
    %v3205 = vmul.f32 %v3201, %v1354
    %3210 = vrot.lane.b32.xlu0 %v3202, 64
    %v3211 = vpop.permute.xlu0 %3210
    %3212 = vrot.lane.b32.xlu0 %v3203, 64
    %v3213 = vpop.permute.xlu0 %3212
    %3214 = vrot.lane.b32.xlu0 %v3204, 64
    %v3215 = vpop.permute.xlu0 %3214
    %3216 = vrot.lane.b32.xlu0 %v3205, 64
    %v3217 = vpop.permute.xlu0 %3216
    %v3222 = vadd.f32 %v3196, %v3211
    %v3223 = vadd.f32 %v3197, %v3213
    %v3224 = vadd.f32 %v3198, %v3215
    %v3225 = vadd.f32 %v3199, %v3217
    %s3226 = scalar_lea.vmem %s7, 32
    %3227 = vst.msk [vmem:[%s3226] sm:$0xff] %vm162, %v3222
    %3228 = vst.msk [vmem:[%s3226 + $0x8] sm:$0xff] %vm162, %v3223
    %s3229 = scalar_lea.vmem %s7, 128
    %3230 = vst.msk [vmem:[%s3229] sm:$0xff] %vm162, %v3224
    %3231 = vst.msk [vmem:[%s3229 + $0x8] sm:$0xff] %vm162, %v3225
    %s3232 = sld [smem:[#allocation11 + $0x3]]
    %s3233 = sld [smem:[#allocation10 + $0x180]]
    %v3234 = vstv %s3233
    %v3235 = vmul.f32 %v3234, %v1339
    %v3236 = vmul.f32 %v3234, %v1343
    %v3237 = vmul.f32 %v3234, %v1347
    %v3238 = vmul.f32 %v3234, %v1351
    %v3239 = vstv %s3232
    %v3240 = vadd.f32 %v3239, %v3235
    %v3241 = vadd.f32 %v3239, %v3236
    %v3242 = vadd.f32 %v3239, %v3237
    %v3243 = vadd.f32 %v3239, %v3238
    %s3244 = sld [smem:[#allocation10 + $0x181]]
    %v3245 = vstv %s3244
    %v3246 = vmul.f32 %v3245, %v1339
    %v3247 = vmul.f32 %v3245, %v1343
    %v3248 = vmul.f32 %v3245, %v1347
    %v3249 = vmul.f32 %v3245, %v1351
    %3254 = vrot.lane.b32.xlu0 %v3246, 64
    %v3255 = vpop.permute.xlu0 %3254
    %3256 = vrot.lane.b32.xlu0 %v3247, 64
    %v3257 = vpop.permute.xlu0 %3256
    %3258 = vrot.lane.b32.xlu0 %v3248, 64
    %v3259 = vpop.permute.xlu0 %3258
    %3260 = vrot.lane.b32.xlu0 %v3249, 64
    %v3261 = vpop.permute.xlu0 %3260
    %v3266 = vadd.f32 %v3240, %v3255
    %v3267 = vadd.f32 %v3241, %v3257
    %v3268 = vadd.f32 %v3242, %v3259
    %v3269 = vadd.f32 %v3243, %v3261
    %s3270 = sld [smem:[#allocation10 + $0x182]]
    %v3271 = vstv %s3270
    %v3272 = vmul.f32 %v3271, %v1340
    %v3273 = vmul.f32 %v3271, %v1344
    %v3274 = vmul.f32 %v3271, %v1348
    %v3275 = vmul.f32 %v3271, %v1352
    %v3276 = vadd.f32 %v3266, %v3272
    %v3277 = vadd.f32 %v3267, %v3273
    %v3278 = vadd.f32 %v3268, %v3274
    %v3279 = vadd.f32 %v3269, %v3275
    %s3280 = sld [smem:[#allocation10 + $0x183]]
    %v3281 = vstv %s3280
    %v3282 = vmul.f32 %v3281, %v1340
    %v3283 = vmul.f32 %v3281, %v1344
    %v3284 = vmul.f32 %v3281, %v1348
    %v3285 = vmul.f32 %v3281, %v1352
    %3290 = vrot.lane.b32.xlu0 %v3282, 64
    %v3291 = vpop.permute.xlu0 %3290
    %3292 = vrot.lane.b32.xlu0 %v3283, 64
    %v3293 = vpop.permute.xlu0 %3292
    %3294 = vrot.lane.b32.xlu0 %v3284, 64
    %v3295 = vpop.permute.xlu0 %3294
    %3296 = vrot.lane.b32.xlu0 %v3285, 64
    %v3297 = vpop.permute.xlu0 %3296
    %v3302 = vadd.f32 %v3276, %v3291
    %v3303 = vadd.f32 %v3277, %v3293
    %v3304 = vadd.f32 %v3278, %v3295
    %v3305 = vadd.f32 %v3279, %v3297
    %s3306 = sld [smem:[#allocation10 + $0x184]]
    %v3307 = vstv %s3306
    %v3308 = vmul.f32 %v3307, %v1341
    %v3309 = vmul.f32 %v3307, %v1345
    %v3310 = vmul.f32 %v3307, %v1349
    %v3311 = vmul.f32 %v3307, %v1353
    %v3312 = vadd.f32 %v3302, %v3308
    %v3313 = vadd.f32 %v3303, %v3309
    %v3314 = vadd.f32 %v3304, %v3310
    %v3315 = vadd.f32 %v3305, %v3311
    %s3316 = sld [smem:[#allocation10 + $0x185]]
    %v3317 = vstv %s3316
    %v3318 = vmul.f32 %v3317, %v1341
    %v3319 = vmul.f32 %v3317, %v1345
    %v3320 = vmul.f32 %v3317, %v1349
    %v3321 = vmul.f32 %v3317, %v1353
    %3326 = vrot.lane.b32.xlu0 %v3318, 64
    %v3327 = vpop.permute.xlu0 %3326
    %3328 = vrot.lane.b32.xlu0 %v3319, 64
    %v3329 = vpop.permute.xlu0 %3328
    %3330 = vrot.lane.b32.xlu0 %v3320, 64
    %v3331 = vpop.permute.xlu0 %3330
    %3332 = vrot.lane.b32.xlu0 %v3321, 64
    %v3333 = vpop.permute.xlu0 %3332
    %v3338 = vadd.f32 %v3312, %v3327
    %v3339 = vadd.f32 %v3313, %v3329
    %v3340 = vadd.f32 %v3314, %v3331
    %v3341 = vadd.f32 %v3315, %v3333
    %s3342 = sld [smem:[#allocation10 + $0x186]]
    %v3343 = vstv %s3342
    %v3344 = vmul.f32 %v3343, %v1342
    %v3345 = vmul.f32 %v3343, %v1346
    %v3346 = vmul.f32 %v3343, %v1350
    %v3347 = vmul.f32 %v3343, %v1354
    %v3348 = vadd.f32 %v3338, %v3344
    %v3349 = vadd.f32 %v3339, %v3345
    %v3350 = vadd.f32 %v3340, %v3346
    %v3351 = vadd.f32 %v3341, %v3347
    %s3352 = sld [smem:[#allocation10 + $0x187]]
    %v3353 = vstv %s3352
    %v3354 = vmul.f32 %v3353, %v1342
    %v3355 = vmul.f32 %v3353, %v1346
    %v3356 = vmul.f32 %v3353, %v1350
    %v3357 = vmul.f32 %v3353, %v1354
    %3362 = vrot.lane.b32.xlu0 %v3354, 64
    %v3363 = vpop.permute.xlu0 %3362
    %3364 = vrot.lane.b32.xlu0 %v3355, 64
    %v3365 = vpop.permute.xlu0 %3364
    %3366 = vrot.lane.b32.xlu0 %v3356, 64
    %v3367 = vpop.permute.xlu0 %3366
    %3368 = vrot.lane.b32.xlu0 %v3357, 64
    %v3369 = vpop.permute.xlu0 %3368
    %v3374 = vadd.f32 %v3348, %v3363
    %v3375 = vadd.f32 %v3349, %v3365
    %v3376 = vadd.f32 %v3350, %v3367
    %v3377 = vadd.f32 %v3351, %v3369
    %s3378 = scalar_lea.vmem %s7, 48
    %3379 = vst.msk [vmem:[%s3378] sm:$0xff] %vm162, %v3374
    %3380 = vst.msk [vmem:[%s3378 + $0x8] sm:$0xff] %vm162, %v3375
    %s3381 = scalar_lea.vmem %s7, 144
    %3382 = vst.msk [vmem:[%s3381] sm:$0xff] %vm162, %v3376
    %3383 = vst.msk [vmem:[%s3381 + $0x8] sm:$0xff] %vm162, %v3377
    %s3384 = sld [smem:[#allocation11 + $0x4]]
    %s3385 = sld [smem:[#allocation10 + $0x200]]
    %v3386 = vstv %s3385
    %v3387 = vmul.f32 %v3386, %v1339
    %v3388 = vmul.f32 %v3386, %v1343
    %v3389 = vmul.f32 %v3386, %v1347
    %v3390 = vmul.f32 %v3386, %v1351
    %v3391 = vstv %s3384
    %v3392 = vadd.f32 %v3391, %v3387
    %v3393 = vadd.f32 %v3391, %v3388
    %v3394 = vadd.f32 %v3391, %v3389
    %v3395 = vadd.f32 %v3391, %v3390
    %s3396 = sld [smem:[#allocation10 + $0x201]]
    %v3397 = vstv %s3396
    %v3398 = vmul.f32 %v3397, %v1339
    %v3399 = vmul.f32 %v3397, %v1343
    %v3400 = vmul.f32 %v3397, %v1347
    %v3401 = vmul.f32 %v3397, %v1351
    %3406 = vrot.lane.b32.xlu0 %v3398, 64
    %v3407 = vpop.permute.xlu0 %3406
    %3408 = vrot.lane.b32.xlu0 %v3399, 64
    %v3409 = vpop.permute.xlu0 %3408
    %3410 = vrot.lane.b32.xlu0 %v3400, 64
    %v3411 = vpop.permute.xlu0 %3410
    %3412 = vrot.lane.b32.xlu0 %v3401, 64
    %v3413 = vpop.permute.xlu0 %3412
    %v3418 = vadd.f32 %v3392, %v3407
    %v3419 = vadd.f32 %v3393, %v3409
    %v3420 = vadd.f32 %v3394, %v3411
    %v3421 = vadd.f32 %v3395, %v3413
    %s3422 = sld [smem:[#allocation10 + $0x202]]
    %v3423 = vstv %s3422
    %v3424 = vmul.f32 %v3423, %v1340
    %v3425 = vmul.f32 %v3423, %v1344
    %v3426 = vmul.f32 %v3423, %v1348
    %v3427 = vmul.f32 %v3423, %v1352
    %v3428 = vadd.f32 %v3418, %v3424
    %v3429 = vadd.f32 %v3419, %v3425
    %v3430 = vadd.f32 %v3420, %v3426
    %v3431 = vadd.f32 %v3421, %v3427
    %s3432 = sld [smem:[#allocation10 + $0x203]]
    %v3433 = vstv %s3432
    %v3434 = vmul.f32 %v3433, %v1340
    %v3435 = vmul.f32 %v3433, %v1344
    %v3436 = vmul.f32 %v3433, %v1348
    %v3437 = vmul.f32 %v3433, %v1352
    %3442 = vrot.lane.b32.xlu0 %v3434, 64
    %v3443 = vpop.permute.xlu0 %3442
    %3444 = vrot.lane.b32.xlu0 %v3435, 64
    %v3445 = vpop.permute.xlu0 %3444
    %3446 = vrot.lane.b32.xlu0 %v3436, 64
    %v3447 = vpop.permute.xlu0 %3446
    %3448 = vrot.lane.b32.xlu0 %v3437, 64
    %v3449 = vpop.permute.xlu0 %3448
    %v3454 = vadd.f32 %v3428, %v3443
    %v3455 = vadd.f32 %v3429, %v3445
    %v3456 = vadd.f32 %v3430, %v3447
    %v3457 = vadd.f32 %v3431, %v3449
    %s3458 = sld [smem:[#allocation10 + $0x204]]
    %v3459 = vstv %s3458
    %v3460 = vmul.f32 %v3459, %v1341
    %v3461 = vmul.f32 %v3459, %v1345
    %v3462 = vmul.f32 %v3459, %v1349
    %v3463 = vmul.f32 %v3459, %v1353
    %v3464 = vadd.f32 %v3454, %v3460
    %v3465 = vadd.f32 %v3455, %v3461
    %v3466 = vadd.f32 %v3456, %v3462
    %v3467 = vadd.f32 %v3457, %v3463
    %s3468 = sld [smem:[#allocation10 + $0x205]]
    %v3469 = vstv %s3468
    %v3470 = vmul.f32 %v3469, %v1341
    %v3471 = vmul.f32 %v3469, %v1345
    %v3472 = vmul.f32 %v3469, %v1349
    %v3473 = vmul.f32 %v3469, %v1353
    %3478 = vrot.lane.b32.xlu0 %v3470, 64
    %v3479 = vpop.permute.xlu0 %3478
    %3480 = vrot.lane.b32.xlu0 %v3471, 64
    %v3481 = vpop.permute.xlu0 %3480
    %3482 = vrot.lane.b32.xlu0 %v3472, 64
    %v3483 = vpop.permute.xlu0 %3482
    %3484 = vrot.lane.b32.xlu0 %v3473, 64
    %v3485 = vpop.permute.xlu0 %3484
    %v3490 = vadd.f32 %v3464, %v3479
    %v3491 = vadd.f32 %v3465, %v3481
    %v3492 = vadd.f32 %v3466, %v3483
    %v3493 = vadd.f32 %v3467, %v3485
    %s3494 = sld [smem:[#allocation10 + $0x206]]
    %v3495 = vstv %s3494
    %v3496 = vmul.f32 %v3495, %v1342
    %v3497 = vmul.f32 %v3495, %v1346
    %v3498 = vmul.f32 %v3495, %v1350
    %v3499 = vmul.f32 %v3495, %v1354
    %v3500 = vadd.f32 %v3490, %v3496
    %v3501 = vadd.f32 %v3491, %v3497
    %v3502 = vadd.f32 %v3492, %v3498
    %v3503 = vadd.f32 %v3493, %v3499
    %s3504 = sld [smem:[#allocation10 + $0x207]]
    %v3505 = vstv %s3504
    %v3506 = vmul.f32 %v3505, %v1342
    %v3507 = vmul.f32 %v3505, %v1346
    %v3508 = vmul.f32 %v3505, %v1350
    %v3509 = vmul.f32 %v3505, %v1354
    %3514 = vrot.lane.b32.xlu0 %v3506, 64
    %v3515 = vpop.permute.xlu0 %3514
    %3516 = vrot.lane.b32.xlu0 %v3507, 64
    %v3517 = vpop.permute.xlu0 %3516
    %3518 = vrot.lane.b32.xlu0 %v3508, 64
    %v3519 = vpop.permute.xlu0 %3518
    %3520 = vrot.lane.b32.xlu0 %v3509, 64
    %v3521 = vpop.permute.xlu0 %3520
    %v3526 = vadd.f32 %v3500, %v3515
    %v3527 = vadd.f32 %v3501, %v3517
    %v3528 = vadd.f32 %v3502, %v3519
    %v3529 = vadd.f32 %v3503, %v3521
    %s3530 = scalar_lea.vmem %s7, 64
    %3531 = vst.msk [vmem:[%s3530] sm:$0xff] %vm162, %v3526
    %3532 = vst.msk [vmem:[%s3530 + $0x8] sm:$0xff] %vm162, %v3527
    %s3533 = scalar_lea.vmem %s7, 160
    %3534 = vst.msk [vmem:[%s3533] sm:$0xff] %vm162, %v3528
    %3535 = vst.msk [vmem:[%s3533 + $0x8] sm:$0xff] %vm162, %v3529
    %s3536 = sld [smem:[#allocation11 + $0x5]]
    %s3537 = sld [smem:[#allocation10 + $0x280]]
    %v3538 = vstv %s3537
    %v3539 = vmul.f32 %v3538, %v1339
    %v3540 = vmul.f32 %v3538, %v1343
    %v3541 = vmul.f32 %v3538, %v1347
    %v3542 = vmul.f32 %v3538, %v1351
    %v3543 = vstv %s3536
    %v3544 = vadd.f32 %v3543, %v3539
    %v3545 = vadd.f32 %v3543, %v3540
    %v3546 = vadd.f32 %v3543, %v3541
    %v3547 = vadd.f32 %v3543, %v3542
    %s3548 = sld [smem:[#allocation10 + $0x281]]
    %v3549 = vstv %s3548
    %v3550 = vmul.f32 %v3549, %v1339
    %v3551 = vmul.f32 %v3549, %v1343
    %v3552 = vmul.f32 %v3549, %v1347
    %v3553 = vmul.f32 %v3549, %v1351
    %3558 = vrot.lane.b32.xlu0 %v3550, 64
    %v3559 = vpop.permute.xlu0 %3558
    %3560 = vrot.lane.b32.xlu0 %v3551, 64
    %v3561 = vpop.permute.xlu0 %3560
    %3562 = vrot.lane.b32.xlu0 %v3552, 64
    %v3563 = vpop.permute.xlu0 %3562
    %3564 = vrot.lane.b32.xlu0 %v3553, 64
    %v3565 = vpop.permute.xlu0 %3564
    %v3570 = vadd.f32 %v3544, %v3559
    %v3571 = vadd.f32 %v3545, %v3561
    %v3572 = vadd.f32 %v3546, %v3563
    %v3573 = vadd.f32 %v3547, %v3565
    %s3574 = sld [smem:[#allocation10 + $0x282]]
    %v3575 = vstv %s3574
    %v3576 = vmul.f32 %v3575, %v1340
    %v3577 = vmul.f32 %v3575, %v1344
    %v3578 = vmul.f32 %v3575, %v1348
    %v3579 = vmul.f32 %v3575, %v1352
    %v3580 = vadd.f32 %v3570, %v3576
    %v3581 = vadd.f32 %v3571, %v3577
    %v3582 = vadd.f32 %v3572, %v3578
    %v3583 = vadd.f32 %v3573, %v3579
    %s3584 = sld [smem:[#allocation10 + $0x283]]
    %v3585 = vstv %s3584
    %v3586 = vmul.f32 %v3585, %v1340
    %v3587 = vmul.f32 %v3585, %v1344
    %v3588 = vmul.f32 %v3585, %v1348
    %v3589 = vmul.f32 %v3585, %v1352
    %3594 = vrot.lane.b32.xlu0 %v3586, 64
    %v3595 = vpop.permute.xlu0 %3594
    %3596 = vrot.lane.b32.xlu0 %v3587, 64
    %v3597 = vpop.permute.xlu0 %3596
    %3598 = vrot.lane.b32.xlu0 %v3588, 64
    %v3599 = vpop.permute.xlu0 %3598
    %3600 = vrot.lane.b32.xlu0 %v3589, 64
    %v3601 = vpop.permute.xlu0 %3600
    %v3606 = vadd.f32 %v3580, %v3595
    %v3607 = vadd.f32 %v3581, %v3597
    %v3608 = vadd.f32 %v3582, %v3599
    %v3609 = vadd.f32 %v3583, %v3601
    %s3610 = sld [smem:[#allocation10 + $0x284]]
    %v3611 = vstv %s3610
    %v3612 = vmul.f32 %v3611, %v1341
    %v3613 = vmul.f32 %v3611, %v1345
    %v3614 = vmul.f32 %v3611, %v1349
    %v3615 = vmul.f32 %v3611, %v1353
    %v3616 = vadd.f32 %v3606, %v3612
    %v3617 = vadd.f32 %v3607, %v3613
    %v3618 = vadd.f32 %v3608, %v3614
    %v3619 = vadd.f32 %v3609, %v3615
    %s3620 = sld [smem:[#allocation10 + $0x285]]
    %v3621 = vstv %s3620
    %v3622 = vmul.f32 %v3621, %v1341
    %v3623 = vmul.f32 %v3621, %v1345
    %v3624 = vmul.f32 %v3621, %v1349
    %v3625 = vmul.f32 %v3621, %v1353
    %3630 = vrot.lane.b32.xlu0 %v3622, 64
    %v3631 = vpop.permute.xlu0 %3630
    %3632 = vrot.lane.b32.xlu0 %v3623, 64
    %v3633 = vpop.permute.xlu0 %3632
    %3634 = vrot.lane.b32.xlu0 %v3624, 64
    %v3635 = vpop.permute.xlu0 %3634
    %3636 = vrot.lane.b32.xlu0 %v3625, 64
    %v3637 = vpop.permute.xlu0 %3636
    %v3642 = vadd.f32 %v3616, %v3631
    %v3643 = vadd.f32 %v3617, %v3633
    %v3644 = vadd.f32 %v3618, %v3635
    %v3645 = vadd.f32 %v3619, %v3637
    %s3646 = sld [smem:[#allocation10 + $0x286]]
    %v3647 = vstv %s3646
    %v3648 = vmul.f32 %v3647, %v1342
    %v3649 = vmul.f32 %v3647, %v1346
    %v3650 = vmul.f32 %v3647, %v1350
    %v3651 = vmul.f32 %v3647, %v1354
    %v3652 = vadd.f32 %v3642, %v3648
    %v3653 = vadd.f32 %v3643, %v3649
    %v3654 = vadd.f32 %v3644, %v3650
    %v3655 = vadd.f32 %v3645, %v3651
    %s3656 = sld [smem:[#allocation10 + $0x287]]
    %v3657 = vstv %s3656
    %v3658 = vmul.f32 %v3657, %v1342
    %v3659 = vmul.f32 %v3657, %v1346
    %v3660 = vmul.f32 %v3657, %v1350
    %v3661 = vmul.f32 %v3657, %v1354
    %3666 = vrot.lane.b32.xlu0 %v3658, 64
    %v3667 = vpop.permute.xlu0 %3666
    %3668 = vrot.lane.b32.xlu0 %v3659, 64
    %v3669 = vpop.permute.xlu0 %3668
    %3670 = vrot.lane.b32.xlu0 %v3660, 64
    %v3671 = vpop.permute.xlu0 %3670
    %3672 = vrot.lane.b32.xlu0 %v3661, 64
    %v3673 = vpop.permute.xlu0 %3672
    %v3678 = vadd.f32 %v3652, %v3667
    %v3679 = vadd.f32 %v3653, %v3669
    %v3680 = vadd.f32 %v3654, %v3671
    %v3681 = vadd.f32 %v3655, %v3673
    %s3682 = scalar_lea.vmem %s7, 80
    %3683 = vst.msk [vmem:[%s3682] sm:$0xff] %vm162, %v3678
    %3684 = vst.msk [vmem:[%s3682 + $0x8] sm:$0xff] %vm162, %v3679
    %s3685 = scalar_lea.vmem %s7, 176
    %3686 = vst.msk [vmem:[%s3685] sm:$0xff] %vm162, %v3680
    %3687 = vst.msk [vmem:[%s3685 + $0x8] sm:$0xff] %vm162, %v3681
    %s3688 = sld [smem:[#allocation11]]
    %s3689 = sld [smem:[#allocation10]]
    %v3690 = vstv %s3689
    %v3691 = vmul.f32 %v3690, %v1985
    %v3692 = vmul.f32 %v3690, %v1989
    %v3693 = vmul.f32 %v3690, %v1993
    %v3694 = vmul.f32 %v3690, %v1997
    %v3695 = vstv %s3688
    %v3696 = vadd.f32 %v3695, %v3691
    %v3697 = vadd.f32 %v3695, %v3692
    %v3698 = vadd.f32 %v3695, %v3693
    %v3699 = vadd.f32 %v3695, %v3694
    %s3700 = sld [smem:[#allocation10 + $0x1]]
    %v3701 = vstv %s3700
    %v3702 = vmul.f32 %v3701, %v1985
    %v3703 = vmul.f32 %v3701, %v1989
    %v3704 = vmul.f32 %v3701, %v1993
    %v3705 = vmul.f32 %v3701, %v1997
    %3710 = vrot.lane.b32.xlu0 %v3702, 64
    %v3711 = vpop.permute.xlu0 %3710
    %3712 = vrot.lane.b32.xlu0 %v3703, 64
    %v3713 = vpop.permute.xlu0 %3712
    %3714 = vrot.lane.b32.xlu0 %v3704, 64
    %v3715 = vpop.permute.xlu0 %3714
    %3716 = vrot.lane.b32.xlu0 %v3705, 64
    %v3717 = vpop.permute.xlu0 %3716
    %v3722 = vadd.f32 %v3696, %v3711
    %v3723 = vadd.f32 %v3697, %v3713
    %v3724 = vadd.f32 %v3698, %v3715
    %v3725 = vadd.f32 %v3699, %v3717
    %s3726 = sld [smem:[#allocation10 + $0x2]]
    %v3727 = vstv %s3726
    %v3728 = vmul.f32 %v3727, %v1986
    %v3729 = vmul.f32 %v3727, %v1990
    %v3730 = vmul.f32 %v3727, %v1994
    %v3731 = vmul.f32 %v3727, %v1998
    %v3732 = vadd.f32 %v3722, %v3728
    %v3733 = vadd.f32 %v3723, %v3729
    %v3734 = vadd.f32 %v3724, %v3730
    %v3735 = vadd.f32 %v3725, %v3731
    %s3736 = sld [smem:[#allocation10 + $0x3]]
    %v3737 = vstv %s3736
    %v3738 = vmul.f32 %v3737, %v1986
    %v3739 = vmul.f32 %v3737, %v1990
    %v3740 = vmul.f32 %v3737, %v1994
    %v3741 = vmul.f32 %v3737, %v1998
    %3746 = vrot.lane.b32.xlu0 %v3738, 64
    %v3747 = vpop.permute.xlu0 %3746
    %3748 = vrot.lane.b32.xlu0 %v3739, 64
    %v3749 = vpop.permute.xlu0 %3748
    %3750 = vrot.lane.b32.xlu0 %v3740, 64
    %v3751 = vpop.permute.xlu0 %3750
    %3752 = vrot.lane.b32.xlu0 %v3741, 64
    %v3753 = vpop.permute.xlu0 %3752
    %v3758 = vadd.f32 %v3732, %v3747
    %v3759 = vadd.f32 %v3733, %v3749
    %v3760 = vadd.f32 %v3734, %v3751
    %v3761 = vadd.f32 %v3735, %v3753
    %s3762 = sld [smem:[#allocation10 + $0x4]]
    %v3763 = vstv %s3762
    %v3764 = vmul.f32 %v3763, %v1987
    %v3765 = vmul.f32 %v3763, %v1991
    %v3766 = vmul.f32 %v3763, %v1995
    %v3767 = vmul.f32 %v3763, %v1999
    %v3768 = vadd.f32 %v3758, %v3764
    %v3769 = vadd.f32 %v3759, %v3765
    %v3770 = vadd.f32 %v3760, %v3766
    %v3771 = vadd.f32 %v3761, %v3767
    %s3772 = sld [smem:[#allocation10 + $0x5]]
    %v3773 = vstv %s3772
    %v3774 = vmul.f32 %v3773, %v1987
    %v3775 = vmul.f32 %v3773, %v1991
    %v3776 = vmul.f32 %v3773, %v1995
    %v3777 = vmul.f32 %v3773, %v1999
    %3782 = vrot.lane.b32.xlu0 %v3774, 64
    %v3783 = vpop.permute.xlu0 %3782
    %3784 = vrot.lane.b32.xlu0 %v3775, 64
    %v3785 = vpop.permute.xlu0 %3784
    %3786 = vrot.lane.b32.xlu0 %v3776, 64
    %v3787 = vpop.permute.xlu0 %3786
    %3788 = vrot.lane.b32.xlu0 %v3777, 64
    %v3789 = vpop.permute.xlu0 %3788
    %v3794 = vadd.f32 %v3768, %v3783
    %v3795 = vadd.f32 %v3769, %v3785
    %v3796 = vadd.f32 %v3770, %v3787
    %v3797 = vadd.f32 %v3771, %v3789
    %s3798 = sld [smem:[#allocation10 + $0x6]]
    %v3799 = vstv %s3798
    %v3800 = vmul.f32 %v3799, %v1988
    %v3801 = vmul.f32 %v3799, %v1992
    %v3802 = vmul.f32 %v3799, %v1996
    %v3803 = vmul.f32 %v3799, %v2000
    %v3804 = vadd.f32 %v3794, %v3800
    %v3805 = vadd.f32 %v3795, %v3801
    %v3806 = vadd.f32 %v3796, %v3802
    %v3807 = vadd.f32 %v3797, %v3803
    %s3808 = sld [smem:[#allocation10 + $0x7]]
    %v3809 = vstv %s3808
    %v3810 = vmul.f32 %v3809, %v1988
    %v3811 = vmul.f32 %v3809, %v1992
    %v3812 = vmul.f32 %v3809, %v1996
    %v3813 = vmul.f32 %v3809, %v2000
    %3818 = vrot.lane.b32.xlu0 %v3810, 64
    %v3819 = vpop.permute.xlu0 %3818
    %3820 = vrot.lane.b32.xlu0 %v3811, 64
    %v3821 = vpop.permute.xlu0 %3820
    %3822 = vrot.lane.b32.xlu0 %v3812, 64
    %v3823 = vpop.permute.xlu0 %3822
    %3824 = vrot.lane.b32.xlu0 %v3813, 64
    %v3825 = vpop.permute.xlu0 %3824
    %v3830 = vadd.f32 %v3804, %v3819
    %v3831 = vadd.f32 %v3805, %v3821
    %v3832 = vadd.f32 %v3806, %v3823
    %v3833 = vadd.f32 %v3807, %v3825
    %s3834 = scalar_lea.vmem %s7, 192
    %3835 = vst.msk [vmem:[%s3834] sm:$0xff] %vm162, %v3830
    %3836 = vst.msk [vmem:[%s3834 + $0x8] sm:$0xff] %vm162, %v3831
    %s3837 = scalar_lea.vmem %s7, 288
    %3838 = vst.msk [vmem:[%s3837] sm:$0xff] %vm162, %v3832
    %3839 = vst.msk [vmem:[%s3837 + $0x8] sm:$0xff] %vm162, %v3833
    %s3840 = sld [smem:[#allocation11 + $0x1]]
    %s3841 = sld [smem:[#allocation10 + $0x80]]
    %v3842 = vstv %s3841
    %v3843 = vmul.f32 %v3842, %v1985
    %v3844 = vmul.f32 %v3842, %v1989
    %v3845 = vmul.f32 %v3842, %v1993
    %v3846 = vmul.f32 %v3842, %v1997
    %v3847 = vstv %s3840
    %v3848 = vadd.f32 %v3847, %v3843
    %v3849 = vadd.f32 %v3847, %v3844
    %v3850 = vadd.f32 %v3847, %v3845
    %v3851 = vadd.f32 %v3847, %v3846
    %s3852 = sld [smem:[#allocation10 + $0x81]]
    %v3853 = vstv %s3852
    %v3854 = vmul.f32 %v3853, %v1985
    %v3855 = vmul.f32 %v3853, %v1989
    %v3856 = vmul.f32 %v3853, %v1993
    %v3857 = vmul.f32 %v3853, %v1997
    %3862 = vrot.lane.b32.xlu0 %v3854, 64
    %v3863 = vpop.permute.xlu0 %3862
    %3864 = vrot.lane.b32.xlu0 %v3855, 64
    %v3865 = vpop.permute.xlu0 %3864
    %3866 = vrot.lane.b32.xlu0 %v3856, 64
    %v3867 = vpop.permute.xlu0 %3866
    %3868 = vrot.lane.b32.xlu0 %v3857, 64
    %v3869 = vpop.permute.xlu0 %3868
    %v3874 = vadd.f32 %v3848, %v3863
    %v3875 = vadd.f32 %v3849, %v3865
    %v3876 = vadd.f32 %v3850, %v3867
    %v3877 = vadd.f32 %v3851, %v3869
    %s3878 = sld [smem:[#allocation10 + $0x82]]
    %v3879 = vstv %s3878
    %v3880 = vmul.f32 %v3879, %v1986
    %v3881 = vmul.f32 %v3879, %v1990
    %v3882 = vmul.f32 %v3879, %v1994
    %v3883 = vmul.f32 %v3879, %v1998
    %v3884 = vadd.f32 %v3874, %v3880
    %v3885 = vadd.f32 %v3875, %v3881
    %v3886 = vadd.f32 %v3876, %v3882
    %v3887 = vadd.f32 %v3877, %v3883
    %s3888 = sld [smem:[#allocation10 + $0x83]]
    %v3889 = vstv %s3888
    %v3890 = vmul.f32 %v3889, %v1986
    %v3891 = vmul.f32 %v3889, %v1990
    %v3892 = vmul.f32 %v3889, %v1994
    %v3893 = vmul.f32 %v3889, %v1998
    %3898 = vrot.lane.b32.xlu0 %v3890, 64
    %v3899 = vpop.permute.xlu0 %3898
    %3900 = vrot.lane.b32.xlu0 %v3891, 64
    %v3901 = vpop.permute.xlu0 %3900
    %3902 = vrot.lane.b32.xlu0 %v3892, 64
    %v3903 = vpop.permute.xlu0 %3902
    %3904 = vrot.lane.b32.xlu0 %v3893, 64
    %v3905 = vpop.permute.xlu0 %3904
    %v3910 = vadd.f32 %v3884, %v3899
    %v3911 = vadd.f32 %v3885, %v3901
    %v3912 = vadd.f32 %v3886, %v3903
    %v3913 = vadd.f32 %v3887, %v3905
    %s3914 = sld [smem:[#allocation10 + $0x84]]
    %v3915 = vstv %s3914
    %v3916 = vmul.f32 %v3915, %v1987
    %v3917 = vmul.f32 %v3915, %v1991
    %v3918 = vmul.f32 %v3915, %v1995
    %v3919 = vmul.f32 %v3915, %v1999
    %v3920 = vadd.f32 %v3910, %v3916
    %v3921 = vadd.f32 %v3911, %v3917
    %v3922 = vadd.f32 %v3912, %v3918
    %v3923 = vadd.f32 %v3913, %v3919
    %s3924 = sld [smem:[#allocation10 + $0x85]]
    %v3925 = vstv %s3924
    %v3926 = vmul.f32 %v3925, %v1987
    %v3927 = vmul.f32 %v3925, %v1991
    %v3928 = vmul.f32 %v3925, %v1995
    %v3929 = vmul.f32 %v3925, %v1999
    %3934 = vrot.lane.b32.xlu0 %v3926, 64
    %v3935 = vpop.permute.xlu0 %3934
    %3936 = vrot.lane.b32.xlu0 %v3927, 64
    %v3937 = vpop.permute.xlu0 %3936
    %3938 = vrot.lane.b32.xlu0 %v3928, 64
    %v3939 = vpop.permute.xlu0 %3938
    %3940 = vrot.lane.b32.xlu0 %v3929, 64
    %v3941 = vpop.permute.xlu0 %3940
    %v3946 = vadd.f32 %v3920, %v3935
    %v3947 = vadd.f32 %v3921, %v3937
    %v3948 = vadd.f32 %v3922, %v3939
    %v3949 = vadd.f32 %v3923, %v3941
    %s3950 = sld [smem:[#allocation10 + $0x86]]
    %v3951 = vstv %s3950
    %v3952 = vmul.f32 %v3951, %v1988
    %v3953 = vmul.f32 %v3951, %v1992
    %v3954 = vmul.f32 %v3951, %v1996
    %v3955 = vmul.f32 %v3951, %v2000
    %v3956 = vadd.f32 %v3946, %v3952
    %v3957 = vadd.f32 %v3947, %v3953
    %v3958 = vadd.f32 %v3948, %v3954
    %v3959 = vadd.f32 %v3949, %v3955
    %s3960 = sld [smem:[#allocation10 + $0x87]]
    %v3961 = vstv %s3960
    %v3962 = vmul.f32 %v3961, %v1988
    %v3963 = vmul.f32 %v3961, %v1992
    %v3964 = vmul.f32 %v3961, %v1996
    %v3965 = vmul.f32 %v3961, %v2000
    %3970 = vrot.lane.b32.xlu0 %v3962, 64
    %v3971 = vpop.permute.xlu0 %3970
    %3972 = vrot.lane.b32.xlu0 %v3963, 64
    %v3973 = vpop.permute.xlu0 %3972
    %3974 = vrot.lane.b32.xlu0 %v3964, 64
    %v3975 = vpop.permute.xlu0 %3974
    %3976 = vrot.lane.b32.xlu0 %v3965, 64
    %v3977 = vpop.permute.xlu0 %3976
    %v3982 = vadd.f32 %v3956, %v3971
    %v3983 = vadd.f32 %v3957, %v3973
    %v3984 = vadd.f32 %v3958, %v3975
    %v3985 = vadd.f32 %v3959, %v3977
    %s3986 = scalar_lea.vmem %s7, 208
    %3987 = vst.msk [vmem:[%s3986] sm:$0xff] %vm162, %v3982
    %3988 = vst.msk [vmem:[%s3986 + $0x8] sm:$0xff] %vm162, %v3983
    %s3989 = scalar_lea.vmem %s7, 304
    %3990 = vst.msk [vmem:[%s3989] sm:$0xff] %vm162, %v3984
    %3991 = vst.msk [vmem:[%s3989 + $0x8] sm:$0xff] %vm162, %v3985
    %s3992 = sld [smem:[#allocation11 + $0x2]]
    %s3993 = sld [smem:[#allocation10 + $0x100]]
    %v3994 = vstv %s3993
    %v3995 = vmul.f32 %v3994, %v1985
    %v3996 = vmul.f32 %v3994, %v1989
    %v3997 = vmul.f32 %v3994, %v1993
    %v3998 = vmul.f32 %v3994, %v1997
    %v3999 = vstv %s3992
    %v4000 = vadd.f32 %v3999, %v3995
    %v4001 = vadd.f32 %v3999, %v3996
    %v4002 = vadd.f32 %v3999, %v3997
    %v4003 = vadd.f32 %v3999, %v3998
    %s4004 = sld [smem:[#allocation10 + $0x101]]
    %v4005 = vstv %s4004
    %v4006 = vmul.f32 %v4005, %v1985
    %v4007 = vmul.f32 %v4005, %v1989
    %v4008 = vmul.f32 %v4005, %v1993
    %v4009 = vmul.f32 %v4005, %v1997
    %4014 = vrot.lane.b32.xlu0 %v4006, 64
    %v4015 = vpop.permute.xlu0 %4014
    %4016 = vrot.lane.b32.xlu0 %v4007, 64
    %v4017 = vpop.permute.xlu0 %4016
    %4018 = vrot.lane.b32.xlu0 %v4008, 64
    %v4019 = vpop.permute.xlu0 %4018
    %4020 = vrot.lane.b32.xlu0 %v4009, 64
    %v4021 = vpop.permute.xlu0 %4020
    %v4026 = vadd.f32 %v4000, %v4015
    %v4027 = vadd.f32 %v4001, %v4017
    %v4028 = vadd.f32 %v4002, %v4019
    %v4029 = vadd.f32 %v4003, %v4021
    %s4030 = sld [smem:[#allocation10 + $0x102]]
    %v4031 = vstv %s4030
    %v4032 = vmul.f32 %v4031, %v1986
    %v4033 = vmul.f32 %v4031, %v1990
    %v4034 = vmul.f32 %v4031, %v1994
    %v4035 = vmul.f32 %v4031, %v1998
    %v4036 = vadd.f32 %v4026, %v4032
    %v4037 = vadd.f32 %v4027, %v4033
    %v4038 = vadd.f32 %v4028, %v4034
    %v4039 = vadd.f32 %v4029, %v4035
    %s4040 = sld [smem:[#allocation10 + $0x103]]
    %v4041 = vstv %s4040
    %v4042 = vmul.f32 %v4041, %v1986
    %v4043 = vmul.f32 %v4041, %v1990
    %v4044 = vmul.f32 %v4041, %v1994
    %v4045 = vmul.f32 %v4041, %v1998
    %4050 = vrot.lane.b32.xlu0 %v4042, 64
    %v4051 = vpop.permute.xlu0 %4050
    %4052 = vrot.lane.b32.xlu0 %v4043, 64
    %v4053 = vpop.permute.xlu0 %4052
    %4054 = vrot.lane.b32.xlu0 %v4044, 64
    %v4055 = vpop.permute.xlu0 %4054
    %4056 = vrot.lane.b32.xlu0 %v4045, 64
    %v4057 = vpop.permute.xlu0 %4056
    %v4062 = vadd.f32 %v4036, %v4051
    %v4063 = vadd.f32 %v4037, %v4053
    %v4064 = vadd.f32 %v4038, %v4055
    %v4065 = vadd.f32 %v4039, %v4057
    %s4066 = sld [smem:[#allocation10 + $0x104]]
    %v4067 = vstv %s4066
    %v4068 = vmul.f32 %v4067, %v1987
    %v4069 = vmul.f32 %v4067, %v1991
    %v4070 = vmul.f32 %v4067, %v1995
    %v4071 = vmul.f32 %v4067, %v1999
    %v4072 = vadd.f32 %v4062, %v4068
    %v4073 = vadd.f32 %v4063, %v4069
    %v4074 = vadd.f32 %v4064, %v4070
    %v4075 = vadd.f32 %v4065, %v4071
    %s4076 = sld [smem:[#allocation10 + $0x105]]
    %v4077 = vstv %s4076
    %v4078 = vmul.f32 %v4077, %v1987
    %v4079 = vmul.f32 %v4077, %v1991
    %v4080 = vmul.f32 %v4077, %v1995
    %v4081 = vmul.f32 %v4077, %v1999
    %4086 = vrot.lane.b32.xlu0 %v4078, 64
    %v4087 = vpop.permute.xlu0 %4086
    %4088 = vrot.lane.b32.xlu0 %v4079, 64
    %v4089 = vpop.permute.xlu0 %4088
    %4090 = vrot.lane.b32.xlu0 %v4080, 64
    %v4091 = vpop.permute.xlu0 %4090
    %4092 = vrot.lane.b32.xlu0 %v4081, 64
    %v4093 = vpop.permute.xlu0 %4092
    %v4098 = vadd.f32 %v4072, %v4087
    %v4099 = vadd.f32 %v4073, %v4089
    %v4100 = vadd.f32 %v4074, %v4091
    %v4101 = vadd.f32 %v4075, %v4093
    %s4102 = sld [smem:[#allocation10 + $0x106]]
    %v4103 = vstv %s4102
    %v4104 = vmul.f32 %v4103, %v1988
    %v4105 = vmul.f32 %v4103, %v1992
    %v4106 = vmul.f32 %v4103, %v1996
    %v4107 = vmul.f32 %v4103, %v2000
    %v4108 = vadd.f32 %v4098, %v4104
    %v4109 = vadd.f32 %v4099, %v4105
    %v4110 = vadd.f32 %v4100, %v4106
    %v4111 = vadd.f32 %v4101, %v4107
    %s4112 = sld [smem:[#allocation10 + $0x107]]
    %v4113 = vstv %s4112
    %v4114 = vmul.f32 %v4113, %v1988
    %v4115 = vmul.f32 %v4113, %v1992
    %v4116 = vmul.f32 %v4113, %v1996
    %v4117 = vmul.f32 %v4113, %v2000
    %4122 = vrot.lane.b32.xlu0 %v4114, 64
    %v4123 = vpop.permute.xlu0 %4122
    %4124 = vrot.lane.b32.xlu0 %v4115, 64
    %v4125 = vpop.permute.xlu0 %4124
    %4126 = vrot.lane.b32.xlu0 %v4116, 64
    %v4127 = vpop.permute.xlu0 %4126
    %4128 = vrot.lane.b32.xlu0 %v4117, 64
    %v4129 = vpop.permute.xlu0 %4128
    %v4134 = vadd.f32 %v4108, %v4123
    %v4135 = vadd.f32 %v4109, %v4125
    %v4136 = vadd.f32 %v4110, %v4127
    %v4137 = vadd.f32 %v4111, %v4129
    %s4138 = scalar_lea.vmem %s7, 224
    %4139 = vst.msk [vmem:[%s4138] sm:$0xff] %vm162, %v4134
    %4140 = vst.msk [vmem:[%s4138 + $0x8] sm:$0xff] %vm162, %v4135
    %s4141 = scalar_lea.vmem %s7, 320
    %4142 = vst.msk [vmem:[%s4141] sm:$0xff] %vm162, %v4136
    %4143 = vst.msk [vmem:[%s4141 + $0x8] sm:$0xff] %vm162, %v4137
    %s4144 = sld [smem:[#allocation11 + $0x3]]
    %s4145 = sld [smem:[#allocation10 + $0x180]]
    %v4146 = vstv %s4145
    %v4147 = vmul.f32 %v4146, %v1985
    %v4148 = vmul.f32 %v4146, %v1989
    %v4149 = vmul.f32 %v4146, %v1993
    %v4150 = vmul.f32 %v4146, %v1997
    %v4151 = vstv %s4144
    %v4152 = vadd.f32 %v4151, %v4147
    %v4153 = vadd.f32 %v4151, %v4148
    %v4154 = vadd.f32 %v4151, %v4149
    %v4155 = vadd.f32 %v4151, %v4150
    %s4156 = sld [smem:[#allocation10 + $0x181]]
    %v4157 = vstv %s4156
    %v4158 = vmul.f32 %v4157, %v1985
    %v4159 = vmul.f32 %v4157, %v1989
    %v4160 = vmul.f32 %v4157, %v1993
    %v4161 = vmul.f32 %v4157, %v1997
    %4166 = vrot.lane.b32.xlu0 %v4158, 64
    %v4167 = vpop.permute.xlu0 %4166
    %4168 = vrot.lane.b32.xlu0 %v4159, 64
    %v4169 = vpop.permute.xlu0 %4168
    %4170 = vrot.lane.b32.xlu0 %v4160, 64
    %v4171 = vpop.permute.xlu0 %4170
    %4172 = vrot.lane.b32.xlu0 %v4161, 64
    %v4173 = vpop.permute.xlu0 %4172
    %v4178 = vadd.f32 %v4152, %v4167
    %v4179 = vadd.f32 %v4153, %v4169
    %v4180 = vadd.f32 %v4154, %v4171
    %v4181 = vadd.f32 %v4155, %v4173
    %s4182 = sld [smem:[#allocation10 + $0x182]]
    %v4183 = vstv %s4182
    %v4184 = vmul.f32 %v4183, %v1986
    %v4185 = vmul.f32 %v4183, %v1990
    %v4186 = vmul.f32 %v4183, %v1994
    %v4187 = vmul.f32 %v4183, %v1998
    %v4188 = vadd.f32 %v4178, %v4184
    %v4189 = vadd.f32 %v4179, %v4185
    %v4190 = vadd.f32 %v4180, %v4186
    %v4191 = vadd.f32 %v4181, %v4187
    %s4192 = sld [smem:[#allocation10 + $0x183]]
    %v4193 = vstv %s4192
    %v4194 = vmul.f32 %v4193, %v1986
    %v4195 = vmul.f32 %v4193, %v1990
    %v4196 = vmul.f32 %v4193, %v1994
    %v4197 = vmul.f32 %v4193, %v1998
    %4202 = vrot.lane.b32.xlu0 %v4194, 64
    %v4203 = vpop.permute.xlu0 %4202
    %4204 = vrot.lane.b32.xlu0 %v4195, 64
    %v4205 = vpop.permute.xlu0 %4204
    %4206 = vrot.lane.b32.xlu0 %v4196, 64
    %v4207 = vpop.permute.xlu0 %4206
    %4208 = vrot.lane.b32.xlu0 %v4197, 64
    %v4209 = vpop.permute.xlu0 %4208
    %v4214 = vadd.f32 %v4188, %v4203
    %v4215 = vadd.f32 %v4189, %v4205
    %v4216 = vadd.f32 %v4190, %v4207
    %v4217 = vadd.f32 %v4191, %v4209
    %s4218 = sld [smem:[#allocation10 + $0x184]]
    %v4219 = vstv %s4218
    %v4220 = vmul.f32 %v4219, %v1987
    %v4221 = vmul.f32 %v4219, %v1991
    %v4222 = vmul.f32 %v4219, %v1995
    %v4223 = vmul.f32 %v4219, %v1999
    %v4224 = vadd.f32 %v4214, %v4220
    %v4225 = vadd.f32 %v4215, %v4221
    %v4226 = vadd.f32 %v4216, %v4222
    %v4227 = vadd.f32 %v4217, %v4223
    %s4228 = sld [smem:[#allocation10 + $0x185]]
    %v4229 = vstv %s4228
    %v4230 = vmul.f32 %v4229, %v1987
    %v4231 = vmul.f32 %v4229, %v1991
    %v4232 = vmul.f32 %v4229, %v1995
    %v4233 = vmul.f32 %v4229, %v1999
    %4238 = vrot.lane.b32.xlu0 %v4230, 64
    %v4239 = vpop.permute.xlu0 %4238
    %4240 = vrot.lane.b32.xlu0 %v4231, 64
    %v4241 = vpop.permute.xlu0 %4240
    %4242 = vrot.lane.b32.xlu0 %v4232, 64
    %v4243 = vpop.permute.xlu0 %4242
    %4244 = vrot.lane.b32.xlu0 %v4233, 64
    %v4245 = vpop.permute.xlu0 %4244
    %v4250 = vadd.f32 %v4224, %v4239
    %v4251 = vadd.f32 %v4225, %v4241
    %v4252 = vadd.f32 %v4226, %v4243
    %v4253 = vadd.f32 %v4227, %v4245
    %s4254 = sld [smem:[#allocation10 + $0x186]]
    %v4255 = vstv %s4254
    %v4256 = vmul.f32 %v4255, %v1988
    %v4257 = vmul.f32 %v4255, %v1992
    %v4258 = vmul.f32 %v4255, %v1996
    %v4259 = vmul.f32 %v4255, %v2000
    %v4260 = vadd.f32 %v4250, %v4256
    %v4261 = vadd.f32 %v4251, %v4257
    %v4262 = vadd.f32 %v4252, %v4258
    %v4263 = vadd.f32 %v4253, %v4259
    %s4264 = sld [smem:[#allocation10 + $0x187]]
    %v4265 = vstv %s4264
    %v4266 = vmul.f32 %v4265, %v1988
    %v4267 = vmul.f32 %v4265, %v1992
    %v4268 = vmul.f32 %v4265, %v1996
    %v4269 = vmul.f32 %v4265, %v2000
    %4274 = vrot.lane.b32.xlu0 %v4266, 64
    %v4275 = vpop.permute.xlu0 %4274
    %4276 = vrot.lane.b32.xlu0 %v4267, 64
    %v4277 = vpop.permute.xlu0 %4276
    %4278 = vrot.lane.b32.xlu0 %v4268, 64
    %v4279 = vpop.permute.xlu0 %4278
    %4280 = vrot.lane.b32.xlu0 %v4269, 64
    %v4281 = vpop.permute.xlu0 %4280
    %v4286 = vadd.f32 %v4260, %v4275
    %v4287 = vadd.f32 %v4261, %v4277
    %v4288 = vadd.f32 %v4262, %v4279
    %v4289 = vadd.f32 %v4263, %v4281
    %s4290 = scalar_lea.vmem %s7, 240
    %4291 = vst.msk [vmem:[%s4290] sm:$0xff] %vm162, %v4286
    %4292 = vst.msk [vmem:[%s4290 + $0x8] sm:$0xff] %vm162, %v4287
    %s4293 = scalar_lea.vmem %s7, 336
    %4294 = vst.msk [vmem:[%s4293] sm:$0xff] %vm162, %v4288
    %4295 = vst.msk [vmem:[%s4293 + $0x8] sm:$0xff] %vm162, %v4289
    %s4296 = sld [smem:[#allocation11 + $0x4]]
    %s4297 = sld [smem:[#allocation10 + $0x200]]
    %v4298 = vstv %s4297
    %v4299 = vmul.f32 %v4298, %v1985
    %v4300 = vmul.f32 %v4298, %v1989
    %v4301 = vmul.f32 %v4298, %v1993
    %v4302 = vmul.f32 %v4298, %v1997
    %v4303 = vstv %s4296
    %v4304 = vadd.f32 %v4303, %v4299
    %v4305 = vadd.f32 %v4303, %v4300
    %v4306 = vadd.f32 %v4303, %v4301
    %v4307 = vadd.f32 %v4303, %v4302
    %s4308 = sld [smem:[#allocation10 + $0x201]]
    %v4309 = vstv %s4308
    %v4310 = vmul.f32 %v4309, %v1985
    %v4311 = vmul.f32 %v4309, %v1989
    %v4312 = vmul.f32 %v4309, %v1993
    %v4313 = vmul.f32 %v4309, %v1997
    %4318 = vrot.lane.b32.xlu0 %v4310, 64
    %v4319 = vpop.permute.xlu0 %4318
    %4320 = vrot.lane.b32.xlu0 %v4311, 64
    %v4321 = vpop.permute.xlu0 %4320
    %4322 = vrot.lane.b32.xlu0 %v4312, 64
    %v4323 = vpop.permute.xlu0 %4322
    %4324 = vrot.lane.b32.xlu0 %v4313, 64
    %v4325 = vpop.permute.xlu0 %4324
    %v4330 = vadd.f32 %v4304, %v4319
    %v4331 = vadd.f32 %v4305, %v4321
    %v4332 = vadd.f32 %v4306, %v4323
    %v4333 = vadd.f32 %v4307, %v4325
    %s4334 = sld [smem:[#allocation10 + $0x202]]
    %v4335 = vstv %s4334
    %v4336 = vmul.f32 %v4335, %v1986
    %v4337 = vmul.f32 %v4335, %v1990
    %v4338 = vmul.f32 %v4335, %v1994
    %v4339 = vmul.f32 %v4335, %v1998
    %v4340 = vadd.f32 %v4330, %v4336
    %v4341 = vadd.f32 %v4331, %v4337
    %v4342 = vadd.f32 %v4332, %v4338
    %v4343 = vadd.f32 %v4333, %v4339
    %s4344 = sld [smem:[#allocation10 + $0x203]]
    %v4345 = vstv %s4344
    %v4346 = vmul.f32 %v4345, %v1986
    %v4347 = vmul.f32 %v4345, %v1990
    %v4348 = vmul.f32 %v4345, %v1994
    %v4349 = vmul.f32 %v4345, %v1998
    %4354 = vrot.lane.b32.xlu0 %v4346, 64
    %v4355 = vpop.permute.xlu0 %4354
    %4356 = vrot.lane.b32.xlu0 %v4347, 64
    %v4357 = vpop.permute.xlu0 %4356
    %4358 = vrot.lane.b32.xlu0 %v4348, 64
    %v4359 = vpop.permute.xlu0 %4358
    %4360 = vrot.lane.b32.xlu0 %v4349, 64
    %v4361 = vpop.permute.xlu0 %4360
    %v4366 = vadd.f32 %v4340, %v4355
    %v4367 = vadd.f32 %v4341, %v4357
    %v4368 = vadd.f32 %v4342, %v4359
    %v4369 = vadd.f32 %v4343, %v4361
    %s4370 = sld [smem:[#allocation10 + $0x204]]
    %v4371 = vstv %s4370
    %v4372 = vmul.f32 %v4371, %v1987
    %v4373 = vmul.f32 %v4371, %v1991
    %v4374 = vmul.f32 %v4371, %v1995
    %v4375 = vmul.f32 %v4371, %v1999
    %v4376 = vadd.f32 %v4366, %v4372
    %v4377 = vadd.f32 %v4367, %v4373
    %v4378 = vadd.f32 %v4368, %v4374
    %v4379 = vadd.f32 %v4369, %v4375
    %s4380 = sld [smem:[#allocation10 + $0x205]]
    %v4381 = vstv %s4380
    %v4382 = vmul.f32 %v4381, %v1987
    %v4383 = vmul.f32 %v4381, %v1991
    %v4384 = vmul.f32 %v4381, %v1995
    %v4385 = vmul.f32 %v4381, %v1999
    %4390 = vrot.lane.b32.xlu0 %v4382, 64
    %v4391 = vpop.permute.xlu0 %4390
    %4392 = vrot.lane.b32.xlu0 %v4383, 64
    %v4393 = vpop.permute.xlu0 %4392
    %4394 = vrot.lane.b32.xlu0 %v4384, 64
    %v4395 = vpop.permute.xlu0 %4394
    %4396 = vrot.lane.b32.xlu0 %v4385, 64
    %v4397 = vpop.permute.xlu0 %4396
    %v4402 = vadd.f32 %v4376, %v4391
    %v4403 = vadd.f32 %v4377, %v4393
    %v4404 = vadd.f32 %v4378, %v4395
    %v4405 = vadd.f32 %v4379, %v4397
    %s4406 = sld [smem:[#allocation10 + $0x206]]
    %v4407 = vstv %s4406
    %v4408 = vmul.f32 %v4407, %v1988
    %v4409 = vmul.f32 %v4407, %v1992
    %v4410 = vmul.f32 %v4407, %v1996
    %v4411 = vmul.f32 %v4407, %v2000
    %v4412 = vadd.f32 %v4402, %v4408
    %v4413 = vadd.f32 %v4403, %v4409
    %v4414 = vadd.f32 %v4404, %v4410
    %v4415 = vadd.f32 %v4405, %v4411
    %s4416 = sld [smem:[#allocation10 + $0x207]]
    %v4417 = vstv %s4416
    %v4418 = vmul.f32 %v4417, %v1988
    %v4419 = vmul.f32 %v4417, %v1992
    %v4420 = vmul.f32 %v4417, %v1996
    %v4421 = vmul.f32 %v4417, %v2000
    %4426 = vrot.lane.b32.xlu0 %v4418, 64
    %v4427 = vpop.permute.xlu0 %4426
    %4428 = vrot.lane.b32.xlu0 %v4419, 64
    %v4429 = vpop.permute.xlu0 %4428
    %4430 = vrot.lane.b32.xlu0 %v4420, 64
    %v4431 = vpop.permute.xlu0 %4430
    %4432 = vrot.lane.b32.xlu0 %v4421, 64
    %v4433 = vpop.permute.xlu0 %4432
    %v4438 = vadd.f32 %v4412, %v4427
    %v4439 = vadd.f32 %v4413, %v4429
    %v4440 = vadd.f32 %v4414, %v4431
    %v4441 = vadd.f32 %v4415, %v4433
    %s4442 = scalar_lea.vmem %s7, 256
    %4443 = vst.msk [vmem:[%s4442] sm:$0xff] %vm162, %v4438
    %4444 = vst.msk [vmem:[%s4442 + $0x8] sm:$0xff] %vm162, %v4439
    %s4445 = scalar_lea.vmem %s7, 352
    %4446 = vst.msk [vmem:[%s4445] sm:$0xff] %vm162, %v4440
    %4447 = vst.msk [vmem:[%s4445 + $0x8] sm:$0xff] %vm162, %v4441
    %s4448 = sld [smem:[#allocation11 + $0x5]]
    %s4449 = sld [smem:[#allocation10 + $0x280]]
    %v4450 = vstv %s4449
    %v4451 = vmul.f32 %v4450, %v1985
    %v4452 = vmul.f32 %v4450, %v1989
    %v4453 = vmul.f32 %v4450, %v1993
    %v4454 = vmul.f32 %v4450, %v1997
    %v4455 = vstv %s4448
    %v4456 = vadd.f32 %v4455, %v4451
    %v4457 = vadd.f32 %v4455, %v4452
    %v4458 = vadd.f32 %v4455, %v4453
    %v4459 = vadd.f32 %v4455, %v4454
    %s4460 = sld [smem:[#allocation10 + $0x281]]
    %v4461 = vstv %s4460
    %v4462 = vmul.f32 %v4461, %v1985
    %v4463 = vmul.f32 %v4461, %v1989
    %v4464 = vmul.f32 %v4461, %v1993
    %v4465 = vmul.f32 %v4461, %v1997
    %4470 = vrot.lane.b32.xlu0 %v4462, 64
    %v4471 = vpop.permute.xlu0 %4470
    %4472 = vrot.lane.b32.xlu0 %v4463, 64
    %v4473 = vpop.permute.xlu0 %4472
    %4474 = vrot.lane.b32.xlu0 %v4464, 64
    %v4475 = vpop.permute.xlu0 %4474
    %4476 = vrot.lane.b32.xlu0 %v4465, 64
    %v4477 = vpop.permute.xlu0 %4476
    %v4482 = vadd.f32 %v4456, %v4471
    %v4483 = vadd.f32 %v4457, %v4473
    %v4484 = vadd.f32 %v4458, %v4475
    %v4485 = vadd.f32 %v4459, %v4477
    %s4486 = sld [smem:[#allocation10 + $0x282]]
    %v4487 = vstv %s4486
    %v4488 = vmul.f32 %v4487, %v1986
    %v4489 = vmul.f32 %v4487, %v1990
    %v4490 = vmul.f32 %v4487, %v1994
    %v4491 = vmul.f32 %v4487, %v1998
    %v4492 = vadd.f32 %v4482, %v4488
    %v4493 = vadd.f32 %v4483, %v4489
    %v4494 = vadd.f32 %v4484, %v4490
    %v4495 = vadd.f32 %v4485, %v4491
    %s4496 = sld [smem:[#allocation10 + $0x283]]
    %v4497 = vstv %s4496
    %v4498 = vmul.f32 %v4497, %v1986
    %v4499 = vmul.f32 %v4497, %v1990
    %v4500 = vmul.f32 %v4497, %v1994
    %v4501 = vmul.f32 %v4497, %v1998
    %4506 = vrot.lane.b32.xlu0 %v4498, 64
    %v4507 = vpop.permute.xlu0 %4506
    %4508 = vrot.lane.b32.xlu0 %v4499, 64
    %v4509 = vpop.permute.xlu0 %4508
    %4510 = vrot.lane.b32.xlu0 %v4500, 64
    %v4511 = vpop.permute.xlu0 %4510
    %4512 = vrot.lane.b32.xlu0 %v4501, 64
    %v4513 = vpop.permute.xlu0 %4512
    %v4518 = vadd.f32 %v4492, %v4507
    %v4519 = vadd.f32 %v4493, %v4509
    %v4520 = vadd.f32 %v4494, %v4511
    %v4521 = vadd.f32 %v4495, %v4513
    %s4522 = sld [smem:[#allocation10 + $0x284]]
    %v4523 = vstv %s4522
    %v4524 = vmul.f32 %v4523, %v1987
    %v4525 = vmul.f32 %v4523, %v1991
    %v4526 = vmul.f32 %v4523, %v1995
    %v4527 = vmul.f32 %v4523, %v1999
    %v4528 = vadd.f32 %v4518, %v4524
    %v4529 = vadd.f32 %v4519, %v4525
    %v4530 = vadd.f32 %v4520, %v4526
    %v4531 = vadd.f32 %v4521, %v4527
    %s4532 = sld [smem:[#allocation10 + $0x285]]
    %v4533 = vstv %s4532
    %v4534 = vmul.f32 %v4533, %v1987
    %v4535 = vmul.f32 %v4533, %v1991
    %v4536 = vmul.f32 %v4533, %v1995
    %v4537 = vmul.f32 %v4533, %v1999
    %4542 = vrot.lane.b32.xlu0 %v4534, 64
    %v4543 = vpop.permute.xlu0 %4542
    %4544 = vrot.lane.b32.xlu0 %v4535, 64
    %v4545 = vpop.permute.xlu0 %4544
    %4546 = vrot.lane.b32.xlu0 %v4536, 64
    %v4547 = vpop.permute.xlu0 %4546
    %4548 = vrot.lane.b32.xlu0 %v4537, 64
    %v4549 = vpop.permute.xlu0 %4548
    %v4554 = vadd.f32 %v4528, %v4543
    %v4555 = vadd.f32 %v4529, %v4545
    %v4556 = vadd.f32 %v4530, %v4547
    %v4557 = vadd.f32 %v4531, %v4549
    %s4558 = sld [smem:[#allocation10 + $0x286]]
    %v4559 = vstv %s4558
    %v4560 = vmul.f32 %v4559, %v1988
    %v4561 = vmul.f32 %v4559, %v1992
    %v4562 = vmul.f32 %v4559, %v1996
    %v4563 = vmul.f32 %v4559, %v2000
    %v4564 = vadd.f32 %v4554, %v4560
    %v4565 = vadd.f32 %v4555, %v4561
    %v4566 = vadd.f32 %v4556, %v4562
    %v4567 = vadd.f32 %v4557, %v4563
    %s4568 = sld [smem:[#allocation10 + $0x287]]
    %v4569 = vstv %s4568
    %v4570 = vmul.f32 %v4569, %v1988
    %v4571 = vmul.f32 %v4569, %v1992
    %v4572 = vmul.f32 %v4569, %v1996
    %v4573 = vmul.f32 %v4569, %v2000
    %4578 = vrot.lane.b32.xlu0 %v4570, 64
    %v4579 = vpop.permute.xlu0 %4578
    %4580 = vrot.lane.b32.xlu0 %v4571, 64
    %v4581 = vpop.permute.xlu0 %4580
    %4582 = vrot.lane.b32.xlu0 %v4572, 64
    %v4583 = vpop.permute.xlu0 %4582
    %4584 = vrot.lane.b32.xlu0 %v4573, 64
    %v4585 = vpop.permute.xlu0 %4584
    %v4590 = vadd.f32 %v4564, %v4579
    %v4591 = vadd.f32 %v4565, %v4581
    %v4592 = vadd.f32 %v4566, %v4583
    %v4593 = vadd.f32 %v4567, %v4585
    %s4594 = scalar_lea.vmem %s7, 272
    %4595 = vst.msk [vmem:[%s4594] sm:$0xff] %vm162, %v4590
    %4596 = vst.msk [vmem:[%s4594 + $0x8] sm:$0xff] %vm162, %v4591
    %s4597 = scalar_lea.vmem %s7, 368
    %4598 = vst.msk [vmem:[%s4597] sm:$0xff] %vm162, %v4592
    %4599 = vst.msk [vmem:[%s4597 + $0x8] sm:$0xff] %vm162, %v4593
    %s4600 = sld [smem:[#allocation11]]
    %s4601 = sld [smem:[#allocation10]]
    %v4602 = vstv %s4601
    %v4603 = vmul.f32 %v4602, %v2373
    %v4604 = vmul.f32 %v4602, %v2377
    %v4605 = vmul.f32 %v4602, %v2381
    %v4606 = vmul.f32 %v4602, %v2385
    %v4607 = vstv %s4600
    %v4608 = vadd.f32 %v4607, %v4603
    %v4609 = vadd.f32 %v4607, %v4604
    %v4610 = vadd.f32 %v4607, %v4605
    %v4611 = vadd.f32 %v4607, %v4606
    %s4612 = sld [smem:[#allocation10 + $0x1]]
    %v4613 = vstv %s4612
    %v4614 = vmul.f32 %v4613, %v2373
    %v4615 = vmul.f32 %v4613, %v2377
    %v4616 = vmul.f32 %v4613, %v2381
    %v4617 = vmul.f32 %v4613, %v2385
    %4622 = vrot.lane.b32.xlu0 %v4614, 64
    %v4623 = vpop.permute.xlu0 %4622
    %4624 = vrot.lane.b32.xlu0 %v4615, 64
    %v4625 = vpop.permute.xlu0 %4624
    %4626 = vrot.lane.b32.xlu0 %v4616, 64
    %v4627 = vpop.permute.xlu0 %4626
    %4628 = vrot.lane.b32.xlu0 %v4617, 64
    %v4629 = vpop.permute.xlu0 %4628
    %v4634 = vadd.f32 %v4608, %v4623
    %v4635 = vadd.f32 %v4609, %v4625
    %v4636 = vadd.f32 %v4610, %v4627
    %v4637 = vadd.f32 %v4611, %v4629
    %s4638 = sld [smem:[#allocation10 + $0x2]]
    %v4639 = vstv %s4638
    %v4640 = vmul.f32 %v4639, %v2374
    %v4641 = vmul.f32 %v4639, %v2378
    %v4642 = vmul.f32 %v4639, %v2382
    %v4643 = vmul.f32 %v4639, %v2386
    %v4644 = vadd.f32 %v4634, %v4640
    %v4645 = vadd.f32 %v4635, %v4641
    %v4646 = vadd.f32 %v4636, %v4642
    %v4647 = vadd.f32 %v4637, %v4643
    %s4648 = sld [smem:[#allocation10 + $0x3]]
    %v4649 = vstv %s4648
    %v4650 = vmul.f32 %v4649, %v2374
    %v4651 = vmul.f32 %v4649, %v2378
    %v4652 = vmul.f32 %v4649, %v2382
    %v4653 = vmul.f32 %v4649, %v2386
    %4658 = vrot.lane.b32.xlu0 %v4650, 64
    %v4659 = vpop.permute.xlu0 %4658
    %4660 = vrot.lane.b32.xlu0 %v4651, 64
    %v4661 = vpop.permute.xlu0 %4660
    %4662 = vrot.lane.b32.xlu0 %v4652, 64
    %v4663 = vpop.permute.xlu0 %4662
    %4664 = vrot.lane.b32.xlu0 %v4653, 64
    %v4665 = vpop.permute.xlu0 %4664
    %v4670 = vadd.f32 %v4644, %v4659
    %v4671 = vadd.f32 %v4645, %v4661
    %v4672 = vadd.f32 %v4646, %v4663
    %v4673 = vadd.f32 %v4647, %v4665
    %s4674 = sld [smem:[#allocation10 + $0x4]]
    %v4675 = vstv %s4674
    %v4676 = vmul.f32 %v4675, %v2375
    %v4677 = vmul.f32 %v4675, %v2379
    %v4678 = vmul.f32 %v4675, %v2383
    %v4679 = vmul.f32 %v4675, %v2387
    %v4680 = vadd.f32 %v4670, %v4676
    %v4681 = vadd.f32 %v4671, %v4677
    %v4682 = vadd.f32 %v4672, %v4678
    %v4683 = vadd.f32 %v4673, %v4679
    %s4684 = sld [smem:[#allocation10 + $0x5]]
    %v4685 = vstv %s4684
    %v4686 = vmul.f32 %v4685, %v2375
    %v4687 = vmul.f32 %v4685, %v2379
    %v4688 = vmul.f32 %v4685, %v2383
    %v4689 = vmul.f32 %v4685, %v2387
    %4694 = vrot.lane.b32.xlu0 %v4686, 64
    %v4695 = vpop.permute.xlu0 %4694
    %4696 = vrot.lane.b32.xlu0 %v4687, 64
    %v4697 = vpop.permute.xlu0 %4696
    %4698 = vrot.lane.b32.xlu0 %v4688, 64
    %v4699 = vpop.permute.xlu0 %4698
    %4700 = vrot.lane.b32.xlu0 %v4689, 64
    %v4701 = vpop.permute.xlu0 %4700
    %v4706 = vadd.f32 %v4680, %v4695
    %v4707 = vadd.f32 %v4681, %v4697
    %v4708 = vadd.f32 %v4682, %v4699
    %v4709 = vadd.f32 %v4683, %v4701
    %s4710 = sld [smem:[#allocation10 + $0x6]]
    %v4711 = vstv %s4710
    %v4712 = vmul.f32 %v4711, %v2376
    %v4713 = vmul.f32 %v4711, %v2380
    %v4714 = vmul.f32 %v4711, %v2384
    %v4715 = vmul.f32 %v4711, %v2388
    %v4716 = vadd.f32 %v4706, %v4712
    %v4717 = vadd.f32 %v4707, %v4713
    %v4718 = vadd.f32 %v4708, %v4714
    %v4719 = vadd.f32 %v4709, %v4715
    %s4720 = sld [smem:[#allocation10 + $0x7]]
    %v4721 = vstv %s4720
    %v4722 = vmul.f32 %v4721, %v2376
    %v4723 = vmul.f32 %v4721, %v2380
    %v4724 = vmul.f32 %v4721, %v2384
    %v4725 = vmul.f32 %v4721, %v2388
    %4730 = vrot.lane.b32.xlu0 %v4722, 64
    %v4731 = vpop.permute.xlu0 %4730
    %4732 = vrot.lane.b32.xlu0 %v4723, 64
    %v4733 = vpop.permute.xlu0 %4732
    %4734 = vrot.lane.b32.xlu0 %v4724, 64
    %v4735 = vpop.permute.xlu0 %4734
    %4736 = vrot.lane.b32.xlu0 %v4725, 64
    %v4737 = vpop.permute.xlu0 %4736
    %v4742 = vadd.f32 %v4716, %v4731
    %v4743 = vadd.f32 %v4717, %v4733
    %v4744 = vadd.f32 %v4718, %v4735
    %v4745 = vadd.f32 %v4719, %v4737
    %s4746 = scalar_lea.vmem %s7, 384
    %4747 = vst.msk [vmem:[%s4746] sm:$0xff] %vm162, %v4742
    %4748 = vst.msk [vmem:[%s4746 + $0x8] sm:$0xff] %vm162, %v4743
    %s4749 = scalar_lea.vmem %s7, 480
    %4750 = vst.msk [vmem:[%s4749] sm:$0xff] %vm162, %v4744
    %4751 = vst.msk [vmem:[%s4749 + $0x8] sm:$0xff] %vm162, %v4745
    %s4752 = sld [smem:[#allocation11 + $0x1]]
    %s4753 = sld [smem:[#allocation10 + $0x80]]
    %v4754 = vstv %s4753
    %v4755 = vmul.f32 %v4754, %v2373
    %v4756 = vmul.f32 %v4754, %v2377
    %v4757 = vmul.f32 %v4754, %v2381
    %v4758 = vmul.f32 %v4754, %v2385
    %v4759 = vstv %s4752
    %v4760 = vadd.f32 %v4759, %v4755
    %v4761 = vadd.f32 %v4759, %v4756
    %v4762 = vadd.f32 %v4759, %v4757
    %v4763 = vadd.f32 %v4759, %v4758
    %s4764 = sld [smem:[#allocation10 + $0x81]]
    %v4765 = vstv %s4764
    %v4766 = vmul.f32 %v4765, %v2373
    %v4767 = vmul.f32 %v4765, %v2377
    %v4768 = vmul.f32 %v4765, %v2381
    %v4769 = vmul.f32 %v4765, %v2385
    %4774 = vrot.lane.b32.xlu0 %v4766, 64
    %v4775 = vpop.permute.xlu0 %4774
    %4776 = vrot.lane.b32.xlu0 %v4767, 64
    %v4777 = vpop.permute.xlu0 %4776
    %4778 = vrot.lane.b32.xlu0 %v4768, 64
    %v4779 = vpop.permute.xlu0 %4778
    %4780 = vrot.lane.b32.xlu0 %v4769, 64
    %v4781 = vpop.permute.xlu0 %4780
    %v4786 = vadd.f32 %v4760, %v4775
    %v4787 = vadd.f32 %v4761, %v4777
    %v4788 = vadd.f32 %v4762, %v4779
    %v4789 = vadd.f32 %v4763, %v4781
    %s4790 = sld [smem:[#allocation10 + $0x82]]
    %v4791 = vstv %s4790
    %v4792 = vmul.f32 %v4791, %v2374
    %v4793 = vmul.f32 %v4791, %v2378
    %v4794 = vmul.f32 %v4791, %v2382
    %v4795 = vmul.f32 %v4791, %v2386
    %v4796 = vadd.f32 %v4786, %v4792
    %v4797 = vadd.f32 %v4787, %v4793
    %v4798 = vadd.f32 %v4788, %v4794
    %v4799 = vadd.f32 %v4789, %v4795
    %s4800 = sld [smem:[#allocation10 + $0x83]]
    %v4801 = vstv %s4800
    %v4802 = vmul.f32 %v4801, %v2374
    %v4803 = vmul.f32 %v4801, %v2378
    %v4804 = vmul.f32 %v4801, %v2382
    %v4805 = vmul.f32 %v4801, %v2386
    %4810 = vrot.lane.b32.xlu0 %v4802, 64
    %v4811 = vpop.permute.xlu0 %4810
    %4812 = vrot.lane.b32.xlu0 %v4803, 64
    %v4813 = vpop.permute.xlu0 %4812
    %4814 = vrot.lane.b32.xlu0 %v4804, 64
    %v4815 = vpop.permute.xlu0 %4814
    %4816 = vrot.lane.b32.xlu0 %v4805, 64
    %v4817 = vpop.permute.xlu0 %4816
    %v4822 = vadd.f32 %v4796, %v4811
    %v4823 = vadd.f32 %v4797, %v4813
    %v4824 = vadd.f32 %v4798, %v4815
    %v4825 = vadd.f32 %v4799, %v4817
    %s4826 = sld [smem:[#allocation10 + $0x84]]
    %v4827 = vstv %s4826
    %v4828 = vmul.f32 %v4827, %v2375
    %v4829 = vmul.f32 %v4827, %v2379
    %v4830 = vmul.f32 %v4827, %v2383
    %v4831 = vmul.f32 %v4827, %v2387
    %v4832 = vadd.f32 %v4822, %v4828
    %v4833 = vadd.f32 %v4823, %v4829
    %v4834 = vadd.f32 %v4824, %v4830
    %v4835 = vadd.f32 %v4825, %v4831
    %s4836 = sld [smem:[#allocation10 + $0x85]]
    %v4837 = vstv %s4836
    %v4838 = vmul.f32 %v4837, %v2375
    %v4839 = vmul.f32 %v4837, %v2379
    %v4840 = vmul.f32 %v4837, %v2383
    %v4841 = vmul.f32 %v4837, %v2387
    %4846 = vrot.lane.b32.xlu0 %v4838, 64
    %v4847 = vpop.permute.xlu0 %4846
    %4848 = vrot.lane.b32.xlu0 %v4839, 64
    %v4849 = vpop.permute.xlu0 %4848
    %4850 = vrot.lane.b32.xlu0 %v4840, 64
    %v4851 = vpop.permute.xlu0 %4850
    %4852 = vrot.lane.b32.xlu0 %v4841, 64
    %v4853 = vpop.permute.xlu0 %4852
    %v4858 = vadd.f32 %v4832, %v4847
    %v4859 = vadd.f32 %v4833, %v4849
    %v4860 = vadd.f32 %v4834, %v4851
    %v4861 = vadd.f32 %v4835, %v4853
    %s4862 = sld [smem:[#allocation10 + $0x86]]
    %v4863 = vstv %s4862
    %v4864 = vmul.f32 %v4863, %v2376
    %v4865 = vmul.f32 %v4863, %v2380
    %v4866 = vmul.f32 %v4863, %v2384
    %v4867 = vmul.f32 %v4863, %v2388
    %v4868 = vadd.f32 %v4858, %v4864
    %v4869 = vadd.f32 %v4859, %v4865
    %v4870 = vadd.f32 %v4860, %v4866
    %v4871 = vadd.f32 %v4861, %v4867
    %s4872 = sld [smem:[#allocation10 + $0x87]]
    %v4873 = vstv %s4872
    %v4874 = vmul.f32 %v4873, %v2376
    %v4875 = vmul.f32 %v4873, %v2380
    %v4876 = vmul.f32 %v4873, %v2384
    %v4877 = vmul.f32 %v4873, %v2388
    %4882 = vrot.lane.b32.xlu0 %v4874, 64
    %v4883 = vpop.permute.xlu0 %4882
    %4884 = vrot.lane.b32.xlu0 %v4875, 64
    %v4885 = vpop.permute.xlu0 %4884
    %4886 = vrot.lane.b32.xlu0 %v4876, 64
    %v4887 = vpop.permute.xlu0 %4886
    %4888 = vrot.lane.b32.xlu0 %v4877, 64
    %v4889 = vpop.permute.xlu0 %4888
    %v4894 = vadd.f32 %v4868, %v4883
    %v4895 = vadd.f32 %v4869, %v4885
    %v4896 = vadd.f32 %v4870, %v4887
    %v4897 = vadd.f32 %v4871, %v4889
    %s4898 = scalar_lea.vmem %s7, 400
    %4899 = vst.msk [vmem:[%s4898] sm:$0xff] %vm162, %v4894
    %4900 = vst.msk [vmem:[%s4898 + $0x8] sm:$0xff] %vm162, %v4895
    %s4901 = scalar_lea.vmem %s7, 496
    %4902 = vst.msk [vmem:[%s4901] sm:$0xff] %vm162, %v4896
    %4903 = vst.msk [vmem:[%s4901 + $0x8] sm:$0xff] %vm162, %v4897
    %s4904 = sld [smem:[#allocation11 + $0x2]]
    %s4905 = sld [smem:[#allocation10 + $0x100]]
    %v4906 = vstv %s4905
    %v4907 = vmul.f32 %v4906, %v2373
    %v4908 = vmul.f32 %v4906, %v2377
    %v4909 = vmul.f32 %v4906, %v2381
    %v4910 = vmul.f32 %v4906, %v2385
    %v4911 = vstv %s4904
    %v4912 = vadd.f32 %v4911, %v4907
    %v4913 = vadd.f32 %v4911, %v4908
    %v4914 = vadd.f32 %v4911, %v4909
    %v4915 = vadd.f32 %v4911, %v4910
    %s4916 = sld [smem:[#allocation10 + $0x101]]
    %v4917 = vstv %s4916
    %v4918 = vmul.f32 %v4917, %v2373
    %v4919 = vmul.f32 %v4917, %v2377
    %v4920 = vmul.f32 %v4917, %v2381
    %v4921 = vmul.f32 %v4917, %v2385
    %4926 = vrot.lane.b32.xlu0 %v4918, 64
    %v4927 = vpop.permute.xlu0 %4926
    %4928 = vrot.lane.b32.xlu0 %v4919, 64
    %v4929 = vpop.permute.xlu0 %4928
    %4930 = vrot.lane.b32.xlu0 %v4920, 64
    %v4931 = vpop.permute.xlu0 %4930
    %4932 = vrot.lane.b32.xlu0 %v4921, 64
    %v4933 = vpop.permute.xlu0 %4932
    %v4938 = vadd.f32 %v4912, %v4927
    %v4939 = vadd.f32 %v4913, %v4929
    %v4940 = vadd.f32 %v4914, %v4931
    %v4941 = vadd.f32 %v4915, %v4933
    %s4942 = sld [smem:[#allocation10 + $0x102]]
    %v4943 = vstv %s4942
    %v4944 = vmul.f32 %v4943, %v2374
    %v4945 = vmul.f32 %v4943, %v2378
    %v4946 = vmul.f32 %v4943, %v2382
    %v4947 = vmul.f32 %v4943, %v2386
    %v4948 = vadd.f32 %v4938, %v4944
    %v4949 = vadd.f32 %v4939, %v4945
    %v4950 = vadd.f32 %v4940, %v4946
    %v4951 = vadd.f32 %v4941, %v4947
    %s4952 = sld [smem:[#allocation10 + $0x103]]
    %v4953 = vstv %s4952
    %v4954 = vmul.f32 %v4953, %v2374
    %v4955 = vmul.f32 %v4953, %v2378
    %v4956 = vmul.f32 %v4953, %v2382
    %v4957 = vmul.f32 %v4953, %v2386
    %4962 = vrot.lane.b32.xlu0 %v4954, 64
    %v4963 = vpop.permute.xlu0 %4962
    %4964 = vrot.lane.b32.xlu0 %v4955, 64
    %v4965 = vpop.permute.xlu0 %4964
    %4966 = vrot.lane.b32.xlu0 %v4956, 64
    %v4967 = vpop.permute.xlu0 %4966
    %4968 = vrot.lane.b32.xlu0 %v4957, 64
    %v4969 = vpop.permute.xlu0 %4968
    %v4974 = vadd.f32 %v4948, %v4963
    %v4975 = vadd.f32 %v4949, %v4965
    %v4976 = vadd.f32 %v4950, %v4967
    %v4977 = vadd.f32 %v4951, %v4969
    %s4978 = sld [smem:[#allocation10 + $0x104]]
    %v4979 = vstv %s4978
    %v4980 = vmul.f32 %v4979, %v2375
    %v4981 = vmul.f32 %v4979, %v2379
    %v4982 = vmul.f32 %v4979, %v2383
    %v4983 = vmul.f32 %v4979, %v2387
    %v4984 = vadd.f32 %v4974, %v4980
    %v4985 = vadd.f32 %v4975, %v4981
    %v4986 = vadd.f32 %v4976, %v4982
    %v4987 = vadd.f32 %v4977, %v4983
    %s4988 = sld [smem:[#allocation10 + $0x105]]
    %v4989 = vstv %s4988
    %v4990 = vmul.f32 %v4989, %v2375
    %v4991 = vmul.f32 %v4989, %v2379
    %v4992 = vmul.f32 %v4989, %v2383
    %v4993 = vmul.f32 %v4989, %v2387
    %4998 = vrot.lane.b32.xlu0 %v4990, 64
    %v4999 = vpop.permute.xlu0 %4998
    %5000 = vrot.lane.b32.xlu0 %v4991, 64
    %v5001 = vpop.permute.xlu0 %5000
    %5002 = vrot.lane.b32.xlu0 %v4992, 64
    %v5003 = vpop.permute.xlu0 %5002
    %5004 = vrot.lane.b32.xlu0 %v4993, 64
    %v5005 = vpop.permute.xlu0 %5004
    %v5010 = vadd.f32 %v4984, %v4999
    %v5011 = vadd.f32 %v4985, %v5001
    %v5012 = vadd.f32 %v4986, %v5003
    %v5013 = vadd.f32 %v4987, %v5005
    %s5014 = sld [smem:[#allocation10 + $0x106]]
    %v5015 = vstv %s5014
    %v5016 = vmul.f32 %v5015, %v2376
    %v5017 = vmul.f32 %v5015, %v2380
    %v5018 = vmul.f32 %v5015, %v2384
    %v5019 = vmul.f32 %v5015, %v2388
    %v5020 = vadd.f32 %v5010, %v5016
    %v5021 = vadd.f32 %v5011, %v5017
    %v5022 = vadd.f32 %v5012, %v5018
    %v5023 = vadd.f32 %v5013, %v5019
    %s5024 = sld [smem:[#allocation10 + $0x107]]
    %v5025 = vstv %s5024
    %v5026 = vmul.f32 %v5025, %v2376
    %v5027 = vmul.f32 %v5025, %v2380
    %v5028 = vmul.f32 %v5025, %v2384
    %v5029 = vmul.f32 %v5025, %v2388
    %5034 = vrot.lane.b32.xlu0 %v5026, 64
    %v5035 = vpop.permute.xlu0 %5034
    %5036 = vrot.lane.b32.xlu0 %v5027, 64
    %v5037 = vpop.permute.xlu0 %5036
    %5038 = vrot.lane.b32.xlu0 %v5028, 64
    %v5039 = vpop.permute.xlu0 %5038
    %5040 = vrot.lane.b32.xlu0 %v5029, 64
    %v5041 = vpop.permute.xlu0 %5040
    %v5046 = vadd.f32 %v5020, %v5035
    %v5047 = vadd.f32 %v5021, %v5037
    %v5048 = vadd.f32 %v5022, %v5039
    %v5049 = vadd.f32 %v5023, %v5041
    %s5050 = scalar_lea.vmem %s7, 416
    %5051 = vst.msk [vmem:[%s5050] sm:$0xff] %vm162, %v5046
    %5052 = vst.msk [vmem:[%s5050 + $0x8] sm:$0xff] %vm162, %v5047
    %s5053 = scalar_lea.vmem %s7, 512
    %5054 = vst.msk [vmem:[%s5053] sm:$0xff] %vm162, %v5048
    %5055 = vst.msk [vmem:[%s5053 + $0x8] sm:$0xff] %vm162, %v5049
    %s5056 = sld [smem:[#allocation11 + $0x3]]
    %s5057 = sld [smem:[#allocation10 + $0x180]]
    %v5058 = vstv %s5057
    %v5059 = vmul.f32 %v5058, %v2373
    %v5060 = vmul.f32 %v5058, %v2377
    %v5061 = vmul.f32 %v5058, %v2381
    %v5062 = vmul.f32 %v5058, %v2385
    %v5063 = vstv %s5056
    %v5064 = vadd.f32 %v5063, %v5059
    %v5065 = vadd.f32 %v5063, %v5060
    %v5066 = vadd.f32 %v5063, %v5061
    %v5067 = vadd.f32 %v5063, %v5062
    %s5068 = sld [smem:[#allocation10 + $0x181]]
    %v5069 = vstv %s5068
    %v5070 = vmul.f32 %v5069, %v2373
    %v5071 = vmul.f32 %v5069, %v2377
    %v5072 = vmul.f32 %v5069, %v2381
    %v5073 = vmul.f32 %v5069, %v2385
    %5078 = vrot.lane.b32.xlu0 %v5070, 64
    %v5079 = vpop.permute.xlu0 %5078
    %5080 = vrot.lane.b32.xlu0 %v5071, 64
    %v5081 = vpop.permute.xlu0 %5080
    %5082 = vrot.lane.b32.xlu0 %v5072, 64
    %v5083 = vpop.permute.xlu0 %5082
    %5084 = vrot.lane.b32.xlu0 %v5073, 64
    %v5085 = vpop.permute.xlu0 %5084
    %v5090 = vadd.f32 %v5064, %v5079
    %v5091 = vadd.f32 %v5065, %v5081
    %v5092 = vadd.f32 %v5066, %v5083
    %v5093 = vadd.f32 %v5067, %v5085
    %s5094 = sld [smem:[#allocation10 + $0x182]]
    %v5095 = vstv %s5094
    %v5096 = vmul.f32 %v5095, %v2374
    %v5097 = vmul.f32 %v5095, %v2378
    %v5098 = vmul.f32 %v5095, %v2382
    %v5099 = vmul.f32 %v5095, %v2386
    %v5100 = vadd.f32 %v5090, %v5096
    %v5101 = vadd.f32 %v5091, %v5097
    %v5102 = vadd.f32 %v5092, %v5098
    %v5103 = vadd.f32 %v5093, %v5099
    %s5104 = sld [smem:[#allocation10 + $0x183]]
    %v5105 = vstv %s5104
    %v5106 = vmul.f32 %v5105, %v2374
    %v5107 = vmul.f32 %v5105, %v2378
    %v5108 = vmul.f32 %v5105, %v2382
    %v5109 = vmul.f32 %v5105, %v2386
    %5114 = vrot.lane.b32.xlu0 %v5106, 64
    %v5115 = vpop.permute.xlu0 %5114
    %5116 = vrot.lane.b32.xlu0 %v5107, 64
    %v5117 = vpop.permute.xlu0 %5116
    %5118 = vrot.lane.b32.xlu0 %v5108, 64
    %v5119 = vpop.permute.xlu0 %5118
    %5120 = vrot.lane.b32.xlu0 %v5109, 64
    %v5121 = vpop.permute.xlu0 %5120
    %v5126 = vadd.f32 %v5100, %v5115
    %v5127 = vadd.f32 %v5101, %v5117
    %v5128 = vadd.f32 %v5102, %v5119
    %v5129 = vadd.f32 %v5103, %v5121
    %s5130 = sld [smem:[#allocation10 + $0x184]]
    %v5131 = vstv %s5130
    %v5132 = vmul.f32 %v5131, %v2375
    %v5133 = vmul.f32 %v5131, %v2379
    %v5134 = vmul.f32 %v5131, %v2383
    %v5135 = vmul.f32 %v5131, %v2387
    %v5136 = vadd.f32 %v5126, %v5132
    %v5137 = vadd.f32 %v5127, %v5133
    %v5138 = vadd.f32 %v5128, %v5134
    %v5139 = vadd.f32 %v5129, %v5135
    %s5140 = sld [smem:[#allocation10 + $0x185]]
    %v5141 = vstv %s5140
    %v5142 = vmul.f32 %v5141, %v2375
    %v5143 = vmul.f32 %v5141, %v2379
    %v5144 = vmul.f32 %v5141, %v2383
    %v5145 = vmul.f32 %v5141, %v2387
    %5150 = vrot.lane.b32.xlu0 %v5142, 64
    %v5151 = vpop.permute.xlu0 %5150
    %5152 = vrot.lane.b32.xlu0 %v5143, 64
    %v5153 = vpop.permute.xlu0 %5152
    %5154 = vrot.lane.b32.xlu0 %v5144, 64
    %v5155 = vpop.permute.xlu0 %5154
    %5156 = vrot.lane.b32.xlu0 %v5145, 64
    %v5157 = vpop.permute.xlu0 %5156
    %v5162 = vadd.f32 %v5136, %v5151
    %v5163 = vadd.f32 %v5137, %v5153
    %v5164 = vadd.f32 %v5138, %v5155
    %v5165 = vadd.f32 %v5139, %v5157
    %s5166 = sld [smem:[#allocation10 + $0x186]]
    %v5167 = vstv %s5166
    %v5168 = vmul.f32 %v5167, %v2376
    %v5169 = vmul.f32 %v5167, %v2380
    %v5170 = vmul.f32 %v5167, %v2384
    %v5171 = vmul.f32 %v5167, %v2388
    %v5172 = vadd.f32 %v5162, %v5168
    %v5173 = vadd.f32 %v5163, %v5169
    %v5174 = vadd.f32 %v5164, %v5170
    %v5175 = vadd.f32 %v5165, %v5171
    %s5176 = sld [smem:[#allocation10 + $0x187]]
    %v5177 = vstv %s5176
    %v5178 = vmul.f32 %v5177, %v2376
    %v5179 = vmul.f32 %v5177, %v2380
    %v5180 = vmul.f32 %v5177, %v2384
    %v5181 = vmul.f32 %v5177, %v2388
    %5186 = vrot.lane.b32.xlu0 %v5178, 64
    %v5187 = vpop.permute.xlu0 %5186
    %5188 = vrot.lane.b32.xlu0 %v5179, 64
    %v5189 = vpop.permute.xlu0 %5188
    %5190 = vrot.lane.b32.xlu0 %v5180, 64
    %v5191 = vpop.permute.xlu0 %5190
    %5192 = vrot.lane.b32.xlu0 %v5181, 64
    %v5193 = vpop.permute.xlu0 %5192
    %v5198 = vadd.f32 %v5172, %v5187
    %v5199 = vadd.f32 %v5173, %v5189
    %v5200 = vadd.f32 %v5174, %v5191
    %v5201 = vadd.f32 %v5175, %v5193
    %s5202 = scalar_lea.vmem %s7, 432
    %5203 = vst.msk [vmem:[%s5202] sm:$0xff] %vm162, %v5198
    %5204 = vst.msk [vmem:[%s5202 + $0x8] sm:$0xff] %vm162, %v5199
    %s5205 = scalar_lea.vmem %s7, 528
    %5206 = vst.msk [vmem:[%s5205] sm:$0xff] %vm162, %v5200
    %5207 = vst.msk [vmem:[%s5205 + $0x8] sm:$0xff] %vm162, %v5201
    %s5208 = sld [smem:[#allocation11 + $0x4]]
    %s5209 = sld [smem:[#allocation10 + $0x200]]
    %v5210 = vstv %s5209
    %v5211 = vmul.f32 %v5210, %v2373
    %v5212 = vmul.f32 %v5210, %v2377
    %v5213 = vmul.f32 %v5210, %v2381
    %v5214 = vmul.f32 %v5210, %v2385
    %v5215 = vstv %s5208
    %v5216 = vadd.f32 %v5215, %v5211
    %v5217 = vadd.f32 %v5215, %v5212
    %v5218 = vadd.f32 %v5215, %v5213
    %v5219 = vadd.f32 %v5215, %v5214
    %s5220 = sld [smem:[#allocation10 + $0x201]]
    %v5221 = vstv %s5220
    %v5222 = vmul.f32 %v5221, %v2373
    %v5223 = vmul.f32 %v5221, %v2377
    %v5224 = vmul.f32 %v5221, %v2381
    %v5225 = vmul.f32 %v5221, %v2385
    %5230 = vrot.lane.b32.xlu0 %v5222, 64
    %v5231 = vpop.permute.xlu0 %5230
    %5232 = vrot.lane.b32.xlu0 %v5223, 64
    %v5233 = vpop.permute.xlu0 %5232
    %5234 = vrot.lane.b32.xlu0 %v5224, 64
    %v5235 = vpop.permute.xlu0 %5234
    %5236 = vrot.lane.b32.xlu0 %v5225, 64
    %v5237 = vpop.permute.xlu0 %5236
    %v5242 = vadd.f32 %v5216, %v5231
    %v5243 = vadd.f32 %v5217, %v5233
    %v5244 = vadd.f32 %v5218, %v5235
    %v5245 = vadd.f32 %v5219, %v5237
    %s5246 = sld [smem:[#allocation10 + $0x202]]
    %v5247 = vstv %s5246
    %v5248 = vmul.f32 %v5247, %v2374
    %v5249 = vmul.f32 %v5247, %v2378
    %v5250 = vmul.f32 %v5247, %v2382
    %v5251 = vmul.f32 %v5247, %v2386
    %v5252 = vadd.f32 %v5242, %v5248
    %v5253 = vadd.f32 %v5243, %v5249
    %v5254 = vadd.f32 %v5244, %v5250
    %v5255 = vadd.f32 %v5245, %v5251
    %s5256 = sld [smem:[#allocation10 + $0x203]]
    %v5257 = vstv %s5256
    %v5258 = vmul.f32 %v5257, %v2374
    %v5259 = vmul.f32 %v5257, %v2378
    %v5260 = vmul.f32 %v5257, %v2382
    %v5261 = vmul.f32 %v5257, %v2386
    %5266 = vrot.lane.b32.xlu0 %v5258, 64
    %v5267 = vpop.permute.xlu0 %5266
    %5268 = vrot.lane.b32.xlu0 %v5259, 64
    %v5269 = vpop.permute.xlu0 %5268
    %5270 = vrot.lane.b32.xlu0 %v5260, 64
    %v5271 = vpop.permute.xlu0 %5270
    %5272 = vrot.lane.b32.xlu0 %v5261, 64
    %v5273 = vpop.permute.xlu0 %5272
    %v5278 = vadd.f32 %v5252, %v5267
    %v5279 = vadd.f32 %v5253, %v5269
    %v5280 = vadd.f32 %v5254, %v5271
    %v5281 = vadd.f32 %v5255, %v5273
    %s5282 = sld [smem:[#allocation10 + $0x204]]
    %v5283 = vstv %s5282
    %v5284 = vmul.f32 %v5283, %v2375
    %v5285 = vmul.f32 %v5283, %v2379
    %v5286 = vmul.f32 %v5283, %v2383
    %v5287 = vmul.f32 %v5283, %v2387
    %v5288 = vadd.f32 %v5278, %v5284
    %v5289 = vadd.f32 %v5279, %v5285
    %v5290 = vadd.f32 %v5280, %v5286
    %v5291 = vadd.f32 %v5281, %v5287
    %s5292 = sld [smem:[#allocation10 + $0x205]]
    %v5293 = vstv %s5292
    %v5294 = vmul.f32 %v5293, %v2375
    %v5295 = vmul.f32 %v5293, %v2379
    %v5296 = vmul.f32 %v5293, %v2383
    %v5297 = vmul.f32 %v5293, %v2387
    %5302 = vrot.lane.b32.xlu0 %v5294, 64
    %v5303 = vpop.permute.xlu0 %5302
    %5304 = vrot.lane.b32.xlu0 %v5295, 64
    %v5305 = vpop.permute.xlu0 %5304
    %5306 = vrot.lane.b32.xlu0 %v5296, 64
    %v5307 = vpop.permute.xlu0 %5306
    %5308 = vrot.lane.b32.xlu0 %v5297, 64
    %v5309 = vpop.permute.xlu0 %5308
    %v5314 = vadd.f32 %v5288, %v5303
    %v5315 = vadd.f32 %v5289, %v5305
    %v5316 = vadd.f32 %v5290, %v5307
    %v5317 = vadd.f32 %v5291, %v5309
    %s5318 = sld [smem:[#allocation10 + $0x206]]
    %v5319 = vstv %s5318
    %v5320 = vmul.f32 %v5319, %v2376
    %v5321 = vmul.f32 %v5319, %v2380
    %v5322 = vmul.f32 %v5319, %v2384
    %v5323 = vmul.f32 %v5319, %v2388
    %v5324 = vadd.f32 %v5314, %v5320
    %v5325 = vadd.f32 %v5315, %v5321
    %v5326 = vadd.f32 %v5316, %v5322
    %v5327 = vadd.f32 %v5317, %v5323
    %s5328 = sld [smem:[#allocation10 + $0x207]]
    %v5329 = vstv %s5328
    %v5330 = vmul.f32 %v5329, %v2376
    %v5331 = vmul.f32 %v5329, %v2380
    %v5332 = vmul.f32 %v5329, %v2384
    %v5333 = vmul.f32 %v5329, %v2388
    %5338 = vrot.lane.b32.xlu0 %v5330, 64
    %v5339 = vpop.permute.xlu0 %5338
    %5340 = vrot.lane.b32.xlu0 %v5331, 64
    %v5341 = vpop.permute.xlu0 %5340
    %5342 = vrot.lane.b32.xlu0 %v5332, 64
    %v5343 = vpop.permute.xlu0 %5342
    %5344 = vrot.lane.b32.xlu0 %v5333, 64
    %v5345 = vpop.permute.xlu0 %5344
    %v5350 = vadd.f32 %v5324, %v5339
    %v5351 = vadd.f32 %v5325, %v5341
    %v5352 = vadd.f32 %v5326, %v5343
    %v5353 = vadd.f32 %v5327, %v5345
    %s5354 = scalar_lea.vmem %s7, 448
    %5355 = vst.msk [vmem:[%s5354] sm:$0xff] %vm162, %v5350
    %5356 = vst.msk [vmem:[%s5354 + $0x8] sm:$0xff] %vm162, %v5351
    %s5357 = scalar_lea.vmem %s7, 544
    %5358 = vst.msk [vmem:[%s5357] sm:$0xff] %vm162, %v5352
    %5359 = vst.msk [vmem:[%s5357 + $0x8] sm:$0xff] %vm162, %v5353
    %s5360 = sld [smem:[#allocation11 + $0x5]]
    %s5361 = sld [smem:[#allocation10 + $0x280]]
    %v5362 = vstv %s5361
    %v5363 = vmul.f32 %v5362, %v2373
    %v5364 = vmul.f32 %v5362, %v2377
    %v5365 = vmul.f32 %v5362, %v2381
    %v5366 = vmul.f32 %v5362, %v2385
    %v5367 = vstv %s5360
    %v5368 = vadd.f32 %v5367, %v5363
    %v5369 = vadd.f32 %v5367, %v5364
    %v5370 = vadd.f32 %v5367, %v5365
    %v5371 = vadd.f32 %v5367, %v5366
    %s5372 = sld [smem:[#allocation10 + $0x281]]
    %v5373 = vstv %s5372
    %v5374 = vmul.f32 %v5373, %v2373
    %v5375 = vmul.f32 %v5373, %v2377
    %v5376 = vmul.f32 %v5373, %v2381
    %v5377 = vmul.f32 %v5373, %v2385
    %5382 = vrot.lane.b32.xlu0 %v5374, 64
    %v5383 = vpop.permute.xlu0 %5382
    %5384 = vrot.lane.b32.xlu0 %v5375, 64
    %v5385 = vpop.permute.xlu0 %5384
    %5386 = vrot.lane.b32.xlu0 %v5376, 64
    %v5387 = vpop.permute.xlu0 %5386
    %5388 = vrot.lane.b32.xlu0 %v5377, 64
    %v5389 = vpop.permute.xlu0 %5388
    %v5394 = vadd.f32 %v5368, %v5383
    %v5395 = vadd.f32 %v5369, %v5385
    %v5396 = vadd.f32 %v5370, %v5387
    %v5397 = vadd.f32 %v5371, %v5389
    %s5398 = sld [smem:[#allocation10 + $0x282]]
    %v5399 = vstv %s5398
    %v5400 = vmul.f32 %v5399, %v2374
    %v5401 = vmul.f32 %v5399, %v2378
    %v5402 = vmul.f32 %v5399, %v2382
    %v5403 = vmul.f32 %v5399, %v2386
    %v5404 = vadd.f32 %v5394, %v5400
    %v5405 = vadd.f32 %v5395, %v5401
    %v5406 = vadd.f32 %v5396, %v5402
    %v5407 = vadd.f32 %v5397, %v5403
    %s5408 = sld [smem:[#allocation10 + $0x283]]
    %v5409 = vstv %s5408
    %v5410 = vmul.f32 %v5409, %v2374
    %v5411 = vmul.f32 %v5409, %v2378
    %v5412 = vmul.f32 %v5409, %v2382
    %v5413 = vmul.f32 %v5409, %v2386
    %5418 = vrot.lane.b32.xlu0 %v5410, 64
    %v5419 = vpop.permute.xlu0 %5418
    %5420 = vrot.lane.b32.xlu0 %v5411, 64
    %v5421 = vpop.permute.xlu0 %5420
    %5422 = vrot.lane.b32.xlu0 %v5412, 64
    %v5423 = vpop.permute.xlu0 %5422
    %5424 = vrot.lane.b32.xlu0 %v5413, 64
    %v5425 = vpop.permute.xlu0 %5424
    %v5430 = vadd.f32 %v5404, %v5419
    %v5431 = vadd.f32 %v5405, %v5421
    %v5432 = vadd.f32 %v5406, %v5423
    %v5433 = vadd.f32 %v5407, %v5425
    %s5434 = sld [smem:[#allocation10 + $0x284]]
    %v5435 = vstv %s5434
    %v5436 = vmul.f32 %v5435, %v2375
    %v5437 = vmul.f32 %v5435, %v2379
    %v5438 = vmul.f32 %v5435, %v2383
    %v5439 = vmul.f32 %v5435, %v2387
    %v5440 = vadd.f32 %v5430, %v5436
    %v5441 = vadd.f32 %v5431, %v5437
    %v5442 = vadd.f32 %v5432, %v5438
    %v5443 = vadd.f32 %v5433, %v5439
    %s5444 = sld [smem:[#allocation10 + $0x285]]
    %v5445 = vstv %s5444
    %v5446 = vmul.f32 %v5445, %v2375
    %v5447 = vmul.f32 %v5445, %v2379
    %v5448 = vmul.f32 %v5445, %v2383
    %v5449 = vmul.f32 %v5445, %v2387
    %5454 = vrot.lane.b32.xlu0 %v5446, 64
    %v5455 = vpop.permute.xlu0 %5454
    %5456 = vrot.lane.b32.xlu0 %v5447, 64
    %v5457 = vpop.permute.xlu0 %5456
    %5458 = vrot.lane.b32.xlu0 %v5448, 64
    %v5459 = vpop.permute.xlu0 %5458
    %5460 = vrot.lane.b32.xlu0 %v5449, 64
    %v5461 = vpop.permute.xlu0 %5460
    %v5466 = vadd.f32 %v5440, %v5455
    %v5467 = vadd.f32 %v5441, %v5457
    %v5468 = vadd.f32 %v5442, %v5459
    %v5469 = vadd.f32 %v5443, %v5461
    %s5470 = sld [smem:[#allocation10 + $0x286]]
    %v5471 = vstv %s5470
    %v5472 = vmul.f32 %v5471, %v2376
    %v5473 = vmul.f32 %v5471, %v2380
    %v5474 = vmul.f32 %v5471, %v2384
    %v5475 = vmul.f32 %v5471, %v2388
    %v5476 = vadd.f32 %v5466, %v5472
    %v5477 = vadd.f32 %v5467, %v5473
    %v5478 = vadd.f32 %v5468, %v5474
    %v5479 = vadd.f32 %v5469, %v5475
    %s5480 = sld [smem:[#allocation10 + $0x287]]
    %v5481 = vstv %s5480
    %v5482 = vmul.f32 %v5481, %v2376
    %v5483 = vmul.f32 %v5481, %v2380
    %v5484 = vmul.f32 %v5481, %v2384
    %v5485 = vmul.f32 %v5481, %v2388
    %5490 = vrot.lane.b32.xlu0 %v5482, 64
    %v5491 = vpop.permute.xlu0 %5490
    %5492 = vrot.lane.b32.xlu0 %v5483, 64
    %v5493 = vpop.permute.xlu0 %5492
    %5494 = vrot.lane.b32.xlu0 %v5484, 64
    %v5495 = vpop.permute.xlu0 %5494
    %5496 = vrot.lane.b32.xlu0 %v5485, 64
    %v5497 = vpop.permute.xlu0 %5496
    %v5502 = vadd.f32 %v5476, %v5491
    %v5503 = vadd.f32 %v5477, %v5493
    %v5504 = vadd.f32 %v5478, %v5495
    %v5505 = vadd.f32 %v5479, %v5497
    %s5506 = scalar_lea.vmem %s7, 464
    %5507 = vst.msk [vmem:[%s5506] sm:$0xff] %vm162, %v5502
    %5508 = vst.msk [vmem:[%s5506 + $0x8] sm:$0xff] %vm162, %v5503
    %s5509 = scalar_lea.vmem %s7, 560
    %5510 = vst.msk [vmem:[%s5509] sm:$0xff] %vm162, %v5504
    %5511 = vst.msk [vmem:[%s5509 + $0x8] sm:$0xff] %vm162, %v5505
    %s5512 = sld [smem:[#allocation11]]
    %s5513 = sld [smem:[#allocation10]]
    %v5514 = vstv %s5513
    %v5515 = vmul.f32 %v5514, %v2761
    %v5516 = vmul.f32 %v5514, %v2765
    %v5517 = vmul.f32 %v5514, %v2769
    %v5518 = vmul.f32 %v5514, %v2773
    %v5519 = vstv %s5512
    %v5520 = vadd.f32 %v5519, %v5515
    %v5521 = vadd.f32 %v5519, %v5516
    %v5522 = vadd.f32 %v5519, %v5517
    %v5523 = vadd.f32 %v5519, %v5518
    %s5524 = sld [smem:[#allocation10 + $0x1]]
    %v5525 = vstv %s5524
    %v5526 = vmul.f32 %v5525, %v2761
    %v5527 = vmul.f32 %v5525, %v2765
    %v5528 = vmul.f32 %v5525, %v2769
    %v5529 = vmul.f32 %v5525, %v2773
    %5534 = vrot.lane.b32.xlu0 %v5526, 64
    %v5535 = vpop.permute.xlu0 %5534
    %5536 = vrot.lane.b32.xlu0 %v5527, 64
    %v5537 = vpop.permute.xlu0 %5536
    %5538 = vrot.lane.b32.xlu0 %v5528, 64
    %v5539 = vpop.permute.xlu0 %5538
    %5540 = vrot.lane.b32.xlu0 %v5529, 64
    %v5541 = vpop.permute.xlu0 %5540
    %v5546 = vadd.f32 %v5520, %v5535
    %v5547 = vadd.f32 %v5521, %v5537
    %v5548 = vadd.f32 %v5522, %v5539
    %v5549 = vadd.f32 %v5523, %v5541
    %s5550 = sld [smem:[#allocation10 + $0x2]]
    %v5551 = vstv %s5550
    %v5552 = vmul.f32 %v5551, %v2762
    %v5553 = vmul.f32 %v5551, %v2766
    %v5554 = vmul.f32 %v5551, %v2770
    %v5555 = vmul.f32 %v5551, %v2774
    %v5556 = vadd.f32 %v5546, %v5552
    %v5557 = vadd.f32 %v5547, %v5553
    %v5558 = vadd.f32 %v5548, %v5554
    %v5559 = vadd.f32 %v5549, %v5555
    %s5560 = sld [smem:[#allocation10 + $0x3]]
    %v5561 = vstv %s5560
    %v5562 = vmul.f32 %v5561, %v2762
    %v5563 = vmul.f32 %v5561, %v2766
    %v5564 = vmul.f32 %v5561, %v2770
    %v5565 = vmul.f32 %v5561, %v2774
    %5570 = vrot.lane.b32.xlu0 %v5562, 64
    %v5571 = vpop.permute.xlu0 %5570
    %5572 = vrot.lane.b32.xlu0 %v5563, 64
    %v5573 = vpop.permute.xlu0 %5572
    %5574 = vrot.lane.b32.xlu0 %v5564, 64
    %v5575 = vpop.permute.xlu0 %5574
    %5576 = vrot.lane.b32.xlu0 %v5565, 64
    %v5577 = vpop.permute.xlu0 %5576
    %v5582 = vadd.f32 %v5556, %v5571
    %v5583 = vadd.f32 %v5557, %v5573
    %v5584 = vadd.f32 %v5558, %v5575
    %v5585 = vadd.f32 %v5559, %v5577
    %s5586 = sld [smem:[#allocation10 + $0x4]]
    %v5587 = vstv %s5586
    %v5588 = vmul.f32 %v5587, %v2763
    %v5589 = vmul.f32 %v5587, %v2767
    %v5590 = vmul.f32 %v5587, %v2771
    %v5591 = vmul.f32 %v5587, %v2775
    %v5592 = vadd.f32 %v5582, %v5588
    %v5593 = vadd.f32 %v5583, %v5589
    %v5594 = vadd.f32 %v5584, %v5590
    %v5595 = vadd.f32 %v5585, %v5591
    %s5596 = sld [smem:[#allocation10 + $0x5]]
    %v5597 = vstv %s5596
    %v5598 = vmul.f32 %v5597, %v2763
    %v5599 = vmul.f32 %v5597, %v2767
    %v5600 = vmul.f32 %v5597, %v2771
    %v5601 = vmul.f32 %v5597, %v2775
    %5606 = vrot.lane.b32.xlu0 %v5598, 64
    %v5607 = vpop.permute.xlu0 %5606
    %5608 = vrot.lane.b32.xlu0 %v5599, 64
    %v5609 = vpop.permute.xlu0 %5608
    %5610 = vrot.lane.b32.xlu0 %v5600, 64
    %v5611 = vpop.permute.xlu0 %5610
    %5612 = vrot.lane.b32.xlu0 %v5601, 64
    %v5613 = vpop.permute.xlu0 %5612
    %v5618 = vadd.f32 %v5592, %v5607
    %v5619 = vadd.f32 %v5593, %v5609
    %v5620 = vadd.f32 %v5594, %v5611
    %v5621 = vadd.f32 %v5595, %v5613
    %s5622 = sld [smem:[#allocation10 + $0x6]]
    %v5623 = vstv %s5622
    %v5624 = vmul.f32 %v5623, %v2764
    %v5625 = vmul.f32 %v5623, %v2768
    %v5626 = vmul.f32 %v5623, %v2772
    %v5627 = vmul.f32 %v5623, %v2776
    %v5628 = vadd.f32 %v5618, %v5624
    %v5629 = vadd.f32 %v5619, %v5625
    %v5630 = vadd.f32 %v5620, %v5626
    %v5631 = vadd.f32 %v5621, %v5627
    %s5632 = sld [smem:[#allocation10 + $0x7]]
    %v5633 = vstv %s5632
    %v5634 = vmul.f32 %v5633, %v2764
    %v5635 = vmul.f32 %v5633, %v2768
    %v5636 = vmul.f32 %v5633, %v2772
    %v5637 = vmul.f32 %v5633, %v2776
    %5642 = vrot.lane.b32.xlu0 %v5634, 64
    %v5643 = vpop.permute.xlu0 %5642
    %5644 = vrot.lane.b32.xlu0 %v5635, 64
    %v5645 = vpop.permute.xlu0 %5644
    %5646 = vrot.lane.b32.xlu0 %v5636, 64
    %v5647 = vpop.permute.xlu0 %5646
    %5648 = vrot.lane.b32.xlu0 %v5637, 64
    %v5649 = vpop.permute.xlu0 %5648
    %v5654 = vadd.f32 %v5628, %v5643
    %v5655 = vadd.f32 %v5629, %v5645
    %v5656 = vadd.f32 %v5630, %v5647
    %v5657 = vadd.f32 %v5631, %v5649
    %s5658 = scalar_lea.vmem %s7, 576
    %5659 = vst.msk [vmem:[%s5658] sm:$0xff] %vm162, %v5654
    %5660 = vst.msk [vmem:[%s5658 + $0x8] sm:$0xff] %vm162, %v5655
    %s5661 = scalar_lea.vmem %s7, 672
    %5662 = vst.msk [vmem:[%s5661] sm:$0xff] %vm162, %v5656
    %5663 = vst.msk [vmem:[%s5661 + $0x8] sm:$0xff] %vm162, %v5657
    %s5664 = sld [smem:[#allocation11 + $0x1]]
    %s5665 = sld [smem:[#allocation10 + $0x80]]
    %v5666 = vstv %s5665
    %v5667 = vmul.f32 %v5666, %v2761
    %v5668 = vmul.f32 %v5666, %v2765
    %v5669 = vmul.f32 %v5666, %v2769
    %v5670 = vmul.f32 %v5666, %v2773
    %v5671 = vstv %s5664
    %v5672 = vadd.f32 %v5671, %v5667
    %v5673 = vadd.f32 %v5671, %v5668
    %v5674 = vadd.f32 %v5671, %v5669
    %v5675 = vadd.f32 %v5671, %v5670
    %s5676 = sld [smem:[#allocation10 + $0x81]]
    %v5677 = vstv %s5676
    %v5678 = vmul.f32 %v5677, %v2761
    %v5679 = vmul.f32 %v5677, %v2765
    %v5680 = vmul.f32 %v5677, %v2769
    %v5681 = vmul.f32 %v5677, %v2773
    %5686 = vrot.lane.b32.xlu0 %v5678, 64
    %v5687 = vpop.permute.xlu0 %5686
    %5688 = vrot.lane.b32.xlu0 %v5679, 64
    %v5689 = vpop.permute.xlu0 %5688
    %5690 = vrot.lane.b32.xlu0 %v5680, 64
    %v5691 = vpop.permute.xlu0 %5690
    %5692 = vrot.lane.b32.xlu0 %v5681, 64
    %v5693 = vpop.permute.xlu0 %5692
    %v5698 = vadd.f32 %v5672, %v5687
    %v5699 = vadd.f32 %v5673, %v5689
    %v5700 = vadd.f32 %v5674, %v5691
    %v5701 = vadd.f32 %v5675, %v5693
    %s5702 = sld [smem:[#allocation10 + $0x82]]
    %v5703 = vstv %s5702
    %v5704 = vmul.f32 %v5703, %v2762
    %v5705 = vmul.f32 %v5703, %v2766
    %v5706 = vmul.f32 %v5703, %v2770
    %v5707 = vmul.f32 %v5703, %v2774
    %v5708 = vadd.f32 %v5698, %v5704
    %v5709 = vadd.f32 %v5699, %v5705
    %v5710 = vadd.f32 %v5700, %v5706
    %v5711 = vadd.f32 %v5701, %v5707
    %s5712 = sld [smem:[#allocation10 + $0x83]]
    %v5713 = vstv %s5712
    %v5714 = vmul.f32 %v5713, %v2762
    %v5715 = vmul.f32 %v5713, %v2766
    %v5716 = vmul.f32 %v5713, %v2770
    %v5717 = vmul.f32 %v5713, %v2774
    %5722 = vrot.lane.b32.xlu0 %v5714, 64
    %v5723 = vpop.permute.xlu0 %5722
    %5724 = vrot.lane.b32.xlu0 %v5715, 64
    %v5725 = vpop.permute.xlu0 %5724
    %5726 = vrot.lane.b32.xlu0 %v5716, 64
    %v5727 = vpop.permute.xlu0 %5726
    %5728 = vrot.lane.b32.xlu0 %v5717, 64
    %v5729 = vpop.permute.xlu0 %5728
    %v5734 = vadd.f32 %v5708, %v5723
    %v5735 = vadd.f32 %v5709, %v5725
    %v5736 = vadd.f32 %v5710, %v5727
    %v5737 = vadd.f32 %v5711, %v5729
    %s5738 = sld [smem:[#allocation10 + $0x84]]
    %v5739 = vstv %s5738
    %v5740 = vmul.f32 %v5739, %v2763
    %v5741 = vmul.f32 %v5739, %v2767
    %v5742 = vmul.f32 %v5739, %v2771
    %v5743 = vmul.f32 %v5739, %v2775
    %v5744 = vadd.f32 %v5734, %v5740
    %v5745 = vadd.f32 %v5735, %v5741
    %v5746 = vadd.f32 %v5736, %v5742
    %v5747 = vadd.f32 %v5737, %v5743
    %s5748 = sld [smem:[#allocation10 + $0x85]]
    %v5749 = vstv %s5748
    %v5750 = vmul.f32 %v5749, %v2763
    %v5751 = vmul.f32 %v5749, %v2767
    %v5752 = vmul.f32 %v5749, %v2771
    %v5753 = vmul.f32 %v5749, %v2775
    %5758 = vrot.lane.b32.xlu0 %v5750, 64
    %v5759 = vpop.permute.xlu0 %5758
    %5760 = vrot.lane.b32.xlu0 %v5751, 64
    %v5761 = vpop.permute.xlu0 %5760
    %5762 = vrot.lane.b32.xlu0 %v5752, 64
    %v5763 = vpop.permute.xlu0 %5762
    %5764 = vrot.lane.b32.xlu0 %v5753, 64
    %v5765 = vpop.permute.xlu0 %5764
    %v5770 = vadd.f32 %v5744, %v5759
    %v5771 = vadd.f32 %v5745, %v5761
    %v5772 = vadd.f32 %v5746, %v5763
    %v5773 = vadd.f32 %v5747, %v5765
    %s5774 = sld [smem:[#allocation10 + $0x86]]
    %v5775 = vstv %s5774
    %v5776 = vmul.f32 %v5775, %v2764
    %v5777 = vmul.f32 %v5775, %v2768
    %v5778 = vmul.f32 %v5775, %v2772
    %v5779 = vmul.f32 %v5775, %v2776
    %v5780 = vadd.f32 %v5770, %v5776
    %v5781 = vadd.f32 %v5771, %v5777
    %v5782 = vadd.f32 %v5772, %v5778
    %v5783 = vadd.f32 %v5773, %v5779
    %s5784 = sld [smem:[#allocation10 + $0x87]]
    %v5785 = vstv %s5784
    %v5786 = vmul.f32 %v5785, %v2764
    %v5787 = vmul.f32 %v5785, %v2768
    %v5788 = vmul.f32 %v5785, %v2772
    %v5789 = vmul.f32 %v5785, %v2776
    %5794 = vrot.lane.b32.xlu0 %v5786, 64
    %v5795 = vpop.permute.xlu0 %5794
    %5796 = vrot.lane.b32.xlu0 %v5787, 64
    %v5797 = vpop.permute.xlu0 %5796
    %5798 = vrot.lane.b32.xlu0 %v5788, 64
    %v5799 = vpop.permute.xlu0 %5798
    %5800 = vrot.lane.b32.xlu0 %v5789, 64
    %v5801 = vpop.permute.xlu0 %5800
    %v5806 = vadd.f32 %v5780, %v5795
    %v5807 = vadd.f32 %v5781, %v5797
    %v5808 = vadd.f32 %v5782, %v5799
    %v5809 = vadd.f32 %v5783, %v5801
    %s5810 = scalar_lea.vmem %s7, 592
    %5811 = vst.msk [vmem:[%s5810] sm:$0xff] %vm162, %v5806
    %5812 = vst.msk [vmem:[%s5810 + $0x8] sm:$0xff] %vm162, %v5807
    %s5813 = scalar_lea.vmem %s7, 688
    %5814 = vst.msk [vmem:[%s5813] sm:$0xff] %vm162, %v5808
    %5815 = vst.msk [vmem:[%s5813 + $0x8] sm:$0xff] %vm162, %v5809
    %s5816 = sld [smem:[#allocation11 + $0x2]]
    %s5817 = sld [smem:[#allocation10 + $0x100]]
    %v5818 = vstv %s5817
    %v5819 = vmul.f32 %v5818, %v2761
    %v5820 = vmul.f32 %v5818, %v2765
    %v5821 = vmul.f32 %v5818, %v2769
    %v5822 = vmul.f32 %v5818, %v2773
    %v5823 = vstv %s5816
    %v5824 = vadd.f32 %v5823, %v5819
    %v5825 = vadd.f32 %v5823, %v5820
    %v5826 = vadd.f32 %v5823, %v5821
    %v5827 = vadd.f32 %v5823, %v5822
    %s5828 = sld [smem:[#allocation10 + $0x101]]
    %v5829 = vstv %s5828
    %v5830 = vmul.f32 %v5829, %v2761
    %v5831 = vmul.f32 %v5829, %v2765
    %v5832 = vmul.f32 %v5829, %v2769
    %v5833 = vmul.f32 %v5829, %v2773
    %5838 = vrot.lane.b32.xlu0 %v5830, 64
    %v5839 = vpop.permute.xlu0 %5838
    %5840 = vrot.lane.b32.xlu0 %v5831, 64
    %v5841 = vpop.permute.xlu0 %5840
    %5842 = vrot.lane.b32.xlu0 %v5832, 64
    %v5843 = vpop.permute.xlu0 %5842
    %5844 = vrot.lane.b32.xlu0 %v5833, 64
    %v5845 = vpop.permute.xlu0 %5844
    %v5850 = vadd.f32 %v5824, %v5839
    %v5851 = vadd.f32 %v5825, %v5841
    %v5852 = vadd.f32 %v5826, %v5843
    %v5853 = vadd.f32 %v5827, %v5845
    %s5854 = sld [smem:[#allocation10 + $0x102]]
    %v5855 = vstv %s5854
    %v5856 = vmul.f32 %v5855, %v2762
    %v5857 = vmul.f32 %v5855, %v2766
    %v5858 = vmul.f32 %v5855, %v2770
    %v5859 = vmul.f32 %v5855, %v2774
    %v5860 = vadd.f32 %v5850, %v5856
    %v5861 = vadd.f32 %v5851, %v5857
    %v5862 = vadd.f32 %v5852, %v5858
    %v5863 = vadd.f32 %v5853, %v5859
    %s5864 = sld [smem:[#allocation10 + $0x103]]
    %v5865 = vstv %s5864
    %v5866 = vmul.f32 %v5865, %v2762
    %v5867 = vmul.f32 %v5865, %v2766
    %v5868 = vmul.f32 %v5865, %v2770
    %v5869 = vmul.f32 %v5865, %v2774
    %5874 = vrot.lane.b32.xlu0 %v5866, 64
    %v5875 = vpop.permute.xlu0 %5874
    %5876 = vrot.lane.b32.xlu0 %v5867, 64
    %v5877 = vpop.permute.xlu0 %5876
    %5878 = vrot.lane.b32.xlu0 %v5868, 64
    %v5879 = vpop.permute.xlu0 %5878
    %5880 = vrot.lane.b32.xlu0 %v5869, 64
    %v5881 = vpop.permute.xlu0 %5880
    %v5886 = vadd.f32 %v5860, %v5875
    %v5887 = vadd.f32 %v5861, %v5877
    %v5888 = vadd.f32 %v5862, %v5879
    %v5889 = vadd.f32 %v5863, %v5881
    %s5890 = sld [smem:[#allocation10 + $0x104]]
    %v5891 = vstv %s5890
    %v5892 = vmul.f32 %v5891, %v2763
    %v5893 = vmul.f32 %v5891, %v2767
    %v5894 = vmul.f32 %v5891, %v2771
    %v5895 = vmul.f32 %v5891, %v2775
    %v5896 = vadd.f32 %v5886, %v5892
    %v5897 = vadd.f32 %v5887, %v5893
    %v5898 = vadd.f32 %v5888, %v5894
    %v5899 = vadd.f32 %v5889, %v5895
    %s5900 = sld [smem:[#allocation10 + $0x105]]
    %v5901 = vstv %s5900
    %v5902 = vmul.f32 %v5901, %v2763
    %v5903 = vmul.f32 %v5901, %v2767
    %v5904 = vmul.f32 %v5901, %v2771
    %v5905 = vmul.f32 %v5901, %v2775
    %5910 = vrot.lane.b32.xlu0 %v5902, 64
    %v5911 = vpop.permute.xlu0 %5910
    %5912 = vrot.lane.b32.xlu0 %v5903, 64
    %v5913 = vpop.permute.xlu0 %5912
    %5914 = vrot.lane.b32.xlu0 %v5904, 64
    %v5915 = vpop.permute.xlu0 %5914
    %5916 = vrot.lane.b32.xlu0 %v5905, 64
    %v5917 = vpop.permute.xlu0 %5916
    %v5922 = vadd.f32 %v5896, %v5911
    %v5923 = vadd.f32 %v5897, %v5913
    %v5924 = vadd.f32 %v5898, %v5915
    %v5925 = vadd.f32 %v5899, %v5917
    %s5926 = sld [smem:[#allocation10 + $0x106]]
    %v5927 = vstv %s5926
    %v5928 = vmul.f32 %v5927, %v2764
    %v5929 = vmul.f32 %v5927, %v2768
    %v5930 = vmul.f32 %v5927, %v2772
    %v5931 = vmul.f32 %v5927, %v2776
    %v5932 = vadd.f32 %v5922, %v5928
    %v5933 = vadd.f32 %v5923, %v5929
    %v5934 = vadd.f32 %v5924, %v5930
    %v5935 = vadd.f32 %v5925, %v5931
    %s5936 = sld [smem:[#allocation10 + $0x107]]
    %v5937 = vstv %s5936
    %v5938 = vmul.f32 %v5937, %v2764
    %v5939 = vmul.f32 %v5937, %v2768
    %v5940 = vmul.f32 %v5937, %v2772
    %v5941 = vmul.f32 %v5937, %v2776
    %5946 = vrot.lane.b32.xlu0 %v5938, 64
    %v5947 = vpop.permute.xlu0 %5946
    %5948 = vrot.lane.b32.xlu0 %v5939, 64
    %v5949 = vpop.permute.xlu0 %5948
    %5950 = vrot.lane.b32.xlu0 %v5940, 64
    %v5951 = vpop.permute.xlu0 %5950
    %5952 = vrot.lane.b32.xlu0 %v5941, 64
    %v5953 = vpop.permute.xlu0 %5952
    %v5958 = vadd.f32 %v5932, %v5947
    %v5959 = vadd.f32 %v5933, %v5949
    %v5960 = vadd.f32 %v5934, %v5951
    %v5961 = vadd.f32 %v5935, %v5953
    %s5962 = scalar_lea.vmem %s7, 608
    %5963 = vst.msk [vmem:[%s5962] sm:$0xff] %vm162, %v5958
    %5964 = vst.msk [vmem:[%s5962 + $0x8] sm:$0xff] %vm162, %v5959
    %s5965 = scalar_lea.vmem %s7, 704
    %5966 = vst.msk [vmem:[%s5965] sm:$0xff] %vm162, %v5960
    %5967 = vst.msk [vmem:[%s5965 + $0x8] sm:$0xff] %vm162, %v5961
    %s5968 = sld [smem:[#allocation11 + $0x3]]
    %s5969 = sld [smem:[#allocation10 + $0x180]]
    %v5970 = vstv %s5969
    %v5971 = vmul.f32 %v5970, %v2761
    %v5972 = vmul.f32 %v5970, %v2765
    %v5973 = vmul.f32 %v5970, %v2769
    %v5974 = vmul.f32 %v5970, %v2773
    %v5975 = vstv %s5968
    %v5976 = vadd.f32 %v5975, %v5971
    %v5977 = vadd.f32 %v5975, %v5972
    %v5978 = vadd.f32 %v5975, %v5973
    %v5979 = vadd.f32 %v5975, %v5974
    %s5980 = sld [smem:[#allocation10 + $0x181]]
    %v5981 = vstv %s5980
    %v5982 = vmul.f32 %v5981, %v2761
    %v5983 = vmul.f32 %v5981, %v2765
    %v5984 = vmul.f32 %v5981, %v2769
    %v5985 = vmul.f32 %v5981, %v2773
    %5990 = vrot.lane.b32.xlu0 %v5982, 64
    %v5991 = vpop.permute.xlu0 %5990
    %5992 = vrot.lane.b32.xlu0 %v5983, 64
    %v5993 = vpop.permute.xlu0 %5992
    %5994 = vrot.lane.b32.xlu0 %v5984, 64
    %v5995 = vpop.permute.xlu0 %5994
    %5996 = vrot.lane.b32.xlu0 %v5985, 64
    %v5997 = vpop.permute.xlu0 %5996
    %v6002 = vadd.f32 %v5976, %v5991
    %v6003 = vadd.f32 %v5977, %v5993
    %v6004 = vadd.f32 %v5978, %v5995
    %v6005 = vadd.f32 %v5979, %v5997
    %s6006 = sld [smem:[#allocation10 + $0x182]]
    %v6007 = vstv %s6006
    %v6008 = vmul.f32 %v6007, %v2762
    %v6009 = vmul.f32 %v6007, %v2766
    %v6010 = vmul.f32 %v6007, %v2770
    %v6011 = vmul.f32 %v6007, %v2774
    %v6012 = vadd.f32 %v6002, %v6008
    %v6013 = vadd.f32 %v6003, %v6009
    %v6014 = vadd.f32 %v6004, %v6010
    %v6015 = vadd.f32 %v6005, %v6011
    %s6016 = sld [smem:[#allocation10 + $0x183]]
    %v6017 = vstv %s6016
    %v6018 = vmul.f32 %v6017, %v2762
    %v6019 = vmul.f32 %v6017, %v2766
    %v6020 = vmul.f32 %v6017, %v2770
    %v6021 = vmul.f32 %v6017, %v2774
    %6026 = vrot.lane.b32.xlu0 %v6018, 64
    %v6027 = vpop.permute.xlu0 %6026
    %6028 = vrot.lane.b32.xlu0 %v6019, 64
    %v6029 = vpop.permute.xlu0 %6028
    %6030 = vrot.lane.b32.xlu0 %v6020, 64
    %v6031 = vpop.permute.xlu0 %6030
    %6032 = vrot.lane.b32.xlu0 %v6021, 64
    %v6033 = vpop.permute.xlu0 %6032
    %v6038 = vadd.f32 %v6012, %v6027
    %v6039 = vadd.f32 %v6013, %v6029
    %v6040 = vadd.f32 %v6014, %v6031
    %v6041 = vadd.f32 %v6015, %v6033
    %s6042 = sld [smem:[#allocation10 + $0x184]]
    %v6043 = vstv %s6042
    %v6044 = vmul.f32 %v6043, %v2763
    %v6045 = vmul.f32 %v6043, %v2767
    %v6046 = vmul.f32 %v6043, %v2771
    %v6047 = vmul.f32 %v6043, %v2775
    %v6048 = vadd.f32 %v6038, %v6044
    %v6049 = vadd.f32 %v6039, %v6045
    %v6050 = vadd.f32 %v6040, %v6046
    %v6051 = vadd.f32 %v6041, %v6047
    %s6052 = sld [smem:[#allocation10 + $0x185]]
    %v6053 = vstv %s6052
    %v6054 = vmul.f32 %v6053, %v2763
    %v6055 = vmul.f32 %v6053, %v2767
    %v6056 = vmul.f32 %v6053, %v2771
    %v6057 = vmul.f32 %v6053, %v2775
    %6062 = vrot.lane.b32.xlu0 %v6054, 64
    %v6063 = vpop.permute.xlu0 %6062
    %6064 = vrot.lane.b32.xlu0 %v6055, 64
    %v6065 = vpop.permute.xlu0 %6064
    %6066 = vrot.lane.b32.xlu0 %v6056, 64
    %v6067 = vpop.permute.xlu0 %6066
    %6068 = vrot.lane.b32.xlu0 %v6057, 64
    %v6069 = vpop.permute.xlu0 %6068
    %v6074 = vadd.f32 %v6048, %v6063
    %v6075 = vadd.f32 %v6049, %v6065
    %v6076 = vadd.f32 %v6050, %v6067
    %v6077 = vadd.f32 %v6051, %v6069
    %s6078 = sld [smem:[#allocation10 + $0x186]]
    %v6079 = vstv %s6078
    %v6080 = vmul.f32 %v6079, %v2764
    %v6081 = vmul.f32 %v6079, %v2768
    %v6082 = vmul.f32 %v6079, %v2772
    %v6083 = vmul.f32 %v6079, %v2776
    %v6084 = vadd.f32 %v6074, %v6080
    %v6085 = vadd.f32 %v6075, %v6081
    %v6086 = vadd.f32 %v6076, %v6082
    %v6087 = vadd.f32 %v6077, %v6083
    %s6088 = sld [smem:[#allocation10 + $0x187]]
    %v6089 = vstv %s6088
    %v6090 = vmul.f32 %v6089, %v2764
    %v6091 = vmul.f32 %v6089, %v2768
    %v6092 = vmul.f32 %v6089, %v2772
    %v6093 = vmul.f32 %v6089, %v2776
    %6098 = vrot.lane.b32.xlu0 %v6090, 64
    %v6099 = vpop.permute.xlu0 %6098
    %6100 = vrot.lane.b32.xlu0 %v6091, 64
    %v6101 = vpop.permute.xlu0 %6100
    %6102 = vrot.lane.b32.xlu0 %v6092, 64
    %v6103 = vpop.permute.xlu0 %6102
    %6104 = vrot.lane.b32.xlu0 %v6093, 64
    %v6105 = vpop.permute.xlu0 %6104
    %v6110 = vadd.f32 %v6084, %v6099
    %v6111 = vadd.f32 %v6085, %v6101
    %v6112 = vadd.f32 %v6086, %v6103
    %v6113 = vadd.f32 %v6087, %v6105
    %s6114 = scalar_lea.vmem %s7, 624
    %6115 = vst.msk [vmem:[%s6114] sm:$0xff] %vm162, %v6110
    %6116 = vst.msk [vmem:[%s6114 + $0x8] sm:$0xff] %vm162, %v6111
    %s6117 = scalar_lea.vmem %s7, 720
    %6118 = vst.msk [vmem:[%s6117] sm:$0xff] %vm162, %v6112
    %6119 = vst.msk [vmem:[%s6117 + $0x8] sm:$0xff] %vm162, %v6113
    %s6120 = sld [smem:[#allocation11 + $0x4]]
    %s6121 = sld [smem:[#allocation10 + $0x200]]
    %v6122 = vstv %s6121
    %v6123 = vmul.f32 %v6122, %v2761
    %v6124 = vmul.f32 %v6122, %v2765
    %v6125 = vmul.f32 %v6122, %v2769
    %v6126 = vmul.f32 %v6122, %v2773
    %v6127 = vstv %s6120
    %v6128 = vadd.f32 %v6127, %v6123
    %v6129 = vadd.f32 %v6127, %v6124
    %v6130 = vadd.f32 %v6127, %v6125
    %v6131 = vadd.f32 %v6127, %v6126
    %s6132 = sld [smem:[#allocation10 + $0x201]]
    %v6133 = vstv %s6132
    %v6134 = vmul.f32 %v6133, %v2761
    %v6135 = vmul.f32 %v6133, %v2765
    %v6136 = vmul.f32 %v6133, %v2769
    %v6137 = vmul.f32 %v6133, %v2773
    %6142 = vrot.lane.b32.xlu0 %v6134, 64
    %v6143 = vpop.permute.xlu0 %6142
    %6144 = vrot.lane.b32.xlu0 %v6135, 64
    %v6145 = vpop.permute.xlu0 %6144
    %6146 = vrot.lane.b32.xlu0 %v6136, 64
    %v6147 = vpop.permute.xlu0 %6146
    %6148 = vrot.lane.b32.xlu0 %v6137, 64
    %v6149 = vpop.permute.xlu0 %6148
    %v6154 = vadd.f32 %v6128, %v6143
    %v6155 = vadd.f32 %v6129, %v6145
    %v6156 = vadd.f32 %v6130, %v6147
    %v6157 = vadd.f32 %v6131, %v6149
    %s6158 = sld [smem:[#allocation10 + $0x202]]
    %v6159 = vstv %s6158
    %v6160 = vmul.f32 %v6159, %v2762
    %v6161 = vmul.f32 %v6159, %v2766
    %v6162 = vmul.f32 %v6159, %v2770
    %v6163 = vmul.f32 %v6159, %v2774
    %v6164 = vadd.f32 %v6154, %v6160
    %v6165 = vadd.f32 %v6155, %v6161
    %v6166 = vadd.f32 %v6156, %v6162
    %v6167 = vadd.f32 %v6157, %v6163
    %s6168 = sld [smem:[#allocation10 + $0x203]]
    %v6169 = vstv %s6168
    %v6170 = vmul.f32 %v6169, %v2762
    %v6171 = vmul.f32 %v6169, %v2766
    %v6172 = vmul.f32 %v6169, %v2770
    %v6173 = vmul.f32 %v6169, %v2774
    %6178 = vrot.lane.b32.xlu0 %v6170, 64
    %v6179 = vpop.permute.xlu0 %6178
    %6180 = vrot.lane.b32.xlu0 %v6171, 64
    %v6181 = vpop.permute.xlu0 %6180
    %6182 = vrot.lane.b32.xlu0 %v6172, 64
    %v6183 = vpop.permute.xlu0 %6182
    %6184 = vrot.lane.b32.xlu0 %v6173, 64
    %v6185 = vpop.permute.xlu0 %6184
    %v6190 = vadd.f32 %v6164, %v6179
    %v6191 = vadd.f32 %v6165, %v6181
    %v6192 = vadd.f32 %v6166, %v6183
    %v6193 = vadd.f32 %v6167, %v6185
    %s6194 = sld [smem:[#allocation10 + $0x204]]
    %v6195 = vstv %s6194
    %v6196 = vmul.f32 %v6195, %v2763
    %v6197 = vmul.f32 %v6195, %v2767
    %v6198 = vmul.f32 %v6195, %v2771
    %v6199 = vmul.f32 %v6195, %v2775
    %v6200 = vadd.f32 %v6190, %v6196
    %v6201 = vadd.f32 %v6191, %v6197
    %v6202 = vadd.f32 %v6192, %v6198
    %v6203 = vadd.f32 %v6193, %v6199
    %s6204 = sld [smem:[#allocation10 + $0x205]]
    %v6205 = vstv %s6204
    %v6206 = vmul.f32 %v6205, %v2763
    %v6207 = vmul.f32 %v6205, %v2767
    %v6208 = vmul.f32 %v6205, %v2771
    %v6209 = vmul.f32 %v6205, %v2775
    %6214 = vrot.lane.b32.xlu0 %v6206, 64
    %v6215 = vpop.permute.xlu0 %6214
    %6216 = vrot.lane.b32.xlu0 %v6207, 64
    %v6217 = vpop.permute.xlu0 %6216
    %6218 = vrot.lane.b32.xlu0 %v6208, 64
    %v6219 = vpop.permute.xlu0 %6218
    %6220 = vrot.lane.b32.xlu0 %v6209, 64
    %v6221 = vpop.permute.xlu0 %6220
    %v6226 = vadd.f32 %v6200, %v6215
    %v6227 = vadd.f32 %v6201, %v6217
    %v6228 = vadd.f32 %v6202, %v6219
    %v6229 = vadd.f32 %v6203, %v6221
    %s6230 = sld [smem:[#allocation10 + $0x206]]
    %v6231 = vstv %s6230
    %v6232 = vmul.f32 %v6231, %v2764
    %v6233 = vmul.f32 %v6231, %v2768
    %v6234 = vmul.f32 %v6231, %v2772
    %v6235 = vmul.f32 %v6231, %v2776
    %v6236 = vadd.f32 %v6226, %v6232
    %v6237 = vadd.f32 %v6227, %v6233
    %v6238 = vadd.f32 %v6228, %v6234
    %v6239 = vadd.f32 %v6229, %v6235
    %s6240 = sld [smem:[#allocation10 + $0x207]]
    %v6241 = vstv %s6240
    %v6242 = vmul.f32 %v6241, %v2764
    %v6243 = vmul.f32 %v6241, %v2768
    %v6244 = vmul.f32 %v6241, %v2772
    %v6245 = vmul.f32 %v6241, %v2776
    %6250 = vrot.lane.b32.xlu0 %v6242, 64
    %v6251 = vpop.permute.xlu0 %6250
    %6252 = vrot.lane.b32.xlu0 %v6243, 64
    %v6253 = vpop.permute.xlu0 %6252
    %6254 = vrot.lane.b32.xlu0 %v6244, 64
    %v6255 = vpop.permute.xlu0 %6254
    %6256 = vrot.lane.b32.xlu0 %v6245, 64
    %v6257 = vpop.permute.xlu0 %6256
    %v6262 = vadd.f32 %v6236, %v6251
    %v6263 = vadd.f32 %v6237, %v6253
    %v6264 = vadd.f32 %v6238, %v6255
    %v6265 = vadd.f32 %v6239, %v6257
    %s6266 = scalar_lea.vmem %s7, 640
    %6267 = vst.msk [vmem:[%s6266] sm:$0xff] %vm162, %v6262
    %6268 = vst.msk [vmem:[%s6266 + $0x8] sm:$0xff] %vm162, %v6263
    %s6269 = scalar_lea.vmem %s7, 736
    %6270 = vst.msk [vmem:[%s6269] sm:$0xff] %vm162, %v6264
    %6271 = vst.msk [vmem:[%s6269 + $0x8] sm:$0xff] %vm162, %v6265
    %s6272 = sld [smem:[#allocation11 + $0x5]]
    %s6273 = sld [smem:[#allocation10 + $0x280]]
    %v6274 = vstv %s6273
    %v6275 = vmul.f32 %v6274, %v2761
    %v6276 = vmul.f32 %v6274, %v2765
    %v6277 = vmul.f32 %v6274, %v2769
    %v6278 = vmul.f32 %v6274, %v2773
    %v6279 = vstv %s6272
    %v6280 = vadd.f32 %v6279, %v6275
    %v6281 = vadd.f32 %v6279, %v6276
    %v6282 = vadd.f32 %v6279, %v6277
    %v6283 = vadd.f32 %v6279, %v6278
    %s6284 = sld [smem:[#allocation10 + $0x281]]
    %v6285 = vstv %s6284
    %v6286 = vmul.f32 %v6285, %v2761
    %v6287 = vmul.f32 %v6285, %v2765
    %v6288 = vmul.f32 %v6285, %v2769
    %v6289 = vmul.f32 %v6285, %v2773
    %6294 = vrot.lane.b32.xlu0 %v6286, 64
    %v6295 = vpop.permute.xlu0 %6294
    %6296 = vrot.lane.b32.xlu0 %v6287, 64
    %v6297 = vpop.permute.xlu0 %6296
    %6298 = vrot.lane.b32.xlu0 %v6288, 64
    %v6299 = vpop.permute.xlu0 %6298
    %6300 = vrot.lane.b32.xlu0 %v6289, 64
    %v6301 = vpop.permute.xlu0 %6300
    %v6306 = vadd.f32 %v6280, %v6295
    %v6307 = vadd.f32 %v6281, %v6297
    %v6308 = vadd.f32 %v6282, %v6299
    %v6309 = vadd.f32 %v6283, %v6301
    %s6310 = sld [smem:[#allocation10 + $0x282]]
    %v6311 = vstv %s6310
    %v6312 = vmul.f32 %v6311, %v2762
    %v6313 = vmul.f32 %v6311, %v2766
    %v6314 = vmul.f32 %v6311, %v2770
    %v6315 = vmul.f32 %v6311, %v2774
    %v6316 = vadd.f32 %v6306, %v6312
    %v6317 = vadd.f32 %v6307, %v6313
    %v6318 = vadd.f32 %v6308, %v6314
    %v6319 = vadd.f32 %v6309, %v6315
    %s6320 = sld [smem:[#allocation10 + $0x283]]
    %v6321 = vstv %s6320
    %v6322 = vmul.f32 %v6321, %v2762
    %v6323 = vmul.f32 %v6321, %v2766
    %v6324 = vmul.f32 %v6321, %v2770
    %v6325 = vmul.f32 %v6321, %v2774
    %6330 = vrot.lane.b32.xlu0 %v6322, 64
    %v6331 = vpop.permute.xlu0 %6330
    %6332 = vrot.lane.b32.xlu0 %v6323, 64
    %v6333 = vpop.permute.xlu0 %6332
    %6334 = vrot.lane.b32.xlu0 %v6324, 64
    %v6335 = vpop.permute.xlu0 %6334
    %6336 = vrot.lane.b32.xlu0 %v6325, 64
    %v6337 = vpop.permute.xlu0 %6336
    %v6342 = vadd.f32 %v6316, %v6331
    %v6343 = vadd.f32 %v6317, %v6333
    %v6344 = vadd.f32 %v6318, %v6335
    %v6345 = vadd.f32 %v6319, %v6337
    %s6346 = sld [smem:[#allocation10 + $0x284]]
    %v6347 = vstv %s6346
    %v6348 = vmul.f32 %v6347, %v2763
    %v6349 = vmul.f32 %v6347, %v2767
    %v6350 = vmul.f32 %v6347, %v2771
    %v6351 = vmul.f32 %v6347, %v2775
    %v6352 = vadd.f32 %v6342, %v6348
    %v6353 = vadd.f32 %v6343, %v6349
    %v6354 = vadd.f32 %v6344, %v6350
    %v6355 = vadd.f32 %v6345, %v6351
    %s6356 = sld [smem:[#allocation10 + $0x285]]
    %v6357 = vstv %s6356
    %v6358 = vmul.f32 %v6357, %v2763
    %v6359 = vmul.f32 %v6357, %v2767
    %v6360 = vmul.f32 %v6357, %v2771
    %v6361 = vmul.f32 %v6357, %v2775
    %6366 = vrot.lane.b32.xlu0 %v6358, 64
    %v6367 = vpop.permute.xlu0 %6366
    %6368 = vrot.lane.b32.xlu0 %v6359, 64
    %v6369 = vpop.permute.xlu0 %6368
    %6370 = vrot.lane.b32.xlu0 %v6360, 64
    %v6371 = vpop.permute.xlu0 %6370
    %6372 = vrot.lane.b32.xlu0 %v6361, 64
    %v6373 = vpop.permute.xlu0 %6372
    %v6378 = vadd.f32 %v6352, %v6367
    %v6379 = vadd.f32 %v6353, %v6369
    %v6380 = vadd.f32 %v6354, %v6371
    %v6381 = vadd.f32 %v6355, %v6373
    %s6382 = sld [smem:[#allocation10 + $0x286]]
    %v6383 = vstv %s6382
    %v6384 = vmul.f32 %v6383, %v2764
    %v6385 = vmul.f32 %v6383, %v2768
    %v6386 = vmul.f32 %v6383, %v2772
    %v6387 = vmul.f32 %v6383, %v2776
    %v6388 = vadd.f32 %v6378, %v6384
    %v6389 = vadd.f32 %v6379, %v6385
    %v6390 = vadd.f32 %v6380, %v6386
    %v6391 = vadd.f32 %v6381, %v6387
    %s6392 = sld [smem:[#allocation10 + $0x287]]
    %v6393 = vstv %s6392
    %v6394 = vmul.f32 %v6393, %v2764
    %v6395 = vmul.f32 %v6393, %v2768
    %v6396 = vmul.f32 %v6393, %v2772
    %v6397 = vmul.f32 %v6393, %v2776
    %6402 = vrot.lane.b32.xlu0 %v6394, 64
    %v6403 = vpop.permute.xlu0 %6402
    %6404 = vrot.lane.b32.xlu0 %v6395, 64
    %v6405 = vpop.permute.xlu0 %6404
    %6406 = vrot.lane.b32.xlu0 %v6396, 64
    %v6407 = vpop.permute.xlu0 %6406
    %6408 = vrot.lane.b32.xlu0 %v6397, 64
    %v6409 = vpop.permute.xlu0 %6408
    %v6414 = vadd.f32 %v6388, %v6403
    %v6415 = vadd.f32 %v6389, %v6405
    %v6416 = vadd.f32 %v6390, %v6407
    %v6417 = vadd.f32 %v6391, %v6409
    %s6418 = scalar_lea.vmem %s7, 656
    %6419 = vst.msk [vmem:[%s6418] sm:$0xff] %vm162, %v6414
    %6420 = vst.msk [vmem:[%s6418 + $0x8] sm:$0xff] %vm162, %v6415
    %s6421 = scalar_lea.vmem %s7, 752
    %6422 = vst.msk [vmem:[%s6421] sm:$0xff] %vm162, %v6416
    %6423 = vst.msk [vmem:[%s6421 + $0x8] sm:$0xff] %vm162, %v6417
    // Predicated region
    $region54: #{ae_simple_head_forward.1} parent=1 // pred_check
      _
    $region55: #{ae_simple_head_forward.1} parent=1 // pred_check_branch
      %6425 = sbr.rel (0) target = $region57
    $region56: #{ae_simple_head_forward.1} parent=1 // pred_region
      _
    $region57: #{ae_simple_head_forward.1} parent=1 // pred_fallthru
      _
    // Predicated region
    $region58: #{ae_simple_head_forward.1} parent=1 // pred_check
      _
    $region59: #{ae_simple_head_forward.1} parent=1 // pred_check_branch
      %6427 = sbr.rel (0) target = $region61
    $region60: #{ae_simple_head_forward.1} parent=1 // pred_region
      _
    $region61: #{ae_simple_head_forward.1} parent=1 // pred_fallthru
      _
    %6428 = vsyncpa [#allocation3], 1
    %6429 = vsyncpa [#allocation6], 1
    %6430 = vsyncpa [#allocation9], 1
    %6431 = vsyncpa [#allocation4], 1
    %6432 = vsyncpa [#allocation12], 1

</llo_original>
